<compile_context>
chip_gen: v7x
topology: tpu7x:2x2x1
jax: 0.10.0
libtpu: 0.0.40
codegen_flags: <defaults>
</compile_context>

<pallas_src>
import jax
import jax.numpy as jnp
import numpy as np
from jax.experimental import pallas as pl
from jax.experimental.pallas import tpu as pltpu

_LANE = 128     # lane tile (last dim)
_SUBLANE = 8    # sublane tile (second-to-last dim)


def _round_up(x, m):
    return ((x + m - 1) // m) * m


def _pick_time_block(T, cap=8):
    # TODO(synk): pad T (with exactly-zero gx rows) instead of degrading Tb for awkward T.
    for tb in range(min(T, cap), 0, -1):
        if T % tb == 0:
            return tb
    return 1


def _pick_row_block(n, cap=512):
    if n <= cap:
        return n
    for rb in range(cap, _SUBLANE - 1, -1):
        if n % rb == 0 and rb % _SUBLANE == 0:
            return rb
    return n


# --------------------------------------------------------------------------------------
# Kernel 1a: layer-0 input projection   gx[d] = x @ W_ih[d] + b[d]     (both directions)
# --------------------------------------------------------------------------------------
def _proj_single_kernel(x_ref, w_ref, b_ref, gx_ref):
    # x_ref: (Rb, Din)   w_ref: (Din, 4Hp) bf16   b_ref: (1, 4Hp) f32   gx_ref: (Rb, 4Hp) bf16
    x = x_ref[...].astype(w_ref.dtype)
    acc = jnp.dot(x, w_ref[...], preferred_element_type=jnp.float32)
    gx_ref[...] = (acc + b_ref[...]).astype(gx_ref.dtype)


def _input_projection_single(x_tbd, wih, b):
    """x_tbd: (T, B, Din) -> gx: (2, T, B, 4Hp) bf16."""
    T, B, Din = x_tbd.shape
    G = wih.shape[-1]
    TB = T * B
    x2d = x_tbd.reshape(TB, Din)
    Rb = _pick_row_block(TB)
    nR = TB // Rb

    gx = pl.pallas_call(
        _proj_single_kernel,
        out_shape=jax.ShapeDtypeStruct((2, TB, G), jnp.bfloat16),
        grid_spec=pltpu.PrefetchScalarGridSpec(
            num_scalar_prefetch=0,
            grid=(2, nR),                      # (direction, row block) — fully parallel
            in_specs=[
                pl.BlockSpec((Rb, Din), lambda d, r: (r, 0)),
                pl.BlockSpec((None, Din, G), lambda d, r: (d, 0, 0)),
                pl.BlockSpec((None, 1, G), lambda d, r: (d, 0, 0)),
            ],
            out_specs=pl.BlockSpec((None, Rb, G), lambda d, r: (d, r, 0)),
        ),
        compiler_params=pltpu.CompilerParams(
            dimension_semantics=("parallel", "parallel")),
    )(x2d, wih, b)
    return gx.reshape(2, T, B, G)


# --------------------------------------------------------------------------------------
# Kernel 1b: upper-layer input projection, consuming fwd/bwd activations directly
#            gx[d] = h_f @ W_f[d] + h_b @ W_b[d] + b[d]     (no inter-layer concat)
# --------------------------------------------------------------------------------------
def _proj_dual_kernel(hf_ref, hb_ref, wf_ref, wb_ref, b_ref, gx_ref):
    acc = jnp.dot(hf_ref[...].astype(wf_ref.dtype), wf_ref[...],
                  preferred_element_type=jnp.float32)
    acc = acc + jnp.dot(hb_ref[...].astype(wb_ref.dtype), wb_ref[...],
                        preferred_element_type=jnp.float32)
    gx_ref[...] = (acc + b_ref[...]).astype(gx_ref.dtype)


def _input_projection_dual(hf_tbh, hb_tbh, wf, wb, b):
    """hf/hb: (T, B, Hp) -> gx: (2, T, B, 4Hp) bf16."""
    T, B, Hp = hf_tbh.shape
    G = wf.shape[-1]
    TB = T * B
    hf2 = hf_tbh.reshape(TB, Hp)
    hb2 = hb_tbh.reshape(TB, Hp)
    Rb = _pick_row_block(TB)
    nR = TB // Rb

    gx = pl.pallas_call(
        _proj_dual_kernel,
        out_shape=jax.ShapeDtypeStruct((2, TB, G), jnp.bfloat16),
        grid_spec=pltpu.PrefetchScalarGridSpec(
            num_scalar_prefetch=0,
            grid=(2, nR),
            in_specs=[
                pl.BlockSpec((Rb, Hp), lambda d, r: (r, 0)),
                pl.BlockSpec((Rb, Hp), lambda d, r: (r, 0)),
                pl.BlockSpec((None, Hp, G), lambda d, r: (d, 0, 0)),
                pl.BlockSpec((None, Hp, G), lambda d, r: (d, 0, 0)),
                pl.BlockSpec((None, 1, G), lambda d, r: (d, 0, 0)),
            ],
            out_specs=pl.BlockSpec((None, Rb, G), lambda d, r: (d, r, 0)),
        ),
        compiler_params=pltpu.CompilerParams(
            dimension_semantics=("parallel", "parallel")),
    )(hf2, hb2, wf, wb, b)
    return gx.reshape(2, T, B, G)


# --------------------------------------------------------------------------------------
# Kernel 2: fused bidirectional recurrence.  Both directions interleaved per time step so
# the MXU (h@W_hh of one direction) overlaps the VPU/EUP gate math of the other.
# --------------------------------------------------------------------------------------
def _lstm_recurrent_kernel(gxf_ref, gxb_ref, whh_ref, outf_ref, outb_ref, h_scr, c_scr):
    # gxf_ref: (Tb, B, 4Hp) bf16   forward gates block (time block tb)
    # gxb_ref: (Tb, B, 4Hp) bf16   backward gates block (time block nT-1-tb)
    # whh_ref: (2, Hp, 4Hp) bf16   hidden->gates weights, both directions (grid-invariant)
    # outf/outb_ref: (Tb, B, Hp)   hidden-state output blocks
    # h_scr, c_scr: (2, B, Hp) f32 recurrent state (persists across the time grid)
    tb = pl.program_id(0)

    @pl.when(tb == 0)
    def _():
        h_scr[...] = jnp.zeros_like(h_scr)
        c_scr[...] = jnp.zeros_like(c_scr)

    Hp = h_scr.shape[-1]
    Tb = gxf_ref.shape[0]
    whh_f = whh_ref[0]          # hoisted: weight tiles read once per grid step
    whh_b = whh_ref[1]
    f32 = jnp.float32

    def sigmoid(v):
        # single EUP pass (tanh) instead of exp + divide
        return 0.5 * jnp.tanh(0.5 * v) + 0.5

    def gates_to_state(g, c_prev):
        # PyTorch gate order: i, f, g, o — lane-aligned slices (Hp % 128 == 0)
        i = sigmoid(g[:, 0 * Hp:1 * Hp])
        f = sigmoid(g[:, 1 * Hp:2 * Hp])
        gg = jnp.tanh(g[:, 2 * Hp:3 * Hp])
        o = sigmoid(g[:, 3 * Hp:4 * Hp])
        c_new = f * c_prev + i * gg
        h_new = o * jnp.tanh(c_new)
        return h_new, c_new

    def step(t, carry):
        tr = Tb - 1 - t   # backward direction walks its block in reverse
        gf = gxf_ref[t].astype(f32) + jnp.dot(
            h_scr[0].astype(whh_f.dtype), whh_f, preferred_element_type=f32)
        gb = gxb_ref[tr].astype(f32) + jnp.dot(
            h_scr[1].astype(whh_b.dtype), whh_b, preferred_element_type=f32)
        hf_new, cf_new = gates_to_state(gf, c_scr[0])
        hb_new, cb_new = gates_to_state(gb, c_scr[1])
        h_scr[0] = hf_new
        c_scr[0] = cf_new
        h_scr[1] = hb_new
        c_scr[1] = cb_new
        outf_ref[t] = hf_new.astype(outf_ref.dtype)
        outb_ref[tr] = hb_new.astype(outb_ref.dtype)
        return carry

    jax.lax.fori_loop(0, Tb, step, 0, unroll=True)


def _recurrence(gx, whh, out_dtype, Tb):
    """gx: (2, T, B, 4Hp) bf16, whh: (2, Hp, 4Hp) bf16 -> (out_fwd, out_bwd) each (T, B, Hp)."""
    _, T, B, G = gx.shape
    Hp = whh.shape[1]
    nT = T // Tb

    out_f, out_b = pl.pallas_call(
        _lstm_recurrent_kernel,
        out_shape=(jax.ShapeDtypeStruct((T, B, Hp), out_dtype),
                   jax.ShapeDtypeStruct((T, B, Hp), out_dtype)),
        grid_spec=pltpu.PrefetchScalarGridSpec(
            num_scalar_prefetch=0,
            grid=(nT,),   # time blocks: the serial recurrence axis
            in_specs=[
                # forward direction reads time blocks 0..nT-1
                pl.BlockSpec((None, Tb, B, G), lambda tb: (0, tb, 0, 0)),
                # backward direction reads time blocks nT-1..0
                pl.BlockSpec((None, Tb, B, G), lambda tb: (1, nT - 1 - tb, 0, 0)),
                # both directions' W_hh, grid-invariant
                pl.BlockSpec((2, Hp, G), lambda tb: (0, 0, 0)),
            ],
            out_specs=(
                pl.BlockSpec((Tb, B, Hp), lambda tb: (tb, 0, 0)),
                pl.BlockSpec((Tb, B, Hp), lambda tb: (nT - 1 - tb, 0, 0)),
            ),
            scratch_shapes=[
                pltpu.VMEM((2, B, Hp), jnp.float32),  # h state (fwd, bwd)
                pltpu.VMEM((2, B, Hp), jnp.float32),  # c state (fwd, bwd)
            ],
        ),
        compiler_params=pltpu.CompilerParams(
            dimension_semantics=("arbitrary",)),
    )(gx, gx, whh)
    return out_f, out_b


# --------------------------------------------------------------------------------------
# Wrapper: multi-layer bidirectional LSTM, batch_first in/out like nn.LSTM.
# --------------------------------------------------------------------------------------
def bilstm_forward(x_btd, kparams, hidden_dim):
    """x_btd: (B, T, embedding_dim) -> (B, T, 2 * hidden_dim)."""
    B0, T, _ = x_btd.shape
    Bp = _round_up(B0, _SUBLANE)
    x = jnp.transpose(x_btd, (1, 0, 2))                 # time-major (T, B, E)
    if Bp != B0:
        x = jnp.pad(x, ((0, 0), (0, Bp - B0), (0, 0)))  # pad batch to sublane multiple
    num_layers = len(kparams)
    Tb = _pick_time_block(T)

    h_f = h_b = None
    for li, layer in enumerate(kparams):
        if li == 0:
            gx = _input_projection_single(x, layer["wih"], layer["b"])
        else:
            gx = _input_projection_dual(h_f, h_b, layer["wih_f"], layer["wih_b"], layer["b"])
        out_dtype = jnp.float32 if li == num_layers - 1 else jnp.bfloat16
        h_f, h_b = _recurrence(gx, layer["whh"], out_dtype, Tb)   # each (T, Bp, Hp)

    # Single user-facing concat + transpose on the final output only (PyTorch [fwd | bwd]).
    out = jnp.concatenate([h_f[:, :B0, :hidden_dim], h_b[:, :B0, :hidden_dim]], axis=-1)
    return jnp.transpose(out, (1, 0, 2))


# --------------------------------------------------------------------------------------
# Parameter init (PyTorch nn.LSTM style) and packing (pad H -> multiple of 128, bf16 cast).
# --------------------------------------------------------------------------------------
def init_raw_params(key, embedding_dim, hidden_dim, num_layers):
    """uniform(-k, k), k = 1/sqrt(H); per layer: w_ih (2,Din,4H), w_hh (2,H,4H), b (2,1,4H)."""
    k = 1.0 / np.sqrt(hidden_dim)
    layers = []
    for layer in range(num_layers):
        din = embedding_dim if layer == 0 else 2 * hidden_dim
        wih, whh, bias = [], [], []
        for _ in range(2):  # fwd, bwd
            key, k1, k2, k3, k4 = jax.random.split(key, 5)
            w_ih = jax.random.uniform(k1, (din, 4 * hidden_dim), jnp.float32, -k, k)
            w_hh = jax.random.uniform(k2, (hidden_dim, 4 * hidden_dim), jnp.float32, -k, k)
            b_ih = jax.random.uniform(k3, (4 * hidden_dim,), jnp.float32, -k, k)
            b_hh = jax.random.uniform(k4, (4 * hidden_dim,), jnp.float32, -k, k)
            wih.append(w_ih)
            whh.append(w_hh)
            bias.append((b_ih + b_hh).reshape(1, -1))
        layers.append({"w_ih": jnp.stack(wih), "w_hh": jnp.stack(whh), "b": jnp.stack(bias)})
    return layers


def _pad_gate_cols(w, H, Hp):
    """Pad the 4H gate axis -> 4Hp, padding each of the i/f/g/o blocks from H to Hp."""
    if Hp == H:
        return w
    lead = w.shape[:-1]
    w4 = w.reshape(lead + (4, H))
    pad = [(0, 0)] * (w4.ndim - 1) + [(0, Hp - H)]
    return jnp.pad(w4, pad).reshape(lead + (4 * Hp,))


def pack_params_for_kernel(raw_params, hidden_dim, mxu_dtype=jnp.bfloat16):
    """Pad H to a multiple of 128 (lane-aligned gate slices, unmasked stores) and cast MXU
    operands to bf16.  Padded gate columns / input rows are zero so padded lanes stay zero."""
    H = hidden_dim
    Hp = _round_up(H, _LANE)
    packed = []
    for li, layer in enumerate(raw_params):
        w_ih, w_hh, b = layer["w_ih"], layer["w_hh"], layer["b"]
        whh = _pad_gate_cols(w_hh, H, Hp)
        whh = jnp.pad(whh, ((0, 0), (0, Hp - H), (0, 0)))           # (2, Hp, 4Hp)
        entry = {"whh": whh.astype(mxu_dtype),
                 "b": _pad_gate_cols(b, H, Hp)}                     # bias stays f32
        if li == 0:
            entry["wih"] = _pad_gate_cols(w_ih, H, Hp).astype(mxu_dtype)   # (2, E, 4Hp)
        else:
            # Din = 2H; split by source direction so upper layers consume (h_f, h_b) directly.
            wf = jnp.pad(_pad_gate_cols(w_ih[:, :H, :], H, Hp), ((0, 0), (0, Hp - H), (0, 0)))
            wb = jnp.pad(_pad_gate_cols(w_ih[:, H:, :], H, Hp), ((0, 0), (0, Hp - H), (0, 0)))
            entry["wih_f"] = wf.astype(mxu_dtype)
            entry["wih_b"] = wb.astype(mxu_dtype)
        packed.append(entry)
    return packed


# ----- pure-JAX reference (lax.scan) with matched precision for the correctness check -----
def bilstm_reference(x_btd, raw_params):
    x = jnp.transpose(x_btd, (1, 0, 2)).astype(jnp.float32)   # (T, B, D)
    num_layers = len(raw_params)

    def sigmoid(v):
        return 0.5 * jnp.tanh(0.5 * v) + 0.5

    for li, layer in enumerate(raw_params):
        w_ih = layer["w_ih"].astype(jnp.bfloat16)
        w_hh = layer["w_hh"].astype(jnp.bfloat16)
        b = layer["b"]
        T, B, _ = x.shape
        H = layer["w_hh"].shape[1]
        gx = jnp.einsum("tbd,zdh->ztbh", x.astype(jnp.bfloat16), w_ih,
                        preferred_element_type=jnp.float32)
        gx = (gx + b[:, None]).astype(jnp.bfloat16)            # match bf16 gx in the kernel

        outs = []
        for z, reverse in ((0, False), (1, True)):
            gxz = gx[z][::-1] if reverse else gx[z]

            def step(carry, g, z=z):
                h, c = carry
                gates = g.astype(jnp.float32) + jnp.dot(
                    h.astype(jnp.bfloat16), w_hh[z], preferred_element_type=jnp.float32)
                i = sigmoid(gates[:, 0 * H:1 * H])
                f = sigmoid(gates[:, 1 * H:2 * H])
                gg = jnp.tanh(gates[:, 2 * H:3 * H])
                o = sigmoid(gates[:, 3 * H:4 * H])
                c = f * c + i * gg
                h = o * jnp.tanh(c)
                return (h, c), h

            init = (jnp.zeros((B, H), jnp.float32), jnp.zeros((B, H), jnp.float32))
            _, hs = jax.lax.scan(step, init, gxz)
            outs.append(hs[::-1] if reverse else hs)

        out_dtype = jnp.float32 if li == num_layers - 1 else jnp.bfloat16
        x = jnp.concatenate(outs, axis=-1).astype(out_dtype)
    return jnp.transpose(x, (1, 0, 2))


if __name__ == "__main__":
    batch, seq_len = 2, 8
    embedding_dim, hidden_dim, num_layers = 16, 32, 2

    key = jax.random.PRNGKey(0)
    key, pkey, xkey = jax.random.split(key, 3)

    raw_params = init_raw_params(pkey, embedding_dim, hidden_dim, num_layers)
    kparams = pack_params_for_kernel(raw_params, hidden_dim)
    x = jax.random.normal(xkey, (batch, seq_len, embedding_dim), jnp.float32)

    fwd = jax.jit(lambda xx, pp: bilstm_forward(xx, pp, hidden_dim))
    out = jax.block_until_ready(fwd(x, kparams))
    assert out.shape == (batch, seq_len, 2 * hidden_dim), out.shape

    ref = jax.block_until_ready(bilstm_reference(x, raw_params))
    # bf16 MXU operands and bf16 gx in both paths; tolerance covers accumulation-order noise.
    np.testing.assert_allclose(np.asarray(out), np.asarray(ref), rtol=2e-2, atol=2e-2)

    print("KERNEL_OK")
</pallas_src>

<mosaic_0001>
module attributes {stable_mosaic.version = 11 : i64} {
  func.func @_proj_single_kernel(%arg0: i32, %arg1: i32, %arg2: memref<64x16xf32, #tpu.memory_space<vmem>>, %arg3: memref<1x16x512xbf16, #tpu.memory_space<vmem>>, %arg4: memref<1x1x512xf32, #tpu.memory_space<vmem>>, %arg5: memref<1x64x512xbf16, #tpu.memory_space<vmem>>) attributes {dimension_semantics = [#tpu.dimension_semantics<parallel>, #tpu.dimension_semantics<parallel>], iteration_bounds = array<i64: 2, 1>, scalar_prefetch = 0 : i64, scratch_operands = 0 : i64, tpu.core_type = #tpu.core_type<tc>, window_params = [{transform_indices = @transform_0, window_bounds = array<i64: 64, 16>}, {transform_indices = @transform_1, window_bounds = array<i64: 1, 16, 512>}, {transform_indices = @transform_2, window_bounds = array<i64: 1, 1, 512>}, {transform_indices = @transform_3, window_bounds = array<i64: 1, 64, 512>}]} {
    %c0 = arith.constant 0 : index
    %c0_0 = arith.constant 0 : index
    %0 = vector.load %arg2[%c0, %c0_0] : memref<64x16xf32, #tpu.memory_space<vmem>>, vector<64x16xf32>
    %1 = arith.truncf %0 : vector<64x16xf32> to vector<64x16xbf16>
    %c0_1 = arith.constant 0 : index
    %c0_2 = arith.constant 0 : index
    %c0_3 = arith.constant 0 : index
    %2 = vector.load %arg3[%c0_1, %c0_2, %c0_3] : memref<1x16x512xbf16, #tpu.memory_space<vmem>>, vector<1x16x512xbf16>
    %3 = vector.shape_cast %2 : vector<1x16x512xbf16> to vector<16x512xbf16>
    %cst = arith.constant dense<0.000000e+00> : vector<64x512xf32>
    %4 = tpu.matmul %1, %3, %cst {dimension_numbers = #tpu.dot_dimension_numbers<[1], [0], [0], [1], [0, 0, 1, 1], [], []>} : vector<64x16xbf16>, vector<16x512xbf16>, vector<64x512xf32> -> vector<64x512xf32>
    %c0_4 = arith.constant 0 : index
    %c0_5 = arith.constant 0 : index
    %c0_6 = arith.constant 0 : index
    %5 = vector.load %arg4[%c0_4, %c0_5, %c0_6] : memref<1x1x512xf32, #tpu.memory_space<vmem>>, vector<1x1x512xf32>
    %6 = vector.shape_cast %5 : vector<1x1x512xf32> to vector<1x512xf32>
    %7 = vector.broadcast %6 : vector<1x512xf32> to vector<64x512xf32>
    %8 = arith.addf %4, %7 : vector<64x512xf32>
    %9 = arith.truncf %8 : vector<64x512xf32> to vector<64x512xbf16>
    %c0_7 = arith.constant 0 : index
    %c0_8 = arith.constant 0 : index
    %c0_9 = arith.constant 0 : index
    %10 = vector.load %arg5[%c0_7, %c0_8, %c0_9] : memref<1x64x512xbf16, #tpu.memory_space<vmem>>, vector<1x64x512xbf16>
    %11 = vector.shape_cast %10 : vector<1x64x512xbf16> to vector<64x512xbf16>
    %12 = vector.shape_cast %9 : vector<64x512xbf16> to vector<1x64x512xbf16>
    tpu.vector_store %arg5[%c0_7, %c0_8, %c0_9], %12 {strides = array<i32>} : memref<1x64x512xbf16, #tpu.memory_space<vmem>>, vector<1x64x512xbf16>,
    return
  }
  func.func @transform_0(%arg0: i32, %arg1: i32) -> (i32, i32) {
    %c0_i32 = arith.constant 0 : i32
    %c0_i32_0 = arith.constant 0 : i32
    return %arg1, %c0_i32 : i32, i32
  }
  func.func @transform_1(%arg0: i32, %arg1: i32) -> (i32, i32, i32) {
    %c0_i32 = arith.constant 0 : i32
    %c0_i32_0 = arith.constant 0 : i32
    %c0_i32_1 = arith.constant 0 : i32
    return %arg0, %c0_i32, %c0_i32_0 : i32, i32, i32
  }
  func.func @transform_2(%arg0: i32, %arg1: i32) -> (i32, i32, i32) {
    %c0_i32 = arith.constant 0 : i32
    %c0_i32_0 = arith.constant 0 : i32
    %c0_i32_1 = arith.constant 0 : i32
    return %arg0, %c0_i32, %c0_i32_0 : i32, i32, i32
  }
  func.func @transform_3(%arg0: i32, %arg1: i32) -> (i32, i32, i32) {
    %c0_i32 = arith.constant 0 : i32
    %c0_i32_0 = arith.constant 0 : i32
    return %arg0, %arg1, %c0_i32 : i32, i32, i32
  }
}

module attributes {stable_mosaic.version = 11 : i64} {
  func.func @_lstm_recurrent_kernel(%arg0: i32, %arg1: memref<1x8x8x512xbf16, #tpu.memory_space<vmem>>, %arg2: memref<1x8x8x512xbf16, #tpu.memory_space<vmem>>, %arg3: memref<2x128x512xbf16, #tpu.memory_space<vmem>>, %arg4: memref<8x8x128xbf16, #tpu.memory_space<vmem>>, %arg5: memref<8x8x128xbf16, #tpu.memory_space<vmem>>, %arg6: memref<2x8x128xf32, #tpu.memory_space<vmem>>, %arg7: memref<2x8x128xf32, #tpu.memory_space<vmem>>) attributes {dimension_semantics = [#tpu.dimension_semantics<arbitrary>], iteration_bounds = array<i64: 1>, scalar_prefetch = 0 : i64, scratch_operands = 2 : i64, tpu.core_type = #tpu.core_type<tc>, window_params = [{transform_indices = @transform_0, window_bounds = array<i64: 1, 8, 8, 512>}, {transform_indices = @transform_1, window_bounds = array<i64: 1, 8, 8, 512>}, {pipeline_mode = #tpu.pipeline_mode<synchronous>, transform_indices = @transform_2, window_bounds = array<i64: 2, 128, 512>}, {transform_indices = @transform_3, window_bounds = array<i64: 8, 8, 128>}, {transform_indices = @transform_4, window_bounds = array<i64: 8, 8, 128>}]} {
    %c0_i32 = arith.constant 0 : i32
    %0 = arith.cmpi eq, %arg0, %c0_i32 : i32
    %1 = arith.extui %0 : i1 to i32
    %c0_i32_0 = arith.constant 0 : i32
    %2 = arith.cmpi ne, %1, %c0_i32_0 : i32
    scf.if %2 {
      %cst_445 = arith.constant 0.000000e+00 : f32
      %863 = vector.broadcast %cst_445 : f32 to vector<2x8x128xf32>
      %c0_446 = arith.constant 0 : index
      %c0_447 = arith.constant 0 : index
      %c0_448 = arith.constant 0 : index
      %864 = vector.load %arg6[%c0_446, %c0_447, %c0_448] : memref<2x8x128xf32, #tpu.memory_space<vmem>>, vector<2x8x128xf32>
      tpu.vector_store %arg6[%c0_446, %c0_447, %c0_448], %863 {strides = array<i32>} : memref<2x8x128xf32, #tpu.memory_space<vmem>>, vector<2x8x128xf32>,
      %cst_449 = arith.constant 0.000000e+00 : f32
      %865 = vector.broadcast %cst_449 : f32 to vector<2x8x128xf32>
      %c0_450 = arith.constant 0 : index
      %c0_451 = arith.constant 0 : index
      %c0_452 = arith.constant 0 : index
      %866 = vector.load %arg7[%c0_450, %c0_451, %c0_452] : memref<2x8x128xf32, #tpu.memory_space<vmem>>, vector<2x8x128xf32>
      tpu.vector_store %arg7[%c0_450, %c0_451, %c0_452], %865 {strides = array<i32>} : memref<2x8x128xf32, #tpu.memory_space<vmem>>, vector<2x8x128xf32>,
    } else {
    }
    %c0 = arith.constant 0 : index
    %c0_1 = arith.constant 0 : index
    %c0_2 = arith.constant 0 : index
    %3 = vector.load %arg3[%c0, %c0_1, %c0_2] : memref<2x128x512xbf16, #tpu.memory_space<vmem>>, vector<1x128x512xbf16>
    %4 = vector.shape_cast %3 : vector<1x128x512xbf16> to vector<128x512xbf16>
    %c1 = arith.constant 1 : index
    %c0_3 = arith.constant 0 : index
    %c0_4 = arith.constant 0 : index
    %5 = vector.load %arg3[%c1, %c0_3, %c0_4] : memref<2x128x512xbf16, #tpu.memory_space<vmem>>, vector<1x128x512xbf16>
    %6 = vector.shape_cast %5 : vector<1x128x512xbf16> to vector<128x512xbf16>
    %c0_i32_5 = arith.constant 0 : i32
    %c7_i32 = arith.constant 7 : i32
    %7 = arith.subi %c7_i32, %c0_i32_5 : i32
    %c0_6 = arith.constant 0 : index
    %8 = arith.index_cast %c0_i32_5 : i32 to index
    %c0_7 = arith.constant 0 : index
    %c0_8 = arith.constant 0 : index
    %9 = vector.load %arg1[%c0_6, %8, %c0_7, %c0_8] : memref<1x8x8x512xbf16, #tpu.memory_space<vmem>>, vector<1x1x8x512xbf16>
    %10 = vector.shape_cast %9 : vector<1x1x8x512xbf16> to vector<8x512xbf16>
    %11 = arith.extf %10 : vector<8x512xbf16> to vector<8x512xf32>
    %c0_9 = arith.constant 0 : index
    %c0_10 = arith.constant 0 : index
    %c0_11 = arith.constant 0 : index
    %12 = vector.load %arg6[%c0_9, %c0_10, %c0_11] : memref<2x8x128xf32, #tpu.memory_space<vmem>>, vector<1x8x128xf32>
    %13 = vector.shape_cast %12 : vector<1x8x128xf32> to vector<8x128xf32>
    %14 = arith.truncf %13 : vector<8x128xf32> to vector<8x128xbf16>
    %cst = arith.constant dense<0.000000e+00> : vector<8x512xf32>
    %15 = tpu.matmul %14, %4, %cst {dimension_numbers = #tpu.dot_dimension_numbers<[1], [0], [0], [1], [0, 0, 1, 1], [], []>} : vector<8x128xbf16>, vector<128x512xbf16>, vector<8x512xf32> -> vector<8x512xf32>
    %16 = arith.addf %11, %15 : vector<8x512xf32>
    %c0_12 = arith.constant 0 : index
    %17 = arith.index_cast %7 : i32 to index
    %c0_13 = arith.constant 0 : index
    %c0_14 = arith.constant 0 : index
    %18 = vector.load %arg2[%c0_12, %17, %c0_13, %c0_14] : memref<1x8x8x512xbf16, #tpu.memory_space<vmem>>, vector<1x1x8x512xbf16>
    %19 = vector.shape_cast %18 : vector<1x1x8x512xbf16> to vector<8x512xbf16>
    %20 = arith.extf %19 : vector<8x512xbf16> to vector<8x512xf32>
    %c1_15 = arith.constant 1 : index
    %c0_16 = arith.constant 0 : index
    %c0_17 = arith.constant 0 : index
    %21 = vector.load %arg6[%c1_15, %c0_16, %c0_17] : memref<2x8x128xf32, #tpu.memory_space<vmem>>, vector<1x8x128xf32>
    %22 = vector.shape_cast %21 : vector<1x8x128xf32> to vector<8x128xf32>
    %23 = arith.truncf %22 : vector<8x128xf32> to vector<8x128xbf16>
    %cst_18 = arith.constant dense<0.000000e+00> : vector<8x512xf32>
    %24 = tpu.matmul %23, %6, %cst_18 {dimension_numbers = #tpu.dot_dimension_numbers<[1], [0], [0], [1], [0, 0, 1, 1], [], []>} : vector<8x128xbf16>, vector<128x512xbf16>, vector<8x512xf32> -> vector<8x512xf32>
    %25 = arith.addf %20, %24 : vector<8x512xf32>
    %c0_19 = arith.constant 0 : index
    %c0_20 = arith.constant 0 : index
    %c0_21 = arith.constant 0 : index
    %26 = vector.load %arg7[%c0_19, %c0_20, %c0_21] : memref<2x8x128xf32, #tpu.memory_space<vmem>>, vector<1x8x128xf32>
    %27 = vector.shape_cast %26 : vector<1x8x128xf32> to vector<8x128xf32>
    %28 = vector.extract_strided_slice %16 {offsets = [0, 0], sizes = [8, 128], strides = [1, 1]} : vector<8x512xf32> to vector<8x128xf32>
    %cst_22 = arith.constant 5.000000e-01 : f32
    %29 = vector.broadcast %cst_22 : f32 to vector<8x128xf32>
    %30 = arith.mulf %29, %28 : vector<8x128xf32>
    %31 = math.tanh %30 : vector<8x128xf32>
    %cst_23 = arith.constant 5.000000e-01 : f32
    %32 = vector.broadcast %cst_23 : f32 to vector<8x128xf32>
    %33 = arith.mulf %32, %31 : vector<8x128xf32>
    %cst_24 = arith.constant 5.000000e-01 : f32
    %34 = vector.broadcast %cst_24 : f32 to vector<8x128xf32>
    %35 = arith.addf %33, %34 : vector<8x128xf32>
    %36 = vector.extract_strided_slice %16 {offsets = [0, 128], sizes = [8, 128], strides = [1, 1]} : vector<8x512xf32> to vector<8x128xf32>
    %cst_25 = arith.constant 5.000000e-01 : f32
    %37 = vector.broadcast %cst_25 : f32 to vector<8x128xf32>
    %38 = arith.mulf %37, %36 : vector<8x128xf32>
    %39 = math.tanh %38 : vector<8x128xf32>
    %cst_26 = arith.constant 5.000000e-01 : f32
    %40 = vector.broadcast %cst_26 : f32 to vector<8x128xf32>
    %41 = arith.mulf %40, %39 : vector<8x128xf32>
    %cst_27 = arith.constant 5.000000e-01 : f32
    %42 = vector.broadcast %cst_27 : f32 to vector<8x128xf32>
    %43 = arith.addf %41, %42 : vector<8x128xf32>
    %44 = vector.extract_strided_slice %16 {offsets = [0, 256], sizes = [8, 128], strides = [1, 1]} : vector<8x512xf32> to vector<8x128xf32>
    %45 = math.tanh %44 : vector<8x128xf32>
    %46 = vector.extract_strided_slice %16 {offsets = [0, 384], sizes = [8, 128], strides = [1, 1]} : vector<8x512xf32> to vector<8x128xf32>
    %cst_28 = arith.constant 5.000000e-01 : f32
    %47 = vector.broadcast %cst_28 : f32 to vector<8x128xf32>
    %48 = arith.mulf %47, %46 : vector<8x128xf32>
    %49 = math.tanh %48 : vector<8x128xf32>
    %cst_29 = arith.constant 5.000000e-01 : f32
    %50 = vector.broadcast %cst_29 : f32 to vector<8x128xf32>
    %51 = arith.mulf %50, %49 : vector<8x128xf32>
    %cst_30 = arith.constant 5.000000e-01 : f32
    %52 = vector.broadcast %cst_30 : f32 to vector<8x128xf32>
    %53 = arith.addf %51, %52 : vector<8x128xf32>
    %54 = arith.mulf %43, %27 : vector<8x128xf32>
    %55 = arith.mulf %35, %45 : vector<8x128xf32>
    %56 = arith.addf %54, %55 : vector<8x128xf32>
    %57 = math.tanh %56 : vector<8x128xf32>
    %58 = arith.mulf %53, %57 : vector<8x128xf32>
    %c1_31 = arith.constant 1 : index
    %c0_32 = arith.constant 0 : index
    %c0_33 = arith.constant 0 : index
    %59 = vector.load %arg7[%c1_31, %c0_32, %c0_33] : memref<2x8x128xf32, #tpu.memory_space<vmem>>, vector<1x8x128xf32>
    %60 = vector.shape_cast %59 : vector<1x8x128xf32> to vector<8x128xf32>
    %61 = vector.extract_strided_slice %25 {offsets = [0, 0], sizes = [8, 128], strides = [1, 1]} : vector<8x512xf32> to vector<8x128xf32>
    %cst_34 = arith.constant 5.000000e-01 : f32
    %62 = vector.broadcast %cst_34 : f32 to vector<8x128xf32>
    %63 = arith.mulf %62, %61 : vector<8x128xf32>
    %64 = math.tanh %63 : vector<8x128xf32>
    %cst_35 = arith.constant 5.000000e-01 : f32
    %65 = vector.broadcast %cst_35 : f32 to vector<8x128xf32>
    %66 = arith.mulf %65, %64 : vector<8x128xf32>
    %cst_36 = arith.constant 5.000000e-01 : f32
    %67 = vector.broadcast %cst_36 : f32 to vector<8x128xf32>
    %68 = arith.addf %66, %67 : vector<8x128xf32>
    %69 = vector.extract_strided_slice %25 {offsets = [0, 128], sizes = [8, 128], strides = [1, 1]} : vector<8x512xf32> to vector<8x128xf32>
    %cst_37 = arith.constant 5.000000e-01 : f32
    %70 = vector.broadcast %cst_37 : f32 to vector<8x128xf32>
    %71 = arith.mulf %70, %69 : vector<8x128xf32>
    %72 = math.tanh %71 : vector<8x128xf32>
    %cst_38 = arith.constant 5.000000e-01 : f32
    %73 = vector.broadcast %cst_38 : f32 to vector<8x128xf32>
    %74 = arith.mulf %73, %72 : vector<8x128xf32>
    %cst_39 = arith.constant 5.000000e-01 : f32
    %75 = vector.broadcast %cst_39 : f32 to vector<8x128xf32>
    %76 = arith.addf %74, %75 : vector<8x128xf32>
    %77 = vector.extract_strided_slice %25 {offsets = [0, 256], sizes = [8, 128], strides = [1, 1]} : vector<8x512xf32> to vector<8x128xf32>
    %78 = math.tanh %77 : vector<8x128xf32>
    %79 = vector.extract_strided_slice %25 {offsets = [0, 384], sizes = [8, 128], strides = [1, 1]} : vector<8x512xf32> to vector<8x128xf32>
    %cst_40 = arith.constant 5.000000e-01 : f32
    %80 = vector.broadcast %cst_40 : f32 to vector<8x128xf32>
    %81 = arith.mulf %80, %79 : vector<8x128xf32>
    %82 = math.tanh %81 : vector<8x128xf32>
    %cst_41 = arith.constant 5.000000e-01 : f32
    %83 = vector.broadcast %cst_41 : f32 to vector<8x128xf32>
    %84 = arith.mulf %83, %82 : vector<8x128xf32>
    %cst_42 = arith.constant 5.000000e-01 : f32
    %85 = vector.broadcast %cst_42 : f32 to vector<8x128xf32>
    %86 = arith.addf %84, %85 : vector<8x128xf32>
    %87 = arith.mulf %76, %60 : vector<8x128xf32>
    %88 = arith.mulf %68, %78 : vector<8x128xf32>
    %89 = arith.addf %87, %88 : vector<8x128xf32>
    %90 = math.tanh %89 : vector<8x128xf32>
    %91 = arith.mulf %86, %90 : vector<8x128xf32>
    %c0_43 = arith.constant 0 : index
    %c0_44 = arith.constant 0 : index
    %c0_45 = arith.constant 0 : index
    %92 = vector.load %arg6[%c0_43, %c0_44, %c0_45] : memref<2x8x128xf32, #tpu.memory_space<vmem>>, vector<1x8x128xf32>
    %93 = vector.shape_cast %92 : vector<1x8x128xf32> to vector<8x128xf32>
    %94 = vector.shape_cast %58 : vector<8x128xf32> to vector<1x8x128xf32>
    tpu.vector_store %arg6[%c0_43, %c0_44, %c0_45], %94 {strides = array<i32>} : memref<2x8x128xf32, #tpu.memory_space<vmem>>, vector<1x8x128xf32>,
    %c0_46 = arith.constant 0 : index
    %c0_47 = arith.constant 0 : index
    %c0_48 = arith.constant 0 : index
    %95 = vector.load %arg7[%c0_46, %c0_47, %c0_48] : memref<2x8x128xf32, #tpu.memory_space<vmem>>, vector<1x8x128xf32>
    %96 = vector.shape_cast %95 : vector<1x8x128xf32> to vector<8x128xf32>
    %97 = vector.shape_cast %56 : vector<8x128xf32> to vector<1x8x128xf32>
    tpu.vector_store %arg7[%c0_46, %c0_47, %c0_48], %97 {strides = array<i32>} : memref<2x8x128xf32, #tpu.memory_space<vmem>>, vector<1x8x128xf32>,
    %c1_49 = arith.constant 1 : index
    %c0_50 = arith.constant 0 : index
    %c0_51 = arith.constant 0 : index
    %98 = vector.load %arg6[%c1_49, %c0_50, %c0_51] : memref<2x8x128xf32, #tpu.memory_space<vmem>>, vector<1x8x128xf32>
    %99 = vector.shape_cast %98 : vector<1x8x128xf32> to vector<8x128xf32>
    %100 = vector.shape_cast %91 : vector<8x128xf32> to vector<1x8x128xf32>
    tpu.vector_store %arg6[%c1_49, %c0_50, %c0_51], %100 {strides = array<i32>} : memref<2x8x128xf32, #tpu.memory_space<vmem>>, vector<1x8x128xf32>,
    %c1_52 = arith.constant 1 : index
    %c0_53 = arith.constant 0 : index
    %c0_54 = arith.constant 0 : index
    %101 = vector.load %arg7[%c1_52, %c0_53, %c0_54] : memref<2x8x128xf32, #tpu.memory_space<vmem>>, vector<1x8x128xf32>
    %102 = vector.shape_cast %101 : vector<1x8x128xf32> to vector<8x128xf32>
    %103 = vector.shape_cast %89 : vector<8x128xf32> to vector<1x8x128xf32>
    tpu.vector_store %arg7[%c1_52, %c0_53, %c0_54], %103 {strides = array<i32>} : memref<2x8x128xf32, #tpu.memory_space<vmem>>, vector<1x8x128xf32>,
    %104 = arith.truncf %58 : vector<8x128xf32> to vector<8x128xbf16>
    %105 = arith.index_cast %c0_i32_5 : i32 to index
    %c0_55 = arith.constant 0 : index
    %c0_56 = arith.constant 0 : index
    %106 = vector.load %arg4[%105, %c0_55, %c0_56] : memref<8x8x128xbf16, #tpu.memory_space<vmem>>, vector<1x8x128xbf16>
    %107 = vector.shape_cast %106 : vector<1x8x128xbf16> to vector<8x128xbf16>
    %108 = vector.shape_cast %104 : vector<8x128xbf16> to vector<1x8x128xbf16>
    tpu.vector_store %arg4[%105, %c0_55, %c0_56], %108 {strides = array<i32>} : memref<8x8x128xbf16, #tpu.memory_space<vmem>>, vector<1x8x128xbf16>,
    %109 = arith.truncf %91 : vector<8x128xf32> to vector<8x128xbf16>
    %110 = arith.index_cast %7 : i32 to index
    %c0_57 = arith.constant 0 : index
    %c0_58 = arith.constant 0 : index
    %111 = vector.load %arg5[%110, %c0_57, %c0_58] : memref<8x8x128xbf16, #tpu.memory_space<vmem>>, vector<1x8x128xbf16>
    %112 = vector.shape_cast %111 : vector<1x8x128xbf16> to vector<8x128xbf16>
    %113 = vector.shape_cast %109 : vector<8x128xbf16> to vector<1x8x128xbf16>
    tpu.vector_store %arg5[%110, %c0_57, %c0_58], %113 {strides = array<i32>} : memref<8x8x128xbf16, #tpu.memory_space<vmem>>, vector<1x8x128xbf16>,
    %c1_i32 = arith.constant 1 : i32
    %c7_i32_59 = arith.constant 7 : i32
    %114 = arith.subi %c7_i32_59, %c1_i32 : i32
    %c0_60 = arith.constant 0 : index
    %115 = arith.index_cast %c1_i32 : i32 to index
    %c0_61 = arith.constant 0 : index
    %c0_62 = arith.constant 0 : index
    %116 = vector.load %arg1[%c0_60, %115, %c0_61, %c0_62] : memref<1x8x8x512xbf16, #tpu.memory_space<vmem>>, vector<1x1x8x512xbf16>
    %117 = vector.shape_cast %116 : vector<1x1x8x512xbf16> to vector<8x512xbf16>
    %118 = arith.extf %117 : vector<8x512xbf16> to vector<8x512xf32>
    %c0_63 = arith.constant 0 : index
    %c0_64 = arith.constant 0 : index
    %c0_65 = arith.constant 0 : index
    %119 = vector.load %arg6[%c0_63, %c0_64, %c0_65] : memref<2x8x128xf32, #tpu.memory_space<vmem>>, vector<1x8x128xf32>
    %120 = vector.shape_cast %119 : vector<1x8x128xf32> to vector<8x128xf32>
    %121 = arith.truncf %120 : vector<8x128xf32> to vector<8x128xbf16>
    %cst_66 = arith.constant dense<0.000000e+00> : vector<8x512xf32>
    %122 = tpu.matmul %121, %4, %cst_66 {dimension_numbers = #tpu.dot_dimension_numbers<[1], [0], [0], [1], [0, 0, 1, 1], [], []>} : vector<8x128xbf16>, vector<128x512xbf16>, vector<8x512xf32> -> vector<8x512xf32>
    %123 = arith.addf %118, %122 : vector<8x512xf32>
    %c0_67 = arith.constant 0 : index
    %124 = arith.index_cast %114 : i32 to index
    %c0_68 = arith.constant 0 : index
    %c0_69 = arith.constant 0 : index
    %125 = vector.load %arg2[%c0_67, %124, %c0_68, %c0_69] : memref<1x8x8x512xbf16, #tpu.memory_space<vmem>>, vector<1x1x8x512xbf16>
    %126 = vector.shape_cast %125 : vector<1x1x8x512xbf16> to vector<8x512xbf16>
    %127 = arith.extf %126 : vector<8x512xbf16> to vector<8x512xf32>
    %c1_70 = arith.constant 1 : index
    %c0_71 = arith.constant 0 : index
    %c0_72 = arith.constant 0 : index
    %128 = vector.load %arg6[%c1_70, %c0_71, %c0_72] : memref<2x8x128xf32, #tpu.memory_space<vmem>>, vector<1x8x128xf32>
    %129 = vector.shape_cast %128 : vector<1x8x128xf32> to vector<8x128xf32>
    %130 = arith.truncf %129 : vector<8x128xf32> to vector<8x128xbf16>
    %cst_73 = arith.constant dense<0.000000e+00> : vector<8x512xf32>
    %131 = tpu.matmul %130, %6, %cst_73 {dimension_numbers = #tpu.dot_dimension_numbers<[1], [0], [0], [1], [0, 0, 1, 1], [], []>} : vector<8x128xbf16>, vector<128x512xbf16>, vector<8x512xf32> -> vector<8x512xf32>
    %132 = arith.addf %127, %131 : vector<8x512xf32>
    %c0_74 = arith.constant 0 : index
    %c0_75 = arith.constant 0 : index
    %c0_76 = arith.constant 0 : index
    %133 = vector.load %arg7[%c0_74, %c0_75, %c0_76] : memref<2x8x128xf32, #tpu.memory_space<vmem>>, vector<1x8x128xf32>
    %134 = vector.shape_cast %133 : vector<1x8x128xf32> to vector<8x128xf32>
    %135 = vector.extract_strided_slice %123 {offsets = [0, 0], sizes = [8, 128], strides = [1, 1]} : vector<8x512xf32> to vector<8x128xf32>
    %cst_77 = arith.constant 5.000000e-01 : f32
    %136 = vector.broadcast %cst_77 : f32 to vector<8x128xf32>
    %137 = arith.mulf %136, %135 : vector<8x128xf32>
    %138 = math.tanh %137 : vector<8x128xf32>
    %cst_78 = arith.constant 5.000000e-01 : f32
    %139 = vector.broadcast %cst_78 : f32 to vector<8x128xf32>
    %140 = arith.mulf %139, %138 : vector<8x128xf32>
    %cst_79 = arith.constant 5.000000e-01 : f32
    %141 = vector.broadcast %cst_79 : f32 to vector<8x128xf32>
    %142 = arith.addf %140, %141 : vector<8x128xf32>
    %143 = vector.extract_strided_slice %123 {offsets = [0, 128], sizes = [8, 128], strides = [1, 1]} : vector<8x512xf32> to vector<8x128xf32>
    %cst_80 = arith.constant 5.000000e-01 : f32
    %144 = vector.broadcast %cst_80 : f32 to vector<8x128xf32>
    %145 = arith.mulf %144, %143 : vector<8x128xf32>
    %146 = math.tanh %145 : vector<8x128xf32>
    %cst_81 = arith.constant 5.000000e-01 : f32
    %147 = vector.broadcast %cst_81 : f32 to vector<8x128xf32>
    %148 = arith.mulf %147, %146 : vector<8x128xf32>
    %cst_82 = arith.constant 5.000000e-01 : f32
    %149 = vector.broadcast %cst_82 : f32 to vector<8x128xf32>
    %150 = arith.addf %148, %149 : vector<8x128xf32>
    %151 = vector.extract_strided_slice %123 {offsets = [0, 256], sizes = [8, 128], strides = [1, 1]} : vector<8x512xf32> to vector<8x128xf32>
    %152 = math.tanh %151 : vector<8x128xf32>
    %153 = vector.extract_strided_slice %123 {offsets = [0, 384], sizes = [8, 128], strides = [1, 1]} : vector<8x512xf32> to vector<8x128xf32>
    %cst_83 = arith.constant 5.000000e-01 : f32
    %154 = vector.broadcast %cst_83 : f32 to vector<8x128xf32>
    %155 = arith.mulf %154, %153 : vector<8x128xf32>
    %156 = math.tanh %155 : vector<8x128xf32>
    %cst_84 = arith.constant 5.000000e-01 : f32
    %157 = vector.broadcast %cst_84 : f32 to vector<8x128xf32>
    %158 = arith.mulf %157, %156 : vector<8x128xf32>
    %cst_85 = arith.constant 5.000000e-01 : f32
    %159 = vector.broadcast %cst_85 : f32 to vector<8x128xf32>
    %160 = arith.addf %158, %159 : vector<8x128xf32>
    %161 = arith.mulf %150, %134 : vector<8x128xf32>
    %162 = arith.mulf %142, %152 : vector<8x128xf32>
    %163 = arith.addf %161, %162 : vector<8x128xf32>
    %164 = math.tanh %163 : vector<8x128xf32>
    %165 = arith.mulf %160, %164 : vector<8x128xf32>
    %c1_86 = arith.constant 1 : index
    %c0_87 = arith.constant 0 : index
    %c0_88 = arith.constant 0 : index
    %166 = vector.load %arg7[%c1_86, %c0_87, %c0_88] : memref<2x8x128xf32, #tpu.memory_space<vmem>>, vector<1x8x128xf32>
    %167 = vector.shape_cast %166 : vector<1x8x128xf32> to vector<8x128xf32>
    %168 = vector.extract_strided_slice %132 {offsets = [0, 0], sizes = [8, 128], strides = [1, 1]} : vector<8x512xf32> to vector<8x128xf32>
    %cst_89 = arith.constant 5.000000e-01 : f32
    %169 = vector.broadcast %cst_89 : f32 to vector<8x128xf32>
    %170 = arith.mulf %169, %168 : vector<8x128xf32>
    %171 = math.tanh %170 : vector<8x128xf32>
    %cst_90 = arith.constant 5.000000e-01 : f32
    %172 = vector.broadcast %cst_90 : f32 to vector<8x128xf32>
    %173 = arith.mulf %172, %171 : vector<8x128xf32>
    %cst_91 = arith.constant 5.000000e-01 : f32
    %174 = vector.broadcast %cst_91 : f32 to vector<8x128xf32>
    %175 = arith.addf %173, %174 : vector<8x128xf32>
    %176 = vector.extract_strided_slice %132 {offsets = [0, 128], sizes = [8, 128], strides = [1, 1]} : vector<8x512xf32> to vector<8x128xf32>
    %cst_92 = arith.constant 5.000000e-01 : f32
    %177 = vector.broadcast %cst_92 : f32 to vector<8x128xf32>
    %178 = arith.mulf %177, %176 : vector<8x128xf32>
    %179 = math.tanh %178 : vector<8x128xf32>
    %cst_93 = arith.constant 5.000000e-01 : f32
    %180 = vector.broadcast %cst_93 : f32 to vector<8x128xf32>
    %181 = arith.mulf %180, %179 : vector<8x128xf32>
    %cst_94 = arith.constant 5.000000e-01 : f32
    %182 = vector.broadcast %cst_94 : f32 to vector<8x128xf32>
    %183 = arith.addf %181, %182 : vector<8x128xf32>
    %184 = vector.extract_strided_slice %132 {offsets = [0, 256], sizes = [8, 128], strides = [1, 1]} : vector<8x512xf32> to vector<8x128xf32>
    %185 = math.tanh %184 : vector<8x128xf32>
    %186 = vector.extract_strided_slice %132 {offsets = [0, 384], sizes = [8, 128], strides = [1, 1]} : vector<8x512xf32> to vector<8x128xf32>
    %cst_95 = arith.constant 5.000000e-01 : f32
    %187 = vector.broadcast %cst_95 : f32 to vector<8x128xf32>
    %188 = arith.mulf %187, %186 : vector<8x128xf32>
    %189 = math.tanh %188 : vector<8x128xf32>
    %cst_96 = arith.constant 5.000000e-01 : f32
    %190 = vector.broadcast %cst_96 : f32 to vector<8x128xf32>
    %191 = arith.mulf %190, %189 : vector<8x128xf32>
    %cst_97 = arith.constant 5.000000e-01 : f32
    %192 = vector.broadcast %cst_97 : f32 to vector<8x128xf32>
    %193 = arith.addf %191, %192 : vector<8x128xf32>
    %194 = arith.mulf %183, %167 : vector<8x128xf32>
    %195 = arith.mulf %175, %185 : vector<8x128xf32>
    %196 = arith.addf %194, %195 : vector<8x128xf32>
    %197 = math.tanh %196 : vector<8x128xf32>
    %198 = arith.mulf %193, %197 : vector<8x128xf32>
    %c0_98 = arith.constant 0 : index
    %c0_99 = arith.constant 0 : index
    %c0_100 = arith.constant 0 : index
    %199 = vector.load %arg6[%c0_98, %c0_99, %c0_100] : memref<2x8x128xf32, #tpu.memory_space<vmem>>, vector<1x8x128xf32>
    %200 = vector.shape_cast %199 : vector<1x8x128xf32> to vector<8x128xf32>
    %201 = vector.shape_cast %165 : vector<8x128xf32> to vector<1x8x128xf32>
    tpu.vector_store %arg6[%c0_98, %c0_99, %c0_100], %201 {strides = array<i32>} : memref<2x8x128xf32, #tpu.memory_space<vmem>>, vector<1x8x128xf32>,
    %c0_101 = arith.constant 0 : index
    %c0_102 = arith.constant 0 : index
    %c0_103 = arith.constant 0 : index
    %202 = vector.load %arg7[%c0_101, %c0_102, %c0_103] : memref<2x8x128xf32, #tpu.memory_space<vmem>>, vector<1x8x128xf32>
    %203 = vector.shape_cast %202 : vector<1x8x128xf32> to vector<8x128xf32>
    %204 = vector.shape_cast %163 : vector<8x128xf32> to vector<1x8x128xf32>
    tpu.vector_store %arg7[%c0_101, %c0_102, %c0_103], %204 {strides = array<i32>} : memref<2x8x128xf32, #tpu.memory_space<vmem>>, vector<1x8x128xf32>,
    %c1_104 = arith.constant 1 : index
    %c0_105 = arith.constant 0 : index
    %c0_106 = arith.constant 0 : index
    %205 = vector.load %arg6[%c1_104, %c0_105, %c0_106] : memref<2x8x128xf32, #tpu.memory_space<vmem>>, vector<1x8x128xf32>
    %206 = vector.shape_cast %205 : vector<1x8x128xf32> to vector<8x128xf32>
    %207 = vector.shape_cast %198 : vector<8x128xf32> to vector<1x8x128xf32>
    tpu.vector_store %arg6[%c1_104, %c0_105, %c0_106], %207 {strides = array<i32>} : memref<2x8x128xf32, #tpu.memory_space<vmem>>, vector<1x8x128xf32>,
    %c1_107 = arith.constant 1 : index
    %c0_108 = arith.constant 0 : index
    %c0_109 = arith.constant 0 : index
    %208 = vector.load %arg7[%c1_107, %c0_108, %c0_109] : memref<2x8x128xf32, #tpu.memory_space<vmem>>, vector<1x8x128xf32>
    %209 = vector.shape_cast %208 : vector<1x8x128xf32> to vector<8x128xf32>
    %210 = vector.shape_cast %196 : vector<8x128xf32> to vector<1x8x128xf32>
    tpu.vector_store %arg7[%c1_107, %c0_108, %c0_109], %210 {strides = array<i32>} : memref<2x8x128xf32, #tpu.memory_space<vmem>>, vector<1x8x128xf32>,
    %211 = arith.truncf %165 : vector<8x128xf32> to vector<8x128xbf16>
    %212 = arith.index_cast %c1_i32 : i32 to index
    %c0_110 = arith.constant 0 : index
    %c0_111 = arith.constant 0 : index
    %213 = vector.load %arg4[%212, %c0_110, %c0_111] : memref<8x8x128xbf16, #tpu.memory_space<vmem>>, vector<1x8x128xbf16>
    %214 = vector.shape_cast %213 : vector<1x8x128xbf16> to vector<8x128xbf16>
    %215 = vector.shape_cast %211 : vector<8x128xbf16> to vector<1x8x128xbf16>
    tpu.vector_store %arg4[%212, %c0_110, %c0_111], %215 {strides = array<i32>} : memref<8x8x128xbf16, #tpu.memory_space<vmem>>, vector<1x8x128xbf16>,
    %216 = arith.truncf %198 : vector<8x128xf32> to vector<8x128xbf16>
    %217 = arith.index_cast %114 : i32 to index
    %c0_112 = arith.constant 0 : index
    %c0_113 = arith.constant 0 : index
    %218 = vector.load %arg5[%217, %c0_112, %c0_113] : memref<8x8x128xbf16, #tpu.memory_space<vmem>>, vector<1x8x128xbf16>
    %219 = vector.shape_cast %218 : vector<1x8x128xbf16> to vector<8x128xbf16>
    %220 = vector.shape_cast %216 : vector<8x128xbf16> to vector<1x8x128xbf16>
    tpu.vector_store %arg5[%217, %c0_112, %c0_113], %220 {strides = array<i32>} : memref<8x8x128xbf16, #tpu.memory_space<vmem>>, vector<1x8x128xbf16>,
    %c2_i32 = arith.constant 2 : i32
    %c7_i32_114 = arith.constant 7 : i32
    %221 = arith.subi %c7_i32_114, %c2_i32 : i32
    %c0_115 = arith.constant 0 : index
    %222 = arith.index_cast %c2_i32 : i32 to index
    %c0_116 = arith.constant 0 : index
    %c0_117 = arith.constant 0 : index
    %223 = vector.load %arg1[%c0_115, %222, %c0_116, %c0_117] : memref<1x8x8x512xbf16, #tpu.memory_space<vmem>>, vector<1x1x8x512xbf16>
    %224 = vector.shape_cast %223 : vector<1x1x8x512xbf16> to vector<8x512xbf16>
    %225 = arith.extf %224 : vector<8x512xbf16> to vector<8x512xf32>
    %c0_118 = arith.constant 0 : index
    %c0_119 = arith.constant 0 : index
    %c0_120 = arith.constant 0 : index
    %226 = vector.load %arg6[%c0_118, %c0_119, %c0_120] : memref<2x8x128xf32, #tpu.memory_space<vmem>>, vector<1x8x128xf32>
    %227 = vector.shape_cast %226 : vector<1x8x128xf32> to vector<8x128xf32>
    %228 = arith.truncf %227 : vector<8x128xf32> to vector<8x128xbf16>
    %cst_121 = arith.constant dense<0.000000e+00> : vector<8x512xf32>
    %229 = tpu.matmul %228, %4, %cst_121 {dimension_numbers = #tpu.dot_dimension_numbers<[1], [0], [0], [1], [0, 0, 1, 1], [], []>} : vector<8x128xbf16>, vector<128x512xbf16>, vector<8x512xf32> -> vector<8x512xf32>
    %230 = arith.addf %225, %229 : vector<8x512xf32>
    %c0_122 = arith.constant 0 : index
    %231 = arith.index_cast %221 : i32 to index
    %c0_123 = arith.constant 0 : index
    %c0_124 = arith.constant 0 : index
    %232 = vector.load %arg2[%c0_122, %231, %c0_123, %c0_124] : memref<1x8x8x512xbf16, #tpu.memory_space<vmem>>, vector<1x1x8x512xbf16>
    %233 = vector.shape_cast %232 : vector<1x1x8x512xbf16> to vector<8x512xbf16>
    %234 = arith.extf %233 : vector<8x512xbf16> to vector<8x512xf32>
    %c1_125 = arith.constant 1 : index
    %c0_126 = arith.constant 0 : index
    %c0_127 = arith.constant 0 : index
    %235 = vector.load %arg6[%c1_125, %c0_126, %c0_127] : memref<2x8x128xf32, #tpu.memory_space<vmem>>, vector<1x8x128xf32>
    %236 = vector.shape_cast %235 : vector<1x8x128xf32> to vector<8x128xf32>
    %237 = arith.truncf %236 : vector<8x128xf32> to vector<8x128xbf16>
    %cst_128 = arith.constant dense<0.000000e+00> : vector<8x512xf32>
    %238 = tpu.matmul %237, %6, %cst_128 {dimension_numbers = #tpu.dot_dimension_numbers<[1], [0], [0], [1], [0, 0, 1, 1], [], []>} : vector<8x128xbf16>, vector<128x512xbf16>, vector<8x512xf32> -> vector<8x512xf32>
    %239 = arith.addf %234, %238 : vector<8x512xf32>
    %c0_129 = arith.constant 0 : index
    %c0_130 = arith.constant 0 : index
    %c0_131 = arith.constant 0 : index
    %240 = vector.load %arg7[%c0_129, %c0_130, %c0_131] : memref<2x8x128xf32, #tpu.memory_space<vmem>>, vector<1x8x128xf32>
    %241 = vector.shape_cast %240 : vector<1x8x128xf32> to vector<8x128xf32>
    %242 = vector.extract_strided_slice %230 {offsets = [0, 0], sizes = [8, 128], strides = [1, 1]} : vector<8x512xf32> to vector<8x128xf32>
    %cst_132 = arith.constant 5.000000e-01 : f32
    %243 = vector.broadcast %cst_132 : f32 to vector<8x128xf32>
    %244 = arith.mulf %243, %242 : vector<8x128xf32>
    %245 = math.tanh %244 : vector<8x128xf32>
    %cst_133 = arith.constant 5.000000e-01 : f32
    %246 = vector.broadcast %cst_133 : f32 to vector<8x128xf32>
    %247 = arith.mulf %246, %245 : vector<8x128xf32>
    %cst_134 = arith.constant 5.000000e-01 : f32
    %248 = vector.broadcast %cst_134 : f32 to vector<8x128xf32>
    %249 = arith.addf %247, %248 : vector<8x128xf32>
    %250 = vector.extract_strided_slice %230 {offsets = [0, 128], sizes = [8, 128], strides = [1, 1]} : vector<8x512xf32> to vector<8x128xf32>
    %cst_135 = arith.constant 5.000000e-01 : f32
    %251 = vector.broadcast %cst_135 : f32 to vector<8x128xf32>
    %252 = arith.mulf %251, %250 : vector<8x128xf32>
    %253 = math.tanh %252 : vector<8x128xf32>
    %cst_136 = arith.constant 5.000000e-01 : f32
    %254 = vector.broadcast %cst_136 : f32 to vector<8x128xf32>
    %255 = arith.mulf %254, %253 : vector<8x128xf32>
    %cst_137 = arith.constant 5.000000e-01 : f32
    %256 = vector.broadcast %cst_137 : f32 to vector<8x128xf32>
    %257 = arith.addf %255, %256 : vector<8x128xf32>
    %258 = vector.extract_strided_slice %230 {offsets = [0, 256], sizes = [8, 128], strides = [1, 1]} : vector<8x512xf32> to vector<8x128xf32>
    %259 = math.tanh %258 : vector<8x128xf32>
    %260 = vector.extract_strided_slice %230 {offsets = [0, 384], sizes = [8, 128], strides = [1, 1]} : vector<8x512xf32> to vector<8x128xf32>
    %cst_138 = arith.constant 5.000000e-01 : f32
    %261 = vector.broadcast %cst_138 : f32 to vector<8x128xf32>
    %262 = arith.mulf %261, %260 : vector<8x128xf32>
    %263 = math.tanh %262 : vector<8x128xf32>
    %cst_139 = arith.constant 5.000000e-01 : f32
    %264 = vector.broadcast %cst_139 : f32 to vector<8x128xf32>
    %265 = arith.mulf %264, %263 : vector<8x128xf32>
    %cst_140 = arith.constant 5.000000e-01 : f32
    %266 = vector.broadcast %cst_140 : f32 to vector<8x128xf32>
    %267 = arith.addf %265, %266 : vector<8x128xf32>
    %268 = arith.mulf %257, %241 : vector<8x128xf32>
    %269 = arith.mulf %249, %259 : vector<8x128xf32>
    %270 = arith.addf %268, %269 : vector<8x128xf32>
    %271 = math.tanh %270 : vector<8x128xf32>
    %272 = arith.mulf %267, %271 : vector<8x128xf32>
    %c1_141 = arith.constant 1 : index
    %c0_142 = arith.constant 0 : index
    %c0_143 = arith.constant 0 : index
    %273 = vector.load %arg7[%c1_141, %c0_142, %c0_143] : memref<2x8x128xf32, #tpu.memory_space<vmem>>, vector<1x8x128xf32>
    %274 = vector.shape_cast %273 : vector<1x8x128xf32> to vector<8x128xf32>
    %275 = vector.extract_strided_slice %239 {offsets = [0, 0], sizes = [8, 128], strides = [1, 1]} : vector<8x512xf32> to vector<8x128xf32>
    %cst_144 = arith.constant 5.000000e-01 : f32
    %276 = vector.broadcast %cst_144 : f32 to vector<8x128xf32>
    %277 = arith.mulf %276, %275 : vector<8x128xf32>
    %278 = math.tanh %277 : vector<8x128xf32>
    %cst_145 = arith.constant 5.000000e-01 : f32
    %279 = vector.broadcast %cst_145 : f32 to vector<8x128xf32>
    %280 = arith.mulf %279, %278 : vector<8x128xf32>
    %cst_146 = arith.constant 5.000000e-01 : f32
    %281 = vector.broadcast %cst_146 : f32 to vector<8x128xf32>
    %282 = arith.addf %280, %281 : vector<8x128xf32>
    %283 = vector.extract_strided_slice %239 {offsets = [0, 128], sizes = [8, 128], strides = [1, 1]} : vector<8x512xf32> to vector<8x128xf32>
    %cst_147 = arith.constant 5.000000e-01 : f32
    %284 = vector.broadcast %cst_147 : f32 to vector<8x128xf32>
    %285 = arith.mulf %284, %283 : vector<8x128xf32>
    %286 = math.tanh %285 : vector<8x128xf32>
    %cst_148 = arith.constant 5.000000e-01 : f32
    %287 = vector.broadcast %cst_148 : f32 to vector<8x128xf32>
    %288 = arith.mulf %287, %286 : vector<8x128xf32>
    %cst_149 = arith.constant 5.000000e-01 : f32
    %289 = vector.broadcast %cst_149 : f32 to vector<8x128xf32>
    %290 = arith.addf %288, %289 : vector<8x128xf32>
    %291 = vector.extract_strided_slice %239 {offsets = [0, 256], sizes = [8, 128], strides = [1, 1]} : vector<8x512xf32> to vector<8x128xf32>
    %292 = math.tanh %291 : vector<8x128xf32>
    %293 = vector.extract_strided_slice %239 {offsets = [0, 384], sizes = [8, 128], strides = [1, 1]} : vector<8x512xf32> to vector<8x128xf32>
    %cst_150 = arith.constant 5.000000e-01 : f32
    %294 = vector.broadcast %cst_150 : f32 to vector<8x128xf32>
    %295 = arith.mulf %294, %293 : vector<8x128xf32>
    %296 = math.tanh %295 : vector<8x128xf32>
    %cst_151 = arith.constant 5.000000e-01 : f32
    %297 = vector.broadcast %cst_151 : f32 to vector<8x128xf32>
    %298 = arith.mulf %297, %296 : vector<8x128xf32>
    %cst_152 = arith.constant 5.000000e-01 : f32
    %299 = vector.broadcast %cst_152 : f32 to vector<8x128xf32>
    %300 = arith.addf %298, %299 : vector<8x128xf32>
    %301 = arith.mulf %290, %274 : vector<8x128xf32>
    %302 = arith.mulf %282, %292 : vector<8x128xf32>
    %303 = arith.addf %301, %302 : vector<8x128xf32>
    %304 = math.tanh %303 : vector<8x128xf32>
    %305 = arith.mulf %300, %304 : vector<8x128xf32>
    %c0_153 = arith.constant 0 : index
    %c0_154 = arith.constant 0 : index
    %c0_155 = arith.constant 0 : index
    %306 = vector.load %arg6[%c0_153, %c0_154, %c0_155] : memref<2x8x128xf32, #tpu.memory_space<vmem>>, vector<1x8x128xf32>
    %307 = vector.shape_cast %306 : vector<1x8x128xf32> to vector<8x128xf32>
    %308 = vector.shape_cast %272 : vector<8x128xf32> to vector<1x8x128xf32>
    tpu.vector_store %arg6[%c0_153, %c0_154, %c0_155], %308 {strides = array<i32>} : memref<2x8x128xf32, #tpu.memory_space<vmem>>, vector<1x8x128xf32>,
    %c0_156 = arith.constant 0 : index
    %c0_157 = arith.constant 0 : index
    %c0_158 = arith.constant 0 : index
    %309 = vector.load %arg7[%c0_156, %c0_157, %c0_158] : memref<2x8x128xf32, #tpu.memory_space<vmem>>, vector<1x8x128xf32>
    %310 = vector.shape_cast %309 : vector<1x8x128xf32> to vector<8x128xf32>
    %311 = vector.shape_cast %270 : vector<8x128xf32> to vector<1x8x128xf32>
    tpu.vector_store %arg7[%c0_156, %c0_157, %c0_158], %311 {strides = array<i32>} : memref<2x8x128xf32, #tpu.memory_space<vmem>>, vector<1x8x128xf32>,
    %c1_159 = arith.constant 1 : index
    %c0_160 = arith.constant 0 : index
    %c0_161 = arith.constant 0 : index
    %312 = vector.load %arg6[%c1_159, %c0_160, %c0_161] : memref<2x8x128xf32, #tpu.memory_space<vmem>>, vector<1x8x128xf32>
    %313 = vector.shape_cast %312 : vector<1x8x128xf32> to vector<8x128xf32>
    %314 = vector.shape_cast %305 : vector<8x128xf32> to vector<1x8x128xf32>
    tpu.vector_store %arg6[%c1_159, %c0_160, %c0_161], %314 {strides = array<i32>} : memref<2x8x128xf32, #tpu.memory_space<vmem>>, vector<1x8x128xf32>,
    %c1_162 = arith.constant 1 : index
    %c0_163 = arith.constant 0 : index
    %c0_164 = arith.constant 0 : index
    %315 = vector.load %arg7[%c1_162, %c0_163, %c0_164] : memref<2x8x128xf32, #tpu.memory_space<vmem>>, vector<1x8x128xf32>
    %316 = vector.shape_cast %315 : vector<1x8x128xf32> to vector<8x128xf32>
    %317 = vector.shape_cast %303 : vector<8x128xf32> to vector<1x8x128xf32>
    tpu.vector_store %arg7[%c1_162, %c0_163, %c0_164], %317 {strides = array<i32>} : memref<2x8x128xf32, #tpu.memory_space<vmem>>, vector<1x8x128xf32>,
    %318 = arith.truncf %272 : vector<8x128xf32> to vector<8x128xbf16>
    %319 = arith.index_cast %c2_i32 : i32 to index
    %c0_165 = arith.constant 0 : index
    %c0_166 = arith.constant 0 : index
    %320 = vector.load %arg4[%319, %c0_165, %c0_166] : memref<8x8x128xbf16, #tpu.memory_space<vmem>>, vector<1x8x128xbf16>
    %321 = vector.shape_cast %320 : vector<1x8x128xbf16> to vector<8x128xbf16>
    %322 = vector.shape_cast %318 : vector<8x128xbf16> to vector<1x8x128xbf16>
    tpu.vector_store %arg4[%319, %c0_165, %c0_166], %322 {strides = array<i32>} : memref<8x8x128xbf16, #tpu.memory_space<vmem>>, vector<1x8x128xbf16>,
    %323 = arith.truncf %305 : vector<8x128xf32> to vector<8x128xbf16>
    %324 = arith.index_cast %221 : i32 to index
    %c0_167 = arith.constant 0 : index
    %c0_168 = arith.constant 0 : index
    %325 = vector.load %arg5[%324, %c0_167, %c0_168] : memref<8x8x128xbf16, #tpu.memory_space<vmem>>, vector<1x8x128xbf16>
    %326 = vector.shape_cast %325 : vector<1x8x128xbf16> to vector<8x128xbf16>
    %327 = vector.shape_cast %323 : vector<8x128xbf16> to vector<1x8x128xbf16>
    tpu.vector_store %arg5[%324, %c0_167, %c0_168], %327 {strides = array<i32>} : memref<8x8x128xbf16, #tpu.memory_space<vmem>>, vector<1x8x128xbf16>,
    %c3_i32 = arith.constant 3 : i32
    %c7_i32_169 = arith.constant 7 : i32
    %328 = arith.subi %c7_i32_169, %c3_i32 : i32
    %c0_170 = arith.constant 0 : index
    %329 = arith.index_cast %c3_i32 : i32 to index
    %c0_171 = arith.constant 0 : index
    %c0_172 = arith.constant 0 : index
    %330 = vector.load %arg1[%c0_170, %329, %c0_171, %c0_172] : memref<1x8x8x512xbf16, #tpu.memory_space<vmem>>, vector<1x1x8x512xbf16>
    %331 = vector.shape_cast %330 : vector<1x1x8x512xbf16> to vector<8x512xbf16>
    %332 = arith.extf %331 : vector<8x512xbf16> to vector<8x512xf32>
    %c0_173 = arith.constant 0 : index
    %c0_174 = arith.constant 0 : index
    %c0_175 = arith.constant 0 : index
    %333 = vector.load %arg6[%c0_173, %c0_174, %c0_175] : memref<2x8x128xf32, #tpu.memory_space<vmem>>, vector<1x8x128xf32>
    %334 = vector.shape_cast %333 : vector<1x8x128xf32> to vector<8x128xf32>
    %335 = arith.truncf %334 : vector<8x128xf32> to vector<8x128xbf16>
    %cst_176 = arith.constant dense<0.000000e+00> : vector<8x512xf32>
    %336 = tpu.matmul %335, %4, %cst_176 {dimension_numbers = #tpu.dot_dimension_numbers<[1], [0], [0], [1], [0, 0, 1, 1], [], []>} : vector<8x128xbf16>, vector<128x512xbf16>, vector<8x512xf32> -> vector<8x512xf32>
    %337 = arith.addf %332, %336 : vector<8x512xf32>
    %c0_177 = arith.constant 0 : index
    %338 = arith.index_cast %328 : i32 to index
    %c0_178 = arith.constant 0 : index
    %c0_179 = arith.constant 0 : index
    %339 = vector.load %arg2[%c0_177, %338, %c0_178, %c0_179] : memref<1x8x8x512xbf16, #tpu.memory_space<vmem>>, vector<1x1x8x512xbf16>
    %340 = vector.shape_cast %339 : vector<1x1x8x512xbf16> to vector<8x512xbf16>
    %341 = arith.extf %340 : vector<8x512xbf16> to vector<8x512xf32>
    %c1_180 = arith.constant 1 : index
    %c0_181 = arith.constant 0 : index
    %c0_182 = arith.constant 0 : index
    %342 = vector.load %arg6[%c1_180, %c0_181, %c0_182] : memref<2x8x128xf32, #tpu.memory_space<vmem>>, vector<1x8x128xf32>
    %343 = vector.shape_cast %342 : vector<1x8x128xf32> to vector<8x128xf32>
    %344 = arith.truncf %343 : vector<8x128xf32> to vector<8x128xbf16>
    %cst_183 = arith.constant dense<0.000000e+00> : vector<8x512xf32>
    %345 = tpu.matmul %344, %6, %cst_183 {dimension_numbers = #tpu.dot_dimension_numbers<[1], [0], [0], [1], [0, 0, 1, 1], [], []>} : vector<8x128xbf16>, vector<128x512xbf16>, vector<8x512xf32> -> vector<8x512xf32>
    %346 = arith.addf %341, %345 : vector<8x512xf32>
    %c0_184 = arith.constant 0 : index
    %c0_185 = arith.constant 0 : index
    %c0_186 = arith.constant 0 : index
    %347 = vector.load %arg7[%c0_184, %c0_185, %c0_186] : memref<2x8x128xf32, #tpu.memory_space<vmem>>, vector<1x8x128xf32>
    %348 = vector.shape_cast %347 : vector<1x8x128xf32> to vector<8x128xf32>
    %349 = vector.extract_strided_slice %337 {offsets = [0, 0], sizes = [8, 128], strides = [1, 1]} : vector<8x512xf32> to vector<8x128xf32>
    %cst_187 = arith.constant 5.000000e-01 : f32
    %350 = vector.broadcast %cst_187 : f32 to vector<8x128xf32>
    %351 = arith.mulf %350, %349 : vector<8x128xf32>
    %352 = math.tanh %351 : vector<8x128xf32>
    %cst_188 = arith.constant 5.000000e-01 : f32
    %353 = vector.broadcast %cst_188 : f32 to vector<8x128xf32>
    %354 = arith.mulf %353, %352 : vector<8x128xf32>
    %cst_189 = arith.constant 5.000000e-01 : f32
    %355 = vector.broadcast %cst_189 : f32 to vector<8x128xf32>
    %356 = arith.addf %354, %355 : vector<8x128xf32>
    %357 = vector.extract_strided_slice %337 {offsets = [0, 128], sizes = [8, 128], strides = [1, 1]} : vector<8x512xf32> to vector<8x128xf32>
    %cst_190 = arith.constant 5.000000e-01 : f32
    %358 = vector.broadcast %cst_190 : f32 to vector<8x128xf32>
    %359 = arith.mulf %358, %357 : vector<8x128xf32>
    %360 = math.tanh %359 : vector<8x128xf32>
    %cst_191 = arith.constant 5.000000e-01 : f32
    %361 = vector.broadcast %cst_191 : f32 to vector<8x128xf32>
    %362 = arith.mulf %361, %360 : vector<8x128xf32>
    %cst_192 = arith.constant 5.000000e-01 : f32
    %363 = vector.broadcast %cst_192 : f32 to vector<8x128xf32>
    %364 = arith.addf %362, %363 : vector<8x128xf32>
    %365 = vector.extract_strided_slice %337 {offsets = [0, 256], sizes = [8, 128], strides = [1, 1]} : vector<8x512xf32> to vector<8x128xf32>
    %366 = math.tanh %365 : vector<8x128xf32>
    %367 = vector.extract_strided_slice %337 {offsets = [0, 384], sizes = [8, 128], strides = [1, 1]} : vector<8x512xf32> to vector<8x128xf32>
    %cst_193 = arith.constant 5.000000e-01 : f32
    %368 = vector.broadcast %cst_193 : f32 to vector<8x128xf32>
    %369 = arith.mulf %368, %367 : vector<8x128xf32>
    %370 = math.tanh %369 : vector<8x128xf32>
    %cst_194 = arith.constant 5.000000e-01 : f32
    %371 = vector.broadcast %cst_194 : f32 to vector<8x128xf32>
    %372 = arith.mulf %371, %370 : vector<8x128xf32>
    %cst_195 = arith.constant 5.000000e-01 : f32
    %373 = vector.broadcast %cst_195 : f32 to vector<8x128xf32>
    %374 = arith.addf %372, %373 : vector<8x128xf32>
    %375 = arith.mulf %364, %348 : vector<8x128xf32>
    %376 = arith.mulf %356, %366 : vector<8x128xf32>
    %377 = arith.addf %375, %376 : vector<8x128xf32>
    %378 = math.tanh %377 : vector<8x128xf32>
    %379 = arith.mulf %374, %378 : vector<8x128xf32>
    %c1_196 = arith.constant 1 : index
    %c0_197 = arith.constant 0 : index
    %c0_198 = arith.constant 0 : index
    %380 = vector.load %arg7[%c1_196, %c0_197, %c0_198] : memref<2x8x128xf32, #tpu.memory_space<vmem>>, vector<1x8x128xf32>
    %381 = vector.shape_cast %380 : vector<1x8x128xf32> to vector<8x128xf32>
    %382 = vector.extract_strided_slice %346 {offsets = [0, 0], sizes = [8, 128], strides = [1, 1]} : vector<8x512xf32> to vector<8x128xf32>
    %cst_199 = arith.constant 5.000000e-01 : f32
    %383 = vector.broadcast %cst_199 : f32 to vector<8x128xf32>
    %384 = arith.mulf %383, %382 : vector<8x128xf32>
    %385 = math.tanh %384 : vector<8x128xf32>
    %cst_200 = arith.constant 5.000000e-01 : f32
    %386 = vector.broadcast %cst_200 : f32 to vector<8x128xf32>
    %387 = arith.mulf %386, %385 : vector<8x128xf32>
    %cst_201 = arith.constant 5.000000e-01 : f32
    %388 = vector.broadcast %cst_201 : f32 to vector<8x128xf32>
    %389 = arith.addf %387, %388 : vector<8x128xf32>
    %390 = vector.extract_strided_slice %346 {offsets = [0, 128], sizes = [8, 128], strides = [1, 1]} : vector<8x512xf32> to vector<8x128xf32>
    %cst_202 = arith.constant 5.000000e-01 : f32
    %391 = vector.broadcast %cst_202 : f32 to vector<8x128xf32>
    %392 = arith.mulf %391, %390 : vector<8x128xf32>
    %393 = math.tanh %392 : vector<8x128xf32>
    %cst_203 = arith.constant 5.000000e-01 : f32
    %394 = vector.broadcast %cst_203 : f32 to vector<8x128xf32>
    %395 = arith.mulf %394, %393 : vector<8x128xf32>
    %cst_204 = arith.constant 5.000000e-01 : f32
    %396 = vector.broadcast %cst_204 : f32 to vector<8x128xf32>
    %397 = arith.addf %395, %396 : vector<8x128xf32>
    %398 = vector.extract_strided_slice %346 {offsets = [0, 256], sizes = [8, 128], strides = [1, 1]} : vector<8x512xf32> to vector<8x128xf32>
    %399 = math.tanh %398 : vector<8x128xf32>
    %400 = vector.extract_strided_slice %346 {offsets = [0, 384], sizes = [8, 128], strides = [1, 1]} : vector<8x512xf32> to vector<8x128xf32>
    %cst_205 = arith.constant 5.000000e-01 : f32
    %401 = vector.broadcast %cst_205 : f32 to vector<8x128xf32>
    %402 = arith.mulf %401, %400 : vector<8x128xf32>
    %403 = math.tanh %402 : vector<8x128xf32>
    %cst_206 = arith.constant 5.000000e-01 : f32
    %404 = vector.broadcast %cst_206 : f32 to vector<8x128xf32>
    %405 = arith.mulf %404, %403 : vector<8x128xf32>
    %cst_207 = arith.constant 5.000000e-01 : f32
    %406 = vector.broadcast %cst_207 : f32 to vector<8x128xf32>
    %407 = arith.addf %405, %406 : vector<8x128xf32>
    %408 = arith.mulf %397, %381 : vector<8x128xf32>
    %409 = arith.mulf %389, %399 : vector<8x128xf32>
    %410 = arith.addf %408, %409 : vector<8x128xf32>
    %411 = math.tanh %410 : vector<8x128xf32>
    %412 = arith.mulf %407, %411 : vector<8x128xf32>
    %c0_208 = arith.constant 0 : index
    %c0_209 = arith.constant 0 : index
    %c0_210 = arith.constant 0 : index
    %413 = vector.load %arg6[%c0_208, %c0_209, %c0_210] : memref<2x8x128xf32, #tpu.memory_space<vmem>>, vector<1x8x128xf32>
    %414 = vector.shape_cast %413 : vector<1x8x128xf32> to vector<8x128xf32>
    %415 = vector.shape_cast %379 : vector<8x128xf32> to vector<1x8x128xf32>
    tpu.vector_store %arg6[%c0_208, %c0_209, %c0_210], %415 {strides = array<i32>} : memref<2x8x128xf32, #tpu.memory_space<vmem>>, vector<1x8x128xf32>,
    %c0_211 = arith.constant 0 : index
    %c0_212 = arith.constant 0 : index
    %c0_213 = arith.constant 0 : index
    %416 = vector.load %arg7[%c0_211, %c0_212, %c0_213] : memref<2x8x128xf32, #tpu.memory_space<vmem>>, vector<1x8x128xf32>
    %417 = vector.shape_cast %416 : vector<1x8x128xf32> to vector<8x128xf32>
    %418 = vector.shape_cast %377 : vector<8x128xf32> to vector<1x8x128xf32>
    tpu.vector_store %arg7[%c0_211, %c0_212, %c0_213], %418 {strides = array<i32>} : memref<2x8x128xf32, #tpu.memory_space<vmem>>, vector<1x8x128xf32>,
    %c1_214 = arith.constant 1 : index
    %c0_215 = arith.constant 0 : index
    %c0_216 = arith.constant 0 : index
    %419 = vector.load %arg6[%c1_214, %c0_215, %c0_216] : memref<2x8x128xf32, #tpu.memory_space<vmem>>, vector<1x8x128xf32>
    %420 = vector.shape_cast %419 : vector<1x8x128xf32> to vector<8x128xf32>
    %421 = vector.shape_cast %412 : vector<8x128xf32> to vector<1x8x128xf32>
    tpu.vector_store %arg6[%c1_214, %c0_215, %c0_216], %421 {strides = array<i32>} : memref<2x8x128xf32, #tpu.memory_space<vmem>>, vector<1x8x128xf32>,
    %c1_217 = arith.constant 1 : index
    %c0_218 = arith.constant 0 : index
    %c0_219 = arith.constant 0 : index
    %422 = vector.load %arg7[%c1_217, %c0_218, %c0_219] : memref<2x8x128xf32, #tpu.memory_space<vmem>>, vector<1x8x128xf32>
    %423 = vector.shape_cast %422 : vector<1x8x128xf32> to vector<8x128xf32>
    %424 = vector.shape_cast %410 : vector<8x128xf32> to vector<1x8x128xf32>
    tpu.vector_store %arg7[%c1_217, %c0_218, %c0_219], %424 {strides = array<i32>} : memref<2x8x128xf32, #tpu.memory_space<vmem>>, vector<1x8x128xf32>,
    %425 = arith.truncf %379 : vector<8x128xf32> to vector<8x128xbf16>
    %426 = arith.index_cast %c3_i32 : i32 to index
    %c0_220 = arith.constant 0 : index
    %c0_221 = arith.constant 0 : index
    %427 = vector.load %arg4[%426, %c0_220, %c0_221] : memref<8x8x128xbf16, #tpu.memory_space<vmem>>, vector<1x8x128xbf16>
    %428 = vector.shape_cast %427 : vector<1x8x128xbf16> to vector<8x128xbf16>
    %429 = vector.shape_cast %425 : vector<8x128xbf16> to vector<1x8x128xbf16>
    tpu.vector_store %arg4[%426, %c0_220, %c0_221], %429 {strides = array<i32>} : memref<8x8x128xbf16, #tpu.memory_space<vmem>>, vector<1x8x128xbf16>,
    %430 = arith.truncf %412 : vector<8x128xf32> to vector<8x128xbf16>
    %431 = arith.index_cast %328 : i32 to index
    %c0_222 = arith.constant 0 : index
    %c0_223 = arith.constant 0 : index
    %432 = vector.load %arg5[%431, %c0_222, %c0_223] : memref<8x8x128xbf16, #tpu.memory_space<vmem>>, vector<1x8x128xbf16>
    %433 = vector.shape_cast %432 : vector<1x8x128xbf16> to vector<8x128xbf16>
    %434 = vector.shape_cast %430 : vector<8x128xbf16> to vector<1x8x128xbf16>
    tpu.vector_store %arg5[%431, %c0_222, %c0_223], %434 {strides = array<i32>} : memref<8x8x128xbf16, #tpu.memory_space<vmem>>, vector<1x8x128xbf16>,
    %c4_i32 = arith.constant 4 : i32
    %c7_i32_224 = arith.constant 7 : i32
    %435 = arith.subi %c7_i32_224, %c4_i32 : i32
    %c0_225 = arith.constant 0 : index
    %436 = arith.index_cast %c4_i32 : i32 to index
    %c0_226 = arith.constant 0 : index
    %c0_227 = arith.constant 0 : index
    %437 = vector.load %arg1[%c0_225, %436, %c0_226, %c0_227] : memref<1x8x8x512xbf16, #tpu.memory_space<vmem>>, vector<1x1x8x512xbf16>
    %438 = vector.shape_cast %437 : vector<1x1x8x512xbf16> to vector<8x512xbf16>
    %439 = arith.extf %438 : vector<8x512xbf16> to vector<8x512xf32>
    %c0_228 = arith.constant 0 : index
    %c0_229 = arith.constant 0 : index
    %c0_230 = arith.constant 0 : index
    %440 = vector.load %arg6[%c0_228, %c0_229, %c0_230] : memref<2x8x128xf32, #tpu.memory_space<vmem>>, vector<1x8x128xf32>
    %441 = vector.shape_cast %440 : vector<1x8x128xf32> to vector<8x128xf32>
    %442 = arith.truncf %441 : vector<8x128xf32> to vector<8x128xbf16>
    %cst_231 = arith.constant dense<0.000000e+00> : vector<8x512xf32>
    %443 = tpu.matmul %442, %4, %cst_231 {dimension_numbers = #tpu.dot_dimension_numbers<[1], [0], [0], [1], [0, 0, 1, 1], [], []>} : vector<8x128xbf16>, vector<128x512xbf16>, vector<8x512xf32> -> vector<8x512xf32>
    %444 = arith.addf %439, %443 : vector<8x512xf32>
    %c0_232 = arith.constant 0 : index
    %445 = arith.index_cast %435 : i32 to index
    %c0_233 = arith.constant 0 : index
    %c0_234 = arith.constant 0 : index
    %446 = vector.load %arg2[%c0_232, %445, %c0_233, %c0_234] : memref<1x8x8x512xbf16, #tpu.memory_space<vmem>>, vector<1x1x8x512xbf16>
    %447 = vector.shape_cast %446 : vector<1x1x8x512xbf16> to vector<8x512xbf16>
    %448 = arith.extf %447 : vector<8x512xbf16> to vector<8x512xf32>
    %c1_235 = arith.constant 1 : index
    %c0_236 = arith.constant 0 : index
    %c0_237 = arith.constant 0 : index
    %449 = vector.load %arg6[%c1_235, %c0_236, %c0_237] : memref<2x8x128xf32, #tpu.memory_space<vmem>>, vector<1x8x128xf32>
    %450 = vector.shape_cast %449 : vector<1x8x128xf32> to vector<8x128xf32>
    %451 = arith.truncf %450 : vector<8x128xf32> to vector<8x128xbf16>
    %cst_238 = arith.constant dense<0.000000e+00> : vector<8x512xf32>
    %452 = tpu.matmul %451, %6, %cst_238 {dimension_numbers = #tpu.dot_dimension_numbers<[1], [0], [0], [1], [0, 0, 1, 1], [], []>} : vector<8x128xbf16>, vector<128x512xbf16>, vector<8x512xf32> -> vector<8x512xf32>
    %453 = arith.addf %448, %452 : vector<8x512xf32>
    %c0_239 = arith.constant 0 : index
    %c0_240 = arith.constant 0 : index
    %c0_241 = arith.constant 0 : index
    %454 = vector.load %arg7[%c0_239, %c0_240, %c0_241] : memref<2x8x128xf32, #tpu.memory_space<vmem>>, vector<1x8x128xf32>
    %455 = vector.shape_cast %454 : vector<1x8x128xf32> to vector<8x128xf32>
    %456 = vector.extract_strided_slice %444 {offsets = [0, 0], sizes = [8, 128], strides = [1, 1]} : vector<8x512xf32> to vector<8x128xf32>
    %cst_242 = arith.constant 5.000000e-01 : f32
    %457 = vector.broadcast %cst_242 : f32 to vector<8x128xf32>
    %458 = arith.mulf %457, %456 : vector<8x128xf32>
    %459 = math.tanh %458 : vector<8x128xf32>
    %cst_243 = arith.constant 5.000000e-01 : f32
    %460 = vector.broadcast %cst_243 : f32 to vector<8x128xf32>
    %461 = arith.mulf %460, %459 : vector<8x128xf32>
    %cst_244 = arith.constant 5.000000e-01 : f32
    %462 = vector.broadcast %cst_244 : f32 to vector<8x128xf32>
    %463 = arith.addf %461, %462 : vector<8x128xf32>
    %464 = vector.extract_strided_slice %444 {offsets = [0, 128], sizes = [8, 128], strides = [1, 1]} : vector<8x512xf32> to vector<8x128xf32>
    %cst_245 = arith.constant 5.000000e-01 : f32
    %465 = vector.broadcast %cst_245 : f32 to vector<8x128xf32>
    %466 = arith.mulf %465, %464 : vector<8x128xf32>
    %467 = math.tanh %466 : vector<8x128xf32>
    %cst_246 = arith.constant 5.000000e-01 : f32
    %468 = vector.broadcast %cst_246 : f32 to vector<8x128xf32>
    %469 = arith.mulf %468, %467 : vector<8x128xf32>
    %cst_247 = arith.constant 5.000000e-01 : f32
    %470 = vector.broadcast %cst_247 : f32 to vector<8x128xf32>
    %471 = arith.addf %469, %470 : vector<8x128xf32>
    %472 = vector.extract_strided_slice %444 {offsets = [0, 256], sizes = [8, 128], strides = [1, 1]} : vector<8x512xf32> to vector<8x128xf32>
    %473 = math.tanh %472 : vector<8x128xf32>
    %474 = vector.extract_strided_slice %444 {offsets = [0, 384], sizes = [8, 128], strides = [1, 1]} : vector<8x512xf32> to vector<8x128xf32>
    %cst_248 = arith.constant 5.000000e-01 : f32
    %475 = vector.broadcast %cst_248 : f32 to vector<8x128xf32>
    %476 = arith.mulf %475, %474 : vector<8x128xf32>
    %477 = math.tanh %476 : vector<8x128xf32>
    %cst_249 = arith.constant 5.000000e-01 : f32
    %478 = vector.broadcast %cst_249 : f32 to vector<8x128xf32>
    %479 = arith.mulf %478, %477 : vector<8x128xf32>
    %cst_250 = arith.constant 5.000000e-01 : f32
    %480 = vector.broadcast %cst_250 : f32 to vector<8x128xf32>
    %481 = arith.addf %479, %480 : vector<8x128xf32>
    %482 = arith.mulf %471, %455 : vector<8x128xf32>
    %483 = arith.mulf %463, %473 : vector<8x128xf32>
    %484 = arith.addf %482, %483 : vector<8x128xf32>
    %485 = math.tanh %484 : vector<8x128xf32>
    %486 = arith.mulf %481, %485 : vector<8x128xf32>
    %c1_251 = arith.constant 1 : index
    %c0_252 = arith.constant 0 : index
    %c0_253 = arith.constant 0 : index
    %487 = vector.load %arg7[%c1_251, %c0_252, %c0_253] : memref<2x8x128xf32, #tpu.memory_space<vmem>>, vector<1x8x128xf32>
    %488 = vector.shape_cast %487 : vector<1x8x128xf32> to vector<8x128xf32>
    %489 = vector.extract_strided_slice %453 {offsets = [0, 0], sizes = [8, 128], strides = [1, 1]} : vector<8x512xf32> to vector<8x128xf32>
    %cst_254 = arith.constant 5.000000e-01 : f32
    %490 = vector.broadcast %cst_254 : f32 to vector<8x128xf32>
    %491 = arith.mulf %490, %489 : vector<8x128xf32>
    %492 = math.tanh %491 : vector<8x128xf32>
    %cst_255 = arith.constant 5.000000e-01 : f32
    %493 = vector.broadcast %cst_255 : f32 to vector<8x128xf32>
    %494 = arith.mulf %493, %492 : vector<8x128xf32>
    %cst_256 = arith.constant 5.000000e-01 : f32
    %495 = vector.broadcast %cst_256 : f32 to vector<8x128xf32>
    %496 = arith.addf %494, %495 : vector<8x128xf32>
    %497 = vector.extract_strided_slice %453 {offsets = [0, 128], sizes = [8, 128], strides = [1, 1]} : vector<8x512xf32> to vector<8x128xf32>
    %cst_257 = arith.constant 5.000000e-01 : f32
    %498 = vector.broadcast %cst_257 : f32 to vector<8x128xf32>
    %499 = arith.mulf %498, %497 : vector<8x128xf32>
    %500 = math.tanh %499 : vector<8x128xf32>
    %cst_258 = arith.constant 5.000000e-01 : f32
    %501 = vector.broadcast %cst_258 : f32 to vector<8x128xf32>
    %502 = arith.mulf %501, %500 : vector<8x128xf32>
    %cst_259 = arith.constant 5.000000e-01 : f32
    %503 = vector.broadcast %cst_259 : f32 to vector<8x128xf32>
    %504 = arith.addf %502, %503 : vector<8x128xf32>
    %505 = vector.extract_strided_slice %453 {offsets = [0, 256], sizes = [8, 128], strides = [1, 1]} : vector<8x512xf32> to vector<8x128xf32>
    %506 = math.tanh %505 : vector<8x128xf32>
    %507 = vector.extract_strided_slice %453 {offsets = [0, 384], sizes = [8, 128], strides = [1, 1]} : vector<8x512xf32> to vector<8x128xf32>
    %cst_260 = arith.constant 5.000000e-01 : f32
    %508 = vector.broadcast %cst_260 : f32 to vector<8x128xf32>
    %509 = arith.mulf %508, %507 : vector<8x128xf32>
    %510 = math.tanh %509 : vector<8x128xf32>
    %cst_261 = arith.constant 5.000000e-01 : f32
    %511 = vector.broadcast %cst_261 : f32 to vector<8x128xf32>
    %512 = arith.mulf %511, %510 : vector<8x128xf32>
    %cst_262 = arith.constant 5.000000e-01 : f32
    %513 = vector.broadcast %cst_262 : f32 to vector<8x128xf32>
    %514 = arith.addf %512, %513 : vector<8x128xf32>
    %515 = arith.mulf %504, %488 : vector<8x128xf32>
    %516 = arith.mulf %496, %506 : vector<8x128xf32>
    %517 = arith.addf %515, %516 : vector<8x128xf32>
    %518 = math.tanh %517 : vector<8x128xf32>
    %519 = arith.mulf %514, %518 : vector<8x128xf32>
    %c0_263 = arith.constant 0 : index
    %c0_264 = arith.constant 0 : index
    %c0_265 = arith.constant 0 : index
    %520 = vector.load %arg6[%c0_263, %c0_264, %c0_265] : memref<2x8x128xf32, #tpu.memory_space<vmem>>, vector<1x8x128xf32>
    %521 = vector.shape_cast %520 : vector<1x8x128xf32> to vector<8x128xf32>
    %522 = vector.shape_cast %486 : vector<8x128xf32> to vector<1x8x128xf32>
    tpu.vector_store %arg6[%c0_263, %c0_264, %c0_265], %522 {strides = array<i32>} : memref<2x8x128xf32, #tpu.memory_space<vmem>>, vector<1x8x128xf32>,
    %c0_266 = arith.constant 0 : index
    %c0_267 = arith.constant 0 : index
    %c0_268 = arith.constant 0 : index
    %523 = vector.load %arg7[%c0_266, %c0_267, %c0_268] : memref<2x8x128xf32, #tpu.memory_space<vmem>>, vector<1x8x128xf32>
    %524 = vector.shape_cast %523 : vector<1x8x128xf32> to vector<8x128xf32>
    %525 = vector.shape_cast %484 : vector<8x128xf32> to vector<1x8x128xf32>
    tpu.vector_store %arg7[%c0_266, %c0_267, %c0_268], %525 {strides = array<i32>} : memref<2x8x128xf32, #tpu.memory_space<vmem>>, vector<1x8x128xf32>,
    %c1_269 = arith.constant 1 : index
    %c0_270 = arith.constant 0 : index
    %c0_271 = arith.constant 0 : index
    %526 = vector.load %arg6[%c1_269, %c0_270, %c0_271] : memref<2x8x128xf32, #tpu.memory_space<vmem>>, vector<1x8x128xf32>
    %527 = vector.shape_cast %526 : vector<1x8x128xf32> to vector<8x128xf32>
    %528 = vector.shape_cast %519 : vector<8x128xf32> to vector<1x8x128xf32>
    tpu.vector_store %arg6[%c1_269, %c0_270, %c0_271], %528 {strides = array<i32>} : memref<2x8x128xf32, #tpu.memory_space<vmem>>, vector<1x8x128xf32>,
    %c1_272 = arith.constant 1 : index
    %c0_273 = arith.constant 0 : index
    %c0_274 = arith.constant 0 : index
    %529 = vector.load %arg7[%c1_272, %c0_273, %c0_274] : memref<2x8x128xf32, #tpu.memory_space<vmem>>, vector<1x8x128xf32>
    %530 = vector.shape_cast %529 : vector<1x8x128xf32> to vector<8x128xf32>
    %531 = vector.shape_cast %517 : vector<8x128xf32> to vector<1x8x128xf32>
    tpu.vector_store %arg7[%c1_272, %c0_273, %c0_274], %531 {strides = array<i32>} : memref<2x8x128xf32, #tpu.memory_space<vmem>>, vector<1x8x128xf32>,
    %532 = arith.truncf %486 : vector<8x128xf32> to vector<8x128xbf16>
    %533 = arith.index_cast %c4_i32 : i32 to index
    %c0_275 = arith.constant 0 : index
    %c0_276 = arith.constant 0 : index
    %534 = vector.load %arg4[%533, %c0_275, %c0_276] : memref<8x8x128xbf16, #tpu.memory_space<vmem>>, vector<1x8x128xbf16>
    %535 = vector.shape_cast %534 : vector<1x8x128xbf16> to vector<8x128xbf16>
    %536 = vector.shape_cast %532 : vector<8x128xbf16> to vector<1x8x128xbf16>
    tpu.vector_store %arg4[%533, %c0_275, %c0_276], %536 {strides = array<i32>} : memref<8x8x128xbf16, #tpu.memory_space<vmem>>, vector<1x8x128xbf16>,
    %537 = arith.truncf %519 : vector<8x128xf32> to vector<8x128xbf16>
    %538 = arith.index_cast %435 : i32 to index
    %c0_277 = arith.constant 0 : index
    %c0_278 = arith.constant 0 : index
    %539 = vector.load %arg5[%538, %c0_277, %c0_278] : memref<8x8x128xbf16, #tpu.memory_space<vmem>>, vector<1x8x128xbf16>
    %540 = vector.shape_cast %539 : vector<1x8x128xbf16> to vector<8x128xbf16>
    %541 = vector.shape_cast %537 : vector<8x128xbf16> to vector<1x8x128xbf16>
    tpu.vector_store %arg5[%538, %c0_277, %c0_278], %541 {strides = array<i32>} : memref<8x8x128xbf16, #tpu.memory_space<vmem>>, vector<1x8x128xbf16>,
    %c5_i32 = arith.constant 5 : i32
    %c7_i32_279 = arith.constant 7 : i32
    %542 = arith.subi %c7_i32_279, %c5_i32 : i32
    %c0_280 = arith.constant 0 : index
    %543 = arith.index_cast %c5_i32 : i32 to index
    %c0_281 = arith.constant 0 : index
    %c0_282 = arith.constant 0 : index
    %544 = vector.load %arg1[%c0_280, %543, %c0_281, %c0_282] : memref<1x8x8x512xbf16, #tpu.memory_space<vmem>>, vector<1x1x8x512xbf16>
    %545 = vector.shape_cast %544 : vector<1x1x8x512xbf16> to vector<8x512xbf16>
    %546 = arith.extf %545 : vector<8x512xbf16> to vector<8x512xf32>
    %c0_283 = arith.constant 0 : index
    %c0_284 = arith.constant 0 : index
    %c0_285 = arith.constant 0 : index
    %547 = vector.load %arg6[%c0_283, %c0_284, %c0_285] : memref<2x8x128xf32, #tpu.memory_space<vmem>>, vector<1x8x128xf32>
    %548 = vector.shape_cast %547 : vector<1x8x128xf32> to vector<8x128xf32>
    %549 = arith.truncf %548 : vector<8x128xf32> to vector<8x128xbf16>
    %cst_286 = arith.constant dense<0.000000e+00> : vector<8x512xf32>
    %550 = tpu.matmul %549, %4, %cst_286 {dimension_numbers = #tpu.dot_dimension_numbers<[1], [0], [0], [1], [0, 0, 1, 1], [], []>} : vector<8x128xbf16>, vector<128x512xbf16>, vector<8x512xf32> -> vector<8x512xf32>
    %551 = arith.addf %546, %550 : vector<8x512xf32>
    %c0_287 = arith.constant 0 : index
    %552 = arith.index_cast %542 : i32 to index
    %c0_288 = arith.constant 0 : index
    %c0_289 = arith.constant 0 : index
    %553 = vector.load %arg2[%c0_287, %552, %c0_288, %c0_289] : memref<1x8x8x512xbf16, #tpu.memory_space<vmem>>, vector<1x1x8x512xbf16>
    %554 = vector.shape_cast %553 : vector<1x1x8x512xbf16> to vector<8x512xbf16>
    %555 = arith.extf %554 : vector<8x512xbf16> to vector<8x512xf32>
    %c1_290 = arith.constant 1 : index
    %c0_291 = arith.constant 0 : index
    %c0_292 = arith.constant 0 : index
    %556 = vector.load %arg6[%c1_290, %c0_291, %c0_292] : memref<2x8x128xf32, #tpu.memory_space<vmem>>, vector<1x8x128xf32>
    %557 = vector.shape_cast %556 : vector<1x8x128xf32> to vector<8x128xf32>
    %558 = arith.truncf %557 : vector<8x128xf32> to vector<8x128xbf16>
    %cst_293 = arith.constant dense<0.000000e+00> : vector<8x512xf32>
    %559 = tpu.matmul %558, %6, %cst_293 {dimension_numbers = #tpu.dot_dimension_numbers<[1], [0], [0], [1], [0, 0, 1, 1], [], []>} : vector<8x128xbf16>, vector<128x512xbf16>, vector<8x512xf32> -> vector<8x512xf32>
    %560 = arith.addf %555, %559 : vector<8x512xf32>
    %c0_294 = arith.constant 0 : index
    %c0_295 = arith.constant 0 : index
    %c0_296 = arith.constant 0 : index
    %561 = vector.load %arg7[%c0_294, %c0_295, %c0_296] : memref<2x8x128xf32, #tpu.memory_space<vmem>>, vector<1x8x128xf32>
    %562 = vector.shape_cast %561 : vector<1x8x128xf32> to vector<8x128xf32>
    %563 = vector.extract_strided_slice %551 {offsets = [0, 0], sizes = [8, 128], strides = [1, 1]} : vector<8x512xf32> to vector<8x128xf32>
    %cst_297 = arith.constant 5.000000e-01 : f32
    %564 = vector.broadcast %cst_297 : f32 to vector<8x128xf32>
    %565 = arith.mulf %564, %563 : vector<8x128xf32>
    %566 = math.tanh %565 : vector<8x128xf32>
    %cst_298 = arith.constant 5.000000e-01 : f32
    %567 = vector.broadcast %cst_298 : f32 to vector<8x128xf32>
    %568 = arith.mulf %567, %566 : vector<8x128xf32>
    %cst_299 = arith.constant 5.000000e-01 : f32
    %569 = vector.broadcast %cst_299 : f32 to vector<8x128xf32>
    %570 = arith.addf %568, %569 : vector<8x128xf32>
    %571 = vector.extract_strided_slice %551 {offsets = [0, 128], sizes = [8, 128], strides = [1, 1]} : vector<8x512xf32> to vector<8x128xf32>
    %cst_300 = arith.constant 5.000000e-01 : f32
    %572 = vector.broadcast %cst_300 : f32 to vector<8x128xf32>
    %573 = arith.mulf %572, %571 : vector<8x128xf32>
    %574 = math.tanh %573 : vector<8x128xf32>
    %cst_301 = arith.constant 5.000000e-01 : f32
    %575 = vector.broadcast %cst_301 : f32 to vector<8x128xf32>
    %576 = arith.mulf %575, %574 : vector<8x128xf32>
    %cst_302 = arith.constant 5.000000e-01 : f32
    %577 = vector.broadcast %cst_302 : f32 to vector<8x128xf32>
    %578 = arith.addf %576, %577 : vector<8x128xf32>
    %579 = vector.extract_strided_slice %551 {offsets = [0, 256], sizes = [8, 128], strides = [1, 1]} : vector<8x512xf32> to vector<8x128xf32>
    %580 = math.tanh %579 : vector<8x128xf32>
    %581 = vector.extract_strided_slice %551 {offsets = [0, 384], sizes = [8, 128], strides = [1, 1]} : vector<8x512xf32> to vector<8x128xf32>
    %cst_303 = arith.constant 5.000000e-01 : f32
    %582 = vector.broadcast %cst_303 : f32 to vector<8x128xf32>
    %583 = arith.mulf %582, %581 : vector<8x128xf32>
    %584 = math.tanh %583 : vector<8x128xf32>
    %cst_304 = arith.constant 5.000000e-01 : f32
    %585 = vector.broadcast %cst_304 : f32 to vector<8x128xf32>
    %586 = arith.mulf %585, %584 : vector<8x128xf32>
    %cst_305 = arith.constant 5.000000e-01 : f32
    %587 = vector.broadcast %cst_305 : f32 to vector<8x128xf32>
    %588 = arith.addf %586, %587 : vector<8x128xf32>
    %589 = arith.mulf %578, %562 : vector<8x128xf32>
    %590 = arith.mulf %570, %580 : vector<8x128xf32>
    %591 = arith.addf %589, %590 : vector<8x128xf32>
    %592 = math.tanh %591 : vector<8x128xf32>
    %593 = arith.mulf %588, %592 : vector<8x128xf32>
    %c1_306 = arith.constant 1 : index
    %c0_307 = arith.constant 0 : index
    %c0_308 = arith.constant 0 : index
    %594 = vector.load %arg7[%c1_306, %c0_307, %c0_308] : memref<2x8x128xf32, #tpu.memory_space<vmem>>, vector<1x8x128xf32>
    %595 = vector.shape_cast %594 : vector<1x8x128xf32> to vector<8x128xf32>
    %596 = vector.extract_strided_slice %560 {offsets = [0, 0], sizes = [8, 128], strides = [1, 1]} : vector<8x512xf32> to vector<8x128xf32>
    %cst_309 = arith.constant 5.000000e-01 : f32
    %597 = vector.broadcast %cst_309 : f32 to vector<8x128xf32>
    %598 = arith.mulf %597, %596 : vector<8x128xf32>
    %599 = math.tanh %598 : vector<8x128xf32>
    %cst_310 = arith.constant 5.000000e-01 : f32
    %600 = vector.broadcast %cst_310 : f32 to vector<8x128xf32>
    %601 = arith.mulf %600, %599 : vector<8x128xf32>
    %cst_311 = arith.constant 5.000000e-01 : f32
    %602 = vector.broadcast %cst_311 : f32 to vector<8x128xf32>
    %603 = arith.addf %601, %602 : vector<8x128xf32>
    %604 = vector.extract_strided_slice %560 {offsets = [0, 128], sizes = [8, 128], strides = [1, 1]} : vector<8x512xf32> to vector<8x128xf32>
    %cst_312 = arith.constant 5.000000e-01 : f32
    %605 = vector.broadcast %cst_312 : f32 to vector<8x128xf32>
    %606 = arith.mulf %605, %604 : vector<8x128xf32>
    %607 = math.tanh %606 : vector<8x128xf32>
    %cst_313 = arith.constant 5.000000e-01 : f32
    %608 = vector.broadcast %cst_313 : f32 to vector<8x128xf32>
    %609 = arith.mulf %608, %607 : vector<8x128xf32>
    %cst_314 = arith.constant 5.000000e-01 : f32
    %610 = vector.broadcast %cst_314 : f32 to vector<8x128xf32>
    %611 = arith.addf %609, %610 : vector<8x128xf32>
    %612 = vector.extract_strided_slice %560 {offsets = [0, 256], sizes = [8, 128], strides = [1, 1]} : vector<8x512xf32> to vector<8x128xf32>
    %613 = math.tanh %612 : vector<8x128xf32>
    %614 = vector.extract_strided_slice %560 {offsets = [0, 384], sizes = [8, 128], strides = [1, 1]} : vector<8x512xf32> to vector<8x128xf32>
    %cst_315 = arith.constant 5.000000e-01 : f32
    %615 = vector.broadcast %cst_315 : f32 to vector<8x128xf32>
    %616 = arith.mulf %615, %614 : vector<8x128xf32>
    %617 = math.tanh %616 : vector<8x128xf32>
    %cst_316 = arith.constant 5.000000e-01 : f32
    %618 = vector.broadcast %cst_316 : f32 to vector<8x128xf32>
    %619 = arith.mulf %618, %617 : vector<8x128xf32>
    %cst_317 = arith.constant 5.000000e-01 : f32
    %620 = vector.broadcast %cst_317 : f32 to vector<8x128xf32>
    %621 = arith.addf %619, %620 : vector<8x128xf32>
    %622 = arith.mulf %611, %595 : vector<8x128xf32>
    %623 = arith.mulf %603, %613 : vector<8x128xf32>
    %624 = arith.addf %622, %623 : vector<8x128xf32>
    %625 = math.tanh %624 : vector<8x128xf32>
    %626 = arith.mulf %621, %625 : vector<8x128xf32>
    %c0_318 = arith.constant 0 : index
    %c0_319 = arith.constant 0 : index
    %c0_320 = arith.constant 0 : index
    %627 = vector.load %arg6[%c0_318, %c0_319, %c0_320] : memref<2x8x128xf32, #tpu.memory_space<vmem>>, vector<1x8x128xf32>
    %628 = vector.shape_cast %627 : vector<1x8x128xf32> to vector<8x128xf32>
    %629 = vector.shape_cast %593 : vector<8x128xf32> to vector<1x8x128xf32>
    tpu.vector_store %arg6[%c0_318, %c0_319, %c0_320], %629 {strides = array<i32>} : memref<2x8x128xf32, #tpu.memory_space<vmem>>, vector<1x8x128xf32>,
    %c0_321 = arith.constant 0 : index
    %c0_322 = arith.constant 0 : index
    %c0_323 = arith.constant 0 : index
    %630 = vector.load %arg7[%c0_321, %c0_322, %c0_323] : memref<2x8x128xf32, #tpu.memory_space<vmem>>, vector<1x8x128xf32>
    %631 = vector.shape_cast %630 : vector<1x8x128xf32> to vector<8x128xf32>
    %632 = vector.shape_cast %591 : vector<8x128xf32> to vector<1x8x128xf32>
    tpu.vector_store %arg7[%c0_321, %c0_322, %c0_323], %632 {strides = array<i32>} : memref<2x8x128xf32, #tpu.memory_space<vmem>>, vector<1x8x128xf32>,
    %c1_324 = arith.constant 1 : index
    %c0_325 = arith.constant 0 : index
    %c0_326 = arith.constant 0 : index
    %633 = vector.load %arg6[%c1_324, %c0_325, %c0_326] : memref<2x8x128xf32, #tpu.memory_space<vmem>>, vector<1x8x128xf32>
    %634 = vector.shape_cast %633 : vector<1x8x128xf32> to vector<8x128xf32>
    %635 = vector.shape_cast %626 : vector<8x128xf32> to vector<1x8x128xf32>
    tpu.vector_store %arg6[%c1_324, %c0_325, %c0_326], %635 {strides = array<i32>} : memref<2x8x128xf32, #tpu.memory_space<vmem>>, vector<1x8x128xf32>,
    %c1_327 = arith.constant 1 : index
    %c0_328 = arith.constant 0 : index
    %c0_329 = arith.constant 0 : index
    %636 = vector.load %arg7[%c1_327, %c0_328, %c0_329] : memref<2x8x128xf32, #tpu.memory_space<vmem>>, vector<1x8x128xf32>
    %637 = vector.shape_cast %636 : vector<1x8x128xf32> to vector<8x128xf32>
    %638 = vector.shape_cast %624 : vector<8x128xf32> to vector<1x8x128xf32>
    tpu.vector_store %arg7[%c1_327, %c0_328, %c0_329], %638 {strides = array<i32>} : memref<2x8x128xf32, #tpu.memory_space<vmem>>, vector<1x8x128xf32>,
    %639 = arith.truncf %593 : vector<8x128xf32> to vector<8x128xbf16>
    %640 = arith.index_cast %c5_i32 : i32 to index
    %c0_330 = arith.constant 0 : index
    %c0_331 = arith.constant 0 : index
    %641 = vector.load %arg4[%640, %c0_330, %c0_331] : memref<8x8x128xbf16, #tpu.memory_space<vmem>>, vector<1x8x128xbf16>
    %642 = vector.shape_cast %641 : vector<1x8x128xbf16> to vector<8x128xbf16>
    %643 = vector.shape_cast %639 : vector<8x128xbf16> to vector<1x8x128xbf16>
    tpu.vector_store %arg4[%640, %c0_330, %c0_331], %643 {strides = array<i32>} : memref<8x8x128xbf16, #tpu.memory_space<vmem>>, vector<1x8x128xbf16>,
    %644 = arith.truncf %626 : vector<8x128xf32> to vector<8x128xbf16>
    %645 = arith.index_cast %542 : i32 to index
    %c0_332 = arith.constant 0 : index
    %c0_333 = arith.constant 0 : index
    %646 = vector.load %arg5[%645, %c0_332, %c0_333] : memref<8x8x128xbf16, #tpu.memory_space<vmem>>, vector<1x8x128xbf16>
    %647 = vector.shape_cast %646 : vector<1x8x128xbf16> to vector<8x128xbf16>
    %648 = vector.shape_cast %644 : vector<8x128xbf16> to vector<1x8x128xbf16>
    tpu.vector_store %arg5[%645, %c0_332, %c0_333], %648 {strides = array<i32>} : memref<8x8x128xbf16, #tpu.memory_space<vmem>>, vector<1x8x128xbf16>,
    %c6_i32 = arith.constant 6 : i32
    %c7_i32_334 = arith.constant 7 : i32
    %649 = arith.subi %c7_i32_334, %c6_i32 : i32
    %c0_335 = arith.constant 0 : index
    %650 = arith.index_cast %c6_i32 : i32 to index
    %c0_336 = arith.constant 0 : index
    %c0_337 = arith.constant 0 : index
    %651 = vector.load %arg1[%c0_335, %650, %c0_336, %c0_337] : memref<1x8x8x512xbf16, #tpu.memory_space<vmem>>, vector<1x1x8x512xbf16>
    %652 = vector.shape_cast %651 : vector<1x1x8x512xbf16> to vector<8x512xbf16>
    %653 = arith.extf %652 : vector<8x512xbf16> to vector<8x512xf32>
    %c0_338 = arith.constant 0 : index
    %c0_339 = arith.constant 0 : index
    %c0_340 = arith.constant 0 : index
    %654 = vector.load %arg6[%c0_338, %c0_339, %c0_340] : memref<2x8x128xf32, #tpu.memory_space<vmem>>, vector<1x8x128xf32>
    %655 = vector.shape_cast %654 : vector<1x8x128xf32> to vector<8x128xf32>
    %656 = arith.truncf %655 : vector<8x128xf32> to vector<8x128xbf16>
    %cst_341 = arith.constant dense<0.000000e+00> : vector<8x512xf32>
    %657 = tpu.matmul %656, %4, %cst_341 {dimension_numbers = #tpu.dot_dimension_numbers<[1], [0], [0], [1], [0, 0, 1, 1], [], []>} : vector<8x128xbf16>, vector<128x512xbf16>, vector<8x512xf32> -> vector<8x512xf32>
    %658 = arith.addf %653, %657 : vector<8x512xf32>
    %c0_342 = arith.constant 0 : index
    %659 = arith.index_cast %649 : i32 to index
    %c0_343 = arith.constant 0 : index
    %c0_344 = arith.constant 0 : index
    %660 = vector.load %arg2[%c0_342, %659, %c0_343, %c0_344] : memref<1x8x8x512xbf16, #tpu.memory_space<vmem>>, vector<1x1x8x512xbf16>
    %661 = vector.shape_cast %660 : vector<1x1x8x512xbf16> to vector<8x512xbf16>
    %662 = arith.extf %661 : vector<8x512xbf16> to vector<8x512xf32>
    %c1_345 = arith.constant 1 : index
    %c0_346 = arith.constant 0 : index
    %c0_347 = arith.constant 0 : index
    %663 = vector.load %arg6[%c1_345, %c0_346, %c0_347] : memref<2x8x128xf32, #tpu.memory_space<vmem>>, vector<1x8x128xf32>
    %664 = vector.shape_cast %663 : vector<1x8x128xf32> to vector<8x128xf32>
    %665 = arith.truncf %664 : vector<8x128xf32> to vector<8x128xbf16>
    %cst_348 = arith.constant dense<0.000000e+00> : vector<8x512xf32>
    %666 = tpu.matmul %665, %6, %cst_348 {dimension_numbers = #tpu.dot_dimension_numbers<[1], [0], [0], [1], [0, 0, 1, 1], [], []>} : vector<8x128xbf16>, vector<128x512xbf16>, vector<8x512xf32> -> vector<8x512xf32>
    %667 = arith.addf %662, %666 : vector<8x512xf32>
    %c0_349 = arith.constant 0 : index
    %c0_350 = arith.constant 0 : index
    %c0_351 = arith.constant 0 : index
    %668 = vector.load %arg7[%c0_349, %c0_350, %c0_351] : memref<2x8x128xf32, #tpu.memory_space<vmem>>, vector<1x8x128xf32>
    %669 = vector.shape_cast %668 : vector<1x8x128xf32> to vector<8x128xf32>
    %670 = vector.extract_strided_slice %658 {offsets = [0, 0], sizes = [8, 128], strides = [1, 1]} : vector<8x512xf32> to vector<8x128xf32>
    %cst_352 = arith.constant 5.000000e-01 : f32
    %671 = vector.broadcast %cst_352 : f32 to vector<8x128xf32>
    %672 = arith.mulf %671, %670 : vector<8x128xf32>
    %673 = math.tanh %672 : vector<8x128xf32>
    %cst_353 = arith.constant 5.000000e-01 : f32
    %674 = vector.broadcast %cst_353 : f32 to vector<8x128xf32>
    %675 = arith.mulf %674, %673 : vector<8x128xf32>
    %cst_354 = arith.constant 5.000000e-01 : f32
    %676 = vector.broadcast %cst_354 : f32 to vector<8x128xf32>
    %677 = arith.addf %675, %676 : vector<8x128xf32>
    %678 = vector.extract_strided_slice %658 {offsets = [0, 128], sizes = [8, 128], strides = [1, 1]} : vector<8x512xf32> to vector<8x128xf32>
    %cst_355 = arith.constant 5.000000e-01 : f32
    %679 = vector.broadcast %cst_355 : f32 to vector<8x128xf32>
    %680 = arith.mulf %679, %678 : vector<8x128xf32>
    %681 = math.tanh %680 : vector<8x128xf32>
    %cst_356 = arith.constant 5.000000e-01 : f32
    %682 = vector.broadcast %cst_356 : f32 to vector<8x128xf32>
    %683 = arith.mulf %682, %681 : vector<8x128xf32>
    %cst_357 = arith.constant 5.000000e-01 : f32
    %684 = vector.broadcast %cst_357 : f32 to vector<8x128xf32>
    %685 = arith.addf %683, %684 : vector<8x128xf32>
    %686 = vector.extract_strided_slice %658 {offsets = [0, 256], sizes = [8, 128], strides = [1, 1]} : vector<8x512xf32> to vector<8x128xf32>
    %687 = math.tanh %686 : vector<8x128xf32>
    %688 = vector.extract_strided_slice %658 {offsets = [0, 384], sizes = [8, 128], strides = [1, 1]} : vector<8x512xf32> to vector<8x128xf32>
    %cst_358 = arith.constant 5.000000e-01 : f32
    %689 = vector.broadcast %cst_358 : f32 to vector<8x128xf32>
    %690 = arith.mulf %689, %688 : vector<8x128xf32>
    %691 = math.tanh %690 : vector<8x128xf32>
    %cst_359 = arith.constant 5.000000e-01 : f32
    %692 = vector.broadcast %cst_359 : f32 to vector<8x128xf32>
    %693 = arith.mulf %692, %691 : vector<8x128xf32>
    %cst_360 = arith.constant 5.000000e-01 : f32
    %694 = vector.broadcast %cst_360 : f32 to vector<8x128xf32>
    %695 = arith.addf %693, %694 : vector<8x128xf32>
    %696 = arith.mulf %685, %669 : vector<8x128xf32>
    %697 = arith.mulf %677, %687 : vector<8x128xf32>
    %698 = arith.addf %696, %697 : vector<8x128xf32>
    %699 = math.tanh %698 : vector<8x128xf32>
    %700 = arith.mulf %695, %699 : vector<8x128xf32>
    %c1_361 = arith.constant 1 : index
    %c0_362 = arith.constant 0 : index
    %c0_363 = arith.constant 0 : index
    %701 = vector.load %arg7[%c1_361, %c0_362, %c0_363] : memref<2x8x128xf32, #tpu.memory_space<vmem>>, vector<1x8x128xf32>
    %702 = vector.shape_cast %701 : vector<1x8x128xf32> to vector<8x128xf32>
    %703 = vector.extract_strided_slice %667 {offsets = [0, 0], sizes = [8, 128], strides = [1, 1]} : vector<8x512xf32> to vector<8x128xf32>
    %cst_364 = arith.constant 5.000000e-01 : f32
    %704 = vector.broadcast %cst_364 : f32 to vector<8x128xf32>
    %705 = arith.mulf %704, %703 : vector<8x128xf32>
    %706 = math.tanh %705 : vector<8x128xf32>
    %cst_365 = arith.constant 5.000000e-01 : f32
    %707 = vector.broadcast %cst_365 : f32 to vector<8x128xf32>
    %708 = arith.mulf %707, %706 : vector<8x128xf32>
    %cst_366 = arith.constant 5.000000e-01 : f32
    %709 = vector.broadcast %cst_366 : f32 to vector<8x128xf32>
    %710 = arith.addf %708, %709 : vector<8x128xf32>
    %711 = vector.extract_strided_slice %667 {offsets = [0, 128], sizes = [8, 128], strides = [1, 1]} : vector<8x512xf32> to vector<8x128xf32>
    %cst_367 = arith.constant 5.000000e-01 : f32
    %712 = vector.broadcast %cst_367 : f32 to vector<8x128xf32>
    %713 = arith.mulf %712, %711 : vector<8x128xf32>
    %714 = math.tanh %713 : vector<8x128xf32>
    %cst_368 = arith.constant 5.000000e-01 : f32
    %715 = vector.broadcast %cst_368 : f32 to vector<8x128xf32>
    %716 = arith.mulf %715, %714 : vector<8x128xf32>
    %cst_369 = arith.constant 5.000000e-01 : f32
    %717 = vector.broadcast %cst_369 : f32 to vector<8x128xf32>
    %718 = arith.addf %716, %717 : vector<8x128xf32>
    %719 = vector.extract_strided_slice %667 {offsets = [0, 256], sizes = [8, 128], strides = [1, 1]} : vector<8x512xf32> to vector<8x128xf32>
    %720 = math.tanh %719 : vector<8x128xf32>
    %721 = vector.extract_strided_slice %667 {offsets = [0, 384], sizes = [8, 128], strides = [1, 1]} : vector<8x512xf32> to vector<8x128xf32>
    %cst_370 = arith.constant 5.000000e-01 : f32
    %722 = vector.broadcast %cst_370 : f32 to vector<8x128xf32>
    %723 = arith.mulf %722, %721 : vector<8x128xf32>
    %724 = math.tanh %723 : vector<8x128xf32>
    %cst_371 = arith.constant 5.000000e-01 : f32
    %725 = vector.broadcast %cst_371 : f32 to vector<8x128xf32>
    %726 = arith.mulf %725, %724 : vector<8x128xf32>
    %cst_372 = arith.constant 5.000000e-01 : f32
    %727 = vector.broadcast %cst_372 : f32 to vector<8x128xf32>
    %728 = arith.addf %726, %727 : vector<8x128xf32>
    %729 = arith.mulf %718, %702 : vector<8x128xf32>
    %730 = arith.mulf %710, %720 : vector<8x128xf32>
    %731 = arith.addf %729, %730 : vector<8x128xf32>
    %732 = math.tanh %731 : vector<8x128xf32>
    %733 = arith.mulf %728, %732 : vector<8x128xf32>
    %c0_373 = arith.constant 0 : index
    %c0_374 = arith.constant 0 : index
    %c0_375 = arith.constant 0 : index
    %734 = vector.load %arg6[%c0_373, %c0_374, %c0_375] : memref<2x8x128xf32, #tpu.memory_space<vmem>>, vector<1x8x128xf32>
    %735 = vector.shape_cast %734 : vector<1x8x128xf32> to vector<8x128xf32>
    %736 = vector.shape_cast %700 : vector<8x128xf32> to vector<1x8x128xf32>
    tpu.vector_store %arg6[%c0_373, %c0_374, %c0_375], %736 {strides = array<i32>} : memref<2x8x128xf32, #tpu.memory_space<vmem>>, vector<1x8x128xf32>,
    %c0_376 = arith.constant 0 : index
    %c0_377 = arith.constant 0 : index
    %c0_378 = arith.constant 0 : index
    %737 = vector.load %arg7[%c0_376, %c0_377, %c0_378] : memref<2x8x128xf32, #tpu.memory_space<vmem>>, vector<1x8x128xf32>
    %738 = vector.shape_cast %737 : vector<1x8x128xf32> to vector<8x128xf32>
    %739 = vector.shape_cast %698 : vector<8x128xf32> to vector<1x8x128xf32>
    tpu.vector_store %arg7[%c0_376, %c0_377, %c0_378], %739 {strides = array<i32>} : memref<2x8x128xf32, #tpu.memory_space<vmem>>, vector<1x8x128xf32>,
    %c1_379 = arith.constant 1 : index
    %c0_380 = arith.constant 0 : index
    %c0_381 = arith.constant 0 : index
    %740 = vector.load %arg6[%c1_379, %c0_380, %c0_381] : memref<2x8x128xf32, #tpu.memory_space<vmem>>, vector<1x8x128xf32>
    %741 = vector.shape_cast %740 : vector<1x8x128xf32> to vector<8x128xf32>
    %742 = vector.shape_cast %733 : vector<8x128xf32> to vector<1x8x128xf32>
    tpu.vector_store %arg6[%c1_379, %c0_380, %c0_381], %742 {strides = array<i32>} : memref<2x8x128xf32, #tpu.memory_space<vmem>>, vector<1x8x128xf32>,
    %c1_382 = arith.constant 1 : index
    %c0_383 = arith.constant 0 : index
    %c0_384 = arith.constant 0 : index
    %743 = vector.load %arg7[%c1_382, %c0_383, %c0_384] : memref<2x8x128xf32, #tpu.memory_space<vmem>>, vector<1x8x128xf32>
    %744 = vector.shape_cast %743 : vector<1x8x128xf32> to vector<8x128xf32>
    %745 = vector.shape_cast %731 : vector<8x128xf32> to vector<1x8x128xf32>
    tpu.vector_store %arg7[%c1_382, %c0_383, %c0_384], %745 {strides = array<i32>} : memref<2x8x128xf32, #tpu.memory_space<vmem>>, vector<1x8x128xf32>,
    %746 = arith.truncf %700 : vector<8x128xf32> to vector<8x128xbf16>
    %747 = arith.index_cast %c6_i32 : i32 to index
    %c0_385 = arith.constant 0 : index
    %c0_386 = arith.constant 0 : index
    %748 = vector.load %arg4[%747, %c0_385, %c0_386] : memref<8x8x128xbf16, #tpu.memory_space<vmem>>, vector<1x8x128xbf16>
    %749 = vector.shape_cast %748 : vector<1x8x128xbf16> to vector<8x128xbf16>
    %750 = vector.shape_cast %746 : vector<8x128xbf16> to vector<1x8x128xbf16>
    tpu.vector_store %arg4[%747, %c0_385, %c0_386], %750 {strides = array<i32>} : memref<8x8x128xbf16, #tpu.memory_space<vmem>>, vector<1x8x128xbf16>,
    %751 = arith.truncf %733 : vector<8x128xf32> to vector<8x128xbf16>
    %752 = arith.index_cast %649 : i32 to index
    %c0_387 = arith.constant 0 : index
    %c0_388 = arith.constant 0 : index
    %753 = vector.load %arg5[%752, %c0_387, %c0_388] : memref<8x8x128xbf16, #tpu.memory_space<vmem>>, vector<1x8x128xbf16>
    %754 = vector.shape_cast %753 : vector<1x8x128xbf16> to vector<8x128xbf16>
    %755 = vector.shape_cast %751 : vector<8x128xbf16> to vector<1x8x128xbf16>
    tpu.vector_store %arg5[%752, %c0_387, %c0_388], %755 {strides = array<i32>} : memref<8x8x128xbf16, #tpu.memory_space<vmem>>, vector<1x8x128xbf16>,
    %c7_i32_389 = arith.constant 7 : i32
    %c7_i32_390 = arith.constant 7 : i32
    %756 = arith.subi %c7_i32_390, %c7_i32_389 : i32
    %c0_391 = arith.constant 0 : index
    %757 = arith.index_cast %c7_i32_389 : i32 to index
    %c0_392 = arith.constant 0 : index
    %c0_393 = arith.constant 0 : index
    %758 = vector.load %arg1[%c0_391, %757, %c0_392, %c0_393] : memref<1x8x8x512xbf16, #tpu.memory_space<vmem>>, vector<1x1x8x512xbf16>
    %759 = vector.shape_cast %758 : vector<1x1x8x512xbf16> to vector<8x512xbf16>
    %760 = arith.extf %759 : vector<8x512xbf16> to vector<8x512xf32>
    %c0_394 = arith.constant 0 : index
    %c0_395 = arith.constant 0 : index
    %c0_396 = arith.constant 0 : index
    %761 = vector.load %arg6[%c0_394, %c0_395, %c0_396] : memref<2x8x128xf32, #tpu.memory_space<vmem>>, vector<1x8x128xf32>
    %762 = vector.shape_cast %761 : vector<1x8x128xf32> to vector<8x128xf32>
    %763 = arith.truncf %762 : vector<8x128xf32> to vector<8x128xbf16>
    %cst_397 = arith.constant dense<0.000000e+00> : vector<8x512xf32>
    %764 = tpu.matmul %763, %4, %cst_397 {dimension_numbers = #tpu.dot_dimension_numbers<[1], [0], [0], [1], [0, 0, 1, 1], [], []>} : vector<8x128xbf16>, vector<128x512xbf16>, vector<8x512xf32> -> vector<8x512xf32>
    %765 = arith.addf %760, %764 : vector<8x512xf32>
    %c0_398 = arith.constant 0 : index
    %766 = arith.index_cast %756 : i32 to index
    %c0_399 = arith.constant 0 : index
    %c0_400 = arith.constant 0 : index
    %767 = vector.load %arg2[%c0_398, %766, %c0_399, %c0_400] : memref<1x8x8x512xbf16, #tpu.memory_space<vmem>>, vector<1x1x8x512xbf16>
    %768 = vector.shape_cast %767 : vector<1x1x8x512xbf16> to vector<8x512xbf16>
    %769 = arith.extf %768 : vector<8x512xbf16> to vector<8x512xf32>
    %c1_401 = arith.constant 1 : index
    %c0_402 = arith.constant 0 : index
    %c0_403 = arith.constant 0 : index
    %770 = vector.load %arg6[%c1_401, %c0_402, %c0_403] : memref<2x8x128xf32, #tpu.memory_space<vmem>>, vector<1x8x128xf32>
    %771 = vector.shape_cast %770 : vector<1x8x128xf32> to vector<8x128xf32>
    %772 = arith.truncf %771 : vector<8x128xf32> to vector<8x128xbf16>
    %cst_404 = arith.constant dense<0.000000e+00> : vector<8x512xf32>
    %773 = tpu.matmul %772, %6, %cst_404 {dimension_numbers = #tpu.dot_dimension_numbers<[1], [0], [0], [1], [0, 0, 1, 1], [], []>} : vector<8x128xbf16>, vector<128x512xbf16>, vector<8x512xf32> -> vector<8x512xf32>
    %774 = arith.addf %769, %773 : vector<8x512xf32>
    %c0_405 = arith.constant 0 : index
    %c0_406 = arith.constant 0 : index
    %c0_407 = arith.constant 0 : index
    %775 = vector.load %arg7[%c0_405, %c0_406, %c0_407] : memref<2x8x128xf32, #tpu.memory_space<vmem>>, vector<1x8x128xf32>
    %776 = vector.shape_cast %775 : vector<1x8x128xf32> to vector<8x128xf32>
    %777 = vector.extract_strided_slice %765 {offsets = [0, 0], sizes = [8, 128], strides = [1, 1]} : vector<8x512xf32> to vector<8x128xf32>
    %cst_408 = arith.constant 5.000000e-01 : f32
    %778 = vector.broadcast %cst_408 : f32 to vector<8x128xf32>
    %779 = arith.mulf %778, %777 : vector<8x128xf32>
    %780 = math.tanh %779 : vector<8x128xf32>
    %cst_409 = arith.constant 5.000000e-01 : f32
    %781 = vector.broadcast %cst_409 : f32 to vector<8x128xf32>
    %782 = arith.mulf %781, %780 : vector<8x128xf32>
    %cst_410 = arith.constant 5.000000e-01 : f32
    %783 = vector.broadcast %cst_410 : f32 to vector<8x128xf32>
    %784 = arith.addf %782, %783 : vector<8x128xf32>
    %785 = vector.extract_strided_slice %765 {offsets = [0, 128], sizes = [8, 128], strides = [1, 1]} : vector<8x512xf32> to vector<8x128xf32>
    %cst_411 = arith.constant 5.000000e-01 : f32
    %786 = vector.broadcast %cst_411 : f32 to vector<8x128xf32>
    %787 = arith.mulf %786, %785 : vector<8x128xf32>
    %788 = math.tanh %787 : vector<8x128xf32>
    %cst_412 = arith.constant 5.000000e-01 : f32
    %789 = vector.broadcast %cst_412 : f32 to vector<8x128xf32>
    %790 = arith.mulf %789, %788 : vector<8x128xf32>
    %cst_413 = arith.constant 5.000000e-01 : f32
    %791 = vector.broadcast %cst_413 : f32 to vector<8x128xf32>
    %792 = arith.addf %790, %791 : vector<8x128xf32>
    %793 = vector.extract_strided_slice %765 {offsets = [0, 256], sizes = [8, 128], strides = [1, 1]} : vector<8x512xf32> to vector<8x128xf32>
    %794 = math.tanh %793 : vector<8x128xf32>
    %795 = vector.extract_strided_slice %765 {offsets = [0, 384], sizes = [8, 128], strides = [1, 1]} : vector<8x512xf32> to vector<8x128xf32>
    %cst_414 = arith.constant 5.000000e-01 : f32
    %796 = vector.broadcast %cst_414 : f32 to vector<8x128xf32>
    %797 = arith.mulf %796, %795 : vector<8x128xf32>
    %798 = math.tanh %797 : vector<8x128xf32>
    %cst_415 = arith.constant 5.000000e-01 : f32
    %799 = vector.broadcast %cst_415 : f32 to vector<8x128xf32>
    %800 = arith.mulf %799, %798 : vector<8x128xf32>
    %cst_416 = arith.constant 5.000000e-01 : f32
    %801 = vector.broadcast %cst_416 : f32 to vector<8x128xf32>
    %802 = arith.addf %800, %801 : vector<8x128xf32>
    %803 = arith.mulf %792, %776 : vector<8x128xf32>
    %804 = arith.mulf %784, %794 : vector<8x128xf32>
    %805 = arith.addf %803, %804 : vector<8x128xf32>
    %806 = math.tanh %805 : vector<8x128xf32>
    %807 = arith.mulf %802, %806 : vector<8x128xf32>
    %c1_417 = arith.constant 1 : index
    %c0_418 = arith.constant 0 : index
    %c0_419 = arith.constant 0 : index
    %808 = vector.load %arg7[%c1_417, %c0_418, %c0_419] : memref<2x8x128xf32, #tpu.memory_space<vmem>>, vector<1x8x128xf32>
    %809 = vector.shape_cast %808 : vector<1x8x128xf32> to vector<8x128xf32>
    %810 = vector.extract_strided_slice %774 {offsets = [0, 0], sizes = [8, 128], strides = [1, 1]} : vector<8x512xf32> to vector<8x128xf32>
    %cst_420 = arith.constant 5.000000e-01 : f32
    %811 = vector.broadcast %cst_420 : f32 to vector<8x128xf32>
    %812 = arith.mulf %811, %810 : vector<8x128xf32>
    %813 = math.tanh %812 : vector<8x128xf32>
    %cst_421 = arith.constant 5.000000e-01 : f32
    %814 = vector.broadcast %cst_421 : f32 to vector<8x128xf32>
    %815 = arith.mulf %814, %813 : vector<8x128xf32>
    %cst_422 = arith.constant 5.000000e-01 : f32
    %816 = vector.broadcast %cst_422 : f32 to vector<8x128xf32>
    %817 = arith.addf %815, %816 : vector<8x128xf32>
    %818 = vector.extract_strided_slice %774 {offsets = [0, 128], sizes = [8, 128], strides = [1, 1]} : vector<8x512xf32> to vector<8x128xf32>
    %cst_423 = arith.constant 5.000000e-01 : f32
    %819 = vector.broadcast %cst_423 : f32 to vector<8x128xf32>
    %820 = arith.mulf %819, %818 : vector<8x128xf32>
    %821 = math.tanh %820 : vector<8x128xf32>
    %cst_424 = arith.constant 5.000000e-01 : f32
    %822 = vector.broadcast %cst_424 : f32 to vector<8x128xf32>
    %823 = arith.mulf %822, %821 : vector<8x128xf32>
    %cst_425 = arith.constant 5.000000e-01 : f32
    %824 = vector.broadcast %cst_425 : f32 to vector<8x128xf32>
    %825 = arith.addf %823, %824 : vector<8x128xf32>
    %826 = vector.extract_strided_slice %774 {offsets = [0, 256], sizes = [8, 128], strides = [1, 1]} : vector<8x512xf32> to vector<8x128xf32>
    %827 = math.tanh %826 : vector<8x128xf32>
    %828 = vector.extract_strided_slice %774 {offsets = [0, 384], sizes = [8, 128], strides = [1, 1]} : vector<8x512xf32> to vector<8x128xf32>
    %cst_426 = arith.constant 5.000000e-01 : f32
    %829 = vector.broadcast %cst_426 : f32 to vector<8x128xf32>
    %830 = arith.mulf %829, %828 : vector<8x128xf32>
    %831 = math.tanh %830 : vector<8x128xf32>
    %cst_427 = arith.constant 5.000000e-01 : f32
    %832 = vector.broadcast %cst_427 : f32 to vector<8x128xf32>
    %833 = arith.mulf %832, %831 : vector<8x128xf32>
    %cst_428 = arith.constant 5.000000e-01 : f32
    %834 = vector.broadcast %cst_428 : f32 to vector<8x128xf32>
    %835 = arith.addf %833, %834 : vector<8x128xf32>
    %836 = arith.mulf %825, %809 : vector<8x128xf32>
    %837 = arith.mulf %817, %827 : vector<8x128xf32>
    %838 = arith.addf %836, %837 : vector<8x128xf32>
    %839 = math.tanh %838 : vector<8x128xf32>
    %840 = arith.mulf %835, %839 : vector<8x128xf32>
    %c0_429 = arith.constant 0 : index
    %c0_430 = arith.constant 0 : index
    %c0_431 = arith.constant 0 : index
    %841 = vector.load %arg6[%c0_429, %c0_430, %c0_431] : memref<2x8x128xf32, #tpu.memory_space<vmem>>, vector<1x8x128xf32>
    %842 = vector.shape_cast %841 : vector<1x8x128xf32> to vector<8x128xf32>
    %843 = vector.shape_cast %807 : vector<8x128xf32> to vector<1x8x128xf32>
    tpu.vector_store %arg6[%c0_429, %c0_430, %c0_431], %843 {strides = array<i32>} : memref<2x8x128xf32, #tpu.memory_space<vmem>>, vector<1x8x128xf32>,
    %c0_432 = arith.constant 0 : index
    %c0_433 = arith.constant 0 : index
    %c0_434 = arith.constant 0 : index
    %844 = vector.load %arg7[%c0_432, %c0_433, %c0_434] : memref<2x8x128xf32, #tpu.memory_space<vmem>>, vector<1x8x128xf32>
    %845 = vector.shape_cast %844 : vector<1x8x128xf32> to vector<8x128xf32>
    %846 = vector.shape_cast %805 : vector<8x128xf32> to vector<1x8x128xf32>
    tpu.vector_store %arg7[%c0_432, %c0_433, %c0_434], %846 {strides = array<i32>} : memref<2x8x128xf32, #tpu.memory_space<vmem>>, vector<1x8x128xf32>,
    %c1_435 = arith.constant 1 : index
    %c0_436 = arith.constant 0 : index
    %c0_437 = arith.constant 0 : index
    %847 = vector.load %arg6[%c1_435, %c0_436, %c0_437] : memref<2x8x128xf32, #tpu.memory_space<vmem>>, vector<1x8x128xf32>
    %848 = vector.shape_cast %847 : vector<1x8x128xf32> to vector<8x128xf32>
    %849 = vector.shape_cast %840 : vector<8x128xf32> to vector<1x8x128xf32>
    tpu.vector_store %arg6[%c1_435, %c0_436, %c0_437], %849 {strides = array<i32>} : memref<2x8x128xf32, #tpu.memory_space<vmem>>, vector<1x8x128xf32>,
    %c1_438 = arith.constant 1 : index
    %c0_439 = arith.constant 0 : index
    %c0_440 = arith.constant 0 : index
    %850 = vector.load %arg7[%c1_438, %c0_439, %c0_440] : memref<2x8x128xf32, #tpu.memory_space<vmem>>, vector<1x8x128xf32>
    %851 = vector.shape_cast %850 : vector<1x8x128xf32> to vector<8x128xf32>
    %852 = vector.shape_cast %838 : vector<8x128xf32> to vector<1x8x128xf32>
    tpu.vector_store %arg7[%c1_438, %c0_439, %c0_440], %852 {strides = array<i32>} : memref<2x8x128xf32, #tpu.memory_space<vmem>>, vector<1x8x128xf32>,
    %853 = arith.truncf %807 : vector<8x128xf32> to vector<8x128xbf16>
    %854 = arith.index_cast %c7_i32_389 : i32 to index
    %c0_441 = arith.constant 0 : index
    %c0_442 = arith.constant 0 : index
    %855 = vector.load %arg4[%854, %c0_441, %c0_442] : memref<8x8x128xbf16, #tpu.memory_space<vmem>>, vector<1x8x128xbf16>
    %856 = vector.shape_cast %855 : vector<1x8x128xbf16> to vector<8x128xbf16>
    %857 = vector.shape_cast %853 : vector<8x128xbf16> to vector<1x8x128xbf16>
    tpu.vector_store %arg4[%854, %c0_441, %c0_442], %857 {strides = array<i32>} : memref<8x8x128xbf16, #tpu.memory_space<vmem>>, vector<1x8x128xbf16>,
    %858 = arith.truncf %840 : vector<8x128xf32> to vector<8x128xbf16>
    %859 = arith.index_cast %756 : i32 to index
    %c0_443 = arith.constant 0 : index
    %c0_444 = arith.constant 0 : index
    %860 = vector.load %arg5[%859, %c0_443, %c0_444] : memref<8x8x128xbf16, #tpu.memory_space<vmem>>, vector<1x8x128xbf16>
    %861 = vector.shape_cast %860 : vector<1x8x128xbf16> to vector<8x128xbf16>
    %862 = vector.shape_cast %858 : vector<8x128xbf16> to vector<1x8x128xbf16>
    tpu.vector_store %arg5[%859, %c0_443, %c0_444], %862 {strides = array<i32>} : memref<8x8x128xbf16, #tpu.memory_space<vmem>>, vector<1x8x128xbf16>,
    %c8_i32 = arith.constant 8 : i32
    return
  }
  func.func @transform_0(%arg0: i32) -> (i32, i32, i32, i32) {
    %c0_i32 = arith.constant 0 : i32
    %c0_i32_0 = arith.constant 0 : i32
    %c0_i32_1 = arith.constant 0 : i32
    %c0_i32_2 = arith.constant 0 : i32
    return %c0_i32, %arg0, %c0_i32_0, %c0_i32_1 : i32, i32, i32, i32
  }
  func.func @transform_1(%arg0: i32) -> (i32, i32, i32, i32) {
    %c0_i32 = arith.constant 0 : i32
    %0 = arith.subi %c0_i32, %arg0 : i32
    %c1_i32 = arith.constant 1 : i32
    %c0_i32_0 = arith.constant 0 : i32
    %c0_i32_1 = arith.constant 0 : i32
    %c0_i32_2 = arith.constant 0 : i32
    return %c1_i32, %0, %c0_i32_0, %c0_i32_1 : i32, i32, i32, i32
  }
  func.func @transform_2(%arg0: i32) -> (i32, i32, i32) {
    %c0_i32 = arith.constant 0 : i32
    %c0_i32_0 = arith.constant 0 : i32
    %c0_i32_1 = arith.constant 0 : i32
    %c0_i32_2 = arith.constant 0 : i32
    return %c0_i32, %c0_i32_0, %c0_i32_1 : i32, i32, i32
  }
  func.func @transform_3(%arg0: i32) -> (i32, i32, i32) {
    %c0_i32 = arith.constant 0 : i32
    %c0_i32_0 = arith.constant 0 : i32
    %c0_i32_1 = arith.constant 0 : i32
    return %arg0, %c0_i32, %c0_i32_0 : i32, i32, i32
  }
  func.func @transform_4(%arg0: i32) -> (i32, i32, i32) {
    %c0_i32 = arith.constant 0 : i32
    %0 = arith.subi %c0_i32, %arg0 : i32
    %c0_i32_0 = arith.constant 0 : i32
    %c0_i32_1 = arith.constant 0 : i32
    %c0_i32_2 = arith.constant 0 : i32
    return %0, %c0_i32_0, %c0_i32_1 : i32, i32, i32
  }
}

module attributes {stable_mosaic.version = 11 : i64} {
  func.func @_proj_dual_kernel(%arg0: i32, %arg1: i32, %arg2: memref<64x128xbf16, #tpu.memory_space<vmem>>, %arg3: memref<64x128xbf16, #tpu.memory_space<vmem>>, %arg4: memref<1x128x512xbf16, #tpu.memory_space<vmem>>, %arg5: memref<1x128x512xbf16, #tpu.memory_space<vmem>>, %arg6: memref<1x1x512xf32, #tpu.memory_space<vmem>>, %arg7: memref<1x64x512xbf16, #tpu.memory_space<vmem>>) attributes {dimension_semantics = [#tpu.dimension_semantics<parallel>, #tpu.dimension_semantics<parallel>], iteration_bounds = array<i64: 2, 1>, scalar_prefetch = 0 : i64, scratch_operands = 0 : i64, tpu.core_type = #tpu.core_type<tc>, window_params = [{transform_indices = @transform_0, window_bounds = array<i64: 64, 128>}, {transform_indices = @transform_1, window_bounds = array<i64: 64, 128>}, {transform_indices = @transform_2, window_bounds = array<i64: 1, 128, 512>}, {transform_indices = @transform_3, window_bounds = array<i64: 1, 128, 512>}, {transform_indices = @transform_4, window_bounds = array<i64: 1, 1, 512>}, {transform_indices = @transform_5, window_bounds = array<i64: 1, 64, 512>}]} {
    %c0 = arith.constant 0 : index
    %c0_0 = arith.constant 0 : index
    %0 = vector.load %arg2[%c0, %c0_0] : memref<64x128xbf16, #tpu.memory_space<vmem>>, vector<64x128xbf16>
    %c0_1 = arith.constant 0 : index
    %c0_2 = arith.constant 0 : index
    %c0_3 = arith.constant 0 : index
    %1 = vector.load %arg4[%c0_1, %c0_2, %c0_3] : memref<1x128x512xbf16, #tpu.memory_space<vmem>>, vector<1x128x512xbf16>
    %2 = vector.shape_cast %1 : vector<1x128x512xbf16> to vector<128x512xbf16>
    %cst = arith.constant dense<0.000000e+00> : vector<64x512xf32>
    %3 = tpu.matmul %0, %2, %cst {dimension_numbers = #tpu.dot_dimension_numbers<[1], [0], [0], [1], [0, 0, 1, 1], [], []>} : vector<64x128xbf16>, vector<128x512xbf16>, vector<64x512xf32> -> vector<64x512xf32>
    %c0_4 = arith.constant 0 : index
    %c0_5 = arith.constant 0 : index
    %4 = vector.load %arg3[%c0_4, %c0_5] : memref<64x128xbf16, #tpu.memory_space<vmem>>, vector<64x128xbf16>
    %c0_6 = arith.constant 0 : index
    %c0_7 = arith.constant 0 : index
    %c0_8 = arith.constant 0 : index
    %5 = vector.load %arg5[%c0_6, %c0_7, %c0_8] : memref<1x128x512xbf16, #tpu.memory_space<vmem>>, vector<1x128x512xbf16>
    %6 = vector.shape_cast %5 : vector<1x128x512xbf16> to vector<128x512xbf16>
    %cst_9 = arith.constant dense<0.000000e+00> : vector<64x512xf32>
    %7 = tpu.matmul %4, %6, %cst_9 {dimension_numbers = #tpu.dot_dimension_numbers<[1], [0], [0], [1], [0, 0, 1, 1], [], []>} : vector<64x128xbf16>, vector<128x512xbf16>, vector<64x512xf32> -> vector<64x512xf32>
    %8 = arith.addf %3, %7 : vector<64x512xf32>
    %c0_10 = arith.constant 0 : index
    %c0_11 = arith.constant 0 : index
    %c0_12 = arith.constant 0 : index
    %9 = vector.load %arg6[%c0_10, %c0_11, %c0_12] : memref<1x1x512xf32, #tpu.memory_space<vmem>>, vector<1x1x512xf32>
    %10 = vector.shape_cast %9 : vector<1x1x512xf32> to vector<1x512xf32>
    %11 = vector.broadcast %10 : vector<1x512xf32> to vector<64x512xf32>
    %12 = arith.addf %8, %11 : vector<64x512xf32>
    %13 = arith.truncf %12 : vector<64x512xf32> to vector<64x512xbf16>
    %c0_13 = arith.constant 0 : index
    %c0_14 = arith.constant 0 : index
    %c0_15 = arith.constant 0 : index
    %14 = vector.load %arg7[%c0_13, %c0_14, %c0_15] : memref<1x64x512xbf16, #tpu.memory_space<vmem>>, vector<1x64x512xbf16>
    %15 = vector.shape_cast %14 : vector<1x64x512xbf16> to vector<64x512xbf16>
    %16 = vector.shape_cast %13 : vector<64x512xbf16> to vector<1x64x512xbf16>
    tpu.vector_store %arg7[%c0_13, %c0_14, %c0_15], %16 {strides = array<i32>} : memref<1x64x512xbf16, #tpu.memory_space<vmem>>, vector<1x64x512xbf16>,
    return
  }
  func.func @transform_0(%arg0: i32, %arg1: i32) -> (i32, i32) {
    %c0_i32 = arith.constant 0 : i32
    %c0_i32_0 = arith.constant 0 : i32
    return %arg1, %c0_i32 : i32, i32
  }
  func.func @transform_1(%arg0: i32, %arg1: i32) -> (i32, i32) {
    %c0_i32 = arith.constant 0 : i32
    %c0_i32_0 = arith.constant 0 : i32
    return %arg1, %c0_i32 : i32, i32
  }
  func.func @transform_2(%arg0: i32, %arg1: i32) -> (i32, i32, i32) {
    %c0_i32 = arith.constant 0 : i32
    %c0_i32_0 = arith.constant 0 : i32
    %c0_i32_1 = arith.constant 0 : i32
    return %arg0, %c0_i32, %c0_i32_0 : i32, i32, i32
  }
  func.func @transform_3(%arg0: i32, %arg1: i32) -> (i32, i32, i32) {
    %c0_i32 = arith.constant 0 : i32
    %c0_i32_0 = arith.constant 0 : i32
    %c0_i32_1 = arith.constant 0 : i32
    return %arg0, %c0_i32, %c0_i32_0 : i32, i32, i32
  }
  func.func @transform_4(%arg0: i32, %arg1: i32) -> (i32, i32, i32) {
    %c0_i32 = arith.constant 0 : i32
    %c0_i32_0 = arith.constant 0 : i32
    %c0_i32_1 = arith.constant 0 : i32
    return %arg0, %c0_i32, %c0_i32_0 : i32, i32, i32
  }
  func.func @transform_5(%arg0: i32, %arg1: i32) -> (i32, i32, i32) {
    %c0_i32 = arith.constant 0 : i32
    %c0_i32_0 = arith.constant 0 : i32
    return %arg0, %arg1, %c0_i32 : i32, i32, i32
  }
}

module attributes {stable_mosaic.version = 11 : i64} {
  func.func @_lstm_recurrent_kernel(%arg0: i32, %arg1: memref<1x8x8x512xbf16, #tpu.memory_space<vmem>>, %arg2: memref<1x8x8x512xbf16, #tpu.memory_space<vmem>>, %arg3: memref<2x128x512xbf16, #tpu.memory_space<vmem>>, %arg4: memref<8x8x128xf32, #tpu.memory_space<vmem>>, %arg5: memref<8x8x128xf32, #tpu.memory_space<vmem>>, %arg6: memref<2x8x128xf32, #tpu.memory_space<vmem>>, %arg7: memref<2x8x128xf32, #tpu.memory_space<vmem>>) attributes {dimension_semantics = [#tpu.dimension_semantics<arbitrary>], iteration_bounds = array<i64: 1>, scalar_prefetch = 0 : i64, scratch_operands = 2 : i64, tpu.core_type = #tpu.core_type<tc>, window_params = [{transform_indices = @transform_0, window_bounds = array<i64: 1, 8, 8, 512>}, {transform_indices = @transform_1, window_bounds = array<i64: 1, 8, 8, 512>}, {pipeline_mode = #tpu.pipeline_mode<synchronous>, transform_indices = @transform_2, window_bounds = array<i64: 2, 128, 512>}, {transform_indices = @transform_3, window_bounds = array<i64: 8, 8, 128>}, {transform_indices = @transform_4, window_bounds = array<i64: 8, 8, 128>}]} {
    %c0_i32 = arith.constant 0 : i32
    %0 = arith.cmpi eq, %arg0, %c0_i32 : i32
    %1 = arith.extui %0 : i1 to i32
    %c0_i32_0 = arith.constant 0 : i32
    %2 = arith.cmpi ne, %1, %c0_i32_0 : i32
    scf.if %2 {
      %cst_445 = arith.constant 0.000000e+00 : f32
      %847 = vector.broadcast %cst_445 : f32 to vector<2x8x128xf32>
      %c0_446 = arith.constant 0 : index
      %c0_447 = arith.constant 0 : index
      %c0_448 = arith.constant 0 : index
      %848 = vector.load %arg6[%c0_446, %c0_447, %c0_448] : memref<2x8x128xf32, #tpu.memory_space<vmem>>, vector<2x8x128xf32>
      tpu.vector_store %arg6[%c0_446, %c0_447, %c0_448], %847 {strides = array<i32>} : memref<2x8x128xf32, #tpu.memory_space<vmem>>, vector<2x8x128xf32>,
      %cst_449 = arith.constant 0.000000e+00 : f32
      %849 = vector.broadcast %cst_449 : f32 to vector<2x8x128xf32>
      %c0_450 = arith.constant 0 : index
      %c0_451 = arith.constant 0 : index
      %c0_452 = arith.constant 0 : index
      %850 = vector.load %arg7[%c0_450, %c0_451, %c0_452] : memref<2x8x128xf32, #tpu.memory_space<vmem>>, vector<2x8x128xf32>
      tpu.vector_store %arg7[%c0_450, %c0_451, %c0_452], %849 {strides = array<i32>} : memref<2x8x128xf32, #tpu.memory_space<vmem>>, vector<2x8x128xf32>,
    } else {
    }
    %c0 = arith.constant 0 : index
    %c0_1 = arith.constant 0 : index
    %c0_2 = arith.constant 0 : index
    %3 = vector.load %arg3[%c0, %c0_1, %c0_2] : memref<2x128x512xbf16, #tpu.memory_space<vmem>>, vector<1x128x512xbf16>
    %4 = vector.shape_cast %3 : vector<1x128x512xbf16> to vector<128x512xbf16>
    %c1 = arith.constant 1 : index
    %c0_3 = arith.constant 0 : index
    %c0_4 = arith.constant 0 : index
    %5 = vector.load %arg3[%c1, %c0_3, %c0_4] : memref<2x128x512xbf16, #tpu.memory_space<vmem>>, vector<1x128x512xbf16>
    %6 = vector.shape_cast %5 : vector<1x128x512xbf16> to vector<128x512xbf16>
    %c0_i32_5 = arith.constant 0 : i32
    %c7_i32 = arith.constant 7 : i32
    %7 = arith.subi %c7_i32, %c0_i32_5 : i32
    %c0_6 = arith.constant 0 : index
    %8 = arith.index_cast %c0_i32_5 : i32 to index
    %c0_7 = arith.constant 0 : index
    %c0_8 = arith.constant 0 : index
    %9 = vector.load %arg1[%c0_6, %8, %c0_7, %c0_8] : memref<1x8x8x512xbf16, #tpu.memory_space<vmem>>, vector<1x1x8x512xbf16>
    %10 = vector.shape_cast %9 : vector<1x1x8x512xbf16> to vector<8x512xbf16>
    %11 = arith.extf %10 : vector<8x512xbf16> to vector<8x512xf32>
    %c0_9 = arith.constant 0 : index
    %c0_10 = arith.constant 0 : index
    %c0_11 = arith.constant 0 : index
    %12 = vector.load %arg6[%c0_9, %c0_10, %c0_11] : memref<2x8x128xf32, #tpu.memory_space<vmem>>, vector<1x8x128xf32>
    %13 = vector.shape_cast %12 : vector<1x8x128xf32> to vector<8x128xf32>
    %14 = arith.truncf %13 : vector<8x128xf32> to vector<8x128xbf16>
    %cst = arith.constant dense<0.000000e+00> : vector<8x512xf32>
    %15 = tpu.matmul %14, %4, %cst {dimension_numbers = #tpu.dot_dimension_numbers<[1], [0], [0], [1], [0, 0, 1, 1], [], []>} : vector<8x128xbf16>, vector<128x512xbf16>, vector<8x512xf32> -> vector<8x512xf32>
    %16 = arith.addf %11, %15 : vector<8x512xf32>
    %c0_12 = arith.constant 0 : index
    %17 = arith.index_cast %7 : i32 to index
    %c0_13 = arith.constant 0 : index
    %c0_14 = arith.constant 0 : index
    %18 = vector.load %arg2[%c0_12, %17, %c0_13, %c0_14] : memref<1x8x8x512xbf16, #tpu.memory_space<vmem>>, vector<1x1x8x512xbf16>
    %19 = vector.shape_cast %18 : vector<1x1x8x512xbf16> to vector<8x512xbf16>
    %20 = arith.extf %19 : vector<8x512xbf16> to vector<8x512xf32>
    %c1_15 = arith.constant 1 : index
    %c0_16 = arith.constant 0 : index
    %c0_17 = arith.constant 0 : index
    %21 = vector.load %arg6[%c1_15, %c0_16, %c0_17] : memref<2x8x128xf32, #tpu.memory_space<vmem>>, vector<1x8x128xf32>
    %22 = vector.shape_cast %21 : vector<1x8x128xf32> to vector<8x128xf32>
    %23 = arith.truncf %22 : vector<8x128xf32> to vector<8x128xbf16>
    %cst_18 = arith.constant dense<0.000000e+00> : vector<8x512xf32>
    %24 = tpu.matmul %23, %6, %cst_18 {dimension_numbers = #tpu.dot_dimension_numbers<[1], [0], [0], [1], [0, 0, 1, 1], [], []>} : vector<8x128xbf16>, vector<128x512xbf16>, vector<8x512xf32> -> vector<8x512xf32>
    %25 = arith.addf %20, %24 : vector<8x512xf32>
    %c0_19 = arith.constant 0 : index
    %c0_20 = arith.constant 0 : index
    %c0_21 = arith.constant 0 : index
    %26 = vector.load %arg7[%c0_19, %c0_20, %c0_21] : memref<2x8x128xf32, #tpu.memory_space<vmem>>, vector<1x8x128xf32>
    %27 = vector.shape_cast %26 : vector<1x8x128xf32> to vector<8x128xf32>
    %28 = vector.extract_strided_slice %16 {offsets = [0, 0], sizes = [8, 128], strides = [1, 1]} : vector<8x512xf32> to vector<8x128xf32>
    %cst_22 = arith.constant 5.000000e-01 : f32
    %29 = vector.broadcast %cst_22 : f32 to vector<8x128xf32>
    %30 = arith.mulf %29, %28 : vector<8x128xf32>
    %31 = math.tanh %30 : vector<8x128xf32>
    %cst_23 = arith.constant 5.000000e-01 : f32
    %32 = vector.broadcast %cst_23 : f32 to vector<8x128xf32>
    %33 = arith.mulf %32, %31 : vector<8x128xf32>
    %cst_24 = arith.constant 5.000000e-01 : f32
    %34 = vector.broadcast %cst_24 : f32 to vector<8x128xf32>
    %35 = arith.addf %33, %34 : vector<8x128xf32>
    %36 = vector.extract_strided_slice %16 {offsets = [0, 128], sizes = [8, 128], strides = [1, 1]} : vector<8x512xf32> to vector<8x128xf32>
    %cst_25 = arith.constant 5.000000e-01 : f32
    %37 = vector.broadcast %cst_25 : f32 to vector<8x128xf32>
    %38 = arith.mulf %37, %36 : vector<8x128xf32>
    %39 = math.tanh %38 : vector<8x128xf32>
    %cst_26 = arith.constant 5.000000e-01 : f32
    %40 = vector.broadcast %cst_26 : f32 to vector<8x128xf32>
    %41 = arith.mulf %40, %39 : vector<8x128xf32>
    %cst_27 = arith.constant 5.000000e-01 : f32
    %42 = vector.broadcast %cst_27 : f32 to vector<8x128xf32>
    %43 = arith.addf %41, %42 : vector<8x128xf32>
    %44 = vector.extract_strided_slice %16 {offsets = [0, 256], sizes = [8, 128], strides = [1, 1]} : vector<8x512xf32> to vector<8x128xf32>
    %45 = math.tanh %44 : vector<8x128xf32>
    %46 = vector.extract_strided_slice %16 {offsets = [0, 384], sizes = [8, 128], strides = [1, 1]} : vector<8x512xf32> to vector<8x128xf32>
    %cst_28 = arith.constant 5.000000e-01 : f32
    %47 = vector.broadcast %cst_28 : f32 to vector<8x128xf32>
    %48 = arith.mulf %47, %46 : vector<8x128xf32>
    %49 = math.tanh %48 : vector<8x128xf32>
    %cst_29 = arith.constant 5.000000e-01 : f32
    %50 = vector.broadcast %cst_29 : f32 to vector<8x128xf32>
    %51 = arith.mulf %50, %49 : vector<8x128xf32>
    %cst_30 = arith.constant 5.000000e-01 : f32
    %52 = vector.broadcast %cst_30 : f32 to vector<8x128xf32>
    %53 = arith.addf %51, %52 : vector<8x128xf32>
    %54 = arith.mulf %43, %27 : vector<8x128xf32>
    %55 = arith.mulf %35, %45 : vector<8x128xf32>
    %56 = arith.addf %54, %55 : vector<8x128xf32>
    %57 = math.tanh %56 : vector<8x128xf32>
    %58 = arith.mulf %53, %57 : vector<8x128xf32>
    %c1_31 = arith.constant 1 : index
    %c0_32 = arith.constant 0 : index
    %c0_33 = arith.constant 0 : index
    %59 = vector.load %arg7[%c1_31, %c0_32, %c0_33] : memref<2x8x128xf32, #tpu.memory_space<vmem>>, vector<1x8x128xf32>
    %60 = vector.shape_cast %59 : vector<1x8x128xf32> to vector<8x128xf32>
    %61 = vector.extract_strided_slice %25 {offsets = [0, 0], sizes = [8, 128], strides = [1, 1]} : vector<8x512xf32> to vector<8x128xf32>
    %cst_34 = arith.constant 5.000000e-01 : f32
    %62 = vector.broadcast %cst_34 : f32 to vector<8x128xf32>
    %63 = arith.mulf %62, %61 : vector<8x128xf32>
    %64 = math.tanh %63 : vector<8x128xf32>
    %cst_35 = arith.constant 5.000000e-01 : f32
    %65 = vector.broadcast %cst_35 : f32 to vector<8x128xf32>
    %66 = arith.mulf %65, %64 : vector<8x128xf32>
    %cst_36 = arith.constant 5.000000e-01 : f32
    %67 = vector.broadcast %cst_36 : f32 to vector<8x128xf32>
    %68 = arith.addf %66, %67 : vector<8x128xf32>
    %69 = vector.extract_strided_slice %25 {offsets = [0, 128], sizes = [8, 128], strides = [1, 1]} : vector<8x512xf32> to vector<8x128xf32>
    %cst_37 = arith.constant 5.000000e-01 : f32
    %70 = vector.broadcast %cst_37 : f32 to vector<8x128xf32>
    %71 = arith.mulf %70, %69 : vector<8x128xf32>
    %72 = math.tanh %71 : vector<8x128xf32>
    %cst_38 = arith.constant 5.000000e-01 : f32
    %73 = vector.broadcast %cst_38 : f32 to vector<8x128xf32>
    %74 = arith.mulf %73, %72 : vector<8x128xf32>
    %cst_39 = arith.constant 5.000000e-01 : f32
    %75 = vector.broadcast %cst_39 : f32 to vector<8x128xf32>
    %76 = arith.addf %74, %75 : vector<8x128xf32>
    %77 = vector.extract_strided_slice %25 {offsets = [0, 256], sizes = [8, 128], strides = [1, 1]} : vector<8x512xf32> to vector<8x128xf32>
    %78 = math.tanh %77 : vector<8x128xf32>
    %79 = vector.extract_strided_slice %25 {offsets = [0, 384], sizes = [8, 128], strides = [1, 1]} : vector<8x512xf32> to vector<8x128xf32>
    %cst_40 = arith.constant 5.000000e-01 : f32
    %80 = vector.broadcast %cst_40 : f32 to vector<8x128xf32>
    %81 = arith.mulf %80, %79 : vector<8x128xf32>
    %82 = math.tanh %81 : vector<8x128xf32>
    %cst_41 = arith.constant 5.000000e-01 : f32
    %83 = vector.broadcast %cst_41 : f32 to vector<8x128xf32>
    %84 = arith.mulf %83, %82 : vector<8x128xf32>
    %cst_42 = arith.constant 5.000000e-01 : f32
    %85 = vector.broadcast %cst_42 : f32 to vector<8x128xf32>
    %86 = arith.addf %84, %85 : vector<8x128xf32>
    %87 = arith.mulf %76, %60 : vector<8x128xf32>
    %88 = arith.mulf %68, %78 : vector<8x128xf32>
    %89 = arith.addf %87, %88 : vector<8x128xf32>
    %90 = math.tanh %89 : vector<8x128xf32>
    %91 = arith.mulf %86, %90 : vector<8x128xf32>
    %c0_43 = arith.constant 0 : index
    %c0_44 = arith.constant 0 : index
    %c0_45 = arith.constant 0 : index
    %92 = vector.load %arg6[%c0_43, %c0_44, %c0_45] : memref<2x8x128xf32, #tpu.memory_space<vmem>>, vector<1x8x128xf32>
    %93 = vector.shape_cast %92 : vector<1x8x128xf32> to vector<8x128xf32>
    %94 = vector.shape_cast %58 : vector<8x128xf32> to vector<1x8x128xf32>
    tpu.vector_store %arg6[%c0_43, %c0_44, %c0_45], %94 {strides = array<i32>} : memref<2x8x128xf32, #tpu.memory_space<vmem>>, vector<1x8x128xf32>,
    %c0_46 = arith.constant 0 : index
    %c0_47 = arith.constant 0 : index
    %c0_48 = arith.constant 0 : index
    %95 = vector.load %arg7[%c0_46, %c0_47, %c0_48] : memref<2x8x128xf32, #tpu.memory_space<vmem>>, vector<1x8x128xf32>
    %96 = vector.shape_cast %95 : vector<1x8x128xf32> to vector<8x128xf32>
    %97 = vector.shape_cast %56 : vector<8x128xf32> to vector<1x8x128xf32>
    tpu.vector_store %arg7[%c0_46, %c0_47, %c0_48], %97 {strides = array<i32>} : memref<2x8x128xf32, #tpu.memory_space<vmem>>, vector<1x8x128xf32>,
    %c1_49 = arith.constant 1 : index
    %c0_50 = arith.constant 0 : index
    %c0_51 = arith.constant 0 : index
    %98 = vector.load %arg6[%c1_49, %c0_50, %c0_51] : memref<2x8x128xf32, #tpu.memory_space<vmem>>, vector<1x8x128xf32>
    %99 = vector.shape_cast %98 : vector<1x8x128xf32> to vector<8x128xf32>
    %100 = vector.shape_cast %91 : vector<8x128xf32> to vector<1x8x128xf32>
    tpu.vector_store %arg6[%c1_49, %c0_50, %c0_51], %100 {strides = array<i32>} : memref<2x8x128xf32, #tpu.memory_space<vmem>>, vector<1x8x128xf32>,
    %c1_52 = arith.constant 1 : index
    %c0_53 = arith.constant 0 : index
    %c0_54 = arith.constant 0 : index
    %101 = vector.load %arg7[%c1_52, %c0_53, %c0_54] : memref<2x8x128xf32, #tpu.memory_space<vmem>>, vector<1x8x128xf32>
    %102 = vector.shape_cast %101 : vector<1x8x128xf32> to vector<8x128xf32>
    %103 = vector.shape_cast %89 : vector<8x128xf32> to vector<1x8x128xf32>
    tpu.vector_store %arg7[%c1_52, %c0_53, %c0_54], %103 {strides = array<i32>} : memref<2x8x128xf32, #tpu.memory_space<vmem>>, vector<1x8x128xf32>,
    %104 = arith.index_cast %c0_i32_5 : i32 to index
    %c0_55 = arith.constant 0 : index
    %c0_56 = arith.constant 0 : index
    %105 = vector.load %arg4[%104, %c0_55, %c0_56] : memref<8x8x128xf32, #tpu.memory_space<vmem>>, vector<1x8x128xf32>
    %106 = vector.shape_cast %105 : vector<1x8x128xf32> to vector<8x128xf32>
    %107 = vector.shape_cast %58 : vector<8x128xf32> to vector<1x8x128xf32>
    tpu.vector_store %arg4[%104, %c0_55, %c0_56], %107 {strides = array<i32>} : memref<8x8x128xf32, #tpu.memory_space<vmem>>, vector<1x8x128xf32>,
    %108 = arith.index_cast %7 : i32 to index
    %c0_57 = arith.constant 0 : index
    %c0_58 = arith.constant 0 : index
    %109 = vector.load %arg5[%108, %c0_57, %c0_58] : memref<8x8x128xf32, #tpu.memory_space<vmem>>, vector<1x8x128xf32>
    %110 = vector.shape_cast %109 : vector<1x8x128xf32> to vector<8x128xf32>
    %111 = vector.shape_cast %91 : vector<8x128xf32> to vector<1x8x128xf32>
    tpu.vector_store %arg5[%108, %c0_57, %c0_58], %111 {strides = array<i32>} : memref<8x8x128xf32, #tpu.memory_space<vmem>>, vector<1x8x128xf32>,
    %c1_i32 = arith.constant 1 : i32
    %c7_i32_59 = arith.constant 7 : i32
    %112 = arith.subi %c7_i32_59, %c1_i32 : i32
    %c0_60 = arith.constant 0 : index
    %113 = arith.index_cast %c1_i32 : i32 to index
    %c0_61 = arith.constant 0 : index
    %c0_62 = arith.constant 0 : index
    %114 = vector.load %arg1[%c0_60, %113, %c0_61, %c0_62] : memref<1x8x8x512xbf16, #tpu.memory_space<vmem>>, vector<1x1x8x512xbf16>
    %115 = vector.shape_cast %114 : vector<1x1x8x512xbf16> to vector<8x512xbf16>
    %116 = arith.extf %115 : vector<8x512xbf16> to vector<8x512xf32>
    %c0_63 = arith.constant 0 : index
    %c0_64 = arith.constant 0 : index
    %c0_65 = arith.constant 0 : index
    %117 = vector.load %arg6[%c0_63, %c0_64, %c0_65] : memref<2x8x128xf32, #tpu.memory_space<vmem>>, vector<1x8x128xf32>
    %118 = vector.shape_cast %117 : vector<1x8x128xf32> to vector<8x128xf32>
    %119 = arith.truncf %118 : vector<8x128xf32> to vector<8x128xbf16>
    %cst_66 = arith.constant dense<0.000000e+00> : vector<8x512xf32>
    %120 = tpu.matmul %119, %4, %cst_66 {dimension_numbers = #tpu.dot_dimension_numbers<[1], [0], [0], [1], [0, 0, 1, 1], [], []>} : vector<8x128xbf16>, vector<128x512xbf16>, vector<8x512xf32> -> vector<8x512xf32>
    %121 = arith.addf %116, %120 : vector<8x512xf32>
    %c0_67 = arith.constant 0 : index
    %122 = arith.index_cast %112 : i32 to index
    %c0_68 = arith.constant 0 : index
    %c0_69 = arith.constant 0 : index
    %123 = vector.load %arg2[%c0_67, %122, %c0_68, %c0_69] : memref<1x8x8x512xbf16, #tpu.memory_space<vmem>>, vector<1x1x8x512xbf16>
    %124 = vector.shape_cast %123 : vector<1x1x8x512xbf16> to vector<8x512xbf16>
    %125 = arith.extf %124 : vector<8x512xbf16> to vector<8x512xf32>
    %c1_70 = arith.constant 1 : index
    %c0_71 = arith.constant 0 : index
    %c0_72 = arith.constant 0 : index
    %126 = vector.load %arg6[%c1_70, %c0_71, %c0_72] : memref<2x8x128xf32, #tpu.memory_space<vmem>>, vector<1x8x128xf32>
    %127 = vector.shape_cast %126 : vector<1x8x128xf32> to vector<8x128xf32>
    %128 = arith.truncf %127 : vector<8x128xf32> to vector<8x128xbf16>
    %cst_73 = arith.constant dense<0.000000e+00> : vector<8x512xf32>
    %129 = tpu.matmul %128, %6, %cst_73 {dimension_numbers = #tpu.dot_dimension_numbers<[1], [0], [0], [1], [0, 0, 1, 1], [], []>} : vector<8x128xbf16>, vector<128x512xbf16>, vector<8x512xf32> -> vector<8x512xf32>
    %130 = arith.addf %125, %129 : vector<8x512xf32>
    %c0_74 = arith.constant 0 : index
    %c0_75 = arith.constant 0 : index
    %c0_76 = arith.constant 0 : index
    %131 = vector.load %arg7[%c0_74, %c0_75, %c0_76] : memref<2x8x128xf32, #tpu.memory_space<vmem>>, vector<1x8x128xf32>
    %132 = vector.shape_cast %131 : vector<1x8x128xf32> to vector<8x128xf32>
    %133 = vector.extract_strided_slice %121 {offsets = [0, 0], sizes = [8, 128], strides = [1, 1]} : vector<8x512xf32> to vector<8x128xf32>
    %cst_77 = arith.constant 5.000000e-01 : f32
    %134 = vector.broadcast %cst_77 : f32 to vector<8x128xf32>
    %135 = arith.mulf %134, %133 : vector<8x128xf32>
    %136 = math.tanh %135 : vector<8x128xf32>
    %cst_78 = arith.constant 5.000000e-01 : f32
    %137 = vector.broadcast %cst_78 : f32 to vector<8x128xf32>
    %138 = arith.mulf %137, %136 : vector<8x128xf32>
    %cst_79 = arith.constant 5.000000e-01 : f32
    %139 = vector.broadcast %cst_79 : f32 to vector<8x128xf32>
    %140 = arith.addf %138, %139 : vector<8x128xf32>
    %141 = vector.extract_strided_slice %121 {offsets = [0, 128], sizes = [8, 128], strides = [1, 1]} : vector<8x512xf32> to vector<8x128xf32>
    %cst_80 = arith.constant 5.000000e-01 : f32
    %142 = vector.broadcast %cst_80 : f32 to vector<8x128xf32>
    %143 = arith.mulf %142, %141 : vector<8x128xf32>
    %144 = math.tanh %143 : vector<8x128xf32>
    %cst_81 = arith.constant 5.000000e-01 : f32
    %145 = vector.broadcast %cst_81 : f32 to vector<8x128xf32>
    %146 = arith.mulf %145, %144 : vector<8x128xf32>
    %cst_82 = arith.constant 5.000000e-01 : f32
    %147 = vector.broadcast %cst_82 : f32 to vector<8x128xf32>
    %148 = arith.addf %146, %147 : vector<8x128xf32>
    %149 = vector.extract_strided_slice %121 {offsets = [0, 256], sizes = [8, 128], strides = [1, 1]} : vector<8x512xf32> to vector<8x128xf32>
    %150 = math.tanh %149 : vector<8x128xf32>
    %151 = vector.extract_strided_slice %121 {offsets = [0, 384], sizes = [8, 128], strides = [1, 1]} : vector<8x512xf32> to vector<8x128xf32>
    %cst_83 = arith.constant 5.000000e-01 : f32
    %152 = vector.broadcast %cst_83 : f32 to vector<8x128xf32>
    %153 = arith.mulf %152, %151 : vector<8x128xf32>
    %154 = math.tanh %153 : vector<8x128xf32>
    %cst_84 = arith.constant 5.000000e-01 : f32
    %155 = vector.broadcast %cst_84 : f32 to vector<8x128xf32>
    %156 = arith.mulf %155, %154 : vector<8x128xf32>
    %cst_85 = arith.constant 5.000000e-01 : f32
    %157 = vector.broadcast %cst_85 : f32 to vector<8x128xf32>
    %158 = arith.addf %156, %157 : vector<8x128xf32>
    %159 = arith.mulf %148, %132 : vector<8x128xf32>
    %160 = arith.mulf %140, %150 : vector<8x128xf32>
    %161 = arith.addf %159, %160 : vector<8x128xf32>
    %162 = math.tanh %161 : vector<8x128xf32>
    %163 = arith.mulf %158, %162 : vector<8x128xf32>
    %c1_86 = arith.constant 1 : index
    %c0_87 = arith.constant 0 : index
    %c0_88 = arith.constant 0 : index
    %164 = vector.load %arg7[%c1_86, %c0_87, %c0_88] : memref<2x8x128xf32, #tpu.memory_space<vmem>>, vector<1x8x128xf32>
    %165 = vector.shape_cast %164 : vector<1x8x128xf32> to vector<8x128xf32>
    %166 = vector.extract_strided_slice %130 {offsets = [0, 0], sizes = [8, 128], strides = [1, 1]} : vector<8x512xf32> to vector<8x128xf32>
    %cst_89 = arith.constant 5.000000e-01 : f32
    %167 = vector.broadcast %cst_89 : f32 to vector<8x128xf32>
    %168 = arith.mulf %167, %166 : vector<8x128xf32>
    %169 = math.tanh %168 : vector<8x128xf32>
    %cst_90 = arith.constant 5.000000e-01 : f32
    %170 = vector.broadcast %cst_90 : f32 to vector<8x128xf32>
    %171 = arith.mulf %170, %169 : vector<8x128xf32>
    %cst_91 = arith.constant 5.000000e-01 : f32
    %172 = vector.broadcast %cst_91 : f32 to vector<8x128xf32>
    %173 = arith.addf %171, %172 : vector<8x128xf32>
    %174 = vector.extract_strided_slice %130 {offsets = [0, 128], sizes = [8, 128], strides = [1, 1]} : vector<8x512xf32> to vector<8x128xf32>
    %cst_92 = arith.constant 5.000000e-01 : f32
    %175 = vector.broadcast %cst_92 : f32 to vector<8x128xf32>
    %176 = arith.mulf %175, %174 : vector<8x128xf32>
    %177 = math.tanh %176 : vector<8x128xf32>
    %cst_93 = arith.constant 5.000000e-01 : f32
    %178 = vector.broadcast %cst_93 : f32 to vector<8x128xf32>
    %179 = arith.mulf %178, %177 : vector<8x128xf32>
    %cst_94 = arith.constant 5.000000e-01 : f32
    %180 = vector.broadcast %cst_94 : f32 to vector<8x128xf32>
    %181 = arith.addf %179, %180 : vector<8x128xf32>
    %182 = vector.extract_strided_slice %130 {offsets = [0, 256], sizes = [8, 128], strides = [1, 1]} : vector<8x512xf32> to vector<8x128xf32>
    %183 = math.tanh %182 : vector<8x128xf32>
    %184 = vector.extract_strided_slice %130 {offsets = [0, 384], sizes = [8, 128], strides = [1, 1]} : vector<8x512xf32> to vector<8x128xf32>
    %cst_95 = arith.constant 5.000000e-01 : f32
    %185 = vector.broadcast %cst_95 : f32 to vector<8x128xf32>
    %186 = arith.mulf %185, %184 : vector<8x128xf32>
    %187 = math.tanh %186 : vector<8x128xf32>
    %cst_96 = arith.constant 5.000000e-01 : f32
    %188 = vector.broadcast %cst_96 : f32 to vector<8x128xf32>
    %189 = arith.mulf %188, %187 : vector<8x128xf32>
    %cst_97 = arith.constant 5.000000e-01 : f32
    %190 = vector.broadcast %cst_97 : f32 to vector<8x128xf32>
    %191 = arith.addf %189, %190 : vector<8x128xf32>
    %192 = arith.mulf %181, %165 : vector<8x128xf32>
    %193 = arith.mulf %173, %183 : vector<8x128xf32>
    %194 = arith.addf %192, %193 : vector<8x128xf32>
    %195 = math.tanh %194 : vector<8x128xf32>
    %196 = arith.mulf %191, %195 : vector<8x128xf32>
    %c0_98 = arith.constant 0 : index
    %c0_99 = arith.constant 0 : index
    %c0_100 = arith.constant 0 : index
    %197 = vector.load %arg6[%c0_98, %c0_99, %c0_100] : memref<2x8x128xf32, #tpu.memory_space<vmem>>, vector<1x8x128xf32>
    %198 = vector.shape_cast %197 : vector<1x8x128xf32> to vector<8x128xf32>
    %199 = vector.shape_cast %163 : vector<8x128xf32> to vector<1x8x128xf32>
    tpu.vector_store %arg6[%c0_98, %c0_99, %c0_100], %199 {strides = array<i32>} : memref<2x8x128xf32, #tpu.memory_space<vmem>>, vector<1x8x128xf32>,
    %c0_101 = arith.constant 0 : index
    %c0_102 = arith.constant 0 : index
    %c0_103 = arith.constant 0 : index
    %200 = vector.load %arg7[%c0_101, %c0_102, %c0_103] : memref<2x8x128xf32, #tpu.memory_space<vmem>>, vector<1x8x128xf32>
    %201 = vector.shape_cast %200 : vector<1x8x128xf32> to vector<8x128xf32>
    %202 = vector.shape_cast %161 : vector<8x128xf32> to vector<1x8x128xf32>
    tpu.vector_store %arg7[%c0_101, %c0_102, %c0_103], %202 {strides = array<i32>} : memref<2x8x128xf32, #tpu.memory_space<vmem>>, vector<1x8x128xf32>,
    %c1_104 = arith.constant 1 : index
    %c0_105 = arith.constant 0 : index
    %c0_106 = arith.constant 0 : index
    %203 = vector.load %arg6[%c1_104, %c0_105, %c0_106] : memref<2x8x128xf32, #tpu.memory_space<vmem>>, vector<1x8x128xf32>
    %204 = vector.shape_cast %203 : vector<1x8x128xf32> to vector<8x128xf32>
    %205 = vector.shape_cast %196 : vector<8x128xf32> to vector<1x8x128xf32>
    tpu.vector_store %arg6[%c1_104, %c0_105, %c0_106], %205 {strides = array<i32>} : memref<2x8x128xf32, #tpu.memory_space<vmem>>, vector<1x8x128xf32>,
    %c1_107 = arith.constant 1 : index
    %c0_108 = arith.constant 0 : index
    %c0_109 = arith.constant 0 : index
    %206 = vector.load %arg7[%c1_107, %c0_108, %c0_109] : memref<2x8x128xf32, #tpu.memory_space<vmem>>, vector<1x8x128xf32>
    %207 = vector.shape_cast %206 : vector<1x8x128xf32> to vector<8x128xf32>
    %208 = vector.shape_cast %194 : vector<8x128xf32> to vector<1x8x128xf32>
    tpu.vector_store %arg7[%c1_107, %c0_108, %c0_109], %208 {strides = array<i32>} : memref<2x8x128xf32, #tpu.memory_space<vmem>>, vector<1x8x128xf32>,
    %209 = arith.index_cast %c1_i32 : i32 to index
    %c0_110 = arith.constant 0 : index
    %c0_111 = arith.constant 0 : index
    %210 = vector.load %arg4[%209, %c0_110, %c0_111] : memref<8x8x128xf32, #tpu.memory_space<vmem>>, vector<1x8x128xf32>
    %211 = vector.shape_cast %210 : vector<1x8x128xf32> to vector<8x128xf32>
    %212 = vector.shape_cast %163 : vector<8x128xf32> to vector<1x8x128xf32>
    tpu.vector_store %arg4[%209, %c0_110, %c0_111], %212 {strides = array<i32>} : memref<8x8x128xf32, #tpu.memory_space<vmem>>, vector<1x8x128xf32>,
    %213 = arith.index_cast %112 : i32 to index
    %c0_112 = arith.constant 0 : index
    %c0_113 = arith.constant 0 : index
    %214 = vector.load %arg5[%213, %c0_112, %c0_113] : memref<8x8x128xf32, #tpu.memory_space<vmem>>, vector<1x8x128xf32>
    %215 = vector.shape_cast %214 : vector<1x8x128xf32> to vector<8x128xf32>
    %216 = vector.shape_cast %196 : vector<8x128xf32> to vector<1x8x128xf32>
    tpu.vector_store %arg5[%213, %c0_112, %c0_113], %216 {strides = array<i32>} : memref<8x8x128xf32, #tpu.memory_space<vmem>>, vector<1x8x128xf32>,
    %c2_i32 = arith.constant 2 : i32
    %c7_i32_114 = arith.constant 7 : i32
    %217 = arith.subi %c7_i32_114, %c2_i32 : i32
    %c0_115 = arith.constant 0 : index
    %218 = arith.index_cast %c2_i32 : i32 to index
    %c0_116 = arith.constant 0 : index
    %c0_117 = arith.constant 0 : index
    %219 = vector.load %arg1[%c0_115, %218, %c0_116, %c0_117] : memref<1x8x8x512xbf16, #tpu.memory_space<vmem>>, vector<1x1x8x512xbf16>
    %220 = vector.shape_cast %219 : vector<1x1x8x512xbf16> to vector<8x512xbf16>
    %221 = arith.extf %220 : vector<8x512xbf16> to vector<8x512xf32>
    %c0_118 = arith.constant 0 : index
    %c0_119 = arith.constant 0 : index
    %c0_120 = arith.constant 0 : index
    %222 = vector.load %arg6[%c0_118, %c0_119, %c0_120] : memref<2x8x128xf32, #tpu.memory_space<vmem>>, vector<1x8x128xf32>
    %223 = vector.shape_cast %222 : vector<1x8x128xf32> to vector<8x128xf32>
    %224 = arith.truncf %223 : vector<8x128xf32> to vector<8x128xbf16>
    %cst_121 = arith.constant dense<0.000000e+00> : vector<8x512xf32>
    %225 = tpu.matmul %224, %4, %cst_121 {dimension_numbers = #tpu.dot_dimension_numbers<[1], [0], [0], [1], [0, 0, 1, 1], [], []>} : vector<8x128xbf16>, vector<128x512xbf16>, vector<8x512xf32> -> vector<8x512xf32>
    %226 = arith.addf %221, %225 : vector<8x512xf32>
    %c0_122 = arith.constant 0 : index
    %227 = arith.index_cast %217 : i32 to index
    %c0_123 = arith.constant 0 : index
    %c0_124 = arith.constant 0 : index
    %228 = vector.load %arg2[%c0_122, %227, %c0_123, %c0_124] : memref<1x8x8x512xbf16, #tpu.memory_space<vmem>>, vector<1x1x8x512xbf16>
    %229 = vector.shape_cast %228 : vector<1x1x8x512xbf16> to vector<8x512xbf16>
    %230 = arith.extf %229 : vector<8x512xbf16> to vector<8x512xf32>
    %c1_125 = arith.constant 1 : index
    %c0_126 = arith.constant 0 : index
    %c0_127 = arith.constant 0 : index
    %231 = vector.load %arg6[%c1_125, %c0_126, %c0_127] : memref<2x8x128xf32, #tpu.memory_space<vmem>>, vector<1x8x128xf32>
    %232 = vector.shape_cast %231 : vector<1x8x128xf32> to vector<8x128xf32>
    %233 = arith.truncf %232 : vector<8x128xf32> to vector<8x128xbf16>
    %cst_128 = arith.constant dense<0.000000e+00> : vector<8x512xf32>
    %234 = tpu.matmul %233, %6, %cst_128 {dimension_numbers = #tpu.dot_dimension_numbers<[1], [0], [0], [1], [0, 0, 1, 1], [], []>} : vector<8x128xbf16>, vector<128x512xbf16>, vector<8x512xf32> -> vector<8x512xf32>
    %235 = arith.addf %230, %234 : vector<8x512xf32>
    %c0_129 = arith.constant 0 : index
    %c0_130 = arith.constant 0 : index
    %c0_131 = arith.constant 0 : index
    %236 = vector.load %arg7[%c0_129, %c0_130, %c0_131] : memref<2x8x128xf32, #tpu.memory_space<vmem>>, vector<1x8x128xf32>
    %237 = vector.shape_cast %236 : vector<1x8x128xf32> to vector<8x128xf32>
    %238 = vector.extract_strided_slice %226 {offsets = [0, 0], sizes = [8, 128], strides = [1, 1]} : vector<8x512xf32> to vector<8x128xf32>
    %cst_132 = arith.constant 5.000000e-01 : f32
    %239 = vector.broadcast %cst_132 : f32 to vector<8x128xf32>
    %240 = arith.mulf %239, %238 : vector<8x128xf32>
    %241 = math.tanh %240 : vector<8x128xf32>
    %cst_133 = arith.constant 5.000000e-01 : f32
    %242 = vector.broadcast %cst_133 : f32 to vector<8x128xf32>
    %243 = arith.mulf %242, %241 : vector<8x128xf32>
    %cst_134 = arith.constant 5.000000e-01 : f32
    %244 = vector.broadcast %cst_134 : f32 to vector<8x128xf32>
    %245 = arith.addf %243, %244 : vector<8x128xf32>
    %246 = vector.extract_strided_slice %226 {offsets = [0, 128], sizes = [8, 128], strides = [1, 1]} : vector<8x512xf32> to vector<8x128xf32>
    %cst_135 = arith.constant 5.000000e-01 : f32
    %247 = vector.broadcast %cst_135 : f32 to vector<8x128xf32>
    %248 = arith.mulf %247, %246 : vector<8x128xf32>
    %249 = math.tanh %248 : vector<8x128xf32>
    %cst_136 = arith.constant 5.000000e-01 : f32
    %250 = vector.broadcast %cst_136 : f32 to vector<8x128xf32>
    %251 = arith.mulf %250, %249 : vector<8x128xf32>
    %cst_137 = arith.constant 5.000000e-01 : f32
    %252 = vector.broadcast %cst_137 : f32 to vector<8x128xf32>
    %253 = arith.addf %251, %252 : vector<8x128xf32>
    %254 = vector.extract_strided_slice %226 {offsets = [0, 256], sizes = [8, 128], strides = [1, 1]} : vector<8x512xf32> to vector<8x128xf32>
    %255 = math.tanh %254 : vector<8x128xf32>
    %256 = vector.extract_strided_slice %226 {offsets = [0, 384], sizes = [8, 128], strides = [1, 1]} : vector<8x512xf32> to vector<8x128xf32>
    %cst_138 = arith.constant 5.000000e-01 : f32
    %257 = vector.broadcast %cst_138 : f32 to vector<8x128xf32>
    %258 = arith.mulf %257, %256 : vector<8x128xf32>
    %259 = math.tanh %258 : vector<8x128xf32>
    %cst_139 = arith.constant 5.000000e-01 : f32
    %260 = vector.broadcast %cst_139 : f32 to vector<8x128xf32>
    %261 = arith.mulf %260, %259 : vector<8x128xf32>
    %cst_140 = arith.constant 5.000000e-01 : f32
    %262 = vector.broadcast %cst_140 : f32 to vector<8x128xf32>
    %263 = arith.addf %261, %262 : vector<8x128xf32>
    %264 = arith.mulf %253, %237 : vector<8x128xf32>
    %265 = arith.mulf %245, %255 : vector<8x128xf32>
    %266 = arith.addf %264, %265 : vector<8x128xf32>
    %267 = math.tanh %266 : vector<8x128xf32>
    %268 = arith.mulf %263, %267 : vector<8x128xf32>
    %c1_141 = arith.constant 1 : index
    %c0_142 = arith.constant 0 : index
    %c0_143 = arith.constant 0 : index
    %269 = vector.load %arg7[%c1_141, %c0_142, %c0_143] : memref<2x8x128xf32, #tpu.memory_space<vmem>>, vector<1x8x128xf32>
    %270 = vector.shape_cast %269 : vector<1x8x128xf32> to vector<8x128xf32>
    %271 = vector.extract_strided_slice %235 {offsets = [0, 0], sizes = [8, 128], strides = [1, 1]} : vector<8x512xf32> to vector<8x128xf32>
    %cst_144 = arith.constant 5.000000e-01 : f32
    %272 = vector.broadcast %cst_144 : f32 to vector<8x128xf32>
    %273 = arith.mulf %272, %271 : vector<8x128xf32>
    %274 = math.tanh %273 : vector<8x128xf32>
    %cst_145 = arith.constant 5.000000e-01 : f32
    %275 = vector.broadcast %cst_145 : f32 to vector<8x128xf32>
    %276 = arith.mulf %275, %274 : vector<8x128xf32>
    %cst_146 = arith.constant 5.000000e-01 : f32
    %277 = vector.broadcast %cst_146 : f32 to vector<8x128xf32>
    %278 = arith.addf %276, %277 : vector<8x128xf32>
    %279 = vector.extract_strided_slice %235 {offsets = [0, 128], sizes = [8, 128], strides = [1, 1]} : vector<8x512xf32> to vector<8x128xf32>
    %cst_147 = arith.constant 5.000000e-01 : f32
    %280 = vector.broadcast %cst_147 : f32 to vector<8x128xf32>
    %281 = arith.mulf %280, %279 : vector<8x128xf32>
    %282 = math.tanh %281 : vector<8x128xf32>
    %cst_148 = arith.constant 5.000000e-01 : f32
    %283 = vector.broadcast %cst_148 : f32 to vector<8x128xf32>
    %284 = arith.mulf %283, %282 : vector<8x128xf32>
    %cst_149 = arith.constant 5.000000e-01 : f32
    %285 = vector.broadcast %cst_149 : f32 to vector<8x128xf32>
    %286 = arith.addf %284, %285 : vector<8x128xf32>
    %287 = vector.extract_strided_slice %235 {offsets = [0, 256], sizes = [8, 128], strides = [1, 1]} : vector<8x512xf32> to vector<8x128xf32>
    %288 = math.tanh %287 : vector<8x128xf32>
    %289 = vector.extract_strided_slice %235 {offsets = [0, 384], sizes = [8, 128], strides = [1, 1]} : vector<8x512xf32> to vector<8x128xf32>
    %cst_150 = arith.constant 5.000000e-01 : f32
    %290 = vector.broadcast %cst_150 : f32 to vector<8x128xf32>
    %291 = arith.mulf %290, %289 : vector<8x128xf32>
    %292 = math.tanh %291 : vector<8x128xf32>
    %cst_151 = arith.constant 5.000000e-01 : f32
    %293 = vector.broadcast %cst_151 : f32 to vector<8x128xf32>
    %294 = arith.mulf %293, %292 : vector<8x128xf32>
    %cst_152 = arith.constant 5.000000e-01 : f32
    %295 = vector.broadcast %cst_152 : f32 to vector<8x128xf32>
    %296 = arith.addf %294, %295 : vector<8x128xf32>
    %297 = arith.mulf %286, %270 : vector<8x128xf32>
    %298 = arith.mulf %278, %288 : vector<8x128xf32>
    %299 = arith.addf %297, %298 : vector<8x128xf32>
    %300 = math.tanh %299 : vector<8x128xf32>
    %301 = arith.mulf %296, %300 : vector<8x128xf32>
    %c0_153 = arith.constant 0 : index
    %c0_154 = arith.constant 0 : index
    %c0_155 = arith.constant 0 : index
    %302 = vector.load %arg6[%c0_153, %c0_154, %c0_155] : memref<2x8x128xf32, #tpu.memory_space<vmem>>, vector<1x8x128xf32>
    %303 = vector.shape_cast %302 : vector<1x8x128xf32> to vector<8x128xf32>
    %304 = vector.shape_cast %268 : vector<8x128xf32> to vector<1x8x128xf32>
    tpu.vector_store %arg6[%c0_153, %c0_154, %c0_155], %304 {strides = array<i32>} : memref<2x8x128xf32, #tpu.memory_space<vmem>>, vector<1x8x128xf32>,
    %c0_156 = arith.constant 0 : index
    %c0_157 = arith.constant 0 : index
    %c0_158 = arith.constant 0 : index
    %305 = vector.load %arg7[%c0_156, %c0_157, %c0_158] : memref<2x8x128xf32, #tpu.memory_space<vmem>>, vector<1x8x128xf32>
    %306 = vector.shape_cast %305 : vector<1x8x128xf32> to vector<8x128xf32>
    %307 = vector.shape_cast %266 : vector<8x128xf32> to vector<1x8x128xf32>
    tpu.vector_store %arg7[%c0_156, %c0_157, %c0_158], %307 {strides = array<i32>} : memref<2x8x128xf32, #tpu.memory_space<vmem>>, vector<1x8x128xf32>,
    %c1_159 = arith.constant 1 : index
    %c0_160 = arith.constant 0 : index
    %c0_161 = arith.constant 0 : index
    %308 = vector.load %arg6[%c1_159, %c0_160, %c0_161] : memref<2x8x128xf32, #tpu.memory_space<vmem>>, vector<1x8x128xf32>
    %309 = vector.shape_cast %308 : vector<1x8x128xf32> to vector<8x128xf32>
    %310 = vector.shape_cast %301 : vector<8x128xf32> to vector<1x8x128xf32>
    tpu.vector_store %arg6[%c1_159, %c0_160, %c0_161], %310 {strides = array<i32>} : memref<2x8x128xf32, #tpu.memory_space<vmem>>, vector<1x8x128xf32>,
    %c1_162 = arith.constant 1 : index
    %c0_163 = arith.constant 0 : index
    %c0_164 = arith.constant 0 : index
    %311 = vector.load %arg7[%c1_162, %c0_163, %c0_164] : memref<2x8x128xf32, #tpu.memory_space<vmem>>, vector<1x8x128xf32>
    %312 = vector.shape_cast %311 : vector<1x8x128xf32> to vector<8x128xf32>
    %313 = vector.shape_cast %299 : vector<8x128xf32> to vector<1x8x128xf32>
    tpu.vector_store %arg7[%c1_162, %c0_163, %c0_164], %313 {strides = array<i32>} : memref<2x8x128xf32, #tpu.memory_space<vmem>>, vector<1x8x128xf32>,
    %314 = arith.index_cast %c2_i32 : i32 to index
    %c0_165 = arith.constant 0 : index
    %c0_166 = arith.constant 0 : index
    %315 = vector.load %arg4[%314, %c0_165, %c0_166] : memref<8x8x128xf32, #tpu.memory_space<vmem>>, vector<1x8x128xf32>
    %316 = vector.shape_cast %315 : vector<1x8x128xf32> to vector<8x128xf32>
    %317 = vector.shape_cast %268 : vector<8x128xf32> to vector<1x8x128xf32>
    tpu.vector_store %arg4[%314, %c0_165, %c0_166], %317 {strides = array<i32>} : memref<8x8x128xf32, #tpu.memory_space<vmem>>, vector<1x8x128xf32>,
    %318 = arith.index_cast %217 : i32 to index
    %c0_167 = arith.constant 0 : index
    %c0_168 = arith.constant 0 : index
    %319 = vector.load %arg5[%318, %c0_167, %c0_168] : memref<8x8x128xf32, #tpu.memory_space<vmem>>, vector<1x8x128xf32>
    %320 = vector.shape_cast %319 : vector<1x8x128xf32> to vector<8x128xf32>
    %321 = vector.shape_cast %301 : vector<8x128xf32> to vector<1x8x128xf32>
    tpu.vector_store %arg5[%318, %c0_167, %c0_168], %321 {strides = array<i32>} : memref<8x8x128xf32, #tpu.memory_space<vmem>>, vector<1x8x128xf32>,
    %c3_i32 = arith.constant 3 : i32
    %c7_i32_169 = arith.constant 7 : i32
    %322 = arith.subi %c7_i32_169, %c3_i32 : i32
    %c0_170 = arith.constant 0 : index
    %323 = arith.index_cast %c3_i32 : i32 to index
    %c0_171 = arith.constant 0 : index
    %c0_172 = arith.constant 0 : index
    %324 = vector.load %arg1[%c0_170, %323, %c0_171, %c0_172] : memref<1x8x8x512xbf16, #tpu.memory_space<vmem>>, vector<1x1x8x512xbf16>
    %325 = vector.shape_cast %324 : vector<1x1x8x512xbf16> to vector<8x512xbf16>
    %326 = arith.extf %325 : vector<8x512xbf16> to vector<8x512xf32>
    %c0_173 = arith.constant 0 : index
    %c0_174 = arith.constant 0 : index
    %c0_175 = arith.constant 0 : index
    %327 = vector.load %arg6[%c0_173, %c0_174, %c0_175] : memref<2x8x128xf32, #tpu.memory_space<vmem>>, vector<1x8x128xf32>
    %328 = vector.shape_cast %327 : vector<1x8x128xf32> to vector<8x128xf32>
    %329 = arith.truncf %328 : vector<8x128xf32> to vector<8x128xbf16>
    %cst_176 = arith.constant dense<0.000000e+00> : vector<8x512xf32>
    %330 = tpu.matmul %329, %4, %cst_176 {dimension_numbers = #tpu.dot_dimension_numbers<[1], [0], [0], [1], [0, 0, 1, 1], [], []>} : vector<8x128xbf16>, vector<128x512xbf16>, vector<8x512xf32> -> vector<8x512xf32>
    %331 = arith.addf %326, %330 : vector<8x512xf32>
    %c0_177 = arith.constant 0 : index
    %332 = arith.index_cast %322 : i32 to index
    %c0_178 = arith.constant 0 : index
    %c0_179 = arith.constant 0 : index
    %333 = vector.load %arg2[%c0_177, %332, %c0_178, %c0_179] : memref<1x8x8x512xbf16, #tpu.memory_space<vmem>>, vector<1x1x8x512xbf16>
    %334 = vector.shape_cast %333 : vector<1x1x8x512xbf16> to vector<8x512xbf16>
    %335 = arith.extf %334 : vector<8x512xbf16> to vector<8x512xf32>
    %c1_180 = arith.constant 1 : index
    %c0_181 = arith.constant 0 : index
    %c0_182 = arith.constant 0 : index
    %336 = vector.load %arg6[%c1_180, %c0_181, %c0_182] : memref<2x8x128xf32, #tpu.memory_space<vmem>>, vector<1x8x128xf32>
    %337 = vector.shape_cast %336 : vector<1x8x128xf32> to vector<8x128xf32>
    %338 = arith.truncf %337 : vector<8x128xf32> to vector<8x128xbf16>
    %cst_183 = arith.constant dense<0.000000e+00> : vector<8x512xf32>
    %339 = tpu.matmul %338, %6, %cst_183 {dimension_numbers = #tpu.dot_dimension_numbers<[1], [0], [0], [1], [0, 0, 1, 1], [], []>} : vector<8x128xbf16>, vector<128x512xbf16>, vector<8x512xf32> -> vector<8x512xf32>
    %340 = arith.addf %335, %339 : vector<8x512xf32>
    %c0_184 = arith.constant 0 : index
    %c0_185 = arith.constant 0 : index
    %c0_186 = arith.constant 0 : index
    %341 = vector.load %arg7[%c0_184, %c0_185, %c0_186] : memref<2x8x128xf32, #tpu.memory_space<vmem>>, vector<1x8x128xf32>
    %342 = vector.shape_cast %341 : vector<1x8x128xf32> to vector<8x128xf32>
    %343 = vector.extract_strided_slice %331 {offsets = [0, 0], sizes = [8, 128], strides = [1, 1]} : vector<8x512xf32> to vector<8x128xf32>
    %cst_187 = arith.constant 5.000000e-01 : f32
    %344 = vector.broadcast %cst_187 : f32 to vector<8x128xf32>
    %345 = arith.mulf %344, %343 : vector<8x128xf32>
    %346 = math.tanh %345 : vector<8x128xf32>
    %cst_188 = arith.constant 5.000000e-01 : f32
    %347 = vector.broadcast %cst_188 : f32 to vector<8x128xf32>
    %348 = arith.mulf %347, %346 : vector<8x128xf32>
    %cst_189 = arith.constant 5.000000e-01 : f32
    %349 = vector.broadcast %cst_189 : f32 to vector<8x128xf32>
    %350 = arith.addf %348, %349 : vector<8x128xf32>
    %351 = vector.extract_strided_slice %331 {offsets = [0, 128], sizes = [8, 128], strides = [1, 1]} : vector<8x512xf32> to vector<8x128xf32>
    %cst_190 = arith.constant 5.000000e-01 : f32
    %352 = vector.broadcast %cst_190 : f32 to vector<8x128xf32>
    %353 = arith.mulf %352, %351 : vector<8x128xf32>
    %354 = math.tanh %353 : vector<8x128xf32>
    %cst_191 = arith.constant 5.000000e-01 : f32
    %355 = vector.broadcast %cst_191 : f32 to vector<8x128xf32>
    %356 = arith.mulf %355, %354 : vector<8x128xf32>
    %cst_192 = arith.constant 5.000000e-01 : f32
    %357 = vector.broadcast %cst_192 : f32 to vector<8x128xf32>
    %358 = arith.addf %356, %357 : vector<8x128xf32>
    %359 = vector.extract_strided_slice %331 {offsets = [0, 256], sizes = [8, 128], strides = [1, 1]} : vector<8x512xf32> to vector<8x128xf32>
    %360 = math.tanh %359 : vector<8x128xf32>
    %361 = vector.extract_strided_slice %331 {offsets = [0, 384], sizes = [8, 128], strides = [1, 1]} : vector<8x512xf32> to vector<8x128xf32>
    %cst_193 = arith.constant 5.000000e-01 : f32
    %362 = vector.broadcast %cst_193 : f32 to vector<8x128xf32>
    %363 = arith.mulf %362, %361 : vector<8x128xf32>
    %364 = math.tanh %363 : vector<8x128xf32>
    %cst_194 = arith.constant 5.000000e-01 : f32
    %365 = vector.broadcast %cst_194 : f32 to vector<8x128xf32>
    %366 = arith.mulf %365, %364 : vector<8x128xf32>
    %cst_195 = arith.constant 5.000000e-01 : f32
    %367 = vector.broadcast %cst_195 : f32 to vector<8x128xf32>
    %368 = arith.addf %366, %367 : vector<8x128xf32>
    %369 = arith.mulf %358, %342 : vector<8x128xf32>
    %370 = arith.mulf %350, %360 : vector<8x128xf32>
    %371 = arith.addf %369, %370 : vector<8x128xf32>
    %372 = math.tanh %371 : vector<8x128xf32>
    %373 = arith.mulf %368, %372 : vector<8x128xf32>
    %c1_196 = arith.constant 1 : index
    %c0_197 = arith.constant 0 : index
    %c0_198 = arith.constant 0 : index
    %374 = vector.load %arg7[%c1_196, %c0_197, %c0_198] : memref<2x8x128xf32, #tpu.memory_space<vmem>>, vector<1x8x128xf32>
    %375 = vector.shape_cast %374 : vector<1x8x128xf32> to vector<8x128xf32>
    %376 = vector.extract_strided_slice %340 {offsets = [0, 0], sizes = [8, 128], strides = [1, 1]} : vector<8x512xf32> to vector<8x128xf32>
    %cst_199 = arith.constant 5.000000e-01 : f32
    %377 = vector.broadcast %cst_199 : f32 to vector<8x128xf32>
    %378 = arith.mulf %377, %376 : vector<8x128xf32>
    %379 = math.tanh %378 : vector<8x128xf32>
    %cst_200 = arith.constant 5.000000e-01 : f32
    %380 = vector.broadcast %cst_200 : f32 to vector<8x128xf32>
    %381 = arith.mulf %380, %379 : vector<8x128xf32>
    %cst_201 = arith.constant 5.000000e-01 : f32
    %382 = vector.broadcast %cst_201 : f32 to vector<8x128xf32>
    %383 = arith.addf %381, %382 : vector<8x128xf32>
    %384 = vector.extract_strided_slice %340 {offsets = [0, 128], sizes = [8, 128], strides = [1, 1]} : vector<8x512xf32> to vector<8x128xf32>
    %cst_202 = arith.constant 5.000000e-01 : f32
    %385 = vector.broadcast %cst_202 : f32 to vector<8x128xf32>
    %386 = arith.mulf %385, %384 : vector<8x128xf32>
    %387 = math.tanh %386 : vector<8x128xf32>
    %cst_203 = arith.constant 5.000000e-01 : f32
    %388 = vector.broadcast %cst_203 : f32 to vector<8x128xf32>
    %389 = arith.mulf %388, %387 : vector<8x128xf32>
    %cst_204 = arith.constant 5.000000e-01 : f32
    %390 = vector.broadcast %cst_204 : f32 to vector<8x128xf32>
    %391 = arith.addf %389, %390 : vector<8x128xf32>
    %392 = vector.extract_strided_slice %340 {offsets = [0, 256], sizes = [8, 128], strides = [1, 1]} : vector<8x512xf32> to vector<8x128xf32>
    %393 = math.tanh %392 : vector<8x128xf32>
    %394 = vector.extract_strided_slice %340 {offsets = [0, 384], sizes = [8, 128], strides = [1, 1]} : vector<8x512xf32> to vector<8x128xf32>
    %cst_205 = arith.constant 5.000000e-01 : f32
    %395 = vector.broadcast %cst_205 : f32 to vector<8x128xf32>
    %396 = arith.mulf %395, %394 : vector<8x128xf32>
    %397 = math.tanh %396 : vector<8x128xf32>
    %cst_206 = arith.constant 5.000000e-01 : f32
    %398 = vector.broadcast %cst_206 : f32 to vector<8x128xf32>
    %399 = arith.mulf %398, %397 : vector<8x128xf32>
    %cst_207 = arith.constant 5.000000e-01 : f32
    %400 = vector.broadcast %cst_207 : f32 to vector<8x128xf32>
    %401 = arith.addf %399, %400 : vector<8x128xf32>
    %402 = arith.mulf %391, %375 : vector<8x128xf32>
    %403 = arith.mulf %383, %393 : vector<8x128xf32>
    %404 = arith.addf %402, %403 : vector<8x128xf32>
    %405 = math.tanh %404 : vector<8x128xf32>
    %406 = arith.mulf %401, %405 : vector<8x128xf32>
    %c0_208 = arith.constant 0 : index
    %c0_209 = arith.constant 0 : index
    %c0_210 = arith.constant 0 : index
    %407 = vector.load %arg6[%c0_208, %c0_209, %c0_210] : memref<2x8x128xf32, #tpu.memory_space<vmem>>, vector<1x8x128xf32>
    %408 = vector.shape_cast %407 : vector<1x8x128xf32> to vector<8x128xf32>
    %409 = vector.shape_cast %373 : vector<8x128xf32> to vector<1x8x128xf32>
    tpu.vector_store %arg6[%c0_208, %c0_209, %c0_210], %409 {strides = array<i32>} : memref<2x8x128xf32, #tpu.memory_space<vmem>>, vector<1x8x128xf32>,
    %c0_211 = arith.constant 0 : index
    %c0_212 = arith.constant 0 : index
    %c0_213 = arith.constant 0 : index
    %410 = vector.load %arg7[%c0_211, %c0_212, %c0_213] : memref<2x8x128xf32, #tpu.memory_space<vmem>>, vector<1x8x128xf32>
    %411 = vector.shape_cast %410 : vector<1x8x128xf32> to vector<8x128xf32>
    %412 = vector.shape_cast %371 : vector<8x128xf32> to vector<1x8x128xf32>
    tpu.vector_store %arg7[%c0_211, %c0_212, %c0_213], %412 {strides = array<i32>} : memref<2x8x128xf32, #tpu.memory_space<vmem>>, vector<1x8x128xf32>,
    %c1_214 = arith.constant 1 : index
    %c0_215 = arith.constant 0 : index
    %c0_216 = arith.constant 0 : index
    %413 = vector.load %arg6[%c1_214, %c0_215, %c0_216] : memref<2x8x128xf32, #tpu.memory_space<vmem>>, vector<1x8x128xf32>
    %414 = vector.shape_cast %413 : vector<1x8x128xf32> to vector<8x128xf32>
    %415 = vector.shape_cast %406 : vector<8x128xf32> to vector<1x8x128xf32>
    tpu.vector_store %arg6[%c1_214, %c0_215, %c0_216], %415 {strides = array<i32>} : memref<2x8x128xf32, #tpu.memory_space<vmem>>, vector<1x8x128xf32>,
    %c1_217 = arith.constant 1 : index
    %c0_218 = arith.constant 0 : index
    %c0_219 = arith.constant 0 : index
    %416 = vector.load %arg7[%c1_217, %c0_218, %c0_219] : memref<2x8x128xf32, #tpu.memory_space<vmem>>, vector<1x8x128xf32>
    %417 = vector.shape_cast %416 : vector<1x8x128xf32> to vector<8x128xf32>
    %418 = vector.shape_cast %404 : vector<8x128xf32> to vector<1x8x128xf32>
    tpu.vector_store %arg7[%c1_217, %c0_218, %c0_219], %418 {strides = array<i32>} : memref<2x8x128xf32, #tpu.memory_space<vmem>>, vector<1x8x128xf32>,
    %419 = arith.index_cast %c3_i32 : i32 to index
    %c0_220 = arith.constant 0 : index
    %c0_221 = arith.constant 0 : index
    %420 = vector.load %arg4[%419, %c0_220, %c0_221] : memref<8x8x128xf32, #tpu.memory_space<vmem>>, vector<1x8x128xf32>
    %421 = vector.shape_cast %420 : vector<1x8x128xf32> to vector<8x128xf32>
    %422 = vector.shape_cast %373 : vector<8x128xf32> to vector<1x8x128xf32>
    tpu.vector_store %arg4[%419, %c0_220, %c0_221], %422 {strides = array<i32>} : memref<8x8x128xf32, #tpu.memory_space<vmem>>, vector<1x8x128xf32>,
    %423 = arith.index_cast %322 : i32 to index
    %c0_222 = arith.constant 0 : index
    %c0_223 = arith.constant 0 : index
    %424 = vector.load %arg5[%423, %c0_222, %c0_223] : memref<8x8x128xf32, #tpu.memory_space<vmem>>, vector<1x8x128xf32>
    %425 = vector.shape_cast %424 : vector<1x8x128xf32> to vector<8x128xf32>
    %426 = vector.shape_cast %406 : vector<8x128xf32> to vector<1x8x128xf32>
    tpu.vector_store %arg5[%423, %c0_222, %c0_223], %426 {strides = array<i32>} : memref<8x8x128xf32, #tpu.memory_space<vmem>>, vector<1x8x128xf32>,
    %c4_i32 = arith.constant 4 : i32
    %c7_i32_224 = arith.constant 7 : i32
    %427 = arith.subi %c7_i32_224, %c4_i32 : i32
    %c0_225 = arith.constant 0 : index
    %428 = arith.index_cast %c4_i32 : i32 to index
    %c0_226 = arith.constant 0 : index
    %c0_227 = arith.constant 0 : index
    %429 = vector.load %arg1[%c0_225, %428, %c0_226, %c0_227] : memref<1x8x8x512xbf16, #tpu.memory_space<vmem>>, vector<1x1x8x512xbf16>
    %430 = vector.shape_cast %429 : vector<1x1x8x512xbf16> to vector<8x512xbf16>
    %431 = arith.extf %430 : vector<8x512xbf16> to vector<8x512xf32>
    %c0_228 = arith.constant 0 : index
    %c0_229 = arith.constant 0 : index
    %c0_230 = arith.constant 0 : index
    %432 = vector.load %arg6[%c0_228, %c0_229, %c0_230] : memref<2x8x128xf32, #tpu.memory_space<vmem>>, vector<1x8x128xf32>
    %433 = vector.shape_cast %432 : vector<1x8x128xf32> to vector<8x128xf32>
    %434 = arith.truncf %433 : vector<8x128xf32> to vector<8x128xbf16>
    %cst_231 = arith.constant dense<0.000000e+00> : vector<8x512xf32>
    %435 = tpu.matmul %434, %4, %cst_231 {dimension_numbers = #tpu.dot_dimension_numbers<[1], [0], [0], [1], [0, 0, 1, 1], [], []>} : vector<8x128xbf16>, vector<128x512xbf16>, vector<8x512xf32> -> vector<8x512xf32>
    %436 = arith.addf %431, %435 : vector<8x512xf32>
    %c0_232 = arith.constant 0 : index
    %437 = arith.index_cast %427 : i32 to index
    %c0_233 = arith.constant 0 : index
    %c0_234 = arith.constant 0 : index
    %438 = vector.load %arg2[%c0_232, %437, %c0_233, %c0_234] : memref<1x8x8x512xbf16, #tpu.memory_space<vmem>>, vector<1x1x8x512xbf16>
    %439 = vector.shape_cast %438 : vector<1x1x8x512xbf16> to vector<8x512xbf16>
    %440 = arith.extf %439 : vector<8x512xbf16> to vector<8x512xf32>
    %c1_235 = arith.constant 1 : index
    %c0_236 = arith.constant 0 : index
    %c0_237 = arith.constant 0 : index
    %441 = vector.load %arg6[%c1_235, %c0_236, %c0_237] : memref<2x8x128xf32, #tpu.memory_space<vmem>>, vector<1x8x128xf32>
    %442 = vector.shape_cast %441 : vector<1x8x128xf32> to vector<8x128xf32>
    %443 = arith.truncf %442 : vector<8x128xf32> to vector<8x128xbf16>
    %cst_238 = arith.constant dense<0.000000e+00> : vector<8x512xf32>
    %444 = tpu.matmul %443, %6, %cst_238 {dimension_numbers = #tpu.dot_dimension_numbers<[1], [0], [0], [1], [0, 0, 1, 1], [], []>} : vector<8x128xbf16>, vector<128x512xbf16>, vector<8x512xf32> -> vector<8x512xf32>
    %445 = arith.addf %440, %444 : vector<8x512xf32>
    %c0_239 = arith.constant 0 : index
    %c0_240 = arith.constant 0 : index
    %c0_241 = arith.constant 0 : index
    %446 = vector.load %arg7[%c0_239, %c0_240, %c0_241] : memref<2x8x128xf32, #tpu.memory_space<vmem>>, vector<1x8x128xf32>
    %447 = vector.shape_cast %446 : vector<1x8x128xf32> to vector<8x128xf32>
    %448 = vector.extract_strided_slice %436 {offsets = [0, 0], sizes = [8, 128], strides = [1, 1]} : vector<8x512xf32> to vector<8x128xf32>
    %cst_242 = arith.constant 5.000000e-01 : f32
    %449 = vector.broadcast %cst_242 : f32 to vector<8x128xf32>
    %450 = arith.mulf %449, %448 : vector<8x128xf32>
    %451 = math.tanh %450 : vector<8x128xf32>
    %cst_243 = arith.constant 5.000000e-01 : f32
    %452 = vector.broadcast %cst_243 : f32 to vector<8x128xf32>
    %453 = arith.mulf %452, %451 : vector<8x128xf32>
    %cst_244 = arith.constant 5.000000e-01 : f32
    %454 = vector.broadcast %cst_244 : f32 to vector<8x128xf32>
    %455 = arith.addf %453, %454 : vector<8x128xf32>
    %456 = vector.extract_strided_slice %436 {offsets = [0, 128], sizes = [8, 128], strides = [1, 1]} : vector<8x512xf32> to vector<8x128xf32>
    %cst_245 = arith.constant 5.000000e-01 : f32
    %457 = vector.broadcast %cst_245 : f32 to vector<8x128xf32>
    %458 = arith.mulf %457, %456 : vector<8x128xf32>
    %459 = math.tanh %458 : vector<8x128xf32>
    %cst_246 = arith.constant 5.000000e-01 : f32
    %460 = vector.broadcast %cst_246 : f32 to vector<8x128xf32>
    %461 = arith.mulf %460, %459 : vector<8x128xf32>
    %cst_247 = arith.constant 5.000000e-01 : f32
    %462 = vector.broadcast %cst_247 : f32 to vector<8x128xf32>
    %463 = arith.addf %461, %462 : vector<8x128xf32>
    %464 = vector.extract_strided_slice %436 {offsets = [0, 256], sizes = [8, 128], strides = [1, 1]} : vector<8x512xf32> to vector<8x128xf32>
    %465 = math.tanh %464 : vector<8x128xf32>
    %466 = vector.extract_strided_slice %436 {offsets = [0, 384], sizes = [8, 128], strides = [1, 1]} : vector<8x512xf32> to vector<8x128xf32>
    %cst_248 = arith.constant 5.000000e-01 : f32
    %467 = vector.broadcast %cst_248 : f32 to vector<8x128xf32>
    %468 = arith.mulf %467, %466 : vector<8x128xf32>
    %469 = math.tanh %468 : vector<8x128xf32>
    %cst_249 = arith.constant 5.000000e-01 : f32
    %470 = vector.broadcast %cst_249 : f32 to vector<8x128xf32>
    %471 = arith.mulf %470, %469 : vector<8x128xf32>
    %cst_250 = arith.constant 5.000000e-01 : f32
    %472 = vector.broadcast %cst_250 : f32 to vector<8x128xf32>
    %473 = arith.addf %471, %472 : vector<8x128xf32>
    %474 = arith.mulf %463, %447 : vector<8x128xf32>
    %475 = arith.mulf %455, %465 : vector<8x128xf32>
    %476 = arith.addf %474, %475 : vector<8x128xf32>
    %477 = math.tanh %476 : vector<8x128xf32>
    %478 = arith.mulf %473, %477 : vector<8x128xf32>
    %c1_251 = arith.constant 1 : index
    %c0_252 = arith.constant 0 : index
    %c0_253 = arith.constant 0 : index
    %479 = vector.load %arg7[%c1_251, %c0_252, %c0_253] : memref<2x8x128xf32, #tpu.memory_space<vmem>>, vector<1x8x128xf32>
    %480 = vector.shape_cast %479 : vector<1x8x128xf32> to vector<8x128xf32>
    %481 = vector.extract_strided_slice %445 {offsets = [0, 0], sizes = [8, 128], strides = [1, 1]} : vector<8x512xf32> to vector<8x128xf32>
    %cst_254 = arith.constant 5.000000e-01 : f32
    %482 = vector.broadcast %cst_254 : f32 to vector<8x128xf32>
    %483 = arith.mulf %482, %481 : vector<8x128xf32>
    %484 = math.tanh %483 : vector<8x128xf32>
    %cst_255 = arith.constant 5.000000e-01 : f32
    %485 = vector.broadcast %cst_255 : f32 to vector<8x128xf32>
    %486 = arith.mulf %485, %484 : vector<8x128xf32>
    %cst_256 = arith.constant 5.000000e-01 : f32
    %487 = vector.broadcast %cst_256 : f32 to vector<8x128xf32>
    %488 = arith.addf %486, %487 : vector<8x128xf32>
    %489 = vector.extract_strided_slice %445 {offsets = [0, 128], sizes = [8, 128], strides = [1, 1]} : vector<8x512xf32> to vector<8x128xf32>
    %cst_257 = arith.constant 5.000000e-01 : f32
    %490 = vector.broadcast %cst_257 : f32 to vector<8x128xf32>
    %491 = arith.mulf %490, %489 : vector<8x128xf32>
    %492 = math.tanh %491 : vector<8x128xf32>
    %cst_258 = arith.constant 5.000000e-01 : f32
    %493 = vector.broadcast %cst_258 : f32 to vector<8x128xf32>
    %494 = arith.mulf %493, %492 : vector<8x128xf32>
    %cst_259 = arith.constant 5.000000e-01 : f32
    %495 = vector.broadcast %cst_259 : f32 to vector<8x128xf32>
    %496 = arith.addf %494, %495 : vector<8x128xf32>
    %497 = vector.extract_strided_slice %445 {offsets = [0, 256], sizes = [8, 128], strides = [1, 1]} : vector<8x512xf32> to vector<8x128xf32>
    %498 = math.tanh %497 : vector<8x128xf32>
    %499 = vector.extract_strided_slice %445 {offsets = [0, 384], sizes = [8, 128], strides = [1, 1]} : vector<8x512xf32> to vector<8x128xf32>
    %cst_260 = arith.constant 5.000000e-01 : f32
    %500 = vector.broadcast %cst_260 : f32 to vector<8x128xf32>
    %501 = arith.mulf %500, %499 : vector<8x128xf32>
    %502 = math.tanh %501 : vector<8x128xf32>
    %cst_261 = arith.constant 5.000000e-01 : f32
    %503 = vector.broadcast %cst_261 : f32 to vector<8x128xf32>
    %504 = arith.mulf %503, %502 : vector<8x128xf32>
    %cst_262 = arith.constant 5.000000e-01 : f32
    %505 = vector.broadcast %cst_262 : f32 to vector<8x128xf32>
    %506 = arith.addf %504, %505 : vector<8x128xf32>
    %507 = arith.mulf %496, %480 : vector<8x128xf32>
    %508 = arith.mulf %488, %498 : vector<8x128xf32>
    %509 = arith.addf %507, %508 : vector<8x128xf32>
    %510 = math.tanh %509 : vector<8x128xf32>
    %511 = arith.mulf %506, %510 : vector<8x128xf32>
    %c0_263 = arith.constant 0 : index
    %c0_264 = arith.constant 0 : index
    %c0_265 = arith.constant 0 : index
    %512 = vector.load %arg6[%c0_263, %c0_264, %c0_265] : memref<2x8x128xf32, #tpu.memory_space<vmem>>, vector<1x8x128xf32>
    %513 = vector.shape_cast %512 : vector<1x8x128xf32> to vector<8x128xf32>
    %514 = vector.shape_cast %478 : vector<8x128xf32> to vector<1x8x128xf32>
    tpu.vector_store %arg6[%c0_263, %c0_264, %c0_265], %514 {strides = array<i32>} : memref<2x8x128xf32, #tpu.memory_space<vmem>>, vector<1x8x128xf32>,
    %c0_266 = arith.constant 0 : index
    %c0_267 = arith.constant 0 : index
    %c0_268 = arith.constant 0 : index
    %515 = vector.load %arg7[%c0_266, %c0_267, %c0_268] : memref<2x8x128xf32, #tpu.memory_space<vmem>>, vector<1x8x128xf32>
    %516 = vector.shape_cast %515 : vector<1x8x128xf32> to vector<8x128xf32>
    %517 = vector.shape_cast %476 : vector<8x128xf32> to vector<1x8x128xf32>
    tpu.vector_store %arg7[%c0_266, %c0_267, %c0_268], %517 {strides = array<i32>} : memref<2x8x128xf32, #tpu.memory_space<vmem>>, vector<1x8x128xf32>,
    %c1_269 = arith.constant 1 : index
    %c0_270 = arith.constant 0 : index
    %c0_271 = arith.constant 0 : index
    %518 = vector.load %arg6[%c1_269, %c0_270, %c0_271] : memref<2x8x128xf32, #tpu.memory_space<vmem>>, vector<1x8x128xf32>
    %519 = vector.shape_cast %518 : vector<1x8x128xf32> to vector<8x128xf32>
    %520 = vector.shape_cast %511 : vector<8x128xf32> to vector<1x8x128xf32>
    tpu.vector_store %arg6[%c1_269, %c0_270, %c0_271], %520 {strides = array<i32>} : memref<2x8x128xf32, #tpu.memory_space<vmem>>, vector<1x8x128xf32>,
    %c1_272 = arith.constant 1 : index
    %c0_273 = arith.constant 0 : index
    %c0_274 = arith.constant 0 : index
    %521 = vector.load %arg7[%c1_272, %c0_273, %c0_274] : memref<2x8x128xf32, #tpu.memory_space<vmem>>, vector<1x8x128xf32>
    %522 = vector.shape_cast %521 : vector<1x8x128xf32> to vector<8x128xf32>
    %523 = vector.shape_cast %509 : vector<8x128xf32> to vector<1x8x128xf32>
    tpu.vector_store %arg7[%c1_272, %c0_273, %c0_274], %523 {strides = array<i32>} : memref<2x8x128xf32, #tpu.memory_space<vmem>>, vector<1x8x128xf32>,
    %524 = arith.index_cast %c4_i32 : i32 to index
    %c0_275 = arith.constant 0 : index
    %c0_276 = arith.constant 0 : index
    %525 = vector.load %arg4[%524, %c0_275, %c0_276] : memref<8x8x128xf32, #tpu.memory_space<vmem>>, vector<1x8x128xf32>
    %526 = vector.shape_cast %525 : vector<1x8x128xf32> to vector<8x128xf32>
    %527 = vector.shape_cast %478 : vector<8x128xf32> to vector<1x8x128xf32>
    tpu.vector_store %arg4[%524, %c0_275, %c0_276], %527 {strides = array<i32>} : memref<8x8x128xf32, #tpu.memory_space<vmem>>, vector<1x8x128xf32>,
    %528 = arith.index_cast %427 : i32 to index
    %c0_277 = arith.constant 0 : index
    %c0_278 = arith.constant 0 : index
    %529 = vector.load %arg5[%528, %c0_277, %c0_278] : memref<8x8x128xf32, #tpu.memory_space<vmem>>, vector<1x8x128xf32>
    %530 = vector.shape_cast %529 : vector<1x8x128xf32> to vector<8x128xf32>
    %531 = vector.shape_cast %511 : vector<8x128xf32> to vector<1x8x128xf32>
    tpu.vector_store %arg5[%528, %c0_277, %c0_278], %531 {strides = array<i32>} : memref<8x8x128xf32, #tpu.memory_space<vmem>>, vector<1x8x128xf32>,
    %c5_i32 = arith.constant 5 : i32
    %c7_i32_279 = arith.constant 7 : i32
    %532 = arith.subi %c7_i32_279, %c5_i32 : i32
    %c0_280 = arith.constant 0 : index
    %533 = arith.index_cast %c5_i32 : i32 to index
    %c0_281 = arith.constant 0 : index
    %c0_282 = arith.constant 0 : index
    %534 = vector.load %arg1[%c0_280, %533, %c0_281, %c0_282] : memref<1x8x8x512xbf16, #tpu.memory_space<vmem>>, vector<1x1x8x512xbf16>
    %535 = vector.shape_cast %534 : vector<1x1x8x512xbf16> to vector<8x512xbf16>
    %536 = arith.extf %535 : vector<8x512xbf16> to vector<8x512xf32>
    %c0_283 = arith.constant 0 : index
    %c0_284 = arith.constant 0 : index
    %c0_285 = arith.constant 0 : index
    %537 = vector.load %arg6[%c0_283, %c0_284, %c0_285] : memref<2x8x128xf32, #tpu.memory_space<vmem>>, vector<1x8x128xf32>
    %538 = vector.shape_cast %537 : vector<1x8x128xf32> to vector<8x128xf32>
    %539 = arith.truncf %538 : vector<8x128xf32> to vector<8x128xbf16>
    %cst_286 = arith.constant dense<0.000000e+00> : vector<8x512xf32>
    %540 = tpu.matmul %539, %4, %cst_286 {dimension_numbers = #tpu.dot_dimension_numbers<[1], [0], [0], [1], [0, 0, 1, 1], [], []>} : vector<8x128xbf16>, vector<128x512xbf16>, vector<8x512xf32> -> vector<8x512xf32>
    %541 = arith.addf %536, %540 : vector<8x512xf32>
    %c0_287 = arith.constant 0 : index
    %542 = arith.index_cast %532 : i32 to index
    %c0_288 = arith.constant 0 : index
    %c0_289 = arith.constant 0 : index
    %543 = vector.load %arg2[%c0_287, %542, %c0_288, %c0_289] : memref<1x8x8x512xbf16, #tpu.memory_space<vmem>>, vector<1x1x8x512xbf16>
    %544 = vector.shape_cast %543 : vector<1x1x8x512xbf16> to vector<8x512xbf16>
    %545 = arith.extf %544 : vector<8x512xbf16> to vector<8x512xf32>
    %c1_290 = arith.constant 1 : index
    %c0_291 = arith.constant 0 : index
    %c0_292 = arith.constant 0 : index
    %546 = vector.load %arg6[%c1_290, %c0_291, %c0_292] : memref<2x8x128xf32, #tpu.memory_space<vmem>>, vector<1x8x128xf32>
    %547 = vector.shape_cast %546 : vector<1x8x128xf32> to vector<8x128xf32>
    %548 = arith.truncf %547 : vector<8x128xf32> to vector<8x128xbf16>
    %cst_293 = arith.constant dense<0.000000e+00> : vector<8x512xf32>
    %549 = tpu.matmul %548, %6, %cst_293 {dimension_numbers = #tpu.dot_dimension_numbers<[1], [0], [0], [1], [0, 0, 1, 1], [], []>} : vector<8x128xbf16>, vector<128x512xbf16>, vector<8x512xf32> -> vector<8x512xf32>
    %550 = arith.addf %545, %549 : vector<8x512xf32>
    %c0_294 = arith.constant 0 : index
    %c0_295 = arith.constant 0 : index
    %c0_296 = arith.constant 0 : index
    %551 = vector.load %arg7[%c0_294, %c0_295, %c0_296] : memref<2x8x128xf32, #tpu.memory_space<vmem>>, vector<1x8x128xf32>
    %552 = vector.shape_cast %551 : vector<1x8x128xf32> to vector<8x128xf32>
    %553 = vector.extract_strided_slice %541 {offsets = [0, 0], sizes = [8, 128], strides = [1, 1]} : vector<8x512xf32> to vector<8x128xf32>
    %cst_297 = arith.constant 5.000000e-01 : f32
    %554 = vector.broadcast %cst_297 : f32 to vector<8x128xf32>
    %555 = arith.mulf %554, %553 : vector<8x128xf32>
    %556 = math.tanh %555 : vector<8x128xf32>
    %cst_298 = arith.constant 5.000000e-01 : f32
    %557 = vector.broadcast %cst_298 : f32 to vector<8x128xf32>
    %558 = arith.mulf %557, %556 : vector<8x128xf32>
    %cst_299 = arith.constant 5.000000e-01 : f32
    %559 = vector.broadcast %cst_299 : f32 to vector<8x128xf32>
    %560 = arith.addf %558, %559 : vector<8x128xf32>
    %561 = vector.extract_strided_slice %541 {offsets = [0, 128], sizes = [8, 128], strides = [1, 1]} : vector<8x512xf32> to vector<8x128xf32>
    %cst_300 = arith.constant 5.000000e-01 : f32
    %562 = vector.broadcast %cst_300 : f32 to vector<8x128xf32>
    %563 = arith.mulf %562, %561 : vector<8x128xf32>
    %564 = math.tanh %563 : vector<8x128xf32>
    %cst_301 = arith.constant 5.000000e-01 : f32
    %565 = vector.broadcast %cst_301 : f32 to vector<8x128xf32>
    %566 = arith.mulf %565, %564 : vector<8x128xf32>
    %cst_302 = arith.constant 5.000000e-01 : f32
    %567 = vector.broadcast %cst_302 : f32 to vector<8x128xf32>
    %568 = arith.addf %566, %567 : vector<8x128xf32>
    %569 = vector.extract_strided_slice %541 {offsets = [0, 256], sizes = [8, 128], strides = [1, 1]} : vector<8x512xf32> to vector<8x128xf32>
    %570 = math.tanh %569 : vector<8x128xf32>
    %571 = vector.extract_strided_slice %541 {offsets = [0, 384], sizes = [8, 128], strides = [1, 1]} : vector<8x512xf32> to vector<8x128xf32>
    %cst_303 = arith.constant 5.000000e-01 : f32
    %572 = vector.broadcast %cst_303 : f32 to vector<8x128xf32>
    %573 = arith.mulf %572, %571 : vector<8x128xf32>
    %574 = math.tanh %573 : vector<8x128xf32>
    %cst_304 = arith.constant 5.000000e-01 : f32
    %575 = vector.broadcast %cst_304 : f32 to vector<8x128xf32>
    %576 = arith.mulf %575, %574 : vector<8x128xf32>
    %cst_305 = arith.constant 5.000000e-01 : f32
    %577 = vector.broadcast %cst_305 : f32 to vector<8x128xf32>
    %578 = arith.addf %576, %577 : vector<8x128xf32>
    %579 = arith.mulf %568, %552 : vector<8x128xf32>
    %580 = arith.mulf %560, %570 : vector<8x128xf32>
    %581 = arith.addf %579, %580 : vector<8x128xf32>
    %582 = math.tanh %581 : vector<8x128xf32>
    %583 = arith.mulf %578, %582 : vector<8x128xf32>
    %c1_306 = arith.constant 1 : index
    %c0_307 = arith.constant 0 : index
    %c0_308 = arith.constant 0 : index
    %584 = vector.load %arg7[%c1_306, %c0_307, %c0_308] : memref<2x8x128xf32, #tpu.memory_space<vmem>>, vector<1x8x128xf32>
    %585 = vector.shape_cast %584 : vector<1x8x128xf32> to vector<8x128xf32>
    %586 = vector.extract_strided_slice %550 {offsets = [0, 0], sizes = [8, 128], strides = [1, 1]} : vector<8x512xf32> to vector<8x128xf32>
    %cst_309 = arith.constant 5.000000e-01 : f32
    %587 = vector.broadcast %cst_309 : f32 to vector<8x128xf32>
    %588 = arith.mulf %587, %586 : vector<8x128xf32>
    %589 = math.tanh %588 : vector<8x128xf32>
    %cst_310 = arith.constant 5.000000e-01 : f32
    %590 = vector.broadcast %cst_310 : f32 to vector<8x128xf32>
    %591 = arith.mulf %590, %589 : vector<8x128xf32>
    %cst_311 = arith.constant 5.000000e-01 : f32
    %592 = vector.broadcast %cst_311 : f32 to vector<8x128xf32>
    %593 = arith.addf %591, %592 : vector<8x128xf32>
    %594 = vector.extract_strided_slice %550 {offsets = [0, 128], sizes = [8, 128], strides = [1, 1]} : vector<8x512xf32> to vector<8x128xf32>
    %cst_312 = arith.constant 5.000000e-01 : f32
    %595 = vector.broadcast %cst_312 : f32 to vector<8x128xf32>
    %596 = arith.mulf %595, %594 : vector<8x128xf32>
    %597 = math.tanh %596 : vector<8x128xf32>
    %cst_313 = arith.constant 5.000000e-01 : f32
    %598 = vector.broadcast %cst_313 : f32 to vector<8x128xf32>
    %599 = arith.mulf %598, %597 : vector<8x128xf32>
    %cst_314 = arith.constant 5.000000e-01 : f32
    %600 = vector.broadcast %cst_314 : f32 to vector<8x128xf32>
    %601 = arith.addf %599, %600 : vector<8x128xf32>
    %602 = vector.extract_strided_slice %550 {offsets = [0, 256], sizes = [8, 128], strides = [1, 1]} : vector<8x512xf32> to vector<8x128xf32>
    %603 = math.tanh %602 : vector<8x128xf32>
    %604 = vector.extract_strided_slice %550 {offsets = [0, 384], sizes = [8, 128], strides = [1, 1]} : vector<8x512xf32> to vector<8x128xf32>
    %cst_315 = arith.constant 5.000000e-01 : f32
    %605 = vector.broadcast %cst_315 : f32 to vector<8x128xf32>
    %606 = arith.mulf %605, %604 : vector<8x128xf32>
    %607 = math.tanh %606 : vector<8x128xf32>
    %cst_316 = arith.constant 5.000000e-01 : f32
    %608 = vector.broadcast %cst_316 : f32 to vector<8x128xf32>
    %609 = arith.mulf %608, %607 : vector<8x128xf32>
    %cst_317 = arith.constant 5.000000e-01 : f32
    %610 = vector.broadcast %cst_317 : f32 to vector<8x128xf32>
    %611 = arith.addf %609, %610 : vector<8x128xf32>
    %612 = arith.mulf %601, %585 : vector<8x128xf32>
    %613 = arith.mulf %593, %603 : vector<8x128xf32>
    %614 = arith.addf %612, %613 : vector<8x128xf32>
    %615 = math.tanh %614 : vector<8x128xf32>
    %616 = arith.mulf %611, %615 : vector<8x128xf32>
    %c0_318 = arith.constant 0 : index
    %c0_319 = arith.constant 0 : index
    %c0_320 = arith.constant 0 : index
    %617 = vector.load %arg6[%c0_318, %c0_319, %c0_320] : memref<2x8x128xf32, #tpu.memory_space<vmem>>, vector<1x8x128xf32>
    %618 = vector.shape_cast %617 : vector<1x8x128xf32> to vector<8x128xf32>
    %619 = vector.shape_cast %583 : vector<8x128xf32> to vector<1x8x128xf32>
    tpu.vector_store %arg6[%c0_318, %c0_319, %c0_320], %619 {strides = array<i32>} : memref<2x8x128xf32, #tpu.memory_space<vmem>>, vector<1x8x128xf32>,
    %c0_321 = arith.constant 0 : index
    %c0_322 = arith.constant 0 : index
    %c0_323 = arith.constant 0 : index
    %620 = vector.load %arg7[%c0_321, %c0_322, %c0_323] : memref<2x8x128xf32, #tpu.memory_space<vmem>>, vector<1x8x128xf32>
    %621 = vector.shape_cast %620 : vector<1x8x128xf32> to vector<8x128xf32>
    %622 = vector.shape_cast %581 : vector<8x128xf32> to vector<1x8x128xf32>
    tpu.vector_store %arg7[%c0_321, %c0_322, %c0_323], %622 {strides = array<i32>} : memref<2x8x128xf32, #tpu.memory_space<vmem>>, vector<1x8x128xf32>,
    %c1_324 = arith.constant 1 : index
    %c0_325 = arith.constant 0 : index
    %c0_326 = arith.constant 0 : index
    %623 = vector.load %arg6[%c1_324, %c0_325, %c0_326] : memref<2x8x128xf32, #tpu.memory_space<vmem>>, vector<1x8x128xf32>
    %624 = vector.shape_cast %623 : vector<1x8x128xf32> to vector<8x128xf32>
    %625 = vector.shape_cast %616 : vector<8x128xf32> to vector<1x8x128xf32>
    tpu.vector_store %arg6[%c1_324, %c0_325, %c0_326], %625 {strides = array<i32>} : memref<2x8x128xf32, #tpu.memory_space<vmem>>, vector<1x8x128xf32>,
    %c1_327 = arith.constant 1 : index
    %c0_328 = arith.constant 0 : index
    %c0_329 = arith.constant 0 : index
    %626 = vector.load %arg7[%c1_327, %c0_328, %c0_329] : memref<2x8x128xf32, #tpu.memory_space<vmem>>, vector<1x8x128xf32>
    %627 = vector.shape_cast %626 : vector<1x8x128xf32> to vector<8x128xf32>
    %628 = vector.shape_cast %614 : vector<8x128xf32> to vector<1x8x128xf32>
    tpu.vector_store %arg7[%c1_327, %c0_328, %c0_329], %628 {strides = array<i32>} : memref<2x8x128xf32, #tpu.memory_space<vmem>>, vector<1x8x128xf32>,
    %629 = arith.index_cast %c5_i32 : i32 to index
    %c0_330 = arith.constant 0 : index
    %c0_331 = arith.constant 0 : index
    %630 = vector.load %arg4[%629, %c0_330, %c0_331] : memref<8x8x128xf32, #tpu.memory_space<vmem>>, vector<1x8x128xf32>
    %631 = vector.shape_cast %630 : vector<1x8x128xf32> to vector<8x128xf32>
    %632 = vector.shape_cast %583 : vector<8x128xf32> to vector<1x8x128xf32>
    tpu.vector_store %arg4[%629, %c0_330, %c0_331], %632 {strides = array<i32>} : memref<8x8x128xf32, #tpu.memory_space<vmem>>, vector<1x8x128xf32>,
    %633 = arith.index_cast %532 : i32 to index
    %c0_332 = arith.constant 0 : index
    %c0_333 = arith.constant 0 : index
    %634 = vector.load %arg5[%633, %c0_332, %c0_333] : memref<8x8x128xf32, #tpu.memory_space<vmem>>, vector<1x8x128xf32>
    %635 = vector.shape_cast %634 : vector<1x8x128xf32> to vector<8x128xf32>
    %636 = vector.shape_cast %616 : vector<8x128xf32> to vector<1x8x128xf32>
    tpu.vector_store %arg5[%633, %c0_332, %c0_333], %636 {strides = array<i32>} : memref<8x8x128xf32, #tpu.memory_space<vmem>>, vector<1x8x128xf32>,
    %c6_i32 = arith.constant 6 : i32
    %c7_i32_334 = arith.constant 7 : i32
    %637 = arith.subi %c7_i32_334, %c6_i32 : i32
    %c0_335 = arith.constant 0 : index
    %638 = arith.index_cast %c6_i32 : i32 to index
    %c0_336 = arith.constant 0 : index
    %c0_337 = arith.constant 0 : index
    %639 = vector.load %arg1[%c0_335, %638, %c0_336, %c0_337] : memref<1x8x8x512xbf16, #tpu.memory_space<vmem>>, vector<1x1x8x512xbf16>
    %640 = vector.shape_cast %639 : vector<1x1x8x512xbf16> to vector<8x512xbf16>
    %641 = arith.extf %640 : vector<8x512xbf16> to vector<8x512xf32>
    %c0_338 = arith.constant 0 : index
    %c0_339 = arith.constant 0 : index
    %c0_340 = arith.constant 0 : index
    %642 = vector.load %arg6[%c0_338, %c0_339, %c0_340] : memref<2x8x128xf32, #tpu.memory_space<vmem>>, vector<1x8x128xf32>
    %643 = vector.shape_cast %642 : vector<1x8x128xf32> to vector<8x128xf32>
    %644 = arith.truncf %643 : vector<8x128xf32> to vector<8x128xbf16>
    %cst_341 = arith.constant dense<0.000000e+00> : vector<8x512xf32>
    %645 = tpu.matmul %644, %4, %cst_341 {dimension_numbers = #tpu.dot_dimension_numbers<[1], [0], [0], [1], [0, 0, 1, 1], [], []>} : vector<8x128xbf16>, vector<128x512xbf16>, vector<8x512xf32> -> vector<8x512xf32>
    %646 = arith.addf %641, %645 : vector<8x512xf32>
    %c0_342 = arith.constant 0 : index
    %647 = arith.index_cast %637 : i32 to index
    %c0_343 = arith.constant 0 : index
    %c0_344 = arith.constant 0 : index
    %648 = vector.load %arg2[%c0_342, %647, %c0_343, %c0_344] : memref<1x8x8x512xbf16, #tpu.memory_space<vmem>>, vector<1x1x8x512xbf16>
    %649 = vector.shape_cast %648 : vector<1x1x8x512xbf16> to vector<8x512xbf16>
    %650 = arith.extf %649 : vector<8x512xbf16> to vector<8x512xf32>
    %c1_345 = arith.constant 1 : index
    %c0_346 = arith.constant 0 : index
    %c0_347 = arith.constant 0 : index
    %651 = vector.load %arg6[%c1_345, %c0_346, %c0_347] : memref<2x8x128xf32, #tpu.memory_space<vmem>>, vector<1x8x128xf32>
    %652 = vector.shape_cast %651 : vector<1x8x128xf32> to vector<8x128xf32>
    %653 = arith.truncf %652 : vector<8x128xf32> to vector<8x128xbf16>
    %cst_348 = arith.constant dense<0.000000e+00> : vector<8x512xf32>
    %654 = tpu.matmul %653, %6, %cst_348 {dimension_numbers = #tpu.dot_dimension_numbers<[1], [0], [0], [1], [0, 0, 1, 1], [], []>} : vector<8x128xbf16>, vector<128x512xbf16>, vector<8x512xf32> -> vector<8x512xf32>
    %655 = arith.addf %650, %654 : vector<8x512xf32>
    %c0_349 = arith.constant 0 : index
    %c0_350 = arith.constant 0 : index
    %c0_351 = arith.constant 0 : index
    %656 = vector.load %arg7[%c0_349, %c0_350, %c0_351] : memref<2x8x128xf32, #tpu.memory_space<vmem>>, vector<1x8x128xf32>
    %657 = vector.shape_cast %656 : vector<1x8x128xf32> to vector<8x128xf32>
    %658 = vector.extract_strided_slice %646 {offsets = [0, 0], sizes = [8, 128], strides = [1, 1]} : vector<8x512xf32> to vector<8x128xf32>
    %cst_352 = arith.constant 5.000000e-01 : f32
    %659 = vector.broadcast %cst_352 : f32 to vector<8x128xf32>
    %660 = arith.mulf %659, %658 : vector<8x128xf32>
    %661 = math.tanh %660 : vector<8x128xf32>
    %cst_353 = arith.constant 5.000000e-01 : f32
    %662 = vector.broadcast %cst_353 : f32 to vector<8x128xf32>
    %663 = arith.mulf %662, %661 : vector<8x128xf32>
    %cst_354 = arith.constant 5.000000e-01 : f32
    %664 = vector.broadcast %cst_354 : f32 to vector<8x128xf32>
    %665 = arith.addf %663, %664 : vector<8x128xf32>
    %666 = vector.extract_strided_slice %646 {offsets = [0, 128], sizes = [8, 128], strides = [1, 1]} : vector<8x512xf32> to vector<8x128xf32>
    %cst_355 = arith.constant 5.000000e-01 : f32
    %667 = vector.broadcast %cst_355 : f32 to vector<8x128xf32>
    %668 = arith.mulf %667, %666 : vector<8x128xf32>
    %669 = math.tanh %668 : vector<8x128xf32>
    %cst_356 = arith.constant 5.000000e-01 : f32
    %670 = vector.broadcast %cst_356 : f32 to vector<8x128xf32>
    %671 = arith.mulf %670, %669 : vector<8x128xf32>
    %cst_357 = arith.constant 5.000000e-01 : f32
    %672 = vector.broadcast %cst_357 : f32 to vector<8x128xf32>
    %673 = arith.addf %671, %672 : vector<8x128xf32>
    %674 = vector.extract_strided_slice %646 {offsets = [0, 256], sizes = [8, 128], strides = [1, 1]} : vector<8x512xf32> to vector<8x128xf32>
    %675 = math.tanh %674 : vector<8x128xf32>
    %676 = vector.extract_strided_slice %646 {offsets = [0, 384], sizes = [8, 128], strides = [1, 1]} : vector<8x512xf32> to vector<8x128xf32>
    %cst_358 = arith.constant 5.000000e-01 : f32
    %677 = vector.broadcast %cst_358 : f32 to vector<8x128xf32>
    %678 = arith.mulf %677, %676 : vector<8x128xf32>
    %679 = math.tanh %678 : vector<8x128xf32>
    %cst_359 = arith.constant 5.000000e-01 : f32
    %680 = vector.broadcast %cst_359 : f32 to vector<8x128xf32>
    %681 = arith.mulf %680, %679 : vector<8x128xf32>
    %cst_360 = arith.constant 5.000000e-01 : f32
    %682 = vector.broadcast %cst_360 : f32 to vector<8x128xf32>
    %683 = arith.addf %681, %682 : vector<8x128xf32>
    %684 = arith.mulf %673, %657 : vector<8x128xf32>
    %685 = arith.mulf %665, %675 : vector<8x128xf32>
    %686 = arith.addf %684, %685 : vector<8x128xf32>
    %687 = math.tanh %686 : vector<8x128xf32>
    %688 = arith.mulf %683, %687 : vector<8x128xf32>
    %c1_361 = arith.constant 1 : index
    %c0_362 = arith.constant 0 : index
    %c0_363 = arith.constant 0 : index
    %689 = vector.load %arg7[%c1_361, %c0_362, %c0_363] : memref<2x8x128xf32, #tpu.memory_space<vmem>>, vector<1x8x128xf32>
    %690 = vector.shape_cast %689 : vector<1x8x128xf32> to vector<8x128xf32>
    %691 = vector.extract_strided_slice %655 {offsets = [0, 0], sizes = [8, 128], strides = [1, 1]} : vector<8x512xf32> to vector<8x128xf32>
    %cst_364 = arith.constant 5.000000e-01 : f32
    %692 = vector.broadcast %cst_364 : f32 to vector<8x128xf32>
    %693 = arith.mulf %692, %691 : vector<8x128xf32>
    %694 = math.tanh %693 : vector<8x128xf32>
    %cst_365 = arith.constant 5.000000e-01 : f32
    %695 = vector.broadcast %cst_365 : f32 to vector<8x128xf32>
    %696 = arith.mulf %695, %694 : vector<8x128xf32>
    %cst_366 = arith.constant 5.000000e-01 : f32
    %697 = vector.broadcast %cst_366 : f32 to vector<8x128xf32>
    %698 = arith.addf %696, %697 : vector<8x128xf32>
    %699 = vector.extract_strided_slice %655 {offsets = [0, 128], sizes = [8, 128], strides = [1, 1]} : vector<8x512xf32> to vector<8x128xf32>
    %cst_367 = arith.constant 5.000000e-01 : f32
    %700 = vector.broadcast %cst_367 : f32 to vector<8x128xf32>
    %701 = arith.mulf %700, %699 : vector<8x128xf32>
    %702 = math.tanh %701 : vector<8x128xf32>
    %cst_368 = arith.constant 5.000000e-01 : f32
    %703 = vector.broadcast %cst_368 : f32 to vector<8x128xf32>
    %704 = arith.mulf %703, %702 : vector<8x128xf32>
    %cst_369 = arith.constant 5.000000e-01 : f32
    %705 = vector.broadcast %cst_369 : f32 to vector<8x128xf32>
    %706 = arith.addf %704, %705 : vector<8x128xf32>
    %707 = vector.extract_strided_slice %655 {offsets = [0, 256], sizes = [8, 128], strides = [1, 1]} : vector<8x512xf32> to vector<8x128xf32>
    %708 = math.tanh %707 : vector<8x128xf32>
    %709 = vector.extract_strided_slice %655 {offsets = [0, 384], sizes = [8, 128], strides = [1, 1]} : vector<8x512xf32> to vector<8x128xf32>
    %cst_370 = arith.constant 5.000000e-01 : f32
    %710 = vector.broadcast %cst_370 : f32 to vector<8x128xf32>
    %711 = arith.mulf %710, %709 : vector<8x128xf32>
    %712 = math.tanh %711 : vector<8x128xf32>
    %cst_371 = arith.constant 5.000000e-01 : f32
    %713 = vector.broadcast %cst_371 : f32 to vector<8x128xf32>
    %714 = arith.mulf %713, %712 : vector<8x128xf32>
    %cst_372 = arith.constant 5.000000e-01 : f32
    %715 = vector.broadcast %cst_372 : f32 to vector<8x128xf32>
    %716 = arith.addf %714, %715 : vector<8x128xf32>
    %717 = arith.mulf %706, %690 : vector<8x128xf32>
    %718 = arith.mulf %698, %708 : vector<8x128xf32>
    %719 = arith.addf %717, %718 : vector<8x128xf32>
    %720 = math.tanh %719 : vector<8x128xf32>
    %721 = arith.mulf %716, %720 : vector<8x128xf32>
    %c0_373 = arith.constant 0 : index
    %c0_374 = arith.constant 0 : index
    %c0_375 = arith.constant 0 : index
    %722 = vector.load %arg6[%c0_373, %c0_374, %c0_375] : memref<2x8x128xf32, #tpu.memory_space<vmem>>, vector<1x8x128xf32>
    %723 = vector.shape_cast %722 : vector<1x8x128xf32> to vector<8x128xf32>
    %724 = vector.shape_cast %688 : vector<8x128xf32> to vector<1x8x128xf32>
    tpu.vector_store %arg6[%c0_373, %c0_374, %c0_375], %724 {strides = array<i32>} : memref<2x8x128xf32, #tpu.memory_space<vmem>>, vector<1x8x128xf32>,
    %c0_376 = arith.constant 0 : index
    %c0_377 = arith.constant 0 : index
    %c0_378 = arith.constant 0 : index
    %725 = vector.load %arg7[%c0_376, %c0_377, %c0_378] : memref<2x8x128xf32, #tpu.memory_space<vmem>>, vector<1x8x128xf32>
    %726 = vector.shape_cast %725 : vector<1x8x128xf32> to vector<8x128xf32>
    %727 = vector.shape_cast %686 : vector<8x128xf32> to vector<1x8x128xf32>
    tpu.vector_store %arg7[%c0_376, %c0_377, %c0_378], %727 {strides = array<i32>} : memref<2x8x128xf32, #tpu.memory_space<vmem>>, vector<1x8x128xf32>,
    %c1_379 = arith.constant 1 : index
    %c0_380 = arith.constant 0 : index
    %c0_381 = arith.constant 0 : index
    %728 = vector.load %arg6[%c1_379, %c0_380, %c0_381] : memref<2x8x128xf32, #tpu.memory_space<vmem>>, vector<1x8x128xf32>
    %729 = vector.shape_cast %728 : vector<1x8x128xf32> to vector<8x128xf32>
    %730 = vector.shape_cast %721 : vector<8x128xf32> to vector<1x8x128xf32>
    tpu.vector_store %arg6[%c1_379, %c0_380, %c0_381], %730 {strides = array<i32>} : memref<2x8x128xf32, #tpu.memory_space<vmem>>, vector<1x8x128xf32>,
    %c1_382 = arith.constant 1 : index
    %c0_383 = arith.constant 0 : index
    %c0_384 = arith.constant 0 : index
    %731 = vector.load %arg7[%c1_382, %c0_383, %c0_384] : memref<2x8x128xf32, #tpu.memory_space<vmem>>, vector<1x8x128xf32>
    %732 = vector.shape_cast %731 : vector<1x8x128xf32> to vector<8x128xf32>
    %733 = vector.shape_cast %719 : vector<8x128xf32> to vector<1x8x128xf32>
    tpu.vector_store %arg7[%c1_382, %c0_383, %c0_384], %733 {strides = array<i32>} : memref<2x8x128xf32, #tpu.memory_space<vmem>>, vector<1x8x128xf32>,
    %734 = arith.index_cast %c6_i32 : i32 to index
    %c0_385 = arith.constant 0 : index
    %c0_386 = arith.constant 0 : index
    %735 = vector.load %arg4[%734, %c0_385, %c0_386] : memref<8x8x128xf32, #tpu.memory_space<vmem>>, vector<1x8x128xf32>
    %736 = vector.shape_cast %735 : vector<1x8x128xf32> to vector<8x128xf32>
    %737 = vector.shape_cast %688 : vector<8x128xf32> to vector<1x8x128xf32>
    tpu.vector_store %arg4[%734, %c0_385, %c0_386], %737 {strides = array<i32>} : memref<8x8x128xf32, #tpu.memory_space<vmem>>, vector<1x8x128xf32>,
    %738 = arith.index_cast %637 : i32 to index
    %c0_387 = arith.constant 0 : index
    %c0_388 = arith.constant 0 : index
    %739 = vector.load %arg5[%738, %c0_387, %c0_388] : memref<8x8x128xf32, #tpu.memory_space<vmem>>, vector<1x8x128xf32>
    %740 = vector.shape_cast %739 : vector<1x8x128xf32> to vector<8x128xf32>
    %741 = vector.shape_cast %721 : vector<8x128xf32> to vector<1x8x128xf32>
    tpu.vector_store %arg5[%738, %c0_387, %c0_388], %741 {strides = array<i32>} : memref<8x8x128xf32, #tpu.memory_space<vmem>>, vector<1x8x128xf32>,
    %c7_i32_389 = arith.constant 7 : i32
    %c7_i32_390 = arith.constant 7 : i32
    %742 = arith.subi %c7_i32_390, %c7_i32_389 : i32
    %c0_391 = arith.constant 0 : index
    %743 = arith.index_cast %c7_i32_389 : i32 to index
    %c0_392 = arith.constant 0 : index
    %c0_393 = arith.constant 0 : index
    %744 = vector.load %arg1[%c0_391, %743, %c0_392, %c0_393] : memref<1x8x8x512xbf16, #tpu.memory_space<vmem>>, vector<1x1x8x512xbf16>
    %745 = vector.shape_cast %744 : vector<1x1x8x512xbf16> to vector<8x512xbf16>
    %746 = arith.extf %745 : vector<8x512xbf16> to vector<8x512xf32>
    %c0_394 = arith.constant 0 : index
    %c0_395 = arith.constant 0 : index
    %c0_396 = arith.constant 0 : index
    %747 = vector.load %arg6[%c0_394, %c0_395, %c0_396] : memref<2x8x128xf32, #tpu.memory_space<vmem>>, vector<1x8x128xf32>
    %748 = vector.shape_cast %747 : vector<1x8x128xf32> to vector<8x128xf32>
    %749 = arith.truncf %748 : vector<8x128xf32> to vector<8x128xbf16>
    %cst_397 = arith.constant dense<0.000000e+00> : vector<8x512xf32>
    %750 = tpu.matmul %749, %4, %cst_397 {dimension_numbers = #tpu.dot_dimension_numbers<[1], [0], [0], [1], [0, 0, 1, 1], [], []>} : vector<8x128xbf16>, vector<128x512xbf16>, vector<8x512xf32> -> vector<8x512xf32>
    %751 = arith.addf %746, %750 : vector<8x512xf32>
    %c0_398 = arith.constant 0 : index
    %752 = arith.index_cast %742 : i32 to index
    %c0_399 = arith.constant 0 : index
    %c0_400 = arith.constant 0 : index
    %753 = vector.load %arg2[%c0_398, %752, %c0_399, %c0_400] : memref<1x8x8x512xbf16, #tpu.memory_space<vmem>>, vector<1x1x8x512xbf16>
    %754 = vector.shape_cast %753 : vector<1x1x8x512xbf16> to vector<8x512xbf16>
    %755 = arith.extf %754 : vector<8x512xbf16> to vector<8x512xf32>
    %c1_401 = arith.constant 1 : index
    %c0_402 = arith.constant 0 : index
    %c0_403 = arith.constant 0 : index
    %756 = vector.load %arg6[%c1_401, %c0_402, %c0_403] : memref<2x8x128xf32, #tpu.memory_space<vmem>>, vector<1x8x128xf32>
    %757 = vector.shape_cast %756 : vector<1x8x128xf32> to vector<8x128xf32>
    %758 = arith.truncf %757 : vector<8x128xf32> to vector<8x128xbf16>
    %cst_404 = arith.constant dense<0.000000e+00> : vector<8x512xf32>
    %759 = tpu.matmul %758, %6, %cst_404 {dimension_numbers = #tpu.dot_dimension_numbers<[1], [0], [0], [1], [0, 0, 1, 1], [], []>} : vector<8x128xbf16>, vector<128x512xbf16>, vector<8x512xf32> -> vector<8x512xf32>
    %760 = arith.addf %755, %759 : vector<8x512xf32>
    %c0_405 = arith.constant 0 : index
    %c0_406 = arith.constant 0 : index
    %c0_407 = arith.constant 0 : index
    %761 = vector.load %arg7[%c0_405, %c0_406, %c0_407] : memref<2x8x128xf32, #tpu.memory_space<vmem>>, vector<1x8x128xf32>
    %762 = vector.shape_cast %761 : vector<1x8x128xf32> to vector<8x128xf32>
    %763 = vector.extract_strided_slice %751 {offsets = [0, 0], sizes = [8, 128], strides = [1, 1]} : vector<8x512xf32> to vector<8x128xf32>
    %cst_408 = arith.constant 5.000000e-01 : f32
    %764 = vector.broadcast %cst_408 : f32 to vector<8x128xf32>
    %765 = arith.mulf %764, %763 : vector<8x128xf32>
    %766 = math.tanh %765 : vector<8x128xf32>
    %cst_409 = arith.constant 5.000000e-01 : f32
    %767 = vector.broadcast %cst_409 : f32 to vector<8x128xf32>
    %768 = arith.mulf %767, %766 : vector<8x128xf32>
    %cst_410 = arith.constant 5.000000e-01 : f32
    %769 = vector.broadcast %cst_410 : f32 to vector<8x128xf32>
    %770 = arith.addf %768, %769 : vector<8x128xf32>
    %771 = vector.extract_strided_slice %751 {offsets = [0, 128], sizes = [8, 128], strides = [1, 1]} : vector<8x512xf32> to vector<8x128xf32>
    %cst_411 = arith.constant 5.000000e-01 : f32
    %772 = vector.broadcast %cst_411 : f32 to vector<8x128xf32>
    %773 = arith.mulf %772, %771 : vector<8x128xf32>
    %774 = math.tanh %773 : vector<8x128xf32>
    %cst_412 = arith.constant 5.000000e-01 : f32
    %775 = vector.broadcast %cst_412 : f32 to vector<8x128xf32>
    %776 = arith.mulf %775, %774 : vector<8x128xf32>
    %cst_413 = arith.constant 5.000000e-01 : f32
    %777 = vector.broadcast %cst_413 : f32 to vector<8x128xf32>
    %778 = arith.addf %776, %777 : vector<8x128xf32>
    %779 = vector.extract_strided_slice %751 {offsets = [0, 256], sizes = [8, 128], strides = [1, 1]} : vector<8x512xf32> to vector<8x128xf32>
    %780 = math.tanh %779 : vector<8x128xf32>
    %781 = vector.extract_strided_slice %751 {offsets = [0, 384], sizes = [8, 128], strides = [1, 1]} : vector<8x512xf32> to vector<8x128xf32>
    %cst_414 = arith.constant 5.000000e-01 : f32
    %782 = vector.broadcast %cst_414 : f32 to vector<8x128xf32>
    %783 = arith.mulf %782, %781 : vector<8x128xf32>
    %784 = math.tanh %783 : vector<8x128xf32>
    %cst_415 = arith.constant 5.000000e-01 : f32
    %785 = vector.broadcast %cst_415 : f32 to vector<8x128xf32>
    %786 = arith.mulf %785, %784 : vector<8x128xf32>
    %cst_416 = arith.constant 5.000000e-01 : f32
    %787 = vector.broadcast %cst_416 : f32 to vector<8x128xf32>
    %788 = arith.addf %786, %787 : vector<8x128xf32>
    %789 = arith.mulf %778, %762 : vector<8x128xf32>
    %790 = arith.mulf %770, %780 : vector<8x128xf32>
    %791 = arith.addf %789, %790 : vector<8x128xf32>
    %792 = math.tanh %791 : vector<8x128xf32>
    %793 = arith.mulf %788, %792 : vector<8x128xf32>
    %c1_417 = arith.constant 1 : index
    %c0_418 = arith.constant 0 : index
    %c0_419 = arith.constant 0 : index
    %794 = vector.load %arg7[%c1_417, %c0_418, %c0_419] : memref<2x8x128xf32, #tpu.memory_space<vmem>>, vector<1x8x128xf32>
    %795 = vector.shape_cast %794 : vector<1x8x128xf32> to vector<8x128xf32>
    %796 = vector.extract_strided_slice %760 {offsets = [0, 0], sizes = [8, 128], strides = [1, 1]} : vector<8x512xf32> to vector<8x128xf32>
    %cst_420 = arith.constant 5.000000e-01 : f32
    %797 = vector.broadcast %cst_420 : f32 to vector<8x128xf32>
    %798 = arith.mulf %797, %796 : vector<8x128xf32>
    %799 = math.tanh %798 : vector<8x128xf32>
    %cst_421 = arith.constant 5.000000e-01 : f32
    %800 = vector.broadcast %cst_421 : f32 to vector<8x128xf32>
    %801 = arith.mulf %800, %799 : vector<8x128xf32>
    %cst_422 = arith.constant 5.000000e-01 : f32
    %802 = vector.broadcast %cst_422 : f32 to vector<8x128xf32>
    %803 = arith.addf %801, %802 : vector<8x128xf32>
    %804 = vector.extract_strided_slice %760 {offsets = [0, 128], sizes = [8, 128], strides = [1, 1]} : vector<8x512xf32> to vector<8x128xf32>
    %cst_423 = arith.constant 5.000000e-01 : f32
    %805 = vector.broadcast %cst_423 : f32 to vector<8x128xf32>
    %806 = arith.mulf %805, %804 : vector<8x128xf32>
    %807 = math.tanh %806 : vector<8x128xf32>
    %cst_424 = arith.constant 5.000000e-01 : f32
    %808 = vector.broadcast %cst_424 : f32 to vector<8x128xf32>
    %809 = arith.mulf %808, %807 : vector<8x128xf32>
    %cst_425 = arith.constant 5.000000e-01 : f32
    %810 = vector.broadcast %cst_425 : f32 to vector<8x128xf32>
    %811 = arith.addf %809, %810 : vector<8x128xf32>
    %812 = vector.extract_strided_slice %760 {offsets = [0, 256], sizes = [8, 128], strides = [1, 1]} : vector<8x512xf32> to vector<8x128xf32>
    %813 = math.tanh %812 : vector<8x128xf32>
    %814 = vector.extract_strided_slice %760 {offsets = [0, 384], sizes = [8, 128], strides = [1, 1]} : vector<8x512xf32> to vector<8x128xf32>
    %cst_426 = arith.constant 5.000000e-01 : f32
    %815 = vector.broadcast %cst_426 : f32 to vector<8x128xf32>
    %816 = arith.mulf %815, %814 : vector<8x128xf32>
    %817 = math.tanh %816 : vector<8x128xf32>
    %cst_427 = arith.constant 5.000000e-01 : f32
    %818 = vector.broadcast %cst_427 : f32 to vector<8x128xf32>
    %819 = arith.mulf %818, %817 : vector<8x128xf32>
    %cst_428 = arith.constant 5.000000e-01 : f32
    %820 = vector.broadcast %cst_428 : f32 to vector<8x128xf32>
    %821 = arith.addf %819, %820 : vector<8x128xf32>
    %822 = arith.mulf %811, %795 : vector<8x128xf32>
    %823 = arith.mulf %803, %813 : vector<8x128xf32>
    %824 = arith.addf %822, %823 : vector<8x128xf32>
    %825 = math.tanh %824 : vector<8x128xf32>
    %826 = arith.mulf %821, %825 : vector<8x128xf32>
    %c0_429 = arith.constant 0 : index
    %c0_430 = arith.constant 0 : index
    %c0_431 = arith.constant 0 : index
    %827 = vector.load %arg6[%c0_429, %c0_430, %c0_431] : memref<2x8x128xf32, #tpu.memory_space<vmem>>, vector<1x8x128xf32>
    %828 = vector.shape_cast %827 : vector<1x8x128xf32> to vector<8x128xf32>
    %829 = vector.shape_cast %793 : vector<8x128xf32> to vector<1x8x128xf32>
    tpu.vector_store %arg6[%c0_429, %c0_430, %c0_431], %829 {strides = array<i32>} : memref<2x8x128xf32, #tpu.memory_space<vmem>>, vector<1x8x128xf32>,
    %c0_432 = arith.constant 0 : index
    %c0_433 = arith.constant 0 : index
    %c0_434 = arith.constant 0 : index
    %830 = vector.load %arg7[%c0_432, %c0_433, %c0_434] : memref<2x8x128xf32, #tpu.memory_space<vmem>>, vector<1x8x128xf32>
    %831 = vector.shape_cast %830 : vector<1x8x128xf32> to vector<8x128xf32>
    %832 = vector.shape_cast %791 : vector<8x128xf32> to vector<1x8x128xf32>
    tpu.vector_store %arg7[%c0_432, %c0_433, %c0_434], %832 {strides = array<i32>} : memref<2x8x128xf32, #tpu.memory_space<vmem>>, vector<1x8x128xf32>,
    %c1_435 = arith.constant 1 : index
    %c0_436 = arith.constant 0 : index
    %c0_437 = arith.constant 0 : index
    %833 = vector.load %arg6[%c1_435, %c0_436, %c0_437] : memref<2x8x128xf32, #tpu.memory_space<vmem>>, vector<1x8x128xf32>
    %834 = vector.shape_cast %833 : vector<1x8x128xf32> to vector<8x128xf32>
    %835 = vector.shape_cast %826 : vector<8x128xf32> to vector<1x8x128xf32>
    tpu.vector_store %arg6[%c1_435, %c0_436, %c0_437], %835 {strides = array<i32>} : memref<2x8x128xf32, #tpu.memory_space<vmem>>, vector<1x8x128xf32>,
    %c1_438 = arith.constant 1 : index
    %c0_439 = arith.constant 0 : index
    %c0_440 = arith.constant 0 : index
    %836 = vector.load %arg7[%c1_438, %c0_439, %c0_440] : memref<2x8x128xf32, #tpu.memory_space<vmem>>, vector<1x8x128xf32>
    %837 = vector.shape_cast %836 : vector<1x8x128xf32> to vector<8x128xf32>
    %838 = vector.shape_cast %824 : vector<8x128xf32> to vector<1x8x128xf32>
    tpu.vector_store %arg7[%c1_438, %c0_439, %c0_440], %838 {strides = array<i32>} : memref<2x8x128xf32, #tpu.memory_space<vmem>>, vector<1x8x128xf32>,
    %839 = arith.index_cast %c7_i32_389 : i32 to index
    %c0_441 = arith.constant 0 : index
    %c0_442 = arith.constant 0 : index
    %840 = vector.load %arg4[%839, %c0_441, %c0_442] : memref<8x8x128xf32, #tpu.memory_space<vmem>>, vector<1x8x128xf32>
    %841 = vector.shape_cast %840 : vector<1x8x128xf32> to vector<8x128xf32>
    %842 = vector.shape_cast %793 : vector<8x128xf32> to vector<1x8x128xf32>
    tpu.vector_store %arg4[%839, %c0_441, %c0_442], %842 {strides = array<i32>} : memref<8x8x128xf32, #tpu.memory_space<vmem>>, vector<1x8x128xf32>,
    %843 = arith.index_cast %742 : i32 to index
    %c0_443 = arith.constant 0 : index
    %c0_444 = arith.constant 0 : index
    %844 = vector.load %arg5[%843, %c0_443, %c0_444] : memref<8x8x128xf32, #tpu.memory_space<vmem>>, vector<1x8x128xf32>
    %845 = vector.shape_cast %844 : vector<1x8x128xf32> to vector<8x128xf32>
    %846 = vector.shape_cast %826 : vector<8x128xf32> to vector<1x8x128xf32>
    tpu.vector_store %arg5[%843, %c0_443, %c0_444], %846 {strides = array<i32>} : memref<8x8x128xf32, #tpu.memory_space<vmem>>, vector<1x8x128xf32>,
    %c8_i32 = arith.constant 8 : i32
    return
  }
  func.func @transform_0(%arg0: i32) -> (i32, i32, i32, i32) {
    %c0_i32 = arith.constant 0 : i32
    %c0_i32_0 = arith.constant 0 : i32
    %c0_i32_1 = arith.constant 0 : i32
    %c0_i32_2 = arith.constant 0 : i32
    return %c0_i32, %arg0, %c0_i32_0, %c0_i32_1 : i32, i32, i32, i32
  }
  func.func @transform_1(%arg0: i32) -> (i32, i32, i32, i32) {
    %c0_i32 = arith.constant 0 : i32
    %0 = arith.subi %c0_i32, %arg0 : i32
    %c1_i32 = arith.constant 1 : i32
    %c0_i32_0 = arith.constant 0 : i32
    %c0_i32_1 = arith.constant 0 : i32
    %c0_i32_2 = arith.constant 0 : i32
    return %c1_i32, %0, %c0_i32_0, %c0_i32_1 : i32, i32, i32, i32
  }
  func.func @transform_2(%arg0: i32) -> (i32, i32, i32) {
    %c0_i32 = arith.constant 0 : i32
    %c0_i32_0 = arith.constant 0 : i32
    %c0_i32_1 = arith.constant 0 : i32
    %c0_i32_2 = arith.constant 0 : i32
    return %c0_i32, %c0_i32_0, %c0_i32_1 : i32, i32, i32
  }
  func.func @transform_3(%arg0: i32) -> (i32, i32, i32) {
    %c0_i32 = arith.constant 0 : i32
    %c0_i32_0 = arith.constant 0 : i32
    %c0_i32_1 = arith.constant 0 : i32
    return %arg0, %c0_i32, %c0_i32_0 : i32, i32, i32
  }
  func.func @transform_4(%arg0: i32) -> (i32, i32, i32) {
    %c0_i32 = arith.constant 0 : i32
    %0 = arith.subi %c0_i32, %arg0 : i32
    %c0_i32_0 = arith.constant 0 : i32
    %c0_i32_1 = arith.constant 0 : i32
    %c0_i32_2 = arith.constant 0 : i32
    return %0, %c0_i32_0, %c0_i32_1 : i32, i32, i32
  }
}

</mosaic_0001>

<llo_original>
// kernel: _lambda_.4
$region0: #{_lambda_.4}
  #allocation0 [shape = 'u32[]', space=smem, size = 0x4, offset = 0x4, fixed_abs, tag = 'smem constant byte address 0x4 - core index']
  #allocation1 [shape = 'u32[144,128]{1,0:T(1,128)}', space=vmem, size = 0x12000, scoped, tag = 'internal scratch']
  %s0 = inlined_call_operand.vmem [shape: f32[64,16], index: 0, kind: input, shape index: {}]
  %s1 = inlined_call_operand.hbm [shape: bf16[2,16,512], index: 1, kind: input, shape index: {}]
  %s2 = inlined_call_operand.hbm [shape: f32[2,1,512], index: 2, kind: input, shape index: {}]
  %s3 = inlined_call_operand.vmem [shape: bf16[2,64,512], index: 3, kind: output, shape index: {}]
  %s4 = sld [smem:[#allocation0]]
  $region53: #{_lambda_.4} parent=0
    _
  %s6 = ssub.s32 1, %s4
  %s7 = scalar_select 0, %s6, %s4
  $region1: #{_lambda_.4} parent=0
    #allocation2 [shape = 'u8[32768]{0}', space=vmem, size = 0x8000, scoped, tag = 'input window, operand 1']
    #allocation3 [shape = 's32[2]{0}', space=sflag, size = 0x8, scoped, tag = 'scoped memory for _lambda_.4']
    #allocation4 [shape = 'u8[4096]{0}', space=vmem, size = 0x1000, scoped, tag = 'input window, operand 2']
    #allocation5 [shape = 's32[2]{0}', space=sflag, size = 0x8, scoped, tag = 'scoped memory for _lambda_.4']
    %8 = vsyncpa [#allocation3], 0
    %s9 = scalar_lea.sflag [#allocation3], 1
    %10 = vsyncpa %s9, 0
    %11 = vsyncpa [#allocation5], 0
    %s12 = scalar_lea.sflag [#allocation5], 1
    %13 = vsyncpa %s12, 0
    loop: start=0, step=1, limit=4
    $region2: #{_lambda_.4} parent=1 // loop_pre_header
      _
    $region3: #{_lambda_.4} parent=1 // loop_header
      %s15 = sphi 0, %s19
      %p16 = scmp.ge.s32.totalorder %s15, 4
      %s22 = sphi 0, %s34
      %s23 = sphi 0, %s30
      %s24 = sphi 0, %s22
      %s25 = sphi 0, %s23
      %s26 = sphi 0, %s24
      %s27 = sphi 0, %s25
      %s37 = sphi 0, %s39
      %s40 = sphi 0, %s37
      %s41 = sphi 0, %s40
      %s57 = sphi 0, %s41
      %s63 = sphi 0, %s65
      %s66 = sphi 0, %s63
      %s67 = sphi 0, %s66
      %s83 = sphi 0, %s67
      %s89 = sphi 0, %s91
      %s92 = sphi 0, %s89
      %s93 = sphi 0, %s92
      %s109 = sphi 0, %s93
      %s117 = sphi 0, %s119
      %s120 = sphi 0, %s117
      %s121 = sphi 0, %s120
      %s137 = sphi 0, %s121
    $region4: #{_lambda_.4} parent=1 // loop_header_branch
      %18 = sbr.rel (%p16) target = $region8
    $region5: #{_lambda_.4} parent=1 // loop_body
      %s20 = ssub.s32 %s15, 1
      %s21 = ssub.s32 %s15, 2
      %s28 = sadd.s32 1, %s23
      %p29 = scmp.ge.s32.totalorder %s28, 1
      %s30 = scalar_select %p29, 0, %s28
      %s31 = sadd.s32 1, %s22
      %s32 = scalar_select %p29, %s31, %s22
      %p33 = scmp.ge.s32.totalorder %s32, 2
      %s34 = scalar_select %p33, 0, %s32
      %s35 = ssub.s32 %s23, %s30
      %p36 = scmp.eq.s32.totalorder %s35, 0
      %s38 = sadd.s32 %s37, 1
      %s39 = scalar_select %p36, %s37, %s38
      %p42 = pneg %p36
      %p43 = scmp.eq.s32.totalorder %s15, 1
      %p44 = por %p42, %p43
      %p45 = scmp.ne.s32.totalorder %s37, %s40
      %p46 = scmp.eq.s32.totalorder %s15, 0
      %p47 = por %p45, %p46
      %p48 = scmp.ne.s32.totalorder %s37, %s40
      %p49 = scmp.eq.s32.totalorder %s20, 1
      %p50 = por %p48, %p49
      %p51 = scmp.ne.s32.totalorder %s40, %s41
      %p52 = scmp.eq.s32.totalorder %s20, 0
      %p53 = por %p51, %p52
      %p54 = scmp.ne.s32.totalorder %s40, %s41
      %p55 = scmp.eq.s32.totalorder %s21, 1
      %p56 = por %p54, %p55
      %p58 = scmp.ne.s32.totalorder %s41, %s57
      %p59 = scmp.eq.s32.totalorder %s21, 0
      %p60 = por %p58, %p59
      %s61 = ssub.s32 %s22, %s34
      %p62 = scmp.eq.s32.totalorder %s61, 0
      %s64 = sadd.s32 %s63, 1
      %s65 = scalar_select %p62, %s63, %s64
      %p68 = pneg %p62
      %p69 = scmp.eq.s32.totalorder %s15, 1
      %p70 = por %p68, %p69
      %p71 = scmp.ne.s32.totalorder %s63, %s66
      %p72 = scmp.eq.s32.totalorder %s15, 0
      %p73 = por %p71, %p72
      %p74 = scmp.ne.s32.totalorder %s63, %s66
      %p75 = scmp.eq.s32.totalorder %s20, 1
      %p76 = por %p74, %p75
      %p77 = scmp.ne.s32.totalorder %s66, %s67
      %p78 = scmp.eq.s32.totalorder %s20, 0
      %p79 = por %p77, %p78
      %p80 = scmp.ne.s32.totalorder %s66, %s67
      %p81 = scmp.eq.s32.totalorder %s21, 1
      %p82 = por %p80, %p81
      %p84 = scmp.ne.s32.totalorder %s67, %s83
      %p85 = scmp.eq.s32.totalorder %s21, 0
      %p86 = por %p84, %p85
      %s87 = ssub.s32 %s22, %s34
      %p88 = scmp.eq.s32.totalorder %s87, 0
      %s90 = sadd.s32 %s89, 1
      %s91 = scalar_select %p88, %s89, %s90
      %p94 = pneg %p88
      %p95 = scmp.eq.s32.totalorder %s15, 1
      %p96 = por %p94, %p95
      %p97 = scmp.ne.s32.totalorder %s89, %s92
      %p98 = scmp.eq.s32.totalorder %s15, 0
      %p99 = por %p97, %p98
      %p100 = scmp.ne.s32.totalorder %s89, %s92
      %p101 = scmp.eq.s32.totalorder %s20, 1
      %p102 = por %p100, %p101
      %p103 = scmp.ne.s32.totalorder %s92, %s93
      %p104 = scmp.eq.s32.totalorder %s20, 0
      %p105 = por %p103, %p104
      %p106 = scmp.ne.s32.totalorder %s92, %s93
      %p107 = scmp.eq.s32.totalorder %s21, 1
      %p108 = por %p106, %p107
      %p110 = scmp.ne.s32.totalorder %s93, %s109
      %p111 = scmp.eq.s32.totalorder %s21, 0
      %p112 = por %p110, %p111
      %s113 = ssub.s32 %s22, %s34
      %s114 = ssub.s32 %s23, %s30
      %s115 = sor.u32 %s113, %s114
      %p116 = scmp.eq.s32.totalorder %s115, 0
      %s118 = sadd.s32 %s117, 1
      %s119 = scalar_select %p116, %s117, %s118
      %p122 = pneg %p116
      %p123 = scmp.eq.s32.totalorder %s15, 1
      %p124 = por %p122, %p123
      %p125 = scmp.ne.s32.totalorder %s117, %s120
      %p126 = scmp.eq.s32.totalorder %s15, 0
      %p127 = por %p125, %p126
      %p128 = scmp.ne.s32.totalorder %s117, %s120
      %p129 = scmp.eq.s32.totalorder %s20, 1
      %p130 = por %p128, %p129
      %p131 = scmp.ne.s32.totalorder %s120, %s121
      %p132 = scmp.eq.s32.totalorder %s20, 0
      %p133 = por %p131, %p132
      %p134 = scmp.ne.s32.totalorder %s120, %s121
      %p135 = scmp.eq.s32.totalorder %s21, 1
      %p136 = por %p134, %p135
      %p138 = scmp.ne.s32.totalorder %s121, %s137
      %p139 = scmp.eq.s32.totalorder %s21, 0
      %p140 = por %p138, %p139
      %p141 = scmp.le.s32.totalorder 1, %s15
      %p142 = scmp.lt.s32.totalorder %s15, 3
      %p143 = pnand %p141, %p142
      %p144 = pneg %p143
      // Predicated region
      $region9: #{_lambda_.4} parent=5 // pred_check
        _
      $region10: #{_lambda_.4} parent=5 // pred_check_branch
        %146 = sbr.rel (%p143) target = $region12
      $region11: #{_lambda_.4} parent=5 // pred_region
        %s147 = ssub.s32 %s15, 1
        // Predicated region
        $region13: #{_lambda_.4} parent=11 // pred_check
          %p148 = pneg %p53
        $region14: #{_lambda_.4} parent=11 // pred_check_branch
          %150 = sbr.rel (%p148) target = $region16
        $region15: #{_lambda_.4} parent=11 // pred_region
          %s151 = smul.u32 8, %s25
          %p152 = scmp.lt.s32.totalorder %s151, 7
          %s153 = scalar_select %p152, %s151, 7
          %s154 = smul.addr %s153, 8
          %s155 = scalar_lea.vmem %s0, %s154
          %s156 = smul.u32 8, %s25
        $region16: #{_lambda_.4} parent=11 // pred_fallthru
          _
      $region12: #{_lambda_.4} parent=5 // pred_fallthru
        _
      %p157 = scmp.lt.s32.totalorder %s15, 2
      // Predicated region
      $region17: #{_lambda_.4} parent=5 // pred_check
        %p158 = pneg %p157
      $region18: #{_lambda_.4} parent=5 // pred_check_branch
        %160 = sbr.rel (%p158) target = $region20
      $region19: #{_lambda_.4} parent=5 // pred_region
        // Predicated region
        $region21: #{_lambda_.4} parent=19 // pred_check
          %p161 = pneg %p73
        $region22: #{_lambda_.4} parent=19 // pred_check_branch
          %163 = sbr.rel (%p161) target = $region24
        $region23: #{_lambda_.4} parent=19 // pred_region
          %s164 = sand.u32 %s63, 1
          %s165 = scalar_lea.sflag [#allocation3], %s164
          %s166 = sand.u32 %s63, 1
          %s167 = smul.addr %s166, 32
          %s168 = scalar_lea.vmem [#allocation2], %s167
          %s170 = ssub.s32 512, 512
          %171 = vsyncadd %s165, %s170
          %s172 = smul.addr %s22, 8
          %s173 = smul.addr %s172, 64
          %s174 = scalar_lea.hbm %s1, %s173
          %s175 = sshll.u32 %s168, 4
          %s176 = int_to_ptr.vmem [resolvable:$true] %s175
          %181 = dma.hbm_to_vmem [thread:$0]  %s174, 512, %s176, %s165, 256, 256, 16
        $region24: #{_lambda_.4} parent=19 // pred_fallthru
          _
        // Predicated region
        $region25: #{_lambda_.4} parent=19 // pred_check
          %p182 = pneg %p99
        $region26: #{_lambda_.4} parent=19 // pred_check_branch
          %184 = sbr.rel (%p182) target = $region28
        $region27: #{_lambda_.4} parent=19 // pred_region
          %s185 = sand.u32 %s89, 1
          %s186 = scalar_lea.sflag [#allocation5], %s185
          %s187 = sand.u32 %s89, 1
          %s188 = smul.addr %s187, 4
          %s189 = scalar_lea.vmem [#allocation4], %s188
          %s191 = ssub.s32 64, 64
          %192 = vsyncadd %s186, %s191
          %s193 = smul.addr %s22, 4
          %s194 = smul.addr %s193, 16
          %s195 = scalar_lea.hbm %s2, %s194
          %s197 = sshll.u32 %s189, 4
          %s198 = int_to_ptr.vmem [resolvable:$true] %s197
          %200 = dma.hbm_to_vmem [thread:$0]  %s195, 64, %s198, %s186
        $region28: #{_lambda_.4} parent=19 // pred_fallthru
          _
      $region20: #{_lambda_.4} parent=5 // pred_fallthru
        _
      %p201 = scmp.le.s32.totalorder 1, %s15
      %p202 = scmp.lt.s32.totalorder %s15, 3
      %p203 = pnand %p201, %p202
      %p204 = pneg %p203
      // Predicated region
      $region29: #{_lambda_.4} parent=5 // pred_check
        _
      $region30: #{_lambda_.4} parent=5 // pred_check_branch
        %206 = sbr.rel (%p203) target = $region32
      $region31: #{_lambda_.4} parent=5 // pred_region
        %s207 = ssub.s32 %s15, 1
        %s208 = sand.u32 %s66, 1
        %s209 = scalar_lea.sflag [#allocation3], %s208
        %s210 = sand.u32 %s66, 1
        %s211 = smul.addr %s210, 32
        %s212 = scalar_lea.vmem [#allocation2], %s211
        // Predicated region
        $region33: #{_lambda_.4} parent=31 // pred_check
          %p213 = pneg %p79
        $region34: #{_lambda_.4} parent=31 // pred_check_branch
          %215 = sbr.rel (%p213) target = $region36
        $region35: #{_lambda_.4} parent=31 // pred_region
          %216 = dma.done %s209, 512
        $region36: #{_lambda_.4} parent=31 // pred_fallthru
          _
        %s217 = sand.u32 %s92, 1
        %s218 = scalar_lea.sflag [#allocation5], %s217
        %s219 = sand.u32 %s92, 1
        %s220 = smul.addr %s219, 4
        %s221 = scalar_lea.vmem [#allocation4], %s220
        // Predicated region
        $region37: #{_lambda_.4} parent=31 // pred_check
          %p222 = pneg %p105
        $region38: #{_lambda_.4} parent=31 // pred_check_branch
          %224 = sbr.rel (%p222) target = $region40
        $region39: #{_lambda_.4} parent=31 // pred_region
          %225 = dma.done %s218, 64
        $region40: #{_lambda_.4} parent=31 // pred_fallthru
          _
        %s226 = smul.u32 8, %s25
        %p227 = scmp.lt.s32.totalorder %s226, 7
        %s228 = scalar_select %p227, %s226, 7
        %s229 = smul.addr %s228, 8
        %s230 = scalar_lea.vmem %s0, %s229
        %p231 = pneg %p53
        %p232 = pneg %p50
        %s233 = sand.u32 %s66, 1
        %s234 = scalar_lea.sflag [#allocation3], %s233
        %s235 = sand.u32 %s66, 1
        %s236 = smul.addr %s235, 32
        %s237 = scalar_lea.vmem [#allocation2], %s236
        %p238 = pneg %p79
        %p239 = pneg %p76
        %s240 = sand.u32 %s92, 1
        %s241 = scalar_lea.sflag [#allocation5], %s240
        %s242 = sand.u32 %s92, 1
        %s243 = smul.addr %s242, 4
        %s244 = scalar_lea.vmem [#allocation4], %s243
        %p245 = pneg %p105
        %p246 = pneg %p102
        %p247 = pneg %p133
        %p248 = pneg %p130
        %s249 = smul.u32 8, %s25
        %p250 = scmp.lt.s32.totalorder %s24, 1
        %s251 = scalar_select %p250, %s24, 1
        %p252 = scmp.lt.s32.totalorder %s249, 7
        %s253 = scalar_select %p252, %s249, 7
        %s254 = smul.addr %s253, 4
        %s255 = smul.addr %s251, 32
        %s256 = sadd.s32 %s254, %s255
        %s257 = smul.addr %s256, 4
        %s258 = scalar_lea.vmem %s3, %s257
        %s259 = smul.u32 8, %s25
        %p260 = scmp.lt.s32.totalorder %s259, 7
        %s261 = scalar_select %p260, %s259, 7
        %s262 = smul.addr %s261, 8
        %s263 = scalar_lea.vmem %s0, %s262
        %s264 = smul.u32 8, %s25
        %s265 = smul.u32 8, %s25
        %p266 = scmp.lt.s32.totalorder %s24, 1
        %s267 = scalar_select %p266, %s24, 1
        %p268 = scmp.lt.s32.totalorder %s265, 7
        %s269 = scalar_select %p268, %s265, 7
        %s270 = smul.addr %s269, 4
        %s271 = smul.addr %s267, 32
        %s272 = sadd.s32 %s270, %s271
        %s273 = smul.addr %s272, 4
        %s274 = scalar_lea.vmem %s3, %s273
        %s275 = smul.u32 8, %s25
        %v277 = vld [vmem:[%s263] sm:$0xff]
        %v278 = vld [vmem:[%s263 + $0x8] sm:$0xff]
        %v279 = vld [vmem:[%s263 + $0x10] sm:$0xff]
        %v280 = vld [vmem:[%s263 + $0x18] sm:$0xff]
        %v281 = vld [vmem:[%s263 + $0x20] sm:$0xff]
        %v282 = vld [vmem:[%s263 + $0x28] sm:$0xff]
        %v283 = vld [vmem:[%s263 + $0x30] sm:$0xff]
        %v284 = vld [vmem:[%s263 + $0x38] sm:$0xff]
        %v285 = vpack.c.bf16 %v278, %v277
        %v286 = vpack.c.bf16 %v280, %v279
        %v287 = vpack.c.bf16 %v282, %v281
        %v288 = vpack.c.bf16 %v284, %v283
        %v289 = vld [vmem:[%s212] sm:$0xff]
        %v290 = vld [vmem:[%s212 + $0x8] sm:$0xff]
        %v291 = vld [vmem:[%s212 + $0x10] sm:$0xff]
        %v292 = vld [vmem:[%s212 + $0x18] sm:$0xff]
        %v293 = vld [vmem:[%s221] sm:$0xf]
        %v295 = vlaneseq
        %v296 = vshrl.u32 %v295, 7
        %v297 = vsub.s32 0, %v296
        %v298 = vrot.slane %v293, %v297
        %v299 = vlaneseq
        %v300 = vshrl.u32 %v299, 7
        %v301 = vsub.s32 1, %v300
        %v302 = vrot.slane %v293, %v301
        %v303 = vlaneseq
        %v304 = vshrl.u32 %v303, 7
        %v305 = vsub.s32 2, %v304
        %v306 = vrot.slane %v293, %v305
        %v307 = vlaneseq
        %v308 = vshrl.u32 %v307, 7
        %v309 = vsub.s32 3, %v308
        %v310 = vrot.slane %v293, %v309
        %v319 = vunpack.c.l.b16 %v289
        %v320 = vunpack.c.h.b16 %v289
        %v321 = vunpack.c.l.b16 %v290
        %v322 = vunpack.c.h.b16 %v290
        %v323 = vunpack.c.l.b16 %v291
        %v324 = vunpack.c.h.b16 %v291
        %v325 = vunpack.c.l.b16 %v292
        %v326 = vunpack.c.h.b16 %v292
        %v327 = vpack.c.b16 %v323, %v319
        %v328 = vpack.c.b16 %v324, %v320
        %v329 = vpack.c.b16 %v325, %v321
        %v330 = vpack.c.b16 %v326, %v322
        %vm335 = vcmask 130048
        %v337 = vsel %vm335, %v285, 0
        %v340 = vsel %vm335, %v286, 0
        %v343 = vsel %vm335, %v287, 0
        %v346 = vsel %vm335, %v288, 0
        %348 = vmatprep.subr.bf16.mxu0 %v328
        %349 = vmatpush1.bf16.msra.mxu0 %v327
        %350 = vmatprep.subr.bf16.mxu0 0
        %351 = vmatpush1.bf16.msra.mxu0 0
        %352 = vmatprep.subr.bf16.mxu0 0
        %353 = vmatpush1.bf16.msra.mxu0 0
        %354 = vmatprep.subr.bf16.mxu0 0
        %355 = vmatpush1.bf16.msra.mxu0 0
        %356 = vmatprep.subr.bf16.mxu0 0
        %357 = vmatpush1.bf16.msra.mxu0 0
        %358 = vmatprep.subr.bf16.mxu0 0
        %359 = vmatpush1.bf16.msra.mxu0 0
        %360 = vmatprep.subr.bf16.mxu0 0
        %361 = vmatpush1.bf16.msra.mxu0 0
        %362 = vmatprep.subr.bf16.mxu0 0
        %363 = vmatpush1.bf16.msra.mxu0 0
        %364 = vmatprep.subr.bf16.mxu0 0
        %365 = vmatpush1.bf16.msra.mxu0 0
        %366 = vmatprep.subr.bf16.mxu0 0
        %367 = vmatpush1.bf16.msra.mxu0 0
        %368 = vmatprep.subr.bf16.mxu0 0
        %369 = vmatpush1.bf16.msra.mxu0 0
        %370 = vmatprep.subr.bf16.mxu0 0
        %371 = vmatpush1.bf16.msra.mxu0 0
        %372 = vmatprep.subr.bf16.mxu0 0
        %373 = vmatpush1.bf16.msra.mxu0 0
        %374 = vmatprep.subr.bf16.mxu0 0
        %375 = vmatpush1.bf16.msra.mxu0 0
        %376 = vmatprep.subr.bf16.mxu0 0
        %377 = vmatpush1.bf16.msra.mxu0 0
        %378 = vmatprep.subr.bf16.mxu0 0
        %379 = vmatpush1.bf16.msra.mxu0 0
        %380 = vmatprep.mubr.bf16.mxu0 0
        %381 = vmatmul.mubr.bf16.gmra.mrb[0].mxu0 %v337
        %v382 = vpop.f32.mrb[0].mxu0
        %v383 = vadd.f32 %v298, %v382
        %v384 = vpop.f32.mrb[0].mxu0
        %v385 = vadd.f32 %v302, %v384
        %v386 = vpop.f32.mrb[0].mxu0
        %v387 = vadd.f32 %v298, %v386
        %v388 = vpop.f32.mrb[0].mxu0
        %v389 = vadd.f32 %v302, %v388
        %390 = vmatprep.mubr.bf16.mxu0 0
        %391 = vmatmul.mubr.bf16.gmra.mrb[0].mxu0 %v340
        %v392 = vpop.f32.mrb[0].mxu0
        %v393 = vadd.f32 %v298, %v392
        %v394 = vpop.f32.mrb[0].mxu0
        %v395 = vadd.f32 %v302, %v394
        %v396 = vpop.f32.mrb[0].mxu0
        %v397 = vadd.f32 %v298, %v396
        %v398 = vpop.f32.mrb[0].mxu0
        %v399 = vadd.f32 %v302, %v398
        %400 = vmatprep.mubr.bf16.mxu0 0
        %401 = vmatmul.mubr.bf16.gmra.mrb[0].mxu0 %v343
        %v402 = vpop.f32.mrb[0].mxu0
        %v403 = vadd.f32 %v298, %v402
        %v404 = vpop.f32.mrb[0].mxu0
        %v405 = vadd.f32 %v302, %v404
        %v406 = vpop.f32.mrb[0].mxu0
        %v407 = vadd.f32 %v298, %v406
        %v408 = vpop.f32.mrb[0].mxu0
        %v409 = vadd.f32 %v302, %v408
        %410 = vmatprep.mubr.bf16.mxu0 0
        %411 = vmatmul.mubr.bf16.gmra.mrb[0].mxu0 %v346
        %v412 = vpop.f32.mrb[0].mxu0
        %v413 = vadd.f32 %v298, %v412
        %v414 = vpop.f32.mrb[0].mxu0
        %v415 = vadd.f32 %v302, %v414
        %v416 = vpop.f32.mrb[0].mxu0
        %v417 = vadd.f32 %v298, %v416
        %v418 = vpop.f32.mrb[0].mxu0
        %v419 = vadd.f32 %v302, %v418
        %420 = vdwg.mxu0
        %421 = vmatprep.subr.bf16.mxu0 %v330
        %422 = vmatpush1.bf16.msra.mxu0 %v329
        %423 = vmatprep.subr.bf16.mxu0 0
        %424 = vmatpush1.bf16.msra.mxu0 0
        %425 = vmatprep.subr.bf16.mxu0 0
        %426 = vmatpush1.bf16.msra.mxu0 0
        %427 = vmatprep.subr.bf16.mxu0 0
        %428 = vmatpush1.bf16.msra.mxu0 0
        %429 = vmatprep.subr.bf16.mxu0 0
        %430 = vmatpush1.bf16.msra.mxu0 0
        %431 = vmatprep.subr.bf16.mxu0 0
        %432 = vmatpush1.bf16.msra.mxu0 0
        %433 = vmatprep.subr.bf16.mxu0 0
        %434 = vmatpush1.bf16.msra.mxu0 0
        %435 = vmatprep.subr.bf16.mxu0 0
        %436 = vmatpush1.bf16.msra.mxu0 0
        %437 = vmatprep.subr.bf16.mxu0 0
        %438 = vmatpush1.bf16.msra.mxu0 0
        %439 = vmatprep.subr.bf16.mxu0 0
        %440 = vmatpush1.bf16.msra.mxu0 0
        %441 = vmatprep.subr.bf16.mxu0 0
        %442 = vmatpush1.bf16.msra.mxu0 0
        %443 = vmatprep.subr.bf16.mxu0 0
        %444 = vmatpush1.bf16.msra.mxu0 0
        %445 = vmatprep.subr.bf16.mxu0 0
        %446 = vmatpush1.bf16.msra.mxu0 0
        %447 = vmatprep.subr.bf16.mxu0 0
        %448 = vmatpush1.bf16.msra.mxu0 0
        %449 = vmatprep.subr.bf16.mxu0 0
        %450 = vmatpush1.bf16.msra.mxu0 0
        %451 = vmatprep.subr.bf16.mxu0 0
        %452 = vmatpush1.bf16.msra.mxu0 0
        %453 = vmatprep.mubr.bf16.mxu0 0
        %454 = vmatmul.mubr.bf16.gmra.mrb[0].mxu0 %v337
        %v455 = vpop.f32.mrb[0].mxu0
        %v456 = vadd.f32 %v306, %v455
        %v457 = vpop.f32.mrb[0].mxu0
        %v458 = vadd.f32 %v310, %v457
        %v459 = vpop.f32.mrb[0].mxu0
        %v460 = vadd.f32 %v306, %v459
        %v461 = vpop.f32.mrb[0].mxu0
        %v462 = vadd.f32 %v310, %v461
        %463 = vmatprep.mubr.bf16.mxu0 0
        %464 = vmatmul.mubr.bf16.gmra.mrb[0].mxu0 %v340
        %v465 = vpop.f32.mrb[0].mxu0
        %v466 = vadd.f32 %v306, %v465
        %v467 = vpop.f32.mrb[0].mxu0
        %v468 = vadd.f32 %v310, %v467
        %v469 = vpop.f32.mrb[0].mxu0
        %v470 = vadd.f32 %v306, %v469
        %v471 = vpop.f32.mrb[0].mxu0
        %v472 = vadd.f32 %v310, %v471
        %473 = vmatprep.mubr.bf16.mxu0 0
        %474 = vmatmul.mubr.bf16.gmra.mrb[0].mxu0 %v343
        %v475 = vpop.f32.mrb[0].mxu0
        %v476 = vadd.f32 %v306, %v475
        %v477 = vpop.f32.mrb[0].mxu0
        %v478 = vadd.f32 %v310, %v477
        %v479 = vpop.f32.mrb[0].mxu0
        %v480 = vadd.f32 %v306, %v479
        %v481 = vpop.f32.mrb[0].mxu0
        %v482 = vadd.f32 %v310, %v481
        %483 = vmatprep.mubr.bf16.mxu0 0
        %484 = vmatmul.mubr.bf16.gmra.mrb[0].mxu0 %v346
        %v485 = vpop.f32.mrb[0].mxu0
        %v486 = vadd.f32 %v306, %v485
        %v487 = vpop.f32.mrb[0].mxu0
        %v488 = vadd.f32 %v310, %v487
        %v489 = vpop.f32.mrb[0].mxu0
        %v490 = vadd.f32 %v306, %v489
        %v491 = vpop.f32.mrb[0].mxu0
        %v492 = vadd.f32 %v310, %v491
        %493 = vdwg.mxu0
        %v494 = vpack.c.bf16 %v387, %v383
        %v495 = vpack.c.bf16 %v389, %v385
        %v496 = vpack.c.bf16 %v460, %v456
        %v497 = vpack.c.bf16 %v462, %v458
        %v498 = vpack.c.bf16 %v397, %v393
        %v499 = vpack.c.bf16 %v399, %v395
        %v500 = vpack.c.bf16 %v470, %v466
        %v501 = vpack.c.bf16 %v472, %v468
        %v502 = vpack.c.bf16 %v407, %v403
        %v503 = vpack.c.bf16 %v409, %v405
        %v504 = vpack.c.bf16 %v480, %v476
        %v505 = vpack.c.bf16 %v482, %v478
        %v506 = vpack.c.bf16 %v417, %v413
        %v507 = vpack.c.bf16 %v419, %v415
        %v508 = vpack.c.bf16 %v490, %v486
        %v509 = vpack.c.bf16 %v492, %v488
        %v526 = vunpack.c.l.b16 %v494
        %v527 = vunpack.c.l.b16 %v495
        %v528 = vunpack.c.l.b16 %v496
        %v529 = vunpack.c.l.b16 %v497
        %v530 = vunpack.c.h.b16 %v494
        %v531 = vunpack.c.h.b16 %v495
        %v532 = vunpack.c.h.b16 %v496
        %v533 = vunpack.c.h.b16 %v497
        %v534 = vunpack.c.l.b16 %v498
        %v535 = vunpack.c.l.b16 %v499
        %v536 = vunpack.c.l.b16 %v500
        %v537 = vunpack.c.l.b16 %v501
        %v538 = vunpack.c.h.b16 %v498
        %v539 = vunpack.c.h.b16 %v499
        %v540 = vunpack.c.h.b16 %v500
        %v541 = vunpack.c.h.b16 %v501
        %v542 = vunpack.c.l.b16 %v502
        %v543 = vunpack.c.l.b16 %v503
        %v544 = vunpack.c.l.b16 %v504
        %v545 = vunpack.c.l.b16 %v505
        %v546 = vunpack.c.h.b16 %v502
        %v547 = vunpack.c.h.b16 %v503
        %v548 = vunpack.c.h.b16 %v504
        %v549 = vunpack.c.h.b16 %v505
        %v550 = vunpack.c.l.b16 %v506
        %v551 = vunpack.c.l.b16 %v507
        %v552 = vunpack.c.l.b16 %v508
        %v553 = vunpack.c.l.b16 %v509
        %v554 = vunpack.c.h.b16 %v506
        %v555 = vunpack.c.h.b16 %v507
        %v556 = vunpack.c.h.b16 %v508
        %v557 = vunpack.c.h.b16 %v509
        %v558 = vpack.c.b16 %v527, %v526
        %v559 = vpack.c.b16 %v529, %v528
        %v560 = vpack.c.b16 %v531, %v530
        %v561 = vpack.c.b16 %v533, %v532
        %v562 = vpack.c.b16 %v535, %v534
        %v563 = vpack.c.b16 %v537, %v536
        %v564 = vpack.c.b16 %v539, %v538
        %v565 = vpack.c.b16 %v541, %v540
        %v566 = vpack.c.b16 %v543, %v542
        %v567 = vpack.c.b16 %v545, %v544
        %v568 = vpack.c.b16 %v547, %v546
        %v569 = vpack.c.b16 %v549, %v548
        %v570 = vpack.c.b16 %v551, %v550
        %v571 = vpack.c.b16 %v553, %v552
        %v572 = vpack.c.b16 %v555, %v554
        %v573 = vpack.c.b16 %v557, %v556
        %590 = vst [vmem:[%s274] sm:$0xff] %v558
        %591 = vst [vmem:[%s274 + $0x8] sm:$0xff] %v559
        %592 = vst [vmem:[%s274 + $0x10] sm:$0xff] %v560
        %593 = vst [vmem:[%s274 + $0x18] sm:$0xff] %v561
        %594 = vst [vmem:[%s274 + $0x20] sm:$0xff] %v562
        %595 = vst [vmem:[%s274 + $0x28] sm:$0xff] %v563
        %596 = vst [vmem:[%s274 + $0x30] sm:$0xff] %v564
        %597 = vst [vmem:[%s274 + $0x38] sm:$0xff] %v565
        %598 = vst [vmem:[%s274 + $0x40] sm:$0xff] %v566
        %599 = vst [vmem:[%s274 + $0x48] sm:$0xff] %v567
        %600 = vst [vmem:[%s274 + $0x50] sm:$0xff] %v568
        %601 = vst [vmem:[%s274 + $0x58] sm:$0xff] %v569
        %602 = vst [vmem:[%s274 + $0x60] sm:$0xff] %v570
        %603 = vst [vmem:[%s274 + $0x68] sm:$0xff] %v571
        %604 = vst [vmem:[%s274 + $0x70] sm:$0xff] %v572
        %605 = vst [vmem:[%s274 + $0x78] sm:$0xff] %v573
        %s606 = smul.u32 8, %s25
        %p607 = scmp.lt.s32.totalorder %s24, 1
        %s608 = scalar_select %p607, %s24, 1
        %p609 = scmp.lt.s32.totalorder %s606, 7
        %s610 = scalar_select %p609, %s606, 7
        %s611 = smul.addr %s610, 4
        %s612 = smul.addr %s608, 32
        %s613 = sadd.s32 %s611, %s612
        %s614 = smul.addr %s613, 4
        %s615 = scalar_lea.vmem %s3, %s614
        // Predicated region
        $region41: #{_lambda_.4} parent=31 // pred_check
          %p616 = pneg %p130
        $region42: #{_lambda_.4} parent=31 // pred_check_branch
          %618 = sbr.rel (%p616) target = $region44
        $region43: #{_lambda_.4} parent=31 // pred_region
          %s619 = smul.u32 8, %s25
        $region44: #{_lambda_.4} parent=31 // pred_fallthru
          _
      $region32: #{_lambda_.4} parent=5 // pred_fallthru
        _
      %p620 = scmp.le.s32.totalorder 2, %s15
      // Predicated region
      $region45: #{_lambda_.4} parent=5 // pred_check
        %p621 = pneg %p620
      $region46: #{_lambda_.4} parent=5 // pred_check_branch
        %623 = sbr.rel (%p621) target = $region48
      $region47: #{_lambda_.4} parent=5 // pred_region
        %s624 = ssub.s32 %s15, 2
        // Predicated region
        $region49: #{_lambda_.4} parent=47 // pred_check
          %p625 = pneg %p136
        $region50: #{_lambda_.4} parent=47 // pred_check_branch
          %627 = sbr.rel (%p625) target = $region52
        $region51: #{_lambda_.4} parent=47 // pred_region
          %s628 = smul.u32 8, %s27
          %p629 = scmp.lt.s32.totalorder %s26, 1
          %s630 = scalar_select %p629, %s26, 1
          %p631 = scmp.lt.s32.totalorder %s628, 7
          %s632 = scalar_select %p631, %s628, 7
          %s633 = smul.addr %s632, 4
          %s634 = smul.addr %s630, 32
          %s635 = sadd.s32 %s633, %s634
          %s636 = smul.addr %s635, 4
          %s637 = scalar_lea.vmem %s3, %s636
        $region52: #{_lambda_.4} parent=47 // pred_fallthru
          _
      $region48: #{_lambda_.4} parent=5 // pred_fallthru
        _
    $region6: #{_lambda_.4} parent=1 // loop_footer
      %s19 = sadd.s32 1, %s15
    $region7: #{_lambda_.4} parent=1 // loop_footer_branch
      %14 = sbr.rel target = $region3
    $region8: #{_lambda_.4} parent=1 // loop_exit
      _
    %638 = vsyncpa [#allocation3], 1
    %s639 = scalar_lea.sflag [#allocation3], 1
    %640 = vsyncpa %s639, 1
    %641 = vsyncpa [#allocation5], 1
    %s642 = scalar_lea.sflag [#allocation5], 1
    %643 = vsyncpa %s642, 1

// kernel: _lambda_.6
$region0: #{_lambda_.6}
  #allocation0 [shape = 'u32[]', space=smem, size = 0x4, offset = 0x4, fixed_abs, tag = 'smem constant byte address 0x4 - core index']
  #allocation1 [shape = 'u32[144,128]{1,0:T(1,128)}', space=vmem, size = 0x12000, scoped, tag = 'internal scratch']
  %s0 = inlined_call_operand.vmem [shape: bf16[64,128], index: 0, kind: input, shape index: {}]
  %s1 = inlined_call_operand.vmem [shape: bf16[64,128], index: 1, kind: input, shape index: {}]
  %s2 = inlined_call_operand.vmem [shape: bf16[2,128,512], index: 2, kind: input, shape index: {}]
  %s3 = inlined_call_operand.vmem [shape: bf16[2,128,512], index: 3, kind: input, shape index: {}]
  %s4 = inlined_call_operand.vmem [shape: f32[2,1,512], index: 4, kind: input, shape index: {}]
  %s5 = inlined_call_operand.vmem [shape: bf16[2,64,512], index: 5, kind: output, shape index: {}]
  %s6 = sld [smem:[#allocation0]]
  $region53: #{_lambda_.6} parent=0
    _
  %s8 = ssub.s32 1, %s6
  %s9 = scalar_select 0, %s8, %s6
  loop: start=0, step=1, limit=4
  $region2: #{_lambda_.6} parent=0 // loop_pre_header
    _
  $region3: #{_lambda_.6} parent=0 // loop_header
    %s11 = sphi 0, %s15
    %p12 = scmp.ge.s32.totalorder %s11, 4
    %s18 = sphi 0, %s30
    %s19 = sphi 0, %s26
    %s20 = sphi 0, %s18
    %s21 = sphi 0, %s19
    %s22 = sphi 0, %s20
    %s23 = sphi 0, %s21
    %s33 = sphi 0, %s35
    %s36 = sphi 0, %s33
    %s37 = sphi 0, %s36
    %s53 = sphi 0, %s37
    %s59 = sphi 0, %s61
    %s62 = sphi 0, %s59
    %s63 = sphi 0, %s62
    %s79 = sphi 0, %s63
    %s85 = sphi 0, %s87
    %s88 = sphi 0, %s85
    %s89 = sphi 0, %s88
    %s105 = sphi 0, %s89
    %s111 = sphi 0, %s113
    %s114 = sphi 0, %s111
    %s115 = sphi 0, %s114
    %s131 = sphi 0, %s115
    %s137 = sphi 0, %s139
    %s140 = sphi 0, %s137
    %s141 = sphi 0, %s140
    %s157 = sphi 0, %s141
    %s165 = sphi 0, %s167
    %s168 = sphi 0, %s165
    %s169 = sphi 0, %s168
    %s185 = sphi 0, %s169
  $region4: #{_lambda_.6} parent=0 // loop_header_branch
    %14 = sbr.rel (%p12) target = $region8
  $region5: #{_lambda_.6} parent=0 // loop_body
    %s16 = ssub.s32 %s11, 1
    %s17 = ssub.s32 %s11, 2
    %s24 = sadd.s32 1, %s19
    %p25 = scmp.ge.s32.totalorder %s24, 1
    %s26 = scalar_select %p25, 0, %s24
    %s27 = sadd.s32 1, %s18
    %s28 = scalar_select %p25, %s27, %s18
    %p29 = scmp.ge.s32.totalorder %s28, 2
    %s30 = scalar_select %p29, 0, %s28
    %s31 = ssub.s32 %s19, %s26
    %p32 = scmp.eq.s32.totalorder %s31, 0
    %s34 = sadd.s32 %s33, 1
    %s35 = scalar_select %p32, %s33, %s34
    %p38 = pneg %p32
    %p39 = scmp.eq.s32.totalorder %s11, 1
    %p40 = por %p38, %p39
    %p41 = scmp.ne.s32.totalorder %s33, %s36
    %p42 = scmp.eq.s32.totalorder %s11, 0
    %p43 = por %p41, %p42
    %p44 = scmp.ne.s32.totalorder %s33, %s36
    %p45 = scmp.eq.s32.totalorder %s16, 1
    %p46 = por %p44, %p45
    %p47 = scmp.ne.s32.totalorder %s36, %s37
    %p48 = scmp.eq.s32.totalorder %s16, 0
    %p49 = por %p47, %p48
    %p50 = scmp.ne.s32.totalorder %s36, %s37
    %p51 = scmp.eq.s32.totalorder %s17, 1
    %p52 = por %p50, %p51
    %p54 = scmp.ne.s32.totalorder %s37, %s53
    %p55 = scmp.eq.s32.totalorder %s17, 0
    %p56 = por %p54, %p55
    %s57 = ssub.s32 %s19, %s26
    %p58 = scmp.eq.s32.totalorder %s57, 0
    %s60 = sadd.s32 %s59, 1
    %s61 = scalar_select %p58, %s59, %s60
    %p64 = pneg %p58
    %p65 = scmp.eq.s32.totalorder %s11, 1
    %p66 = por %p64, %p65
    %p67 = scmp.ne.s32.totalorder %s59, %s62
    %p68 = scmp.eq.s32.totalorder %s11, 0
    %p69 = por %p67, %p68
    %p70 = scmp.ne.s32.totalorder %s59, %s62
    %p71 = scmp.eq.s32.totalorder %s16, 1
    %p72 = por %p70, %p71
    %p73 = scmp.ne.s32.totalorder %s62, %s63
    %p74 = scmp.eq.s32.totalorder %s16, 0
    %p75 = por %p73, %p74
    %p76 = scmp.ne.s32.totalorder %s62, %s63
    %p77 = scmp.eq.s32.totalorder %s17, 1
    %p78 = por %p76, %p77
    %p80 = scmp.ne.s32.totalorder %s63, %s79
    %p81 = scmp.eq.s32.totalorder %s17, 0
    %p82 = por %p80, %p81
    %s83 = ssub.s32 %s18, %s30
    %p84 = scmp.eq.s32.totalorder %s83, 0
    %s86 = sadd.s32 %s85, 1
    %s87 = scalar_select %p84, %s85, %s86
    %p90 = pneg %p84
    %p91 = scmp.eq.s32.totalorder %s11, 1
    %p92 = por %p90, %p91
    %p93 = scmp.ne.s32.totalorder %s85, %s88
    %p94 = scmp.eq.s32.totalorder %s11, 0
    %p95 = por %p93, %p94
    %p96 = scmp.ne.s32.totalorder %s85, %s88
    %p97 = scmp.eq.s32.totalorder %s16, 1
    %p98 = por %p96, %p97
    %p99 = scmp.ne.s32.totalorder %s88, %s89
    %p100 = scmp.eq.s32.totalorder %s16, 0
    %p101 = por %p99, %p100
    %p102 = scmp.ne.s32.totalorder %s88, %s89
    %p103 = scmp.eq.s32.totalorder %s17, 1
    %p104 = por %p102, %p103
    %p106 = scmp.ne.s32.totalorder %s89, %s105
    %p107 = scmp.eq.s32.totalorder %s17, 0
    %p108 = por %p106, %p107
    %s109 = ssub.s32 %s18, %s30
    %p110 = scmp.eq.s32.totalorder %s109, 0
    %s112 = sadd.s32 %s111, 1
    %s113 = scalar_select %p110, %s111, %s112
    %p116 = pneg %p110
    %p117 = scmp.eq.s32.totalorder %s11, 1
    %p118 = por %p116, %p117
    %p119 = scmp.ne.s32.totalorder %s111, %s114
    %p120 = scmp.eq.s32.totalorder %s11, 0
    %p121 = por %p119, %p120
    %p122 = scmp.ne.s32.totalorder %s111, %s114
    %p123 = scmp.eq.s32.totalorder %s16, 1
    %p124 = por %p122, %p123
    %p125 = scmp.ne.s32.totalorder %s114, %s115
    %p126 = scmp.eq.s32.totalorder %s16, 0
    %p127 = por %p125, %p126
    %p128 = scmp.ne.s32.totalorder %s114, %s115
    %p129 = scmp.eq.s32.totalorder %s17, 1
    %p130 = por %p128, %p129
    %p132 = scmp.ne.s32.totalorder %s115, %s131
    %p133 = scmp.eq.s32.totalorder %s17, 0
    %p134 = por %p132, %p133
    %s135 = ssub.s32 %s18, %s30
    %p136 = scmp.eq.s32.totalorder %s135, 0
    %s138 = sadd.s32 %s137, 1
    %s139 = scalar_select %p136, %s137, %s138
    %p142 = pneg %p136
    %p143 = scmp.eq.s32.totalorder %s11, 1
    %p144 = por %p142, %p143
    %p145 = scmp.ne.s32.totalorder %s137, %s140
    %p146 = scmp.eq.s32.totalorder %s11, 0
    %p147 = por %p145, %p146
    %p148 = scmp.ne.s32.totalorder %s137, %s140
    %p149 = scmp.eq.s32.totalorder %s16, 1
    %p150 = por %p148, %p149
    %p151 = scmp.ne.s32.totalorder %s140, %s141
    %p152 = scmp.eq.s32.totalorder %s16, 0
    %p153 = por %p151, %p152
    %p154 = scmp.ne.s32.totalorder %s140, %s141
    %p155 = scmp.eq.s32.totalorder %s17, 1
    %p156 = por %p154, %p155
    %p158 = scmp.ne.s32.totalorder %s141, %s157
    %p159 = scmp.eq.s32.totalorder %s17, 0
    %p160 = por %p158, %p159
    %s161 = ssub.s32 %s18, %s30
    %s162 = ssub.s32 %s19, %s26
    %s163 = sor.u32 %s161, %s162
    %p164 = scmp.eq.s32.totalorder %s163, 0
    %s166 = sadd.s32 %s165, 1
    %s167 = scalar_select %p164, %s165, %s166
    %p170 = pneg %p164
    %p171 = scmp.eq.s32.totalorder %s11, 1
    %p172 = por %p170, %p171
    %p173 = scmp.ne.s32.totalorder %s165, %s168
    %p174 = scmp.eq.s32.totalorder %s11, 0
    %p175 = por %p173, %p174
    %p176 = scmp.ne.s32.totalorder %s165, %s168
    %p177 = scmp.eq.s32.totalorder %s16, 1
    %p178 = por %p176, %p177
    %p179 = scmp.ne.s32.totalorder %s168, %s169
    %p180 = scmp.eq.s32.totalorder %s16, 0
    %p181 = por %p179, %p180
    %p182 = scmp.ne.s32.totalorder %s168, %s169
    %p183 = scmp.eq.s32.totalorder %s17, 1
    %p184 = por %p182, %p183
    %p186 = scmp.ne.s32.totalorder %s169, %s185
    %p187 = scmp.eq.s32.totalorder %s17, 0
    %p188 = por %p186, %p187
    %p189 = scmp.le.s32.totalorder 1, %s11
    %p190 = scmp.lt.s32.totalorder %s11, 3
    %p191 = pnand %p189, %p190
    %p192 = pneg %p191
    // Predicated region
    $region9: #{_lambda_.6} parent=5 // pred_check
      _
    $region10: #{_lambda_.6} parent=5 // pred_check_branch
      %194 = sbr.rel (%p191) target = $region12
    $region11: #{_lambda_.6} parent=5 // pred_region
      %s195 = ssub.s32 %s11, 1
      // Predicated region
      $region13: #{_lambda_.6} parent=11 // pred_check
        %p196 = pneg %p49
      $region14: #{_lambda_.6} parent=11 // pred_check_branch
        %198 = sbr.rel (%p196) target = $region16
      $region15: #{_lambda_.6} parent=11 // pred_region
        %s199 = smul.u32 8, %s21
        %p200 = scmp.lt.s32.totalorder %s199, 7
        %s201 = scalar_select %p200, %s199, 7
        %s202 = smul.addr %s201, 4
        %s203 = scalar_lea.vmem %s0, %s202
        %s204 = smul.u32 8, %s21
      $region16: #{_lambda_.6} parent=11 // pred_fallthru
        _
      // Predicated region
      $region17: #{_lambda_.6} parent=11 // pred_check
        %p205 = pneg %p75
      $region18: #{_lambda_.6} parent=11 // pred_check_branch
        %207 = sbr.rel (%p205) target = $region20
      $region19: #{_lambda_.6} parent=11 // pred_region
        %s208 = smul.u32 8, %s21
        %p209 = scmp.lt.s32.totalorder %s208, 7
        %s210 = scalar_select %p209, %s208, 7
        %s211 = smul.addr %s210, 4
        %s212 = scalar_lea.vmem %s1, %s211
        %s213 = smul.u32 8, %s21
      $region20: #{_lambda_.6} parent=11 // pred_fallthru
        _
    $region12: #{_lambda_.6} parent=5 // pred_fallthru
      _
    %p214 = scmp.lt.s32.totalorder %s11, 2
    // Predicated region
    $region21: #{_lambda_.6} parent=5 // pred_check
      %p215 = pneg %p214
    $region22: #{_lambda_.6} parent=5 // pred_check_branch
      %217 = sbr.rel (%p215) target = $region24
    $region23: #{_lambda_.6} parent=5 // pred_region
      // Predicated region
      $region25: #{_lambda_.6} parent=23 // pred_check
        %p218 = pneg %p95
      $region26: #{_lambda_.6} parent=23 // pred_check_branch
        %220 = sbr.rel (%p218) target = $region28
      $region27: #{_lambda_.6} parent=23 // pred_region
        %p221 = scmp.lt.s32.totalorder %s18, 1
        %s222 = scalar_select %p221, %s18, 1
        %s223 = smul.addr %s222, 64
        %s224 = smul.addr %s223, 4
        %s225 = scalar_lea.vmem %s2, %s224
      $region28: #{_lambda_.6} parent=23 // pred_fallthru
        _
      // Predicated region
      $region29: #{_lambda_.6} parent=23 // pred_check
        %p226 = pneg %p121
      $region30: #{_lambda_.6} parent=23 // pred_check_branch
        %228 = sbr.rel (%p226) target = $region32
      $region31: #{_lambda_.6} parent=23 // pred_region
        %p229 = scmp.lt.s32.totalorder %s18, 1
        %s230 = scalar_select %p229, %s18, 1
        %s231 = smul.addr %s230, 64
        %s232 = smul.addr %s231, 4
        %s233 = scalar_lea.vmem %s3, %s232
      $region32: #{_lambda_.6} parent=23 // pred_fallthru
        _
      // Predicated region
      $region33: #{_lambda_.6} parent=23 // pred_check
        %p234 = pneg %p147
      $region34: #{_lambda_.6} parent=23 // pred_check_branch
        %236 = sbr.rel (%p234) target = $region36
      $region35: #{_lambda_.6} parent=23 // pred_region
        %p237 = scmp.lt.s32.totalorder %s18, 1
        %s238 = scalar_select %p237, %s18, 1
        %s239 = smul.addr %s238, 4
        %s240 = scalar_lea.vmem %s4, %s239
      $region36: #{_lambda_.6} parent=23 // pred_fallthru
        _
    $region24: #{_lambda_.6} parent=5 // pred_fallthru
      _
    %p241 = scmp.le.s32.totalorder 1, %s11
    %p242 = scmp.lt.s32.totalorder %s11, 3
    %p243 = pnand %p241, %p242
    %p244 = pneg %p243
    // Predicated region
    $region37: #{_lambda_.6} parent=5 // pred_check
      _
    $region38: #{_lambda_.6} parent=5 // pred_check_branch
      %246 = sbr.rel (%p243) target = $region40
    $region39: #{_lambda_.6} parent=5 // pred_region
      %s247 = ssub.s32 %s11, 1
      %s248 = smul.u32 8, %s21
      %p249 = scmp.lt.s32.totalorder %s248, 7
      %s250 = scalar_select %p249, %s248, 7
      %s251 = smul.addr %s250, 4
      %s252 = scalar_lea.vmem %s0, %s251
      %p253 = pneg %p49
      %p254 = pneg %p46
      %s255 = smul.u32 8, %s21
      %p256 = scmp.lt.s32.totalorder %s255, 7
      %s257 = scalar_select %p256, %s255, 7
      %s258 = smul.addr %s257, 4
      %s259 = scalar_lea.vmem %s1, %s258
      %p260 = pneg %p75
      %p261 = pneg %p72
      %p262 = scmp.lt.s32.totalorder %s20, 1
      %s263 = scalar_select %p262, %s20, 1
      %s264 = smul.addr %s263, 64
      %s265 = smul.addr %s264, 4
      %s266 = scalar_lea.vmem %s2, %s265
      %p267 = pneg %p101
      %p268 = pneg %p98
      %p269 = scmp.lt.s32.totalorder %s20, 1
      %s270 = scalar_select %p269, %s20, 1
      %s271 = smul.addr %s270, 64
      %s272 = smul.addr %s271, 4
      %s273 = scalar_lea.vmem %s3, %s272
      %p274 = pneg %p127
      %p275 = pneg %p124
      %p276 = scmp.lt.s32.totalorder %s20, 1
      %s277 = scalar_select %p276, %s20, 1
      %s278 = smul.addr %s277, 4
      %s279 = scalar_lea.vmem %s4, %s278
      %p280 = pneg %p153
      %p281 = pneg %p150
      %p282 = pneg %p181
      %p283 = pneg %p178
      %s284 = smul.u32 8, %s21
      %p285 = scmp.lt.s32.totalorder %s20, 1
      %s286 = scalar_select %p285, %s20, 1
      %p287 = scmp.lt.s32.totalorder %s284, 7
      %s288 = scalar_select %p287, %s284, 7
      %s289 = smul.addr %s288, 4
      %s290 = smul.addr %s286, 32
      %s291 = sadd.s32 %s289, %s290
      %s292 = smul.addr %s291, 4
      %s293 = scalar_lea.vmem %s5, %s292
      %s294 = smul.u32 8, %s21
      %p295 = scmp.lt.s32.totalorder %s294, 7
      %s296 = scalar_select %p295, %s294, 7
      %s297 = smul.addr %s296, 4
      %s298 = scalar_lea.vmem %s0, %s297
      %s299 = smul.u32 8, %s21
      %s300 = smul.u32 8, %s21
      %p301 = scmp.lt.s32.totalorder %s300, 7
      %s302 = scalar_select %p301, %s300, 7
      %s303 = smul.addr %s302, 4
      %s304 = scalar_lea.vmem %s1, %s303
      %s305 = smul.u32 8, %s21
      %p306 = scmp.lt.s32.totalorder %s20, 1
      %s307 = scalar_select %p306, %s20, 1
      %s308 = smul.addr %s307, 64
      %s309 = smul.addr %s308, 4
      %s310 = scalar_lea.vmem %s2, %s309
      %p311 = scmp.lt.s32.totalorder %s20, 1
      %s312 = scalar_select %p311, %s20, 1
      %s313 = smul.addr %s312, 64
      %s314 = smul.addr %s313, 4
      %s315 = scalar_lea.vmem %s3, %s314
      %p316 = scmp.lt.s32.totalorder %s20, 1
      %s317 = scalar_select %p316, %s20, 1
      %s318 = smul.addr %s317, 4
      %s319 = scalar_lea.vmem %s4, %s318
      %s320 = smul.u32 8, %s21
      %p321 = scmp.lt.s32.totalorder %s20, 1
      %s322 = scalar_select %p321, %s20, 1
      %p323 = scmp.lt.s32.totalorder %s320, 7
      %s324 = scalar_select %p323, %s320, 7
      %s325 = smul.addr %s324, 4
      %s326 = smul.addr %s322, 32
      %s327 = sadd.s32 %s325, %s326
      %s328 = smul.addr %s327, 4
      %s329 = scalar_lea.vmem %s5, %s328
      %s330 = smul.u32 8, %s21
      %v332 = vld [vmem:[%s298] sm:$0xf]
      %v333 = vld [vmem:[%s298 + $0x4] sm:$0xf]
      %v334 = vld [vmem:[%s298 + $0x8] sm:$0xf]
      %v335 = vld [vmem:[%s298 + $0xc] sm:$0xf]
      %v336 = vld [vmem:[%s298 + $0x10] sm:$0xf]
      %v337 = vld [vmem:[%s298 + $0x14] sm:$0xf]
      %v338 = vld [vmem:[%s298 + $0x18] sm:$0xf]
      %v339 = vld [vmem:[%s298 + $0x1c] sm:$0xf]
      %v340 = vld [vmem:[%s310] sm:$0xff]
      %v341 = vld [vmem:[%s310 + $0x8] sm:$0xff]
      %v342 = vld [vmem:[%s310 + $0x10] sm:$0xff]
      %v343 = vld [vmem:[%s310 + $0x18] sm:$0xff]
      %v344 = vld [vmem:[%s310 + $0x20] sm:$0xff]
      %v345 = vld [vmem:[%s310 + $0x28] sm:$0xff]
      %v346 = vld [vmem:[%s310 + $0x30] sm:$0xff]
      %v347 = vld [vmem:[%s310 + $0x38] sm:$0xff]
      %v348 = vld [vmem:[%s310 + $0x40] sm:$0xff]
      %v349 = vld [vmem:[%s310 + $0x48] sm:$0xff]
      %v350 = vld [vmem:[%s310 + $0x50] sm:$0xff]
      %v351 = vld [vmem:[%s310 + $0x58] sm:$0xff]
      %v352 = vld [vmem:[%s310 + $0x60] sm:$0xff]
      %v353 = vld [vmem:[%s310 + $0x68] sm:$0xff]
      %v354 = vld [vmem:[%s310 + $0x70] sm:$0xff]
      %v355 = vld [vmem:[%s310 + $0x78] sm:$0xff]
      %v356 = vld [vmem:[%s310 + $0x80] sm:$0xff]
      %v357 = vld [vmem:[%s310 + $0x88] sm:$0xff]
      %v358 = vld [vmem:[%s310 + $0x90] sm:$0xff]
      %v359 = vld [vmem:[%s310 + $0x98] sm:$0xff]
      %v360 = vld [vmem:[%s310 + $0xa0] sm:$0xff]
      %v361 = vld [vmem:[%s310 + $0xa8] sm:$0xff]
      %v362 = vld [vmem:[%s310 + $0xb0] sm:$0xff]
      %v363 = vld [vmem:[%s310 + $0xb8] sm:$0xff]
      %v364 = vld [vmem:[%s310 + $0xc0] sm:$0xff]
      %v365 = vld [vmem:[%s310 + $0xc8] sm:$0xff]
      %v366 = vld [vmem:[%s310 + $0xd0] sm:$0xff]
      %v367 = vld [vmem:[%s310 + $0xd8] sm:$0xff]
      %v368 = vld [vmem:[%s310 + $0xe0] sm:$0xff]
      %v369 = vld [vmem:[%s310 + $0xe8] sm:$0xff]
      %v370 = vld [vmem:[%s310 + $0xf0] sm:$0xff]
      %v371 = vld [vmem:[%s310 + $0xf8] sm:$0xff]
      %v372 = vld [vmem:[%s304] sm:$0xf]
      %v373 = vld [vmem:[%s304 + $0x4] sm:$0xf]
      %v374 = vld [vmem:[%s304 + $0x8] sm:$0xf]
      %v375 = vld [vmem:[%s304 + $0xc] sm:$0xf]
      %v376 = vld [vmem:[%s304 + $0x10] sm:$0xf]
      %v377 = vld [vmem:[%s304 + $0x14] sm:$0xf]
      %v378 = vld [vmem:[%s304 + $0x18] sm:$0xf]
      %v379 = vld [vmem:[%s304 + $0x1c] sm:$0xf]
      %v380 = vld [vmem:[%s315] sm:$0xff]
      %v381 = vld [vmem:[%s315 + $0x8] sm:$0xff]
      %v382 = vld [vmem:[%s315 + $0x10] sm:$0xff]
      %v383 = vld [vmem:[%s315 + $0x18] sm:$0xff]
      %v384 = vld [vmem:[%s315 + $0x20] sm:$0xff]
      %v385 = vld [vmem:[%s315 + $0x28] sm:$0xff]
      %v386 = vld [vmem:[%s315 + $0x30] sm:$0xff]
      %v387 = vld [vmem:[%s315 + $0x38] sm:$0xff]
      %v388 = vld [vmem:[%s315 + $0x40] sm:$0xff]
      %v389 = vld [vmem:[%s315 + $0x48] sm:$0xff]
      %v390 = vld [vmem:[%s315 + $0x50] sm:$0xff]
      %v391 = vld [vmem:[%s315 + $0x58] sm:$0xff]
      %v392 = vld [vmem:[%s315 + $0x60] sm:$0xff]
      %v393 = vld [vmem:[%s315 + $0x68] sm:$0xff]
      %v394 = vld [vmem:[%s315 + $0x70] sm:$0xff]
      %v395 = vld [vmem:[%s315 + $0x78] sm:$0xff]
      %v396 = vld [vmem:[%s315 + $0x80] sm:$0xff]
      %v397 = vld [vmem:[%s315 + $0x88] sm:$0xff]
      %v398 = vld [vmem:[%s315 + $0x90] sm:$0xff]
      %v399 = vld [vmem:[%s315 + $0x98] sm:$0xff]
      %v400 = vld [vmem:[%s315 + $0xa0] sm:$0xff]
      %v401 = vld [vmem:[%s315 + $0xa8] sm:$0xff]
      %v402 = vld [vmem:[%s315 + $0xb0] sm:$0xff]
      %v403 = vld [vmem:[%s315 + $0xb8] sm:$0xff]
      %v404 = vld [vmem:[%s315 + $0xc0] sm:$0xff]
      %v405 = vld [vmem:[%s315 + $0xc8] sm:$0xff]
      %v406 = vld [vmem:[%s315 + $0xd0] sm:$0xff]
      %v407 = vld [vmem:[%s315 + $0xd8] sm:$0xff]
      %v408 = vld [vmem:[%s315 + $0xe0] sm:$0xff]
      %v409 = vld [vmem:[%s315 + $0xe8] sm:$0xff]
      %v410 = vld [vmem:[%s315 + $0xf0] sm:$0xff]
      %v411 = vld [vmem:[%s315 + $0xf8] sm:$0xff]
      %v420 = vunpack.c.l.b16 %v372
      %v421 = vunpack.c.l.b16 %v373
      %v422 = vunpack.c.l.b16 %v374
      %v423 = vunpack.c.l.b16 %v375
      %v424 = vunpack.c.l.b16 %v376
      %v425 = vunpack.c.l.b16 %v377
      %v426 = vunpack.c.l.b16 %v378
      %v427 = vunpack.c.l.b16 %v379
      %v428 = vpack.c.b16 %v421, %v420
      %v429 = vpack.c.b16 %v423, %v422
      %v430 = vpack.c.b16 %v425, %v424
      %v431 = vpack.c.b16 %v427, %v426
      %v468 = vunpack.c.l.b16 %v380
      %v469 = vunpack.c.h.b16 %v380
      %v470 = vunpack.c.l.b16 %v381
      %v471 = vunpack.c.h.b16 %v381
      %v472 = vunpack.c.l.b16 %v382
      %v473 = vunpack.c.h.b16 %v382
      %v474 = vunpack.c.l.b16 %v383
      %v475 = vunpack.c.h.b16 %v383
      %v476 = vunpack.c.l.b16 %v384
      %v477 = vunpack.c.h.b16 %v384
      %v478 = vunpack.c.l.b16 %v385
      %v479 = vunpack.c.h.b16 %v385
      %v480 = vunpack.c.l.b16 %v386
      %v481 = vunpack.c.h.b16 %v386
      %v482 = vunpack.c.l.b16 %v387
      %v483 = vunpack.c.h.b16 %v387
      %v484 = vunpack.c.l.b16 %v388
      %v485 = vunpack.c.h.b16 %v388
      %v486 = vunpack.c.l.b16 %v389
      %v487 = vunpack.c.h.b16 %v389
      %v488 = vunpack.c.l.b16 %v390
      %v489 = vunpack.c.h.b16 %v390
      %v490 = vunpack.c.l.b16 %v391
      %v491 = vunpack.c.h.b16 %v391
      %v492 = vunpack.c.l.b16 %v392
      %v493 = vunpack.c.h.b16 %v392
      %v494 = vunpack.c.l.b16 %v393
      %v495 = vunpack.c.h.b16 %v393
      %v496 = vunpack.c.l.b16 %v394
      %v497 = vunpack.c.h.b16 %v394
      %v498 = vunpack.c.l.b16 %v395
      %v499 = vunpack.c.h.b16 %v395
      %v500 = vunpack.c.l.b16 %v396
      %v501 = vunpack.c.h.b16 %v396
      %v502 = vunpack.c.l.b16 %v397
      %v503 = vunpack.c.h.b16 %v397
      %v504 = vunpack.c.l.b16 %v398
      %v505 = vunpack.c.h.b16 %v398
      %v506 = vunpack.c.l.b16 %v399
      %v507 = vunpack.c.h.b16 %v399
      %v508 = vunpack.c.l.b16 %v400
      %v509 = vunpack.c.h.b16 %v400
      %v510 = vunpack.c.l.b16 %v401
      %v511 = vunpack.c.h.b16 %v401
      %v512 = vunpack.c.l.b16 %v402
      %v513 = vunpack.c.h.b16 %v402
      %v514 = vunpack.c.l.b16 %v403
      %v515 = vunpack.c.h.b16 %v403
      %v516 = vunpack.c.l.b16 %v404
      %v517 = vunpack.c.h.b16 %v404
      %v518 = vunpack.c.l.b16 %v405
      %v519 = vunpack.c.h.b16 %v405
      %v520 = vunpack.c.l.b16 %v406
      %v521 = vunpack.c.h.b16 %v406
      %v522 = vunpack.c.l.b16 %v407
      %v523 = vunpack.c.h.b16 %v407
      %v524 = vunpack.c.l.b16 %v408
      %v525 = vunpack.c.h.b16 %v408
      %v526 = vunpack.c.l.b16 %v409
      %v527 = vunpack.c.h.b16 %v409
      %v528 = vunpack.c.l.b16 %v410
      %v529 = vunpack.c.h.b16 %v410
      %v530 = vunpack.c.l.b16 %v411
      %v531 = vunpack.c.h.b16 %v411
      %v532 = vpack.c.b16 %v472, %v468
      %v533 = vpack.c.b16 %v473, %v469
      %v534 = vpack.c.b16 %v474, %v470
      %v535 = vpack.c.b16 %v475, %v471
      %v536 = vpack.c.b16 %v480, %v476
      %v537 = vpack.c.b16 %v481, %v477
      %v538 = vpack.c.b16 %v482, %v478
      %v539 = vpack.c.b16 %v483, %v479
      %v540 = vpack.c.b16 %v488, %v484
      %v541 = vpack.c.b16 %v489, %v485
      %v542 = vpack.c.b16 %v490, %v486
      %v543 = vpack.c.b16 %v491, %v487
      %v544 = vpack.c.b16 %v496, %v492
      %v545 = vpack.c.b16 %v497, %v493
      %v546 = vpack.c.b16 %v498, %v494
      %v547 = vpack.c.b16 %v499, %v495
      %v548 = vpack.c.b16 %v504, %v500
      %v549 = vpack.c.b16 %v505, %v501
      %v550 = vpack.c.b16 %v506, %v502
      %v551 = vpack.c.b16 %v507, %v503
      %v552 = vpack.c.b16 %v512, %v508
      %v553 = vpack.c.b16 %v513, %v509
      %v554 = vpack.c.b16 %v514, %v510
      %v555 = vpack.c.b16 %v515, %v511
      %v556 = vpack.c.b16 %v520, %v516
      %v557 = vpack.c.b16 %v521, %v517
      %v558 = vpack.c.b16 %v522, %v518
      %v559 = vpack.c.b16 %v523, %v519
      %v560 = vpack.c.b16 %v528, %v524
      %v561 = vpack.c.b16 %v529, %v525
      %v562 = vpack.c.b16 %v530, %v526
      %v563 = vpack.c.b16 %v531, %v527
      %596 = vmatprep.subr.bf16.mxu0 %v533
      %597 = vmatpush1.bf16.msra.mxu0 %v532
      %598 = vmatprep.subr.bf16.mxu0 %v537
      %599 = vmatpush1.bf16.msra.mxu0 %v536
      %600 = vmatprep.subr.bf16.mxu0 %v541
      %601 = vmatpush1.bf16.msra.mxu0 %v540
      %602 = vmatprep.subr.bf16.mxu0 %v545
      %603 = vmatpush1.bf16.msra.mxu0 %v544
      %604 = vmatprep.subr.bf16.mxu0 %v549
      %605 = vmatpush1.bf16.msra.mxu0 %v548
      %606 = vmatprep.subr.bf16.mxu0 %v553
      %607 = vmatpush1.bf16.msra.mxu0 %v552
      %608 = vmatprep.subr.bf16.mxu0 %v557
      %609 = vmatpush1.bf16.msra.mxu0 %v556
      %610 = vmatprep.subr.bf16.mxu0 %v561
      %611 = vmatpush1.bf16.msra.mxu0 %v560
      %612 = vmatprep.subr.bf16.mxu0 0
      %613 = vmatpush1.bf16.msra.mxu0 0
      %614 = vmatprep.subr.bf16.mxu0 0
      %615 = vmatpush1.bf16.msra.mxu0 0
      %616 = vmatprep.subr.bf16.mxu0 0
      %617 = vmatpush1.bf16.msra.mxu0 0
      %618 = vmatprep.subr.bf16.mxu0 0
      %619 = vmatpush1.bf16.msra.mxu0 0
      %620 = vmatprep.subr.bf16.mxu0 0
      %621 = vmatpush1.bf16.msra.mxu0 0
      %622 = vmatprep.subr.bf16.mxu0 0
      %623 = vmatpush1.bf16.msra.mxu0 0
      %624 = vmatprep.subr.bf16.mxu0 0
      %625 = vmatpush1.bf16.msra.mxu0 0
      %626 = vmatprep.subr.bf16.mxu0 0
      %627 = vmatpush1.bf16.msra.mxu0 0
      %628 = vmatprep.mubr.bf16.mxu0 0
      %629 = vmatmul.mubr.bf16.gmra.mrb[0].mxu0 %v428
      %v630 = vpop.f32.mrb[0].mxu0
      %v631 = vadd.f32 0.0, %v630
      %v632 = vpop.f32.mrb[0].mxu0
      %v633 = vadd.f32 0.0, %v632
      %v634 = vpop.f32.mrb[0].mxu0
      %v635 = vadd.f32 0.0, %v634
      %v636 = vpop.f32.mrb[0].mxu0
      %v637 = vadd.f32 0.0, %v636
      %638 = vmatprep.mubr.bf16.mxu0 0
      %639 = vmatmul.mubr.bf16.gmra.mrb[0].mxu0 %v429
      %v640 = vpop.f32.mrb[0].mxu0
      %v641 = vadd.f32 0.0, %v640
      %v642 = vpop.f32.mrb[0].mxu0
      %v643 = vadd.f32 0.0, %v642
      %v644 = vpop.f32.mrb[0].mxu0
      %v645 = vadd.f32 0.0, %v644
      %v646 = vpop.f32.mrb[0].mxu0
      %v647 = vadd.f32 0.0, %v646
      %648 = vmatprep.mubr.bf16.mxu0 0
      %649 = vmatmul.mubr.bf16.gmra.mrb[0].mxu0 %v430
      %v650 = vpop.f32.mrb[0].mxu0
      %v651 = vadd.f32 0.0, %v650
      %v652 = vpop.f32.mrb[0].mxu0
      %v653 = vadd.f32 0.0, %v652
      %v654 = vpop.f32.mrb[0].mxu0
      %v655 = vadd.f32 0.0, %v654
      %v656 = vpop.f32.mrb[0].mxu0
      %v657 = vadd.f32 0.0, %v656
      %658 = vmatprep.mubr.bf16.mxu0 0
      %659 = vmatmul.mubr.bf16.gmra.mrb[0].mxu0 %v431
      %v660 = vpop.f32.mrb[0].mxu0
      %v661 = vadd.f32 0.0, %v660
      %v662 = vpop.f32.mrb[0].mxu0
      %v663 = vadd.f32 0.0, %v662
      %v664 = vpop.f32.mrb[0].mxu0
      %v665 = vadd.f32 0.0, %v664
      %v666 = vpop.f32.mrb[0].mxu0
      %v667 = vadd.f32 0.0, %v666
      %668 = vdwg.mxu0
      %669 = vmatprep.subr.bf16.mxu0 %v535
      %670 = vmatpush1.bf16.msra.mxu0 %v534
      %671 = vmatprep.subr.bf16.mxu0 %v539
      %672 = vmatpush1.bf16.msra.mxu0 %v538
      %673 = vmatprep.subr.bf16.mxu0 %v543
      %674 = vmatpush1.bf16.msra.mxu0 %v542
      %675 = vmatprep.subr.bf16.mxu0 %v547
      %676 = vmatpush1.bf16.msra.mxu0 %v546
      %677 = vmatprep.subr.bf16.mxu0 %v551
      %678 = vmatpush1.bf16.msra.mxu0 %v550
      %679 = vmatprep.subr.bf16.mxu0 %v555
      %680 = vmatpush1.bf16.msra.mxu0 %v554
      %681 = vmatprep.subr.bf16.mxu0 %v559
      %682 = vmatpush1.bf16.msra.mxu0 %v558
      %683 = vmatprep.subr.bf16.mxu0 %v563
      %684 = vmatpush1.bf16.msra.mxu0 %v562
      %685 = vmatprep.subr.bf16.mxu0 0
      %686 = vmatpush1.bf16.msra.mxu0 0
      %687 = vmatprep.subr.bf16.mxu0 0
      %688 = vmatpush1.bf16.msra.mxu0 0
      %689 = vmatprep.subr.bf16.mxu0 0
      %690 = vmatpush1.bf16.msra.mxu0 0
      %691 = vmatprep.subr.bf16.mxu0 0
      %692 = vmatpush1.bf16.msra.mxu0 0
      %693 = vmatprep.subr.bf16.mxu0 0
      %694 = vmatpush1.bf16.msra.mxu0 0
      %695 = vmatprep.subr.bf16.mxu0 0
      %696 = vmatpush1.bf16.msra.mxu0 0
      %697 = vmatprep.subr.bf16.mxu0 0
      %698 = vmatpush1.bf16.msra.mxu0 0
      %699 = vmatprep.subr.bf16.mxu0 0
      %700 = vmatpush1.bf16.msra.mxu0 0
      %701 = vmatprep.mubr.bf16.mxu0 0
      %702 = vmatmul.mubr.bf16.gmra.mrb[0].mxu0 %v428
      %v703 = vpop.f32.mrb[0].mxu0
      %v704 = vadd.f32 0.0, %v703
      %v705 = vpop.f32.mrb[0].mxu0
      %v706 = vadd.f32 0.0, %v705
      %v707 = vpop.f32.mrb[0].mxu0
      %v708 = vadd.f32 0.0, %v707
      %v709 = vpop.f32.mrb[0].mxu0
      %v710 = vadd.f32 0.0, %v709
      %711 = vmatprep.mubr.bf16.mxu0 0
      %712 = vmatmul.mubr.bf16.gmra.mrb[0].mxu0 %v429
      %v713 = vpop.f32.mrb[0].mxu0
      %v714 = vadd.f32 0.0, %v713
      %v715 = vpop.f32.mrb[0].mxu0
      %v716 = vadd.f32 0.0, %v715
      %v717 = vpop.f32.mrb[0].mxu0
      %v718 = vadd.f32 0.0, %v717
      %v719 = vpop.f32.mrb[0].mxu0
      %v720 = vadd.f32 0.0, %v719
      %721 = vmatprep.mubr.bf16.mxu0 0
      %722 = vmatmul.mubr.bf16.gmra.mrb[0].mxu0 %v430
      %v723 = vpop.f32.mrb[0].mxu0
      %v724 = vadd.f32 0.0, %v723
      %v725 = vpop.f32.mrb[0].mxu0
      %v726 = vadd.f32 0.0, %v725
      %v727 = vpop.f32.mrb[0].mxu0
      %v728 = vadd.f32 0.0, %v727
      %v729 = vpop.f32.mrb[0].mxu0
      %v730 = vadd.f32 0.0, %v729
      %731 = vmatprep.mubr.bf16.mxu0 0
      %732 = vmatmul.mubr.bf16.gmra.mrb[0].mxu0 %v431
      %v733 = vpop.f32.mrb[0].mxu0
      %v734 = vadd.f32 0.0, %v733
      %v735 = vpop.f32.mrb[0].mxu0
      %v736 = vadd.f32 0.0, %v735
      %v737 = vpop.f32.mrb[0].mxu0
      %v738 = vadd.f32 0.0, %v737
      %v739 = vpop.f32.mrb[0].mxu0
      %v740 = vadd.f32 0.0, %v739
      %741 = vdwg.mxu0
      %v750 = vunpack.c.l.b16 %v332
      %v751 = vunpack.c.l.b16 %v333
      %v752 = vunpack.c.l.b16 %v334
      %v753 = vunpack.c.l.b16 %v335
      %v754 = vunpack.c.l.b16 %v336
      %v755 = vunpack.c.l.b16 %v337
      %v756 = vunpack.c.l.b16 %v338
      %v757 = vunpack.c.l.b16 %v339
      %v758 = vpack.c.b16 %v751, %v750
      %v759 = vpack.c.b16 %v753, %v752
      %v760 = vpack.c.b16 %v755, %v754
      %v761 = vpack.c.b16 %v757, %v756
      %v798 = vunpack.c.l.b16 %v340
      %v799 = vunpack.c.h.b16 %v340
      %v800 = vunpack.c.l.b16 %v341
      %v801 = vunpack.c.h.b16 %v341
      %v802 = vunpack.c.l.b16 %v342
      %v803 = vunpack.c.h.b16 %v342
      %v804 = vunpack.c.l.b16 %v343
      %v805 = vunpack.c.h.b16 %v343
      %v806 = vunpack.c.l.b16 %v344
      %v807 = vunpack.c.h.b16 %v344
      %v808 = vunpack.c.l.b16 %v345
      %v809 = vunpack.c.h.b16 %v345
      %v810 = vunpack.c.l.b16 %v346
      %v811 = vunpack.c.h.b16 %v346
      %v812 = vunpack.c.l.b16 %v347
      %v813 = vunpack.c.h.b16 %v347
      %v814 = vunpack.c.l.b16 %v348
      %v815 = vunpack.c.h.b16 %v348
      %v816 = vunpack.c.l.b16 %v349
      %v817 = vunpack.c.h.b16 %v349
      %v818 = vunpack.c.l.b16 %v350
      %v819 = vunpack.c.h.b16 %v350
      %v820 = vunpack.c.l.b16 %v351
      %v821 = vunpack.c.h.b16 %v351
      %v822 = vunpack.c.l.b16 %v352
      %v823 = vunpack.c.h.b16 %v352
      %v824 = vunpack.c.l.b16 %v353
      %v825 = vunpack.c.h.b16 %v353
      %v826 = vunpack.c.l.b16 %v354
      %v827 = vunpack.c.h.b16 %v354
      %v828 = vunpack.c.l.b16 %v355
      %v829 = vunpack.c.h.b16 %v355
      %v830 = vunpack.c.l.b16 %v356
      %v831 = vunpack.c.h.b16 %v356
      %v832 = vunpack.c.l.b16 %v357
      %v833 = vunpack.c.h.b16 %v357
      %v834 = vunpack.c.l.b16 %v358
      %v835 = vunpack.c.h.b16 %v358
      %v836 = vunpack.c.l.b16 %v359
      %v837 = vunpack.c.h.b16 %v359
      %v838 = vunpack.c.l.b16 %v360
      %v839 = vunpack.c.h.b16 %v360
      %v840 = vunpack.c.l.b16 %v361
      %v841 = vunpack.c.h.b16 %v361
      %v842 = vunpack.c.l.b16 %v362
      %v843 = vunpack.c.h.b16 %v362
      %v844 = vunpack.c.l.b16 %v363
      %v845 = vunpack.c.h.b16 %v363
      %v846 = vunpack.c.l.b16 %v364
      %v847 = vunpack.c.h.b16 %v364
      %v848 = vunpack.c.l.b16 %v365
      %v849 = vunpack.c.h.b16 %v365
      %v850 = vunpack.c.l.b16 %v366
      %v851 = vunpack.c.h.b16 %v366
      %v852 = vunpack.c.l.b16 %v367
      %v853 = vunpack.c.h.b16 %v367
      %v854 = vunpack.c.l.b16 %v368
      %v855 = vunpack.c.h.b16 %v368
      %v856 = vunpack.c.l.b16 %v369
      %v857 = vunpack.c.h.b16 %v369
      %v858 = vunpack.c.l.b16 %v370
      %v859 = vunpack.c.h.b16 %v370
      %v860 = vunpack.c.l.b16 %v371
      %v861 = vunpack.c.h.b16 %v371
      %v862 = vpack.c.b16 %v802, %v798
      %v863 = vpack.c.b16 %v803, %v799
      %v864 = vpack.c.b16 %v804, %v800
      %v865 = vpack.c.b16 %v805, %v801
      %v866 = vpack.c.b16 %v810, %v806
      %v867 = vpack.c.b16 %v811, %v807
      %v868 = vpack.c.b16 %v812, %v808
      %v869 = vpack.c.b16 %v813, %v809
      %v870 = vpack.c.b16 %v818, %v814
      %v871 = vpack.c.b16 %v819, %v815
      %v872 = vpack.c.b16 %v820, %v816
      %v873 = vpack.c.b16 %v821, %v817
      %v874 = vpack.c.b16 %v826, %v822
      %v875 = vpack.c.b16 %v827, %v823
      %v876 = vpack.c.b16 %v828, %v824
      %v877 = vpack.c.b16 %v829, %v825
      %v878 = vpack.c.b16 %v834, %v830
      %v879 = vpack.c.b16 %v835, %v831
      %v880 = vpack.c.b16 %v836, %v832
      %v881 = vpack.c.b16 %v837, %v833
      %v882 = vpack.c.b16 %v842, %v838
      %v883 = vpack.c.b16 %v843, %v839
      %v884 = vpack.c.b16 %v844, %v840
      %v885 = vpack.c.b16 %v845, %v841
      %v886 = vpack.c.b16 %v850, %v846
      %v887 = vpack.c.b16 %v851, %v847
      %v888 = vpack.c.b16 %v852, %v848
      %v889 = vpack.c.b16 %v853, %v849
      %v890 = vpack.c.b16 %v858, %v854
      %v891 = vpack.c.b16 %v859, %v855
      %v892 = vpack.c.b16 %v860, %v856
      %v893 = vpack.c.b16 %v861, %v857
      %926 = vmatprep.subr.bf16.mxu0 %v863
      %927 = vmatpush1.bf16.msra.mxu0 %v862
      %928 = vmatprep.subr.bf16.mxu0 %v867
      %929 = vmatpush1.bf16.msra.mxu0 %v866
      %930 = vmatprep.subr.bf16.mxu0 %v871
      %931 = vmatpush1.bf16.msra.mxu0 %v870
      %932 = vmatprep.subr.bf16.mxu0 %v875
      %933 = vmatpush1.bf16.msra.mxu0 %v874
      %934 = vmatprep.subr.bf16.mxu0 %v879
      %935 = vmatpush1.bf16.msra.mxu0 %v878
      %936 = vmatprep.subr.bf16.mxu0 %v883
      %937 = vmatpush1.bf16.msra.mxu0 %v882
      %938 = vmatprep.subr.bf16.mxu0 %v887
      %939 = vmatpush1.bf16.msra.mxu0 %v886
      %940 = vmatprep.subr.bf16.mxu0 %v891
      %941 = vmatpush1.bf16.msra.mxu0 %v890
      %942 = vmatprep.subr.bf16.mxu0 0
      %943 = vmatpush1.bf16.msra.mxu0 0
      %944 = vmatprep.subr.bf16.mxu0 0
      %945 = vmatpush1.bf16.msra.mxu0 0
      %946 = vmatprep.subr.bf16.mxu0 0
      %947 = vmatpush1.bf16.msra.mxu0 0
      %948 = vmatprep.subr.bf16.mxu0 0
      %949 = vmatpush1.bf16.msra.mxu0 0
      %950 = vmatprep.subr.bf16.mxu0 0
      %951 = vmatpush1.bf16.msra.mxu0 0
      %952 = vmatprep.subr.bf16.mxu0 0
      %953 = vmatpush1.bf16.msra.mxu0 0
      %954 = vmatprep.subr.bf16.mxu0 0
      %955 = vmatpush1.bf16.msra.mxu0 0
      %956 = vmatprep.subr.bf16.mxu0 0
      %957 = vmatpush1.bf16.msra.mxu0 0
      %958 = vmatprep.mubr.bf16.mxu0 0
      %959 = vmatmul.mubr.bf16.gmra.mrb[0].mxu0 %v758
      %v960 = vpop.f32.mrb[0].mxu0
      %v961 = vadd.f32 %v631, %v960
      %v962 = vpop.f32.mrb[0].mxu0
      %v963 = vadd.f32 %v633, %v962
      %v964 = vpop.f32.mrb[0].mxu0
      %v965 = vadd.f32 %v635, %v964
      %v966 = vpop.f32.mrb[0].mxu0
      %v967 = vadd.f32 %v637, %v966
      %968 = vmatprep.mubr.bf16.mxu0 0
      %969 = vmatmul.mubr.bf16.gmra.mrb[0].mxu0 %v759
      %v970 = vpop.f32.mrb[0].mxu0
      %v971 = vadd.f32 %v641, %v970
      %v972 = vpop.f32.mrb[0].mxu0
      %v973 = vadd.f32 %v643, %v972
      %v974 = vpop.f32.mrb[0].mxu0
      %v975 = vadd.f32 %v645, %v974
      %v976 = vpop.f32.mrb[0].mxu0
      %v977 = vadd.f32 %v647, %v976
      %978 = vmatprep.mubr.bf16.mxu0 0
      %979 = vmatmul.mubr.bf16.gmra.mrb[0].mxu0 %v760
      %v980 = vpop.f32.mrb[0].mxu0
      %v981 = vadd.f32 %v651, %v980
      %v982 = vpop.f32.mrb[0].mxu0
      %v983 = vadd.f32 %v653, %v982
      %v984 = vpop.f32.mrb[0].mxu0
      %v985 = vadd.f32 %v655, %v984
      %v986 = vpop.f32.mrb[0].mxu0
      %v987 = vadd.f32 %v657, %v986
      %988 = vmatprep.mubr.bf16.mxu0 0
      %989 = vmatmul.mubr.bf16.gmra.mrb[0].mxu0 %v761
      %v990 = vpop.f32.mrb[0].mxu0
      %v991 = vadd.f32 %v661, %v990
      %v992 = vpop.f32.mrb[0].mxu0
      %v993 = vadd.f32 %v663, %v992
      %v994 = vpop.f32.mrb[0].mxu0
      %v995 = vadd.f32 %v665, %v994
      %v996 = vpop.f32.mrb[0].mxu0
      %v997 = vadd.f32 %v667, %v996
      %998 = vdwg.mxu0
      %999 = vmatprep.subr.bf16.mxu0 %v865
      %1000 = vmatpush1.bf16.msra.mxu0 %v864
      %1001 = vmatprep.subr.bf16.mxu0 %v869
      %1002 = vmatpush1.bf16.msra.mxu0 %v868
      %1003 = vmatprep.subr.bf16.mxu0 %v873
      %1004 = vmatpush1.bf16.msra.mxu0 %v872
      %1005 = vmatprep.subr.bf16.mxu0 %v877
      %1006 = vmatpush1.bf16.msra.mxu0 %v876
      %1007 = vmatprep.subr.bf16.mxu0 %v881
      %1008 = vmatpush1.bf16.msra.mxu0 %v880
      %1009 = vmatprep.subr.bf16.mxu0 %v885
      %1010 = vmatpush1.bf16.msra.mxu0 %v884
      %1011 = vmatprep.subr.bf16.mxu0 %v889
      %1012 = vmatpush1.bf16.msra.mxu0 %v888
      %1013 = vmatprep.subr.bf16.mxu0 %v893
      %1014 = vmatpush1.bf16.msra.mxu0 %v892
      %1015 = vmatprep.subr.bf16.mxu0 0
      %1016 = vmatpush1.bf16.msra.mxu0 0
      %1017 = vmatprep.subr.bf16.mxu0 0
      %1018 = vmatpush1.bf16.msra.mxu0 0
      %1019 = vmatprep.subr.bf16.mxu0 0
      %1020 = vmatpush1.bf16.msra.mxu0 0
      %1021 = vmatprep.subr.bf16.mxu0 0
      %1022 = vmatpush1.bf16.msra.mxu0 0
      %1023 = vmatprep.subr.bf16.mxu0 0
      %1024 = vmatpush1.bf16.msra.mxu0 0
      %1025 = vmatprep.subr.bf16.mxu0 0
      %1026 = vmatpush1.bf16.msra.mxu0 0
      %1027 = vmatprep.subr.bf16.mxu0 0
      %1028 = vmatpush1.bf16.msra.mxu0 0
      %1029 = vmatprep.subr.bf16.mxu0 0
      %1030 = vmatpush1.bf16.msra.mxu0 0
      %1031 = vmatprep.mubr.bf16.mxu0 0
      %1032 = vmatmul.mubr.bf16.gmra.mrb[0].mxu0 %v758
      %v1033 = vpop.f32.mrb[0].mxu0
      %v1034 = vadd.f32 %v704, %v1033
      %v1035 = vpop.f32.mrb[0].mxu0
      %v1036 = vadd.f32 %v706, %v1035
      %v1037 = vpop.f32.mrb[0].mxu0
      %v1038 = vadd.f32 %v708, %v1037
      %v1039 = vpop.f32.mrb[0].mxu0
      %v1040 = vadd.f32 %v710, %v1039
      %1041 = vmatprep.mubr.bf16.mxu0 0
      %1042 = vmatmul.mubr.bf16.gmra.mrb[0].mxu0 %v759
      %v1043 = vpop.f32.mrb[0].mxu0
      %v1044 = vadd.f32 %v714, %v1043
      %v1045 = vpop.f32.mrb[0].mxu0
      %v1046 = vadd.f32 %v716, %v1045
      %v1047 = vpop.f32.mrb[0].mxu0
      %v1048 = vadd.f32 %v718, %v1047
      %v1049 = vpop.f32.mrb[0].mxu0
      %v1050 = vadd.f32 %v720, %v1049
      %1051 = vmatprep.mubr.bf16.mxu0 0
      %1052 = vmatmul.mubr.bf16.gmra.mrb[0].mxu0 %v760
      %v1053 = vpop.f32.mrb[0].mxu0
      %v1054 = vadd.f32 %v724, %v1053
      %v1055 = vpop.f32.mrb[0].mxu0
      %v1056 = vadd.f32 %v726, %v1055
      %v1057 = vpop.f32.mrb[0].mxu0
      %v1058 = vadd.f32 %v728, %v1057
      %v1059 = vpop.f32.mrb[0].mxu0
      %v1060 = vadd.f32 %v730, %v1059
      %1061 = vmatprep.mubr.bf16.mxu0 0
      %1062 = vmatmul.mubr.bf16.gmra.mrb[0].mxu0 %v761
      %v1063 = vpop.f32.mrb[0].mxu0
      %v1064 = vadd.f32 %v734, %v1063
      %v1065 = vpop.f32.mrb[0].mxu0
      %v1066 = vadd.f32 %v736, %v1065
      %v1067 = vpop.f32.mrb[0].mxu0
      %v1068 = vadd.f32 %v738, %v1067
      %v1069 = vpop.f32.mrb[0].mxu0
      %v1070 = vadd.f32 %v740, %v1069
      %1071 = vdwg.mxu0
      %v1072 = vld [vmem:[%s319] sm:$0xf]
      %v1074 = vlaneseq
      %v1075 = vshrl.u32 %v1074, 7
      %v1076 = vsub.s32 0, %v1075
      %v1077 = vrot.slane %v1072, %v1076
      %v1078 = vlaneseq
      %v1079 = vshrl.u32 %v1078, 7
      %v1080 = vsub.s32 1, %v1079
      %v1081 = vrot.slane %v1072, %v1080
      %v1082 = vlaneseq
      %v1083 = vshrl.u32 %v1082, 7
      %v1084 = vsub.s32 2, %v1083
      %v1085 = vrot.slane %v1072, %v1084
      %v1086 = vlaneseq
      %v1087 = vshrl.u32 %v1086, 7
      %v1088 = vsub.s32 3, %v1087
      %v1089 = vrot.slane %v1072, %v1088
      %v1094 = vadd.f32 %v961, %v1077
      %v1095 = vadd.f32 %v963, %v1081
      %v1096 = vadd.f32 %v1034, %v1085
      %v1097 = vadd.f32 %v1036, %v1089
      %v1098 = vadd.f32 %v965, %v1077
      %v1099 = vadd.f32 %v967, %v1081
      %v1100 = vadd.f32 %v1038, %v1085
      %v1101 = vadd.f32 %v1040, %v1089
      %v1102 = vadd.f32 %v971, %v1077
      %v1103 = vadd.f32 %v973, %v1081
      %v1104 = vadd.f32 %v1044, %v1085
      %v1105 = vadd.f32 %v1046, %v1089
      %v1106 = vadd.f32 %v975, %v1077
      %v1107 = vadd.f32 %v977, %v1081
      %v1108 = vadd.f32 %v1048, %v1085
      %v1109 = vadd.f32 %v1050, %v1089
      %v1110 = vadd.f32 %v981, %v1077
      %v1111 = vadd.f32 %v983, %v1081
      %v1112 = vadd.f32 %v1054, %v1085
      %v1113 = vadd.f32 %v1056, %v1089
      %v1114 = vadd.f32 %v985, %v1077
      %v1115 = vadd.f32 %v987, %v1081
      %v1116 = vadd.f32 %v1058, %v1085
      %v1117 = vadd.f32 %v1060, %v1089
      %v1118 = vadd.f32 %v991, %v1077
      %v1119 = vadd.f32 %v993, %v1081
      %v1120 = vadd.f32 %v1064, %v1085
      %v1121 = vadd.f32 %v1066, %v1089
      %v1122 = vadd.f32 %v995, %v1077
      %v1123 = vadd.f32 %v997, %v1081
      %v1124 = vadd.f32 %v1068, %v1085
      %v1125 = vadd.f32 %v1070, %v1089
      %v1126 = vpack.c.bf16 %v1098, %v1094
      %v1127 = vpack.c.bf16 %v1099, %v1095
      %v1128 = vpack.c.bf16 %v1100, %v1096
      %v1129 = vpack.c.bf16 %v1101, %v1097
      %v1130 = vpack.c.bf16 %v1106, %v1102
      %v1131 = vpack.c.bf16 %v1107, %v1103
      %v1132 = vpack.c.bf16 %v1108, %v1104
      %v1133 = vpack.c.bf16 %v1109, %v1105
      %v1134 = vpack.c.bf16 %v1114, %v1110
      %v1135 = vpack.c.bf16 %v1115, %v1111
      %v1136 = vpack.c.bf16 %v1116, %v1112
      %v1137 = vpack.c.bf16 %v1117, %v1113
      %v1138 = vpack.c.bf16 %v1122, %v1118
      %v1139 = vpack.c.bf16 %v1123, %v1119
      %v1140 = vpack.c.bf16 %v1124, %v1120
      %v1141 = vpack.c.bf16 %v1125, %v1121
      %v1158 = vunpack.c.l.b16 %v1126
      %v1159 = vunpack.c.l.b16 %v1127
      %v1160 = vunpack.c.l.b16 %v1128
      %v1161 = vunpack.c.l.b16 %v1129
      %v1162 = vunpack.c.h.b16 %v1126
      %v1163 = vunpack.c.h.b16 %v1127
      %v1164 = vunpack.c.h.b16 %v1128
      %v1165 = vunpack.c.h.b16 %v1129
      %v1166 = vunpack.c.l.b16 %v1130
      %v1167 = vunpack.c.l.b16 %v1131
      %v1168 = vunpack.c.l.b16 %v1132
      %v1169 = vunpack.c.l.b16 %v1133
      %v1170 = vunpack.c.h.b16 %v1130
      %v1171 = vunpack.c.h.b16 %v1131
      %v1172 = vunpack.c.h.b16 %v1132
      %v1173 = vunpack.c.h.b16 %v1133
      %v1174 = vunpack.c.l.b16 %v1134
      %v1175 = vunpack.c.l.b16 %v1135
      %v1176 = vunpack.c.l.b16 %v1136
      %v1177 = vunpack.c.l.b16 %v1137
      %v1178 = vunpack.c.h.b16 %v1134
      %v1179 = vunpack.c.h.b16 %v1135
      %v1180 = vunpack.c.h.b16 %v1136
      %v1181 = vunpack.c.h.b16 %v1137
      %v1182 = vunpack.c.l.b16 %v1138
      %v1183 = vunpack.c.l.b16 %v1139
      %v1184 = vunpack.c.l.b16 %v1140
      %v1185 = vunpack.c.l.b16 %v1141
      %v1186 = vunpack.c.h.b16 %v1138
      %v1187 = vunpack.c.h.b16 %v1139
      %v1188 = vunpack.c.h.b16 %v1140
      %v1189 = vunpack.c.h.b16 %v1141
      %v1190 = vpack.c.b16 %v1159, %v1158
      %v1191 = vpack.c.b16 %v1161, %v1160
      %v1192 = vpack.c.b16 %v1163, %v1162
      %v1193 = vpack.c.b16 %v1165, %v1164
      %v1194 = vpack.c.b16 %v1167, %v1166
      %v1195 = vpack.c.b16 %v1169, %v1168
      %v1196 = vpack.c.b16 %v1171, %v1170
      %v1197 = vpack.c.b16 %v1173, %v1172
      %v1198 = vpack.c.b16 %v1175, %v1174
      %v1199 = vpack.c.b16 %v1177, %v1176
      %v1200 = vpack.c.b16 %v1179, %v1178
      %v1201 = vpack.c.b16 %v1181, %v1180
      %v1202 = vpack.c.b16 %v1183, %v1182
      %v1203 = vpack.c.b16 %v1185, %v1184
      %v1204 = vpack.c.b16 %v1187, %v1186
      %v1205 = vpack.c.b16 %v1189, %v1188
      %1222 = vst [vmem:[%s329] sm:$0xff] %v1190
      %1223 = vst [vmem:[%s329 + $0x8] sm:$0xff] %v1191
      %1224 = vst [vmem:[%s329 + $0x10] sm:$0xff] %v1192
      %1225 = vst [vmem:[%s329 + $0x18] sm:$0xff] %v1193
      %1226 = vst [vmem:[%s329 + $0x20] sm:$0xff] %v1194
      %1227 = vst [vmem:[%s329 + $0x28] sm:$0xff] %v1195
      %1228 = vst [vmem:[%s329 + $0x30] sm:$0xff] %v1196
      %1229 = vst [vmem:[%s329 + $0x38] sm:$0xff] %v1197
      %1230 = vst [vmem:[%s329 + $0x40] sm:$0xff] %v1198
      %1231 = vst [vmem:[%s329 + $0x48] sm:$0xff] %v1199
      %1232 = vst [vmem:[%s329 + $0x50] sm:$0xff] %v1200
      %1233 = vst [vmem:[%s329 + $0x58] sm:$0xff] %v1201
      %1234 = vst [vmem:[%s329 + $0x60] sm:$0xff] %v1202
      %1235 = vst [vmem:[%s329 + $0x68] sm:$0xff] %v1203
      %1236 = vst [vmem:[%s329 + $0x70] sm:$0xff] %v1204
      %1237 = vst [vmem:[%s329 + $0x78] sm:$0xff] %v1205
      %s1238 = smul.u32 8, %s21
      %p1239 = scmp.lt.s32.totalorder %s20, 1
      %s1240 = scalar_select %p1239, %s20, 1
      %p1241 = scmp.lt.s32.totalorder %s1238, 7
      %s1242 = scalar_select %p1241, %s1238, 7
      %s1243 = smul.addr %s1242, 4
      %s1244 = smul.addr %s1240, 32
      %s1245 = sadd.s32 %s1243, %s1244
      %s1246 = smul.addr %s1245, 4
      %s1247 = scalar_lea.vmem %s5, %s1246
      // Predicated region
      $region41: #{_lambda_.6} parent=39 // pred_check
        %p1248 = pneg %p178
      $region42: #{_lambda_.6} parent=39 // pred_check_branch
        %1250 = sbr.rel (%p1248) target = $region44
      $region43: #{_lambda_.6} parent=39 // pred_region
        %s1251 = smul.u32 8, %s21
      $region44: #{_lambda_.6} parent=39 // pred_fallthru
        _
    $region40: #{_lambda_.6} parent=5 // pred_fallthru
      _
    %p1252 = scmp.le.s32.totalorder 2, %s11
    // Predicated region
    $region45: #{_lambda_.6} parent=5 // pred_check
      %p1253 = pneg %p1252
    $region46: #{_lambda_.6} parent=5 // pred_check_branch
      %1255 = sbr.rel (%p1253) target = $region48
    $region47: #{_lambda_.6} parent=5 // pred_region
      %s1256 = ssub.s32 %s11, 2
      // Predicated region
      $region49: #{_lambda_.6} parent=47 // pred_check
        %p1257 = pneg %p184
      $region50: #{_lambda_.6} parent=47 // pred_check_branch
        %1259 = sbr.rel (%p1257) target = $region52
      $region51: #{_lambda_.6} parent=47 // pred_region
        %s1260 = smul.u32 8, %s23
        %p1261 = scmp.lt.s32.totalorder %s22, 1
        %s1262 = scalar_select %p1261, %s22, 1
        %p1263 = scmp.lt.s32.totalorder %s1260, 7
        %s1264 = scalar_select %p1263, %s1260, 7
        %s1265 = smul.addr %s1264, 4
        %s1266 = smul.addr %s1262, 32
        %s1267 = sadd.s32 %s1265, %s1266
        %s1268 = smul.addr %s1267, 4
        %s1269 = scalar_lea.vmem %s5, %s1268
      $region52: #{_lambda_.6} parent=47 // pred_fallthru
        _
    $region48: #{_lambda_.6} parent=5 // pred_fallthru
      _
  $region6: #{_lambda_.6} parent=0 // loop_footer
    %s15 = sadd.s32 1, %s11
  $region7: #{_lambda_.6} parent=0 // loop_footer_branch
    %10 = sbr.rel target = $region3
  $region8: #{_lambda_.6} parent=0 // loop_exit
    _

// kernel: _lambda_.5
$region0: #{_lambda_.5}
  #allocation0 [shape = 'u32[]', space=smem, size = 0x4, offset = 0x4, fixed_abs, tag = 'smem constant byte address 0x4 - core index']
  #allocation1 [shape = 'u32[144,128]{1,0:T(1,128)}', space=vmem, size = 0x12000, scoped, tag = 'internal scratch']
  #allocation2 [shape = 'f32[2,8,128]{2,1,0:T(8,128)}', space=vmem, size = 0x2000, scoped, tag = 'scratch operand']
  #allocation3 [shape = 'f32[2,8,128]{2,1,0:T(8,128)}', space=vmem, size = 0x2000, scoped, tag = 'scratch operand']
  %s0 = inlined_call_operand.vmem [shape: bf16[2,8,8,512], index: 0, kind: input, shape index: {}, may-alias: {0,1}]
  %s1 = inlined_call_operand.vmem [shape: bf16[2,8,8,512], index: 1, kind: input, shape index: {}, may-alias: {0,1}]
  %s2 = inlined_call_operand.vmem [shape: bf16[2,128,512], index: 2, kind: input, shape index: {}]
  %s3 = inlined_call_operand.vmem [shape: bf16[8,8,128], index: 3, kind: output, shape index: {0}]
  %s4 = inlined_call_operand.vmem [shape: bf16[8,8,128], index: 4, kind: output, shape index: {1}]
  %5 = xla_tuple %s3, %s4
  %s6 = sld [smem:[#allocation0]]
  $region34: #{_lambda_.5} parent=0
    _
  %s8 = ssub.s32 1, %s6
  %s9 = scalar_select 0, %s8, %s6
  // Predicated region
  $region2: #{_lambda_.5} parent=0 // pred_check
    _
  $region3: #{_lambda_.5} parent=0 // pred_check_branch
    %11 = sbr.rel (0) target = $region5
  $region4: #{_lambda_.5} parent=0 // pred_region
    _
  $region5: #{_lambda_.5} parent=0 // pred_fallthru
    _
  // Predicated region
  $region6: #{_lambda_.5} parent=0 // pred_check
    _
  $region7: #{_lambda_.5} parent=0 // pred_check_branch
    %13 = sbr.rel (0) target = $region9
  $region8: #{_lambda_.5} parent=0 // pred_region
    %s14 = ssub.s32 0, 0
    %s15 = smul.u32 8, %s14
    %p16 = scmp.lt.s32.totalorder %s15, 7
    %s17 = scalar_select %p16, %s15, 7
    %s18 = smul.addr %s17, 4
    %s19 = sadd.s32 %s18, 32
    %s20 = smul.addr %s19, 4
    %s21 = scalar_lea.vmem %s1, %s20
    %s22 = ssub.s32 0, 0
    %s23 = smul.u32 8, %s22
  $region9: #{_lambda_.5} parent=0 // pred_fallthru
    _
  // Predicated region
  $region10: #{_lambda_.5} parent=0 // pred_check
    _
  $region11: #{_lambda_.5} parent=0 // pred_check_branch
    %25 = sbr.rel (0) target = $region13
  $region12: #{_lambda_.5} parent=0 // pred_region
    _
  $region13: #{_lambda_.5} parent=0 // pred_fallthru
    _
  %s26 = ssub.s32 0, 0
  %s27 = smul.u32 8, %s26
  %p28 = scmp.lt.s32.totalorder %s27, 7
  %s29 = scalar_select %p28, %s27, 7
  %s30 = smul.addr %s29, 4
  %s31 = sadd.s32 %s30, 32
  %s32 = smul.addr %s31, 4
  %s33 = scalar_lea.vmem %s1, %s32
  %s34 = ssub.s32 0, 0
  %s35 = smul.u32 8, %s34
  %p36 = scmp.lt.s32.totalorder %s35, 7
  %s37 = scalar_select %p36, %s35, 7
  %s38 = smul.addr %s37, 4
  %s39 = scalar_lea.vmem %s4, %s38
  %s40 = ssub.s32 0, 0
  %s41 = smul.u32 8, %s40
  %p42 = scmp.lt.s32.totalorder %s41, 7
  %s43 = scalar_select %p42, %s41, 7
  %s44 = smul.addr %s43, 4
  %s45 = sadd.s32 %s44, 32
  %s46 = smul.addr %s45, 4
  %s47 = scalar_lea.vmem %s1, %s46
  %s48 = ssub.s32 0, 0
  %s49 = smul.u32 8, %s48
  %s50 = ssub.s32 0, 0
  %s51 = smul.u32 8, %s50
  %p52 = scmp.lt.s32.totalorder %s51, 7
  %s53 = scalar_select %p52, %s51, 7
  %s54 = smul.addr %s53, 4
  %s55 = scalar_lea.vmem %s4, %s54
  %s56 = ssub.s32 0, 0
  %s57 = smul.u32 8, %s56
  %p59 = scmp.eq.s32.totalorder 0, 0
  // Predicated region
  $region14: #{_lambda_.5} parent=0 // pred_check
    %p60 = pneg %p59
  $region15: #{_lambda_.5} parent=0 // pred_check_branch
    %62 = sbr.rel (%p60) target = $region17
  $region16: #{_lambda_.5} parent=0 // pred_region
    %63 = vst [vmem:[#allocation2] sm:$0xff] 0.0
    %64 = vst [vmem:[#allocation2 + $0x8] sm:$0xff] 0.0
    %65 = vst [vmem:[#allocation3] sm:$0xff] 0.0
    %66 = vst [vmem:[#allocation3 + $0x8] sm:$0xff] 0.0
  $region17: #{_lambda_.5} parent=0 // pred_fallthru
    _
  %v67 = vld [vmem:[%s2] sm:$0xff]
  %v68 = vld [vmem:[%s2 + $0x8] sm:$0xff]
  %v69 = vld [vmem:[%s2 + $0x10] sm:$0xff]
  %v70 = vld [vmem:[%s2 + $0x18] sm:$0xff]
  %v71 = vld [vmem:[%s2 + $0x20] sm:$0xff]
  %v72 = vld [vmem:[%s2 + $0x28] sm:$0xff]
  %v73 = vld [vmem:[%s2 + $0x30] sm:$0xff]
  %v74 = vld [vmem:[%s2 + $0x38] sm:$0xff]
  %v75 = vld [vmem:[%s2 + $0x40] sm:$0xff]
  %v76 = vld [vmem:[%s2 + $0x48] sm:$0xff]
  %v77 = vld [vmem:[%s2 + $0x50] sm:$0xff]
  %v78 = vld [vmem:[%s2 + $0x58] sm:$0xff]
  %v79 = vld [vmem:[%s2 + $0x60] sm:$0xff]
  %v80 = vld [vmem:[%s2 + $0x68] sm:$0xff]
  %v81 = vld [vmem:[%s2 + $0x70] sm:$0xff]
  %v82 = vld [vmem:[%s2 + $0x78] sm:$0xff]
  %v83 = vld [vmem:[%s2 + $0x80] sm:$0xff]
  %v84 = vld [vmem:[%s2 + $0x88] sm:$0xff]
  %v85 = vld [vmem:[%s2 + $0x90] sm:$0xff]
  %v86 = vld [vmem:[%s2 + $0x98] sm:$0xff]
  %v87 = vld [vmem:[%s2 + $0xa0] sm:$0xff]
  %v88 = vld [vmem:[%s2 + $0xa8] sm:$0xff]
  %v89 = vld [vmem:[%s2 + $0xb0] sm:$0xff]
  %v90 = vld [vmem:[%s2 + $0xb8] sm:$0xff]
  %v91 = vld [vmem:[%s2 + $0xc0] sm:$0xff]
  %v92 = vld [vmem:[%s2 + $0xc8] sm:$0xff]
  %v93 = vld [vmem:[%s2 + $0xd0] sm:$0xff]
  %v94 = vld [vmem:[%s2 + $0xd8] sm:$0xff]
  %v95 = vld [vmem:[%s2 + $0xe0] sm:$0xff]
  %v96 = vld [vmem:[%s2 + $0xe8] sm:$0xff]
  %v97 = vld [vmem:[%s2 + $0xf0] sm:$0xff]
  %v98 = vld [vmem:[%s2 + $0xf8] sm:$0xff]
  %s99 = scalar_lea.vmem %s2, 256
  %v100 = vld [vmem:[%s99] sm:$0xff]
  %v101 = vld [vmem:[%s99 + $0x8] sm:$0xff]
  %v102 = vld [vmem:[%s99 + $0x10] sm:$0xff]
  %v103 = vld [vmem:[%s99 + $0x18] sm:$0xff]
  %v104 = vld [vmem:[%s99 + $0x20] sm:$0xff]
  %v105 = vld [vmem:[%s99 + $0x28] sm:$0xff]
  %v106 = vld [vmem:[%s99 + $0x30] sm:$0xff]
  %v107 = vld [vmem:[%s99 + $0x38] sm:$0xff]
  %v108 = vld [vmem:[%s99 + $0x40] sm:$0xff]
  %v109 = vld [vmem:[%s99 + $0x48] sm:$0xff]
  %v110 = vld [vmem:[%s99 + $0x50] sm:$0xff]
  %v111 = vld [vmem:[%s99 + $0x58] sm:$0xff]
  %v112 = vld [vmem:[%s99 + $0x60] sm:$0xff]
  %v113 = vld [vmem:[%s99 + $0x68] sm:$0xff]
  %v114 = vld [vmem:[%s99 + $0x70] sm:$0xff]
  %v115 = vld [vmem:[%s99 + $0x78] sm:$0xff]
  %v116 = vld [vmem:[%s99 + $0x80] sm:$0xff]
  %v117 = vld [vmem:[%s99 + $0x88] sm:$0xff]
  %v118 = vld [vmem:[%s99 + $0x90] sm:$0xff]
  %v119 = vld [vmem:[%s99 + $0x98] sm:$0xff]
  %v120 = vld [vmem:[%s99 + $0xa0] sm:$0xff]
  %v121 = vld [vmem:[%s99 + $0xa8] sm:$0xff]
  %v122 = vld [vmem:[%s99 + $0xb0] sm:$0xff]
  %v123 = vld [vmem:[%s99 + $0xb8] sm:$0xff]
  %v124 = vld [vmem:[%s99 + $0xc0] sm:$0xff]
  %v125 = vld [vmem:[%s99 + $0xc8] sm:$0xff]
  %v126 = vld [vmem:[%s99 + $0xd0] sm:$0xff]
  %v127 = vld [vmem:[%s99 + $0xd8] sm:$0xff]
  %v128 = vld [vmem:[%s99 + $0xe0] sm:$0xff]
  %v129 = vld [vmem:[%s99 + $0xe8] sm:$0xff]
  %v130 = vld [vmem:[%s99 + $0xf0] sm:$0xff]
  %v131 = vld [vmem:[%s99 + $0xf8] sm:$0xff]
  %v132 = vld [vmem:[%s0] sm:$0xff]
  %v133 = vld [vmem:[%s0 + $0x8] sm:$0xff]
  %v134 = vunpack.c.l.bf16 %v132
  %v135 = vunpack.c.h.bf16 %v132
  %v136 = vunpack.c.l.bf16 %v133
  %v137 = vunpack.c.h.bf16 %v133
  %v138 = vld [vmem:[#allocation2] sm:$0xff]
  %v139 = vpack.c.bf16 %v138, %v138
  %v172 = vunpack.c.l.b16 %v67
  %v173 = vunpack.c.h.b16 %v67
  %v174 = vunpack.c.l.b16 %v68
  %v175 = vunpack.c.h.b16 %v68
  %v176 = vunpack.c.l.b16 %v69
  %v177 = vunpack.c.h.b16 %v69
  %v178 = vunpack.c.l.b16 %v70
  %v179 = vunpack.c.h.b16 %v70
  %v180 = vunpack.c.l.b16 %v71
  %v181 = vunpack.c.h.b16 %v71
  %v182 = vunpack.c.l.b16 %v72
  %v183 = vunpack.c.h.b16 %v72
  %v184 = vunpack.c.l.b16 %v73
  %v185 = vunpack.c.h.b16 %v73
  %v186 = vunpack.c.l.b16 %v74
  %v187 = vunpack.c.h.b16 %v74
  %v188 = vunpack.c.l.b16 %v75
  %v189 = vunpack.c.h.b16 %v75
  %v190 = vunpack.c.l.b16 %v76
  %v191 = vunpack.c.h.b16 %v76
  %v192 = vunpack.c.l.b16 %v77
  %v193 = vunpack.c.h.b16 %v77
  %v194 = vunpack.c.l.b16 %v78
  %v195 = vunpack.c.h.b16 %v78
  %v196 = vunpack.c.l.b16 %v79
  %v197 = vunpack.c.h.b16 %v79
  %v198 = vunpack.c.l.b16 %v80
  %v199 = vunpack.c.h.b16 %v80
  %v200 = vunpack.c.l.b16 %v81
  %v201 = vunpack.c.h.b16 %v81
  %v202 = vunpack.c.l.b16 %v82
  %v203 = vunpack.c.h.b16 %v82
  %v204 = vunpack.c.l.b16 %v83
  %v205 = vunpack.c.h.b16 %v83
  %v206 = vunpack.c.l.b16 %v84
  %v207 = vunpack.c.h.b16 %v84
  %v208 = vunpack.c.l.b16 %v85
  %v209 = vunpack.c.h.b16 %v85
  %v210 = vunpack.c.l.b16 %v86
  %v211 = vunpack.c.h.b16 %v86
  %v212 = vunpack.c.l.b16 %v87
  %v213 = vunpack.c.h.b16 %v87
  %v214 = vunpack.c.l.b16 %v88
  %v215 = vunpack.c.h.b16 %v88
  %v216 = vunpack.c.l.b16 %v89
  %v217 = vunpack.c.h.b16 %v89
  %v218 = vunpack.c.l.b16 %v90
  %v219 = vunpack.c.h.b16 %v90
  %v220 = vunpack.c.l.b16 %v91
  %v221 = vunpack.c.h.b16 %v91
  %v222 = vunpack.c.l.b16 %v92
  %v223 = vunpack.c.h.b16 %v92
  %v224 = vunpack.c.l.b16 %v93
  %v225 = vunpack.c.h.b16 %v93
  %v226 = vunpack.c.l.b16 %v94
  %v227 = vunpack.c.h.b16 %v94
  %v228 = vunpack.c.l.b16 %v95
  %v229 = vunpack.c.h.b16 %v95
  %v230 = vunpack.c.l.b16 %v96
  %v231 = vunpack.c.h.b16 %v96
  %v232 = vunpack.c.l.b16 %v97
  %v233 = vunpack.c.h.b16 %v97
  %v234 = vunpack.c.l.b16 %v98
  %v235 = vunpack.c.h.b16 %v98
  %v236 = vpack.c.b16 %v176, %v172
  %v237 = vpack.c.b16 %v177, %v173
  %v238 = vpack.c.b16 %v178, %v174
  %v239 = vpack.c.b16 %v179, %v175
  %v240 = vpack.c.b16 %v184, %v180
  %v241 = vpack.c.b16 %v185, %v181
  %v242 = vpack.c.b16 %v186, %v182
  %v243 = vpack.c.b16 %v187, %v183
  %v244 = vpack.c.b16 %v192, %v188
  %v245 = vpack.c.b16 %v193, %v189
  %v246 = vpack.c.b16 %v194, %v190
  %v247 = vpack.c.b16 %v195, %v191
  %v248 = vpack.c.b16 %v200, %v196
  %v249 = vpack.c.b16 %v201, %v197
  %v250 = vpack.c.b16 %v202, %v198
  %v251 = vpack.c.b16 %v203, %v199
  %v252 = vpack.c.b16 %v208, %v204
  %v253 = vpack.c.b16 %v209, %v205
  %v254 = vpack.c.b16 %v210, %v206
  %v255 = vpack.c.b16 %v211, %v207
  %v256 = vpack.c.b16 %v216, %v212
  %v257 = vpack.c.b16 %v217, %v213
  %v258 = vpack.c.b16 %v218, %v214
  %v259 = vpack.c.b16 %v219, %v215
  %v260 = vpack.c.b16 %v224, %v220
  %v261 = vpack.c.b16 %v225, %v221
  %v262 = vpack.c.b16 %v226, %v222
  %v263 = vpack.c.b16 %v227, %v223
  %v264 = vpack.c.b16 %v232, %v228
  %v265 = vpack.c.b16 %v233, %v229
  %v266 = vpack.c.b16 %v234, %v230
  %v267 = vpack.c.b16 %v235, %v231
  %300 = vmatprep.subr.bf16.mxu0 %v237
  %301 = vmatpush1.bf16.msra.mxu0 %v236
  %302 = vmatprep.subr.bf16.mxu0 %v241
  %303 = vmatpush1.bf16.msra.mxu0 %v240
  %304 = vmatprep.subr.bf16.mxu0 %v245
  %305 = vmatpush1.bf16.msra.mxu0 %v244
  %306 = vmatprep.subr.bf16.mxu0 %v249
  %307 = vmatpush1.bf16.msra.mxu0 %v248
  %308 = vmatprep.subr.bf16.mxu0 %v253
  %309 = vmatpush1.bf16.msra.mxu0 %v252
  %310 = vmatprep.subr.bf16.mxu0 %v257
  %311 = vmatpush1.bf16.msra.mxu0 %v256
  %312 = vmatprep.subr.bf16.mxu0 %v261
  %313 = vmatpush1.bf16.msra.mxu0 %v260
  %314 = vmatprep.subr.bf16.mxu0 %v265
  %315 = vmatpush1.bf16.msra.mxu0 %v264
  %316 = vmatprep.subr.bf16.mxu0 0
  %317 = vmatpush1.bf16.msra.mxu0 0
  %318 = vmatprep.subr.bf16.mxu0 0
  %319 = vmatpush1.bf16.msra.mxu0 0
  %320 = vmatprep.subr.bf16.mxu0 0
  %321 = vmatpush1.bf16.msra.mxu0 0
  %322 = vmatprep.subr.bf16.mxu0 0
  %323 = vmatpush1.bf16.msra.mxu0 0
  %324 = vmatprep.subr.bf16.mxu0 0
  %325 = vmatpush1.bf16.msra.mxu0 0
  %326 = vmatprep.subr.bf16.mxu0 0
  %327 = vmatpush1.bf16.msra.mxu0 0
  %328 = vmatprep.subr.bf16.mxu0 0
  %329 = vmatpush1.bf16.msra.mxu0 0
  %330 = vmatprep.subr.bf16.mxu0 0
  %331 = vmatpush1.bf16.msra.mxu0 0
  %332 = vmatprep.mubr.bf16.mxu0 0
  %333 = vmatmul.mubr.bf16.gmra.mrb[0].mxu0 %v139
  %v334 = vpop.f32.mrb[0].mxu0
  %v335 = vadd.f32 0.0, %v334
  %v336 = vpop.f32.mrb[0].mxu0
  %v337 = vadd.f32 0.0, %v336
  %v338 = vpop.f32.mrb[0].mxu0
  %v339 = vpop.f32.mrb[0].mxu0
  %340 = vdwg.mxu0
  %341 = vmatprep.subr.bf16.mxu0 %v239
  %342 = vmatpush1.bf16.msra.mxu0 %v238
  %343 = vmatprep.subr.bf16.mxu0 %v243
  %344 = vmatpush1.bf16.msra.mxu0 %v242
  %345 = vmatprep.subr.bf16.mxu0 %v247
  %346 = vmatpush1.bf16.msra.mxu0 %v246
  %347 = vmatprep.subr.bf16.mxu0 %v251
  %348 = vmatpush1.bf16.msra.mxu0 %v250
  %349 = vmatprep.subr.bf16.mxu0 %v255
  %350 = vmatpush1.bf16.msra.mxu0 %v254
  %351 = vmatprep.subr.bf16.mxu0 %v259
  %352 = vmatpush1.bf16.msra.mxu0 %v258
  %353 = vmatprep.subr.bf16.mxu0 %v263
  %354 = vmatpush1.bf16.msra.mxu0 %v262
  %355 = vmatprep.subr.bf16.mxu0 %v267
  %356 = vmatpush1.bf16.msra.mxu0 %v266
  %357 = vmatprep.subr.bf16.mxu0 0
  %358 = vmatpush1.bf16.msra.mxu0 0
  %359 = vmatprep.subr.bf16.mxu0 0
  %360 = vmatpush1.bf16.msra.mxu0 0
  %361 = vmatprep.subr.bf16.mxu0 0
  %362 = vmatpush1.bf16.msra.mxu0 0
  %363 = vmatprep.subr.bf16.mxu0 0
  %364 = vmatpush1.bf16.msra.mxu0 0
  %365 = vmatprep.subr.bf16.mxu0 0
  %366 = vmatpush1.bf16.msra.mxu0 0
  %367 = vmatprep.subr.bf16.mxu0 0
  %368 = vmatpush1.bf16.msra.mxu0 0
  %369 = vmatprep.subr.bf16.mxu0 0
  %370 = vmatpush1.bf16.msra.mxu0 0
  %371 = vmatprep.subr.bf16.mxu0 0
  %372 = vmatpush1.bf16.msra.mxu0 0
  %373 = vmatprep.mubr.bf16.mxu0 0
  %374 = vmatmul.mubr.bf16.gmra.mrb[0].mxu0 %v139
  %v375 = vpop.f32.mrb[0].mxu0
  %v376 = vadd.f32 0.0, %v375
  %v377 = vpop.f32.mrb[0].mxu0
  %v378 = vadd.f32 0.0, %v377
  %v379 = vpop.f32.mrb[0].mxu0
  %v380 = vpop.f32.mrb[0].mxu0
  %381 = vdwg.mxu0
  %v382 = vadd.f32 %v134, %v335
  %v383 = vadd.f32 %v135, %v337
  %v384 = vadd.f32 %v136, %v376
  %v385 = vadd.f32 %v137, %v378
  %s386 = scalar_lea.vmem %s47, 112
  %v387 = vld [vmem:[%s386] sm:$0xff]
  %v388 = vld [vmem:[%s386 + $0x8] sm:$0xff]
  %v389 = vunpack.c.l.bf16 %v387
  %v390 = vunpack.c.h.bf16 %v387
  %v391 = vunpack.c.l.bf16 %v388
  %v392 = vunpack.c.h.bf16 %v388
  %s393 = scalar_lea.vmem [#allocation2], 8
  %v394 = vld [vmem:[%s393] sm:$0xff]
  %v395 = vpack.c.bf16 %v394, %v394
  %v428 = vunpack.c.l.b16 %v100
  %v429 = vunpack.c.h.b16 %v100
  %v430 = vunpack.c.l.b16 %v101
  %v431 = vunpack.c.h.b16 %v101
  %v432 = vunpack.c.l.b16 %v102
  %v433 = vunpack.c.h.b16 %v102
  %v434 = vunpack.c.l.b16 %v103
  %v435 = vunpack.c.h.b16 %v103
  %v436 = vunpack.c.l.b16 %v104
  %v437 = vunpack.c.h.b16 %v104
  %v438 = vunpack.c.l.b16 %v105
  %v439 = vunpack.c.h.b16 %v105
  %v440 = vunpack.c.l.b16 %v106
  %v441 = vunpack.c.h.b16 %v106
  %v442 = vunpack.c.l.b16 %v107
  %v443 = vunpack.c.h.b16 %v107
  %v444 = vunpack.c.l.b16 %v108
  %v445 = vunpack.c.h.b16 %v108
  %v446 = vunpack.c.l.b16 %v109
  %v447 = vunpack.c.h.b16 %v109
  %v448 = vunpack.c.l.b16 %v110
  %v449 = vunpack.c.h.b16 %v110
  %v450 = vunpack.c.l.b16 %v111
  %v451 = vunpack.c.h.b16 %v111
  %v452 = vunpack.c.l.b16 %v112
  %v453 = vunpack.c.h.b16 %v112
  %v454 = vunpack.c.l.b16 %v113
  %v455 = vunpack.c.h.b16 %v113
  %v456 = vunpack.c.l.b16 %v114
  %v457 = vunpack.c.h.b16 %v114
  %v458 = vunpack.c.l.b16 %v115
  %v459 = vunpack.c.h.b16 %v115
  %v460 = vunpack.c.l.b16 %v116
  %v461 = vunpack.c.h.b16 %v116
  %v462 = vunpack.c.l.b16 %v117
  %v463 = vunpack.c.h.b16 %v117
  %v464 = vunpack.c.l.b16 %v118
  %v465 = vunpack.c.h.b16 %v118
  %v466 = vunpack.c.l.b16 %v119
  %v467 = vunpack.c.h.b16 %v119
  %v468 = vunpack.c.l.b16 %v120
  %v469 = vunpack.c.h.b16 %v120
  %v470 = vunpack.c.l.b16 %v121
  %v471 = vunpack.c.h.b16 %v121
  %v472 = vunpack.c.l.b16 %v122
  %v473 = vunpack.c.h.b16 %v122
  %v474 = vunpack.c.l.b16 %v123
  %v475 = vunpack.c.h.b16 %v123
  %v476 = vunpack.c.l.b16 %v124
  %v477 = vunpack.c.h.b16 %v124
  %v478 = vunpack.c.l.b16 %v125
  %v479 = vunpack.c.h.b16 %v125
  %v480 = vunpack.c.l.b16 %v126
  %v481 = vunpack.c.h.b16 %v126
  %v482 = vunpack.c.l.b16 %v127
  %v483 = vunpack.c.h.b16 %v127
  %v484 = vunpack.c.l.b16 %v128
  %v485 = vunpack.c.h.b16 %v128
  %v486 = vunpack.c.l.b16 %v129
  %v487 = vunpack.c.h.b16 %v129
  %v488 = vunpack.c.l.b16 %v130
  %v489 = vunpack.c.h.b16 %v130
  %v490 = vunpack.c.l.b16 %v131
  %v491 = vunpack.c.h.b16 %v131
  %v492 = vpack.c.b16 %v432, %v428
  %v493 = vpack.c.b16 %v433, %v429
  %v494 = vpack.c.b16 %v434, %v430
  %v495 = vpack.c.b16 %v435, %v431
  %v496 = vpack.c.b16 %v440, %v436
  %v497 = vpack.c.b16 %v441, %v437
  %v498 = vpack.c.b16 %v442, %v438
  %v499 = vpack.c.b16 %v443, %v439
  %v500 = vpack.c.b16 %v448, %v444
  %v501 = vpack.c.b16 %v449, %v445
  %v502 = vpack.c.b16 %v450, %v446
  %v503 = vpack.c.b16 %v451, %v447
  %v504 = vpack.c.b16 %v456, %v452
  %v505 = vpack.c.b16 %v457, %v453
  %v506 = vpack.c.b16 %v458, %v454
  %v507 = vpack.c.b16 %v459, %v455
  %v508 = vpack.c.b16 %v464, %v460
  %v509 = vpack.c.b16 %v465, %v461
  %v510 = vpack.c.b16 %v466, %v462
  %v511 = vpack.c.b16 %v467, %v463
  %v512 = vpack.c.b16 %v472, %v468
  %v513 = vpack.c.b16 %v473, %v469
  %v514 = vpack.c.b16 %v474, %v470
  %v515 = vpack.c.b16 %v475, %v471
  %v516 = vpack.c.b16 %v480, %v476
  %v517 = vpack.c.b16 %v481, %v477
  %v518 = vpack.c.b16 %v482, %v478
  %v519 = vpack.c.b16 %v483, %v479
  %v520 = vpack.c.b16 %v488, %v484
  %v521 = vpack.c.b16 %v489, %v485
  %v522 = vpack.c.b16 %v490, %v486
  %v523 = vpack.c.b16 %v491, %v487
  %556 = vmatprep.subr.bf16.mxu0 %v493
  %557 = vmatpush1.bf16.msra.mxu0 %v492
  %558 = vmatprep.subr.bf16.mxu0 %v497
  %559 = vmatpush1.bf16.msra.mxu0 %v496
  %560 = vmatprep.subr.bf16.mxu0 %v501
  %561 = vmatpush1.bf16.msra.mxu0 %v500
  %562 = vmatprep.subr.bf16.mxu0 %v505
  %563 = vmatpush1.bf16.msra.mxu0 %v504
  %564 = vmatprep.subr.bf16.mxu0 %v509
  %565 = vmatpush1.bf16.msra.mxu0 %v508
  %566 = vmatprep.subr.bf16.mxu0 %v513
  %567 = vmatpush1.bf16.msra.mxu0 %v512
  %568 = vmatprep.subr.bf16.mxu0 %v517
  %569 = vmatpush1.bf16.msra.mxu0 %v516
  %570 = vmatprep.subr.bf16.mxu0 %v521
  %571 = vmatpush1.bf16.msra.mxu0 %v520
  %572 = vmatprep.subr.bf16.mxu0 0
  %573 = vmatpush1.bf16.msra.mxu0 0
  %574 = vmatprep.subr.bf16.mxu0 0
  %575 = vmatpush1.bf16.msra.mxu0 0
  %576 = vmatprep.subr.bf16.mxu0 0
  %577 = vmatpush1.bf16.msra.mxu0 0
  %578 = vmatprep.subr.bf16.mxu0 0
  %579 = vmatpush1.bf16.msra.mxu0 0
  %580 = vmatprep.subr.bf16.mxu0 0
  %581 = vmatpush1.bf16.msra.mxu0 0
  %582 = vmatprep.subr.bf16.mxu0 0
  %583 = vmatpush1.bf16.msra.mxu0 0
  %584 = vmatprep.subr.bf16.mxu0 0
  %585 = vmatpush1.bf16.msra.mxu0 0
  %586 = vmatprep.subr.bf16.mxu0 0
  %587 = vmatpush1.bf16.msra.mxu0 0
  %588 = vmatprep.mubr.bf16.mxu0 0
  %589 = vmatmul.mubr.bf16.gmra.mrb[0].mxu0 %v395
  %v590 = vpop.f32.mrb[0].mxu0
  %v591 = vadd.f32 0.0, %v590
  %v592 = vpop.f32.mrb[0].mxu0
  %v593 = vadd.f32 0.0, %v592
  %v594 = vpop.f32.mrb[0].mxu0
  %v595 = vpop.f32.mrb[0].mxu0
  %596 = vdwg.mxu0
  %597 = vmatprep.subr.bf16.mxu0 %v495
  %598 = vmatpush1.bf16.msra.mxu0 %v494
  %599 = vmatprep.subr.bf16.mxu0 %v499
  %600 = vmatpush1.bf16.msra.mxu0 %v498
  %601 = vmatprep.subr.bf16.mxu0 %v503
  %602 = vmatpush1.bf16.msra.mxu0 %v502
  %603 = vmatprep.subr.bf16.mxu0 %v507
  %604 = vmatpush1.bf16.msra.mxu0 %v506
  %605 = vmatprep.subr.bf16.mxu0 %v511
  %606 = vmatpush1.bf16.msra.mxu0 %v510
  %607 = vmatprep.subr.bf16.mxu0 %v515
  %608 = vmatpush1.bf16.msra.mxu0 %v514
  %609 = vmatprep.subr.bf16.mxu0 %v519
  %610 = vmatpush1.bf16.msra.mxu0 %v518
  %611 = vmatprep.subr.bf16.mxu0 %v523
  %612 = vmatpush1.bf16.msra.mxu0 %v522
  %613 = vmatprep.subr.bf16.mxu0 0
  %614 = vmatpush1.bf16.msra.mxu0 0
  %615 = vmatprep.subr.bf16.mxu0 0
  %616 = vmatpush1.bf16.msra.mxu0 0
  %617 = vmatprep.subr.bf16.mxu0 0
  %618 = vmatpush1.bf16.msra.mxu0 0
  %619 = vmatprep.subr.bf16.mxu0 0
  %620 = vmatpush1.bf16.msra.mxu0 0
  %621 = vmatprep.subr.bf16.mxu0 0
  %622 = vmatpush1.bf16.msra.mxu0 0
  %623 = vmatprep.subr.bf16.mxu0 0
  %624 = vmatpush1.bf16.msra.mxu0 0
  %625 = vmatprep.subr.bf16.mxu0 0
  %626 = vmatpush1.bf16.msra.mxu0 0
  %627 = vmatprep.subr.bf16.mxu0 0
  %628 = vmatpush1.bf16.msra.mxu0 0
  %629 = vmatprep.mubr.bf16.mxu0 0
  %630 = vmatmul.mubr.bf16.gmra.mrb[0].mxu0 %v395
  %v631 = vpop.f32.mrb[0].mxu0
  %v632 = vadd.f32 0.0, %v631
  %v633 = vpop.f32.mrb[0].mxu0
  %v634 = vadd.f32 0.0, %v633
  %v635 = vpop.f32.mrb[0].mxu0
  %v636 = vpop.f32.mrb[0].mxu0
  %637 = vdwg.mxu0
  %v638 = vadd.f32 %v389, %v591
  %v639 = vadd.f32 %v390, %v593
  %v640 = vadd.f32 %v391, %v632
  %v641 = vadd.f32 %v392, %v634
  %v642 = vld [vmem:[#allocation3] sm:$0xff]
  %v643 = vmul.f32 %v382, 0.5
  %v644 = vtanh.pop %v643
  %v645 = vmul.f32 %v644, 0.5
  %v646 = vadd.f32 %v645, 0.5
  %v647 = vmul.f32 %v383, 0.5
  %v648 = vtanh.pop %v647
  %v649 = vmul.f32 %v648, 0.5
  %v650 = vadd.f32 %v649, 0.5
  %v651 = vtanh.pop %v384
  %v652 = vmul.f32 %v385, 0.5
  %v653 = vtanh.pop %v652
  %v654 = vmul.f32 %v653, 0.5
  %v655 = vadd.f32 %v654, 0.5
  %v656 = vmul.f32 %v650, %v642
  %v657 = vmul.f32 %v646, %v651
  %v658 = vadd.f32 %v656, %v657
  %v659 = vtanh.pop %v658
  %v660 = vmul.f32 %v655, %v659
  %s661 = scalar_lea.vmem [#allocation3], 8
  %v662 = vld [vmem:[%s661] sm:$0xff]
  %v663 = vmul.f32 %v638, 0.5
  %v664 = vtanh.pop %v663
  %v665 = vmul.f32 %v664, 0.5
  %v666 = vadd.f32 %v665, 0.5
  %v667 = vmul.f32 %v639, 0.5
  %v668 = vtanh.pop %v667
  %v669 = vmul.f32 %v668, 0.5
  %v670 = vadd.f32 %v669, 0.5
  %v671 = vtanh.pop %v640
  %v672 = vmul.f32 %v641, 0.5
  %v673 = vtanh.pop %v672
  %v674 = vmul.f32 %v673, 0.5
  %v675 = vadd.f32 %v674, 0.5
  %v676 = vmul.f32 %v670, %v662
  %v677 = vmul.f32 %v666, %v671
  %v678 = vadd.f32 %v676, %v677
  %v679 = vtanh.pop %v678
  %v680 = vmul.f32 %v675, %v679
  %681 = vst [vmem:[#allocation2] sm:$0xff] %v660
  %682 = vst [vmem:[#allocation3] sm:$0xff] %v658
  %683 = vst [vmem:[%s393] sm:$0xff] %v680
  %684 = vst [vmem:[%s661] sm:$0xff] %v678
  %v685 = vpack.c.bf16 %v660, %v660
  %686 = vst [vmem:[%s3] sm:$0xf] %v685
  %v687 = vpack.c.bf16 %v680, %v680
  %s688 = scalar_lea.vmem %s55, 28
  %689 = vst [vmem:[%s688] sm:$0xf] %v687
  %s690 = scalar_lea.vmem %s0, 16
  %v691 = vld [vmem:[%s690] sm:$0xff]
  %v692 = vld [vmem:[%s690 + $0x8] sm:$0xff]
  %v693 = vunpack.c.l.bf16 %v691
  %v694 = vunpack.c.h.bf16 %v691
  %v695 = vunpack.c.l.bf16 %v692
  %v696 = vunpack.c.h.bf16 %v692
  %v697 = vld [vmem:[#allocation2] sm:$0xff]
  %v698 = vpack.c.bf16 %v697, %v697
  %699 = vmatprep.subr.bf16.mxu0 %v237
  %700 = vmatpush1.bf16.msra.mxu0 %v236
  %701 = vmatprep.subr.bf16.mxu0 %v241
  %702 = vmatpush1.bf16.msra.mxu0 %v240
  %703 = vmatprep.subr.bf16.mxu0 %v245
  %704 = vmatpush1.bf16.msra.mxu0 %v244
  %705 = vmatprep.subr.bf16.mxu0 %v249
  %706 = vmatpush1.bf16.msra.mxu0 %v248
  %707 = vmatprep.subr.bf16.mxu0 %v253
  %708 = vmatpush1.bf16.msra.mxu0 %v252
  %709 = vmatprep.subr.bf16.mxu0 %v257
  %710 = vmatpush1.bf16.msra.mxu0 %v256
  %711 = vmatprep.subr.bf16.mxu0 %v261
  %712 = vmatpush1.bf16.msra.mxu0 %v260
  %713 = vmatprep.subr.bf16.mxu0 %v265
  %714 = vmatpush1.bf16.msra.mxu0 %v264
  %715 = vmatprep.subr.bf16.mxu0 0
  %716 = vmatpush1.bf16.msra.mxu0 0
  %717 = vmatprep.subr.bf16.mxu0 0
  %718 = vmatpush1.bf16.msra.mxu0 0
  %719 = vmatprep.subr.bf16.mxu0 0
  %720 = vmatpush1.bf16.msra.mxu0 0
  %721 = vmatprep.subr.bf16.mxu0 0
  %722 = vmatpush1.bf16.msra.mxu0 0
  %723 = vmatprep.subr.bf16.mxu0 0
  %724 = vmatpush1.bf16.msra.mxu0 0
  %725 = vmatprep.subr.bf16.mxu0 0
  %726 = vmatpush1.bf16.msra.mxu0 0
  %727 = vmatprep.subr.bf16.mxu0 0
  %728 = vmatpush1.bf16.msra.mxu0 0
  %729 = vmatprep.subr.bf16.mxu0 0
  %730 = vmatpush1.bf16.msra.mxu0 0
  %731 = vmatprep.mubr.bf16.mxu0 0
  %732 = vmatmul.mubr.bf16.gmra.mrb[0].mxu0 %v698
  %v733 = vpop.f32.mrb[0].mxu0
  %v734 = vadd.f32 0.0, %v733
  %v735 = vpop.f32.mrb[0].mxu0
  %v736 = vadd.f32 0.0, %v735
  %v737 = vpop.f32.mrb[0].mxu0
  %v738 = vpop.f32.mrb[0].mxu0
  %739 = vdwg.mxu0
  %740 = vmatprep.subr.bf16.mxu0 %v239
  %741 = vmatpush1.bf16.msra.mxu0 %v238
  %742 = vmatprep.subr.bf16.mxu0 %v243
  %743 = vmatpush1.bf16.msra.mxu0 %v242
  %744 = vmatprep.subr.bf16.mxu0 %v247
  %745 = vmatpush1.bf16.msra.mxu0 %v246
  %746 = vmatprep.subr.bf16.mxu0 %v251
  %747 = vmatpush1.bf16.msra.mxu0 %v250
  %748 = vmatprep.subr.bf16.mxu0 %v255
  %749 = vmatpush1.bf16.msra.mxu0 %v254
  %750 = vmatprep.subr.bf16.mxu0 %v259
  %751 = vmatpush1.bf16.msra.mxu0 %v258
  %752 = vmatprep.subr.bf16.mxu0 %v263
  %753 = vmatpush1.bf16.msra.mxu0 %v262
  %754 = vmatprep.subr.bf16.mxu0 %v267
  %755 = vmatpush1.bf16.msra.mxu0 %v266
  %756 = vmatprep.subr.bf16.mxu0 0
  %757 = vmatpush1.bf16.msra.mxu0 0
  %758 = vmatprep.subr.bf16.mxu0 0
  %759 = vmatpush1.bf16.msra.mxu0 0
  %760 = vmatprep.subr.bf16.mxu0 0
  %761 = vmatpush1.bf16.msra.mxu0 0
  %762 = vmatprep.subr.bf16.mxu0 0
  %763 = vmatpush1.bf16.msra.mxu0 0
  %764 = vmatprep.subr.bf16.mxu0 0
  %765 = vmatpush1.bf16.msra.mxu0 0
  %766 = vmatprep.subr.bf16.mxu0 0
  %767 = vmatpush1.bf16.msra.mxu0 0
  %768 = vmatprep.subr.bf16.mxu0 0
  %769 = vmatpush1.bf16.msra.mxu0 0
  %770 = vmatprep.subr.bf16.mxu0 0
  %771 = vmatpush1.bf16.msra.mxu0 0
  %772 = vmatprep.mubr.bf16.mxu0 0
  %773 = vmatmul.mubr.bf16.gmra.mrb[0].mxu0 %v698
  %v774 = vpop.f32.mrb[0].mxu0
  %v775 = vadd.f32 0.0, %v774
  %v776 = vpop.f32.mrb[0].mxu0
  %v777 = vadd.f32 0.0, %v776
  %v778 = vpop.f32.mrb[0].mxu0
  %v779 = vpop.f32.mrb[0].mxu0
  %780 = vdwg.mxu0
  %v781 = vadd.f32 %v693, %v734
  %v782 = vadd.f32 %v694, %v736
  %v783 = vadd.f32 %v695, %v775
  %v784 = vadd.f32 %v696, %v777
  %s785 = scalar_lea.vmem %s47, 96
  %v786 = vld [vmem:[%s785] sm:$0xff]
  %v787 = vld [vmem:[%s785 + $0x8] sm:$0xff]
  %v788 = vunpack.c.l.bf16 %v786
  %v789 = vunpack.c.h.bf16 %v786
  %v790 = vunpack.c.l.bf16 %v787
  %v791 = vunpack.c.h.bf16 %v787
  %v792 = vld [vmem:[%s393] sm:$0xff]
  %v793 = vpack.c.bf16 %v792, %v792
  %794 = vmatprep.subr.bf16.mxu0 %v493
  %795 = vmatpush1.bf16.msra.mxu0 %v492
  %796 = vmatprep.subr.bf16.mxu0 %v497
  %797 = vmatpush1.bf16.msra.mxu0 %v496
  %798 = vmatprep.subr.bf16.mxu0 %v501
  %799 = vmatpush1.bf16.msra.mxu0 %v500
  %800 = vmatprep.subr.bf16.mxu0 %v505
  %801 = vmatpush1.bf16.msra.mxu0 %v504
  %802 = vmatprep.subr.bf16.mxu0 %v509
  %803 = vmatpush1.bf16.msra.mxu0 %v508
  %804 = vmatprep.subr.bf16.mxu0 %v513
  %805 = vmatpush1.bf16.msra.mxu0 %v512
  %806 = vmatprep.subr.bf16.mxu0 %v517
  %807 = vmatpush1.bf16.msra.mxu0 %v516
  %808 = vmatprep.subr.bf16.mxu0 %v521
  %809 = vmatpush1.bf16.msra.mxu0 %v520
  %810 = vmatprep.subr.bf16.mxu0 0
  %811 = vmatpush1.bf16.msra.mxu0 0
  %812 = vmatprep.subr.bf16.mxu0 0
  %813 = vmatpush1.bf16.msra.mxu0 0
  %814 = vmatprep.subr.bf16.mxu0 0
  %815 = vmatpush1.bf16.msra.mxu0 0
  %816 = vmatprep.subr.bf16.mxu0 0
  %817 = vmatpush1.bf16.msra.mxu0 0
  %818 = vmatprep.subr.bf16.mxu0 0
  %819 = vmatpush1.bf16.msra.mxu0 0
  %820 = vmatprep.subr.bf16.mxu0 0
  %821 = vmatpush1.bf16.msra.mxu0 0
  %822 = vmatprep.subr.bf16.mxu0 0
  %823 = vmatpush1.bf16.msra.mxu0 0
  %824 = vmatprep.subr.bf16.mxu0 0
  %825 = vmatpush1.bf16.msra.mxu0 0
  %826 = vmatprep.mubr.bf16.mxu0 0
  %827 = vmatmul.mubr.bf16.gmra.mrb[0].mxu0 %v793
  %v828 = vpop.f32.mrb[0].mxu0
  %v829 = vadd.f32 0.0, %v828
  %v830 = vpop.f32.mrb[0].mxu0
  %v831 = vadd.f32 0.0, %v830
  %v832 = vpop.f32.mrb[0].mxu0
  %v833 = vpop.f32.mrb[0].mxu0
  %834 = vdwg.mxu0
  %835 = vmatprep.subr.bf16.mxu0 %v495
  %836 = vmatpush1.bf16.msra.mxu0 %v494
  %837 = vmatprep.subr.bf16.mxu0 %v499
  %838 = vmatpush1.bf16.msra.mxu0 %v498
  %839 = vmatprep.subr.bf16.mxu0 %v503
  %840 = vmatpush1.bf16.msra.mxu0 %v502
  %841 = vmatprep.subr.bf16.mxu0 %v507
  %842 = vmatpush1.bf16.msra.mxu0 %v506
  %843 = vmatprep.subr.bf16.mxu0 %v511
  %844 = vmatpush1.bf16.msra.mxu0 %v510
  %845 = vmatprep.subr.bf16.mxu0 %v515
  %846 = vmatpush1.bf16.msra.mxu0 %v514
  %847 = vmatprep.subr.bf16.mxu0 %v519
  %848 = vmatpush1.bf16.msra.mxu0 %v518
  %849 = vmatprep.subr.bf16.mxu0 %v523
  %850 = vmatpush1.bf16.msra.mxu0 %v522
  %851 = vmatprep.subr.bf16.mxu0 0
  %852 = vmatpush1.bf16.msra.mxu0 0
  %853 = vmatprep.subr.bf16.mxu0 0
  %854 = vmatpush1.bf16.msra.mxu0 0
  %855 = vmatprep.subr.bf16.mxu0 0
  %856 = vmatpush1.bf16.msra.mxu0 0
  %857 = vmatprep.subr.bf16.mxu0 0
  %858 = vmatpush1.bf16.msra.mxu0 0
  %859 = vmatprep.subr.bf16.mxu0 0
  %860 = vmatpush1.bf16.msra.mxu0 0
  %861 = vmatprep.subr.bf16.mxu0 0
  %862 = vmatpush1.bf16.msra.mxu0 0
  %863 = vmatprep.subr.bf16.mxu0 0
  %864 = vmatpush1.bf16.msra.mxu0 0
  %865 = vmatprep.subr.bf16.mxu0 0
  %866 = vmatpush1.bf16.msra.mxu0 0
  %867 = vmatprep.mubr.bf16.mxu0 0
  %868 = vmatmul.mubr.bf16.gmra.mrb[0].mxu0 %v793
  %v869 = vpop.f32.mrb[0].mxu0
  %v870 = vadd.f32 0.0, %v869
  %v871 = vpop.f32.mrb[0].mxu0
  %v872 = vadd.f32 0.0, %v871
  %v873 = vpop.f32.mrb[0].mxu0
  %v874 = vpop.f32.mrb[0].mxu0
  %875 = vdwg.mxu0
  %v876 = vadd.f32 %v788, %v829
  %v877 = vadd.f32 %v789, %v831
  %v878 = vadd.f32 %v790, %v870
  %v879 = vadd.f32 %v791, %v872
  %v880 = vld [vmem:[#allocation3] sm:$0xff]
  %v881 = vmul.f32 %v781, 0.5
  %v882 = vtanh.pop %v881
  %v883 = vmul.f32 %v882, 0.5
  %v884 = vadd.f32 %v883, 0.5
  %v885 = vmul.f32 %v782, 0.5
  %v886 = vtanh.pop %v885
  %v887 = vmul.f32 %v886, 0.5
  %v888 = vadd.f32 %v887, 0.5
  %v889 = vtanh.pop %v783
  %v890 = vmul.f32 %v784, 0.5
  %v891 = vtanh.pop %v890
  %v892 = vmul.f32 %v891, 0.5
  %v893 = vadd.f32 %v892, 0.5
  %v894 = vmul.f32 %v888, %v880
  %v895 = vmul.f32 %v884, %v889
  %v896 = vadd.f32 %v894, %v895
  %v897 = vtanh.pop %v896
  %v898 = vmul.f32 %v893, %v897
  %v899 = vld [vmem:[%s661] sm:$0xff]
  %v900 = vmul.f32 %v876, 0.5
  %v901 = vtanh.pop %v900
  %v902 = vmul.f32 %v901, 0.5
  %v903 = vadd.f32 %v902, 0.5
  %v904 = vmul.f32 %v877, 0.5
  %v905 = vtanh.pop %v904
  %v906 = vmul.f32 %v905, 0.5
  %v907 = vadd.f32 %v906, 0.5
  %v908 = vtanh.pop %v878
  %v909 = vmul.f32 %v879, 0.5
  %v910 = vtanh.pop %v909
  %v911 = vmul.f32 %v910, 0.5
  %v912 = vadd.f32 %v911, 0.5
  %v913 = vmul.f32 %v907, %v899
  %v914 = vmul.f32 %v903, %v908
  %v915 = vadd.f32 %v913, %v914
  %v916 = vtanh.pop %v915
  %v917 = vmul.f32 %v912, %v916
  %918 = vst [vmem:[#allocation2] sm:$0xff] %v898
  %919 = vst [vmem:[#allocation3] sm:$0xff] %v896
  %920 = vst [vmem:[%s393] sm:$0xff] %v917
  %921 = vst [vmem:[%s661] sm:$0xff] %v915
  %v922 = vpack.c.bf16 %v898, %v898
  %s923 = scalar_lea.vmem %s3, 4
  %924 = vst [vmem:[%s923] sm:$0xf] %v922
  %v925 = vpack.c.bf16 %v917, %v917
  %s926 = scalar_lea.vmem %s55, 24
  %927 = vst [vmem:[%s926] sm:$0xf] %v925
  %s928 = scalar_lea.vmem %s0, 32
  %v929 = vld [vmem:[%s928] sm:$0xff]
  %v930 = vld [vmem:[%s928 + $0x8] sm:$0xff]
  %v931 = vunpack.c.l.bf16 %v929
  %v932 = vunpack.c.h.bf16 %v929
  %v933 = vunpack.c.l.bf16 %v930
  %v934 = vunpack.c.h.bf16 %v930
  %v935 = vld [vmem:[#allocation2] sm:$0xff]
  %v936 = vpack.c.bf16 %v935, %v935
  %937 = vmatprep.subr.bf16.mxu0 %v237
  %938 = vmatpush1.bf16.msra.mxu0 %v236
  %939 = vmatprep.subr.bf16.mxu0 %v241
  %940 = vmatpush1.bf16.msra.mxu0 %v240
  %941 = vmatprep.subr.bf16.mxu0 %v245
  %942 = vmatpush1.bf16.msra.mxu0 %v244
  %943 = vmatprep.subr.bf16.mxu0 %v249
  %944 = vmatpush1.bf16.msra.mxu0 %v248
  %945 = vmatprep.subr.bf16.mxu0 %v253
  %946 = vmatpush1.bf16.msra.mxu0 %v252
  %947 = vmatprep.subr.bf16.mxu0 %v257
  %948 = vmatpush1.bf16.msra.mxu0 %v256
  %949 = vmatprep.subr.bf16.mxu0 %v261
  %950 = vmatpush1.bf16.msra.mxu0 %v260
  %951 = vmatprep.subr.bf16.mxu0 %v265
  %952 = vmatpush1.bf16.msra.mxu0 %v264
  %953 = vmatprep.subr.bf16.mxu0 0
  %954 = vmatpush1.bf16.msra.mxu0 0
  %955 = vmatprep.subr.bf16.mxu0 0
  %956 = vmatpush1.bf16.msra.mxu0 0
  %957 = vmatprep.subr.bf16.mxu0 0
  %958 = vmatpush1.bf16.msra.mxu0 0
  %959 = vmatprep.subr.bf16.mxu0 0
  %960 = vmatpush1.bf16.msra.mxu0 0
  %961 = vmatprep.subr.bf16.mxu0 0
  %962 = vmatpush1.bf16.msra.mxu0 0
  %963 = vmatprep.subr.bf16.mxu0 0
  %964 = vmatpush1.bf16.msra.mxu0 0
  %965 = vmatprep.subr.bf16.mxu0 0
  %966 = vmatpush1.bf16.msra.mxu0 0
  %967 = vmatprep.subr.bf16.mxu0 0
  %968 = vmatpush1.bf16.msra.mxu0 0
  %969 = vmatprep.mubr.bf16.mxu0 0
  %970 = vmatmul.mubr.bf16.gmra.mrb[0].mxu0 %v936
  %v971 = vpop.f32.mrb[0].mxu0
  %v972 = vadd.f32 0.0, %v971
  %v973 = vpop.f32.mrb[0].mxu0
  %v974 = vadd.f32 0.0, %v973
  %v975 = vpop.f32.mrb[0].mxu0
  %v976 = vpop.f32.mrb[0].mxu0
  %977 = vdwg.mxu0
  %978 = vmatprep.subr.bf16.mxu0 %v239
  %979 = vmatpush1.bf16.msra.mxu0 %v238
  %980 = vmatprep.subr.bf16.mxu0 %v243
  %981 = vmatpush1.bf16.msra.mxu0 %v242
  %982 = vmatprep.subr.bf16.mxu0 %v247
  %983 = vmatpush1.bf16.msra.mxu0 %v246
  %984 = vmatprep.subr.bf16.mxu0 %v251
  %985 = vmatpush1.bf16.msra.mxu0 %v250
  %986 = vmatprep.subr.bf16.mxu0 %v255
  %987 = vmatpush1.bf16.msra.mxu0 %v254
  %988 = vmatprep.subr.bf16.mxu0 %v259
  %989 = vmatpush1.bf16.msra.mxu0 %v258
  %990 = vmatprep.subr.bf16.mxu0 %v263
  %991 = vmatpush1.bf16.msra.mxu0 %v262
  %992 = vmatprep.subr.bf16.mxu0 %v267
  %993 = vmatpush1.bf16.msra.mxu0 %v266
  %994 = vmatprep.subr.bf16.mxu0 0
  %995 = vmatpush1.bf16.msra.mxu0 0
  %996 = vmatprep.subr.bf16.mxu0 0
  %997 = vmatpush1.bf16.msra.mxu0 0
  %998 = vmatprep.subr.bf16.mxu0 0
  %999 = vmatpush1.bf16.msra.mxu0 0
  %1000 = vmatprep.subr.bf16.mxu0 0
  %1001 = vmatpush1.bf16.msra.mxu0 0
  %1002 = vmatprep.subr.bf16.mxu0 0
  %1003 = vmatpush1.bf16.msra.mxu0 0
  %1004 = vmatprep.subr.bf16.mxu0 0
  %1005 = vmatpush1.bf16.msra.mxu0 0
  %1006 = vmatprep.subr.bf16.mxu0 0
  %1007 = vmatpush1.bf16.msra.mxu0 0
  %1008 = vmatprep.subr.bf16.mxu0 0
  %1009 = vmatpush1.bf16.msra.mxu0 0
  %1010 = vmatprep.mubr.bf16.mxu0 0
  %1011 = vmatmul.mubr.bf16.gmra.mrb[0].mxu0 %v936
  %v1012 = vpop.f32.mrb[0].mxu0
  %v1013 = vadd.f32 0.0, %v1012
  %v1014 = vpop.f32.mrb[0].mxu0
  %v1015 = vadd.f32 0.0, %v1014
  %v1016 = vpop.f32.mrb[0].mxu0
  %v1017 = vpop.f32.mrb[0].mxu0
  %1018 = vdwg.mxu0
  %v1019 = vadd.f32 %v931, %v972
  %v1020 = vadd.f32 %v932, %v974
  %v1021 = vadd.f32 %v933, %v1013
  %v1022 = vadd.f32 %v934, %v1015
  %s1023 = scalar_lea.vmem %s47, 80
  %v1024 = vld [vmem:[%s1023] sm:$0xff]
  %v1025 = vld [vmem:[%s1023 + $0x8] sm:$0xff]
  %v1026 = vunpack.c.l.bf16 %v1024
  %v1027 = vunpack.c.h.bf16 %v1024
  %v1028 = vunpack.c.l.bf16 %v1025
  %v1029 = vunpack.c.h.bf16 %v1025
  %v1030 = vld [vmem:[%s393] sm:$0xff]
  %v1031 = vpack.c.bf16 %v1030, %v1030
  %1032 = vmatprep.subr.bf16.mxu0 %v493
  %1033 = vmatpush1.bf16.msra.mxu0 %v492
  %1034 = vmatprep.subr.bf16.mxu0 %v497
  %1035 = vmatpush1.bf16.msra.mxu0 %v496
  %1036 = vmatprep.subr.bf16.mxu0 %v501
  %1037 = vmatpush1.bf16.msra.mxu0 %v500
  %1038 = vmatprep.subr.bf16.mxu0 %v505
  %1039 = vmatpush1.bf16.msra.mxu0 %v504
  %1040 = vmatprep.subr.bf16.mxu0 %v509
  %1041 = vmatpush1.bf16.msra.mxu0 %v508
  %1042 = vmatprep.subr.bf16.mxu0 %v513
  %1043 = vmatpush1.bf16.msra.mxu0 %v512
  %1044 = vmatprep.subr.bf16.mxu0 %v517
  %1045 = vmatpush1.bf16.msra.mxu0 %v516
  %1046 = vmatprep.subr.bf16.mxu0 %v521
  %1047 = vmatpush1.bf16.msra.mxu0 %v520
  %1048 = vmatprep.subr.bf16.mxu0 0
  %1049 = vmatpush1.bf16.msra.mxu0 0
  %1050 = vmatprep.subr.bf16.mxu0 0
  %1051 = vmatpush1.bf16.msra.mxu0 0
  %1052 = vmatprep.subr.bf16.mxu0 0
  %1053 = vmatpush1.bf16.msra.mxu0 0
  %1054 = vmatprep.subr.bf16.mxu0 0
  %1055 = vmatpush1.bf16.msra.mxu0 0
  %1056 = vmatprep.subr.bf16.mxu0 0
  %1057 = vmatpush1.bf16.msra.mxu0 0
  %1058 = vmatprep.subr.bf16.mxu0 0
  %1059 = vmatpush1.bf16.msra.mxu0 0
  %1060 = vmatprep.subr.bf16.mxu0 0
  %1061 = vmatpush1.bf16.msra.mxu0 0
  %1062 = vmatprep.subr.bf16.mxu0 0
  %1063 = vmatpush1.bf16.msra.mxu0 0
  %1064 = vmatprep.mubr.bf16.mxu0 0
  %1065 = vmatmul.mubr.bf16.gmra.mrb[0].mxu0 %v1031
  %v1066 = vpop.f32.mrb[0].mxu0
  %v1067 = vadd.f32 0.0, %v1066
  %v1068 = vpop.f32.mrb[0].mxu0
  %v1069 = vadd.f32 0.0, %v1068
  %v1070 = vpop.f32.mrb[0].mxu0
  %v1071 = vpop.f32.mrb[0].mxu0
  %1072 = vdwg.mxu0
  %1073 = vmatprep.subr.bf16.mxu0 %v495
  %1074 = vmatpush1.bf16.msra.mxu0 %v494
  %1075 = vmatprep.subr.bf16.mxu0 %v499
  %1076 = vmatpush1.bf16.msra.mxu0 %v498
  %1077 = vmatprep.subr.bf16.mxu0 %v503
  %1078 = vmatpush1.bf16.msra.mxu0 %v502
  %1079 = vmatprep.subr.bf16.mxu0 %v507
  %1080 = vmatpush1.bf16.msra.mxu0 %v506
  %1081 = vmatprep.subr.bf16.mxu0 %v511
  %1082 = vmatpush1.bf16.msra.mxu0 %v510
  %1083 = vmatprep.subr.bf16.mxu0 %v515
  %1084 = vmatpush1.bf16.msra.mxu0 %v514
  %1085 = vmatprep.subr.bf16.mxu0 %v519
  %1086 = vmatpush1.bf16.msra.mxu0 %v518
  %1087 = vmatprep.subr.bf16.mxu0 %v523
  %1088 = vmatpush1.bf16.msra.mxu0 %v522
  %1089 = vmatprep.subr.bf16.mxu0 0
  %1090 = vmatpush1.bf16.msra.mxu0 0
  %1091 = vmatprep.subr.bf16.mxu0 0
  %1092 = vmatpush1.bf16.msra.mxu0 0
  %1093 = vmatprep.subr.bf16.mxu0 0
  %1094 = vmatpush1.bf16.msra.mxu0 0
  %1095 = vmatprep.subr.bf16.mxu0 0
  %1096 = vmatpush1.bf16.msra.mxu0 0
  %1097 = vmatprep.subr.bf16.mxu0 0
  %1098 = vmatpush1.bf16.msra.mxu0 0
  %1099 = vmatprep.subr.bf16.mxu0 0
  %1100 = vmatpush1.bf16.msra.mxu0 0
  %1101 = vmatprep.subr.bf16.mxu0 0
  %1102 = vmatpush1.bf16.msra.mxu0 0
  %1103 = vmatprep.subr.bf16.mxu0 0
  %1104 = vmatpush1.bf16.msra.mxu0 0
  %1105 = vmatprep.mubr.bf16.mxu0 0
  %1106 = vmatmul.mubr.bf16.gmra.mrb[0].mxu0 %v1031
  %v1107 = vpop.f32.mrb[0].mxu0
  %v1108 = vadd.f32 0.0, %v1107
  %v1109 = vpop.f32.mrb[0].mxu0
  %v1110 = vadd.f32 0.0, %v1109
  %v1111 = vpop.f32.mrb[0].mxu0
  %v1112 = vpop.f32.mrb[0].mxu0
  %1113 = vdwg.mxu0
  %v1114 = vadd.f32 %v1026, %v1067
  %v1115 = vadd.f32 %v1027, %v1069
  %v1116 = vadd.f32 %v1028, %v1108
  %v1117 = vadd.f32 %v1029, %v1110
  %v1118 = vld [vmem:[#allocation3] sm:$0xff]
  %v1119 = vmul.f32 %v1019, 0.5
  %v1120 = vtanh.pop %v1119
  %v1121 = vmul.f32 %v1120, 0.5
  %v1122 = vadd.f32 %v1121, 0.5
  %v1123 = vmul.f32 %v1020, 0.5
  %v1124 = vtanh.pop %v1123
  %v1125 = vmul.f32 %v1124, 0.5
  %v1126 = vadd.f32 %v1125, 0.5
  %v1127 = vtanh.pop %v1021
  %v1128 = vmul.f32 %v1022, 0.5
  %v1129 = vtanh.pop %v1128
  %v1130 = vmul.f32 %v1129, 0.5
  %v1131 = vadd.f32 %v1130, 0.5
  %v1132 = vmul.f32 %v1126, %v1118
  %v1133 = vmul.f32 %v1122, %v1127
  %v1134 = vadd.f32 %v1132, %v1133
  %v1135 = vtanh.pop %v1134
  %v1136 = vmul.f32 %v1131, %v1135
  %v1137 = vld [vmem:[%s661] sm:$0xff]
  %v1138 = vmul.f32 %v1114, 0.5
  %v1139 = vtanh.pop %v1138
  %v1140 = vmul.f32 %v1139, 0.5
  %v1141 = vadd.f32 %v1140, 0.5
  %v1142 = vmul.f32 %v1115, 0.5
  %v1143 = vtanh.pop %v1142
  %v1144 = vmul.f32 %v1143, 0.5
  %v1145 = vadd.f32 %v1144, 0.5
  %v1146 = vtanh.pop %v1116
  %v1147 = vmul.f32 %v1117, 0.5
  %v1148 = vtanh.pop %v1147
  %v1149 = vmul.f32 %v1148, 0.5
  %v1150 = vadd.f32 %v1149, 0.5
  %v1151 = vmul.f32 %v1145, %v1137
  %v1152 = vmul.f32 %v1141, %v1146
  %v1153 = vadd.f32 %v1151, %v1152
  %v1154 = vtanh.pop %v1153
  %v1155 = vmul.f32 %v1150, %v1154
  %1156 = vst [vmem:[#allocation2] sm:$0xff] %v1136
  %1157 = vst [vmem:[#allocation3] sm:$0xff] %v1134
  %1158 = vst [vmem:[%s393] sm:$0xff] %v1155
  %1159 = vst [vmem:[%s661] sm:$0xff] %v1153
  %v1160 = vpack.c.bf16 %v1136, %v1136
  %s1161 = scalar_lea.vmem %s3, 8
  %1162 = vst [vmem:[%s1161] sm:$0xf] %v1160
  %v1163 = vpack.c.bf16 %v1155, %v1155
  %s1164 = scalar_lea.vmem %s55, 20
  %1165 = vst [vmem:[%s1164] sm:$0xf] %v1163
  %s1166 = scalar_lea.vmem %s0, 48
  %v1167 = vld [vmem:[%s1166] sm:$0xff]
  %v1168 = vld [vmem:[%s1166 + $0x8] sm:$0xff]
  %v1169 = vunpack.c.l.bf16 %v1167
  %v1170 = vunpack.c.h.bf16 %v1167
  %v1171 = vunpack.c.l.bf16 %v1168
  %v1172 = vunpack.c.h.bf16 %v1168
  %v1173 = vld [vmem:[#allocation2] sm:$0xff]
  %v1174 = vpack.c.bf16 %v1173, %v1173
  %1175 = vmatprep.subr.bf16.mxu0 %v237
  %1176 = vmatpush1.bf16.msra.mxu0 %v236
  %1177 = vmatprep.subr.bf16.mxu0 %v241
  %1178 = vmatpush1.bf16.msra.mxu0 %v240
  %1179 = vmatprep.subr.bf16.mxu0 %v245
  %1180 = vmatpush1.bf16.msra.mxu0 %v244
  %1181 = vmatprep.subr.bf16.mxu0 %v249
  %1182 = vmatpush1.bf16.msra.mxu0 %v248
  %1183 = vmatprep.subr.bf16.mxu0 %v253
  %1184 = vmatpush1.bf16.msra.mxu0 %v252
  %1185 = vmatprep.subr.bf16.mxu0 %v257
  %1186 = vmatpush1.bf16.msra.mxu0 %v256
  %1187 = vmatprep.subr.bf16.mxu0 %v261
  %1188 = vmatpush1.bf16.msra.mxu0 %v260
  %1189 = vmatprep.subr.bf16.mxu0 %v265
  %1190 = vmatpush1.bf16.msra.mxu0 %v264
  %1191 = vmatprep.subr.bf16.mxu0 0
  %1192 = vmatpush1.bf16.msra.mxu0 0
  %1193 = vmatprep.subr.bf16.mxu0 0
  %1194 = vmatpush1.bf16.msra.mxu0 0
  %1195 = vmatprep.subr.bf16.mxu0 0
  %1196 = vmatpush1.bf16.msra.mxu0 0
  %1197 = vmatprep.subr.bf16.mxu0 0
  %1198 = vmatpush1.bf16.msra.mxu0 0
  %1199 = vmatprep.subr.bf16.mxu0 0
  %1200 = vmatpush1.bf16.msra.mxu0 0
  %1201 = vmatprep.subr.bf16.mxu0 0
  %1202 = vmatpush1.bf16.msra.mxu0 0
  %1203 = vmatprep.subr.bf16.mxu0 0
  %1204 = vmatpush1.bf16.msra.mxu0 0
  %1205 = vmatprep.subr.bf16.mxu0 0
  %1206 = vmatpush1.bf16.msra.mxu0 0
  %1207 = vmatprep.mubr.bf16.mxu0 0
  %1208 = vmatmul.mubr.bf16.gmra.mrb[0].mxu0 %v1174
  %v1209 = vpop.f32.mrb[0].mxu0
  %v1210 = vadd.f32 0.0, %v1209
  %v1211 = vpop.f32.mrb[0].mxu0
  %v1212 = vadd.f32 0.0, %v1211
  %v1213 = vpop.f32.mrb[0].mxu0
  %v1214 = vpop.f32.mrb[0].mxu0
  %1215 = vdwg.mxu0
  %1216 = vmatprep.subr.bf16.mxu0 %v239
  %1217 = vmatpush1.bf16.msra.mxu0 %v238
  %1218 = vmatprep.subr.bf16.mxu0 %v243
  %1219 = vmatpush1.bf16.msra.mxu0 %v242
  %1220 = vmatprep.subr.bf16.mxu0 %v247
  %1221 = vmatpush1.bf16.msra.mxu0 %v246
  %1222 = vmatprep.subr.bf16.mxu0 %v251
  %1223 = vmatpush1.bf16.msra.mxu0 %v250
  %1224 = vmatprep.subr.bf16.mxu0 %v255
  %1225 = vmatpush1.bf16.msra.mxu0 %v254
  %1226 = vmatprep.subr.bf16.mxu0 %v259
  %1227 = vmatpush1.bf16.msra.mxu0 %v258
  %1228 = vmatprep.subr.bf16.mxu0 %v263
  %1229 = vmatpush1.bf16.msra.mxu0 %v262
  %1230 = vmatprep.subr.bf16.mxu0 %v267
  %1231 = vmatpush1.bf16.msra.mxu0 %v266
  %1232 = vmatprep.subr.bf16.mxu0 0
  %1233 = vmatpush1.bf16.msra.mxu0 0
  %1234 = vmatprep.subr.bf16.mxu0 0
  %1235 = vmatpush1.bf16.msra.mxu0 0
  %1236 = vmatprep.subr.bf16.mxu0 0
  %1237 = vmatpush1.bf16.msra.mxu0 0
  %1238 = vmatprep.subr.bf16.mxu0 0
  %1239 = vmatpush1.bf16.msra.mxu0 0
  %1240 = vmatprep.subr.bf16.mxu0 0
  %1241 = vmatpush1.bf16.msra.mxu0 0
  %1242 = vmatprep.subr.bf16.mxu0 0
  %1243 = vmatpush1.bf16.msra.mxu0 0
  %1244 = vmatprep.subr.bf16.mxu0 0
  %1245 = vmatpush1.bf16.msra.mxu0 0
  %1246 = vmatprep.subr.bf16.mxu0 0
  %1247 = vmatpush1.bf16.msra.mxu0 0
  %1248 = vmatprep.mubr.bf16.mxu0 0
  %1249 = vmatmul.mubr.bf16.gmra.mrb[0].mxu0 %v1174
  %v1250 = vpop.f32.mrb[0].mxu0
  %v1251 = vadd.f32 0.0, %v1250
  %v1252 = vpop.f32.mrb[0].mxu0
  %v1253 = vadd.f32 0.0, %v1252
  %v1254 = vpop.f32.mrb[0].mxu0
  %v1255 = vpop.f32.mrb[0].mxu0
  %1256 = vdwg.mxu0
  %v1257 = vadd.f32 %v1169, %v1210
  %v1258 = vadd.f32 %v1170, %v1212
  %v1259 = vadd.f32 %v1171, %v1251
  %v1260 = vadd.f32 %v1172, %v1253
  %s1261 = scalar_lea.vmem %s47, 64
  %v1262 = vld [vmem:[%s1261] sm:$0xff]
  %v1263 = vld [vmem:[%s1261 + $0x8] sm:$0xff]
  %v1264 = vunpack.c.l.bf16 %v1262
  %v1265 = vunpack.c.h.bf16 %v1262
  %v1266 = vunpack.c.l.bf16 %v1263
  %v1267 = vunpack.c.h.bf16 %v1263
  %v1268 = vld [vmem:[%s393] sm:$0xff]
  %v1269 = vpack.c.bf16 %v1268, %v1268
  %1270 = vmatprep.subr.bf16.mxu0 %v493
  %1271 = vmatpush1.bf16.msra.mxu0 %v492
  %1272 = vmatprep.subr.bf16.mxu0 %v497
  %1273 = vmatpush1.bf16.msra.mxu0 %v496
  %1274 = vmatprep.subr.bf16.mxu0 %v501
  %1275 = vmatpush1.bf16.msra.mxu0 %v500
  %1276 = vmatprep.subr.bf16.mxu0 %v505
  %1277 = vmatpush1.bf16.msra.mxu0 %v504
  %1278 = vmatprep.subr.bf16.mxu0 %v509
  %1279 = vmatpush1.bf16.msra.mxu0 %v508
  %1280 = vmatprep.subr.bf16.mxu0 %v513
  %1281 = vmatpush1.bf16.msra.mxu0 %v512
  %1282 = vmatprep.subr.bf16.mxu0 %v517
  %1283 = vmatpush1.bf16.msra.mxu0 %v516
  %1284 = vmatprep.subr.bf16.mxu0 %v521
  %1285 = vmatpush1.bf16.msra.mxu0 %v520
  %1286 = vmatprep.subr.bf16.mxu0 0
  %1287 = vmatpush1.bf16.msra.mxu0 0
  %1288 = vmatprep.subr.bf16.mxu0 0
  %1289 = vmatpush1.bf16.msra.mxu0 0
  %1290 = vmatprep.subr.bf16.mxu0 0
  %1291 = vmatpush1.bf16.msra.mxu0 0
  %1292 = vmatprep.subr.bf16.mxu0 0
  %1293 = vmatpush1.bf16.msra.mxu0 0
  %1294 = vmatprep.subr.bf16.mxu0 0
  %1295 = vmatpush1.bf16.msra.mxu0 0
  %1296 = vmatprep.subr.bf16.mxu0 0
  %1297 = vmatpush1.bf16.msra.mxu0 0
  %1298 = vmatprep.subr.bf16.mxu0 0
  %1299 = vmatpush1.bf16.msra.mxu0 0
  %1300 = vmatprep.subr.bf16.mxu0 0
  %1301 = vmatpush1.bf16.msra.mxu0 0
  %1302 = vmatprep.mubr.bf16.mxu0 0
  %1303 = vmatmul.mubr.bf16.gmra.mrb[0].mxu0 %v1269
  %v1304 = vpop.f32.mrb[0].mxu0
  %v1305 = vadd.f32 0.0, %v1304
  %v1306 = vpop.f32.mrb[0].mxu0
  %v1307 = vadd.f32 0.0, %v1306
  %v1308 = vpop.f32.mrb[0].mxu0
  %v1309 = vpop.f32.mrb[0].mxu0
  %1310 = vdwg.mxu0
  %1311 = vmatprep.subr.bf16.mxu0 %v495
  %1312 = vmatpush1.bf16.msra.mxu0 %v494
  %1313 = vmatprep.subr.bf16.mxu0 %v499
  %1314 = vmatpush1.bf16.msra.mxu0 %v498
  %1315 = vmatprep.subr.bf16.mxu0 %v503
  %1316 = vmatpush1.bf16.msra.mxu0 %v502
  %1317 = vmatprep.subr.bf16.mxu0 %v507
  %1318 = vmatpush1.bf16.msra.mxu0 %v506
  %1319 = vmatprep.subr.bf16.mxu0 %v511
  %1320 = vmatpush1.bf16.msra.mxu0 %v510
  %1321 = vmatprep.subr.bf16.mxu0 %v515
  %1322 = vmatpush1.bf16.msra.mxu0 %v514
  %1323 = vmatprep.subr.bf16.mxu0 %v519
  %1324 = vmatpush1.bf16.msra.mxu0 %v518
  %1325 = vmatprep.subr.bf16.mxu0 %v523
  %1326 = vmatpush1.bf16.msra.mxu0 %v522
  %1327 = vmatprep.subr.bf16.mxu0 0
  %1328 = vmatpush1.bf16.msra.mxu0 0
  %1329 = vmatprep.subr.bf16.mxu0 0
  %1330 = vmatpush1.bf16.msra.mxu0 0
  %1331 = vmatprep.subr.bf16.mxu0 0
  %1332 = vmatpush1.bf16.msra.mxu0 0
  %1333 = vmatprep.subr.bf16.mxu0 0
  %1334 = vmatpush1.bf16.msra.mxu0 0
  %1335 = vmatprep.subr.bf16.mxu0 0
  %1336 = vmatpush1.bf16.msra.mxu0 0
  %1337 = vmatprep.subr.bf16.mxu0 0
  %1338 = vmatpush1.bf16.msra.mxu0 0
  %1339 = vmatprep.subr.bf16.mxu0 0
  %1340 = vmatpush1.bf16.msra.mxu0 0
  %1341 = vmatprep.subr.bf16.mxu0 0
  %1342 = vmatpush1.bf16.msra.mxu0 0
  %1343 = vmatprep.mubr.bf16.mxu0 0
  %1344 = vmatmul.mubr.bf16.gmra.mrb[0].mxu0 %v1269
  %v1345 = vpop.f32.mrb[0].mxu0
  %v1346 = vadd.f32 0.0, %v1345
  %v1347 = vpop.f32.mrb[0].mxu0
  %v1348 = vadd.f32 0.0, %v1347
  %v1349 = vpop.f32.mrb[0].mxu0
  %v1350 = vpop.f32.mrb[0].mxu0
  %1351 = vdwg.mxu0
  %v1352 = vadd.f32 %v1264, %v1305
  %v1353 = vadd.f32 %v1265, %v1307
  %v1354 = vadd.f32 %v1266, %v1346
  %v1355 = vadd.f32 %v1267, %v1348
  %v1356 = vld [vmem:[#allocation3] sm:$0xff]
  %v1357 = vmul.f32 %v1257, 0.5
  %v1358 = vtanh.pop %v1357
  %v1359 = vmul.f32 %v1358, 0.5
  %v1360 = vadd.f32 %v1359, 0.5
  %v1361 = vmul.f32 %v1258, 0.5
  %v1362 = vtanh.pop %v1361
  %v1363 = vmul.f32 %v1362, 0.5
  %v1364 = vadd.f32 %v1363, 0.5
  %v1365 = vtanh.pop %v1259
  %v1366 = vmul.f32 %v1260, 0.5
  %v1367 = vtanh.pop %v1366
  %v1368 = vmul.f32 %v1367, 0.5
  %v1369 = vadd.f32 %v1368, 0.5
  %v1370 = vmul.f32 %v1364, %v1356
  %v1371 = vmul.f32 %v1360, %v1365
  %v1372 = vadd.f32 %v1370, %v1371
  %v1373 = vtanh.pop %v1372
  %v1374 = vmul.f32 %v1369, %v1373
  %v1375 = vld [vmem:[%s661] sm:$0xff]
  %v1376 = vmul.f32 %v1352, 0.5
  %v1377 = vtanh.pop %v1376
  %v1378 = vmul.f32 %v1377, 0.5
  %v1379 = vadd.f32 %v1378, 0.5
  %v1380 = vmul.f32 %v1353, 0.5
  %v1381 = vtanh.pop %v1380
  %v1382 = vmul.f32 %v1381, 0.5
  %v1383 = vadd.f32 %v1382, 0.5
  %v1384 = vtanh.pop %v1354
  %v1385 = vmul.f32 %v1355, 0.5
  %v1386 = vtanh.pop %v1385
  %v1387 = vmul.f32 %v1386, 0.5
  %v1388 = vadd.f32 %v1387, 0.5
  %v1389 = vmul.f32 %v1383, %v1375
  %v1390 = vmul.f32 %v1379, %v1384
  %v1391 = vadd.f32 %v1389, %v1390
  %v1392 = vtanh.pop %v1391
  %v1393 = vmul.f32 %v1388, %v1392
  %1394 = vst [vmem:[#allocation2] sm:$0xff] %v1374
  %1395 = vst [vmem:[#allocation3] sm:$0xff] %v1372
  %1396 = vst [vmem:[%s393] sm:$0xff] %v1393
  %1397 = vst [vmem:[%s661] sm:$0xff] %v1391
  %v1398 = vpack.c.bf16 %v1374, %v1374
  %s1399 = scalar_lea.vmem %s3, 12
  %1400 = vst [vmem:[%s1399] sm:$0xf] %v1398
  %v1401 = vpack.c.bf16 %v1393, %v1393
  %s1402 = scalar_lea.vmem %s55, 16
  %1403 = vst [vmem:[%s1402] sm:$0xf] %v1401
  %s1404 = scalar_lea.vmem %s0, 64
  %v1405 = vld [vmem:[%s1404] sm:$0xff]
  %v1406 = vld [vmem:[%s1404 + $0x8] sm:$0xff]
  %v1407 = vunpack.c.l.bf16 %v1405
  %v1408 = vunpack.c.h.bf16 %v1405
  %v1409 = vunpack.c.l.bf16 %v1406
  %v1410 = vunpack.c.h.bf16 %v1406
  %v1411 = vld [vmem:[#allocation2] sm:$0xff]
  %v1412 = vpack.c.bf16 %v1411, %v1411
  %1413 = vmatprep.subr.bf16.mxu0 %v237
  %1414 = vmatpush1.bf16.msra.mxu0 %v236
  %1415 = vmatprep.subr.bf16.mxu0 %v241
  %1416 = vmatpush1.bf16.msra.mxu0 %v240
  %1417 = vmatprep.subr.bf16.mxu0 %v245
  %1418 = vmatpush1.bf16.msra.mxu0 %v244
  %1419 = vmatprep.subr.bf16.mxu0 %v249
  %1420 = vmatpush1.bf16.msra.mxu0 %v248
  %1421 = vmatprep.subr.bf16.mxu0 %v253
  %1422 = vmatpush1.bf16.msra.mxu0 %v252
  %1423 = vmatprep.subr.bf16.mxu0 %v257
  %1424 = vmatpush1.bf16.msra.mxu0 %v256
  %1425 = vmatprep.subr.bf16.mxu0 %v261
  %1426 = vmatpush1.bf16.msra.mxu0 %v260
  %1427 = vmatprep.subr.bf16.mxu0 %v265
  %1428 = vmatpush1.bf16.msra.mxu0 %v264
  %1429 = vmatprep.subr.bf16.mxu0 0
  %1430 = vmatpush1.bf16.msra.mxu0 0
  %1431 = vmatprep.subr.bf16.mxu0 0
  %1432 = vmatpush1.bf16.msra.mxu0 0
  %1433 = vmatprep.subr.bf16.mxu0 0
  %1434 = vmatpush1.bf16.msra.mxu0 0
  %1435 = vmatprep.subr.bf16.mxu0 0
  %1436 = vmatpush1.bf16.msra.mxu0 0
  %1437 = vmatprep.subr.bf16.mxu0 0
  %1438 = vmatpush1.bf16.msra.mxu0 0
  %1439 = vmatprep.subr.bf16.mxu0 0
  %1440 = vmatpush1.bf16.msra.mxu0 0
  %1441 = vmatprep.subr.bf16.mxu0 0
  %1442 = vmatpush1.bf16.msra.mxu0 0
  %1443 = vmatprep.subr.bf16.mxu0 0
  %1444 = vmatpush1.bf16.msra.mxu0 0
  %1445 = vmatprep.mubr.bf16.mxu0 0
  %1446 = vmatmul.mubr.bf16.gmra.mrb[0].mxu0 %v1412
  %v1447 = vpop.f32.mrb[0].mxu0
  %v1448 = vadd.f32 0.0, %v1447
  %v1449 = vpop.f32.mrb[0].mxu0
  %v1450 = vadd.f32 0.0, %v1449
  %v1451 = vpop.f32.mrb[0].mxu0
  %v1452 = vpop.f32.mrb[0].mxu0
  %1453 = vdwg.mxu0
  %1454 = vmatprep.subr.bf16.mxu0 %v239
  %1455 = vmatpush1.bf16.msra.mxu0 %v238
  %1456 = vmatprep.subr.bf16.mxu0 %v243
  %1457 = vmatpush1.bf16.msra.mxu0 %v242
  %1458 = vmatprep.subr.bf16.mxu0 %v247
  %1459 = vmatpush1.bf16.msra.mxu0 %v246
  %1460 = vmatprep.subr.bf16.mxu0 %v251
  %1461 = vmatpush1.bf16.msra.mxu0 %v250
  %1462 = vmatprep.subr.bf16.mxu0 %v255
  %1463 = vmatpush1.bf16.msra.mxu0 %v254
  %1464 = vmatprep.subr.bf16.mxu0 %v259
  %1465 = vmatpush1.bf16.msra.mxu0 %v258
  %1466 = vmatprep.subr.bf16.mxu0 %v263
  %1467 = vmatpush1.bf16.msra.mxu0 %v262
  %1468 = vmatprep.subr.bf16.mxu0 %v267
  %1469 = vmatpush1.bf16.msra.mxu0 %v266
  %1470 = vmatprep.subr.bf16.mxu0 0
  %1471 = vmatpush1.bf16.msra.mxu0 0
  %1472 = vmatprep.subr.bf16.mxu0 0
  %1473 = vmatpush1.bf16.msra.mxu0 0
  %1474 = vmatprep.subr.bf16.mxu0 0
  %1475 = vmatpush1.bf16.msra.mxu0 0
  %1476 = vmatprep.subr.bf16.mxu0 0
  %1477 = vmatpush1.bf16.msra.mxu0 0
  %1478 = vmatprep.subr.bf16.mxu0 0
  %1479 = vmatpush1.bf16.msra.mxu0 0
  %1480 = vmatprep.subr.bf16.mxu0 0
  %1481 = vmatpush1.bf16.msra.mxu0 0
  %1482 = vmatprep.subr.bf16.mxu0 0
  %1483 = vmatpush1.bf16.msra.mxu0 0
  %1484 = vmatprep.subr.bf16.mxu0 0
  %1485 = vmatpush1.bf16.msra.mxu0 0
  %1486 = vmatprep.mubr.bf16.mxu0 0
  %1487 = vmatmul.mubr.bf16.gmra.mrb[0].mxu0 %v1412
  %v1488 = vpop.f32.mrb[0].mxu0
  %v1489 = vadd.f32 0.0, %v1488
  %v1490 = vpop.f32.mrb[0].mxu0
  %v1491 = vadd.f32 0.0, %v1490
  %v1492 = vpop.f32.mrb[0].mxu0
  %v1493 = vpop.f32.mrb[0].mxu0
  %1494 = vdwg.mxu0
  %v1495 = vadd.f32 %v1407, %v1448
  %v1496 = vadd.f32 %v1408, %v1450
  %v1497 = vadd.f32 %v1409, %v1489
  %v1498 = vadd.f32 %v1410, %v1491
  %s1499 = scalar_lea.vmem %s47, 48
  %v1500 = vld [vmem:[%s1499] sm:$0xff]
  %v1501 = vld [vmem:[%s1499 + $0x8] sm:$0xff]
  %v1502 = vunpack.c.l.bf16 %v1500
  %v1503 = vunpack.c.h.bf16 %v1500
  %v1504 = vunpack.c.l.bf16 %v1501
  %v1505 = vunpack.c.h.bf16 %v1501
  %v1506 = vld [vmem:[%s393] sm:$0xff]
  %v1507 = vpack.c.bf16 %v1506, %v1506
  %1508 = vmatprep.subr.bf16.mxu0 %v493
  %1509 = vmatpush1.bf16.msra.mxu0 %v492
  %1510 = vmatprep.subr.bf16.mxu0 %v497
  %1511 = vmatpush1.bf16.msra.mxu0 %v496
  %1512 = vmatprep.subr.bf16.mxu0 %v501
  %1513 = vmatpush1.bf16.msra.mxu0 %v500
  %1514 = vmatprep.subr.bf16.mxu0 %v505
  %1515 = vmatpush1.bf16.msra.mxu0 %v504
  %1516 = vmatprep.subr.bf16.mxu0 %v509
  %1517 = vmatpush1.bf16.msra.mxu0 %v508
  %1518 = vmatprep.subr.bf16.mxu0 %v513
  %1519 = vmatpush1.bf16.msra.mxu0 %v512
  %1520 = vmatprep.subr.bf16.mxu0 %v517
  %1521 = vmatpush1.bf16.msra.mxu0 %v516
  %1522 = vmatprep.subr.bf16.mxu0 %v521
  %1523 = vmatpush1.bf16.msra.mxu0 %v520
  %1524 = vmatprep.subr.bf16.mxu0 0
  %1525 = vmatpush1.bf16.msra.mxu0 0
  %1526 = vmatprep.subr.bf16.mxu0 0
  %1527 = vmatpush1.bf16.msra.mxu0 0
  %1528 = vmatprep.subr.bf16.mxu0 0
  %1529 = vmatpush1.bf16.msra.mxu0 0
  %1530 = vmatprep.subr.bf16.mxu0 0
  %1531 = vmatpush1.bf16.msra.mxu0 0
  %1532 = vmatprep.subr.bf16.mxu0 0
  %1533 = vmatpush1.bf16.msra.mxu0 0
  %1534 = vmatprep.subr.bf16.mxu0 0
  %1535 = vmatpush1.bf16.msra.mxu0 0
  %1536 = vmatprep.subr.bf16.mxu0 0
  %1537 = vmatpush1.bf16.msra.mxu0 0
  %1538 = vmatprep.subr.bf16.mxu0 0
  %1539 = vmatpush1.bf16.msra.mxu0 0
  %1540 = vmatprep.mubr.bf16.mxu0 0
  %1541 = vmatmul.mubr.bf16.gmra.mrb[0].mxu0 %v1507
  %v1542 = vpop.f32.mrb[0].mxu0
  %v1543 = vadd.f32 0.0, %v1542
  %v1544 = vpop.f32.mrb[0].mxu0
  %v1545 = vadd.f32 0.0, %v1544
  %v1546 = vpop.f32.mrb[0].mxu0
  %v1547 = vpop.f32.mrb[0].mxu0
  %1548 = vdwg.mxu0
  %1549 = vmatprep.subr.bf16.mxu0 %v495
  %1550 = vmatpush1.bf16.msra.mxu0 %v494
  %1551 = vmatprep.subr.bf16.mxu0 %v499
  %1552 = vmatpush1.bf16.msra.mxu0 %v498
  %1553 = vmatprep.subr.bf16.mxu0 %v503
  %1554 = vmatpush1.bf16.msra.mxu0 %v502
  %1555 = vmatprep.subr.bf16.mxu0 %v507
  %1556 = vmatpush1.bf16.msra.mxu0 %v506
  %1557 = vmatprep.subr.bf16.mxu0 %v511
  %1558 = vmatpush1.bf16.msra.mxu0 %v510
  %1559 = vmatprep.subr.bf16.mxu0 %v515
  %1560 = vmatpush1.bf16.msra.mxu0 %v514
  %1561 = vmatprep.subr.bf16.mxu0 %v519
  %1562 = vmatpush1.bf16.msra.mxu0 %v518
  %1563 = vmatprep.subr.bf16.mxu0 %v523
  %1564 = vmatpush1.bf16.msra.mxu0 %v522
  %1565 = vmatprep.subr.bf16.mxu0 0
  %1566 = vmatpush1.bf16.msra.mxu0 0
  %1567 = vmatprep.subr.bf16.mxu0 0
  %1568 = vmatpush1.bf16.msra.mxu0 0
  %1569 = vmatprep.subr.bf16.mxu0 0
  %1570 = vmatpush1.bf16.msra.mxu0 0
  %1571 = vmatprep.subr.bf16.mxu0 0
  %1572 = vmatpush1.bf16.msra.mxu0 0
  %1573 = vmatprep.subr.bf16.mxu0 0
  %1574 = vmatpush1.bf16.msra.mxu0 0
  %1575 = vmatprep.subr.bf16.mxu0 0
  %1576 = vmatpush1.bf16.msra.mxu0 0
  %1577 = vmatprep.subr.bf16.mxu0 0
  %1578 = vmatpush1.bf16.msra.mxu0 0
  %1579 = vmatprep.subr.bf16.mxu0 0
  %1580 = vmatpush1.bf16.msra.mxu0 0
  %1581 = vmatprep.mubr.bf16.mxu0 0
  %1582 = vmatmul.mubr.bf16.gmra.mrb[0].mxu0 %v1507
  %v1583 = vpop.f32.mrb[0].mxu0
  %v1584 = vadd.f32 0.0, %v1583
  %v1585 = vpop.f32.mrb[0].mxu0
  %v1586 = vadd.f32 0.0, %v1585
  %v1587 = vpop.f32.mrb[0].mxu0
  %v1588 = vpop.f32.mrb[0].mxu0
  %1589 = vdwg.mxu0
  %v1590 = vadd.f32 %v1502, %v1543
  %v1591 = vadd.f32 %v1503, %v1545
  %v1592 = vadd.f32 %v1504, %v1584
  %v1593 = vadd.f32 %v1505, %v1586
  %v1594 = vld [vmem:[#allocation3] sm:$0xff]
  %v1595 = vmul.f32 %v1495, 0.5
  %v1596 = vtanh.pop %v1595
  %v1597 = vmul.f32 %v1596, 0.5
  %v1598 = vadd.f32 %v1597, 0.5
  %v1599 = vmul.f32 %v1496, 0.5
  %v1600 = vtanh.pop %v1599
  %v1601 = vmul.f32 %v1600, 0.5
  %v1602 = vadd.f32 %v1601, 0.5
  %v1603 = vtanh.pop %v1497
  %v1604 = vmul.f32 %v1498, 0.5
  %v1605 = vtanh.pop %v1604
  %v1606 = vmul.f32 %v1605, 0.5
  %v1607 = vadd.f32 %v1606, 0.5
  %v1608 = vmul.f32 %v1602, %v1594
  %v1609 = vmul.f32 %v1598, %v1603
  %v1610 = vadd.f32 %v1608, %v1609
  %v1611 = vtanh.pop %v1610
  %v1612 = vmul.f32 %v1607, %v1611
  %v1613 = vld [vmem:[%s661] sm:$0xff]
  %v1614 = vmul.f32 %v1590, 0.5
  %v1615 = vtanh.pop %v1614
  %v1616 = vmul.f32 %v1615, 0.5
  %v1617 = vadd.f32 %v1616, 0.5
  %v1618 = vmul.f32 %v1591, 0.5
  %v1619 = vtanh.pop %v1618
  %v1620 = vmul.f32 %v1619, 0.5
  %v1621 = vadd.f32 %v1620, 0.5
  %v1622 = vtanh.pop %v1592
  %v1623 = vmul.f32 %v1593, 0.5
  %v1624 = vtanh.pop %v1623
  %v1625 = vmul.f32 %v1624, 0.5
  %v1626 = vadd.f32 %v1625, 0.5
  %v1627 = vmul.f32 %v1621, %v1613
  %v1628 = vmul.f32 %v1617, %v1622
  %v1629 = vadd.f32 %v1627, %v1628
  %v1630 = vtanh.pop %v1629
  %v1631 = vmul.f32 %v1626, %v1630
  %1632 = vst [vmem:[#allocation2] sm:$0xff] %v1612
  %1633 = vst [vmem:[#allocation3] sm:$0xff] %v1610
  %1634 = vst [vmem:[%s393] sm:$0xff] %v1631
  %1635 = vst [vmem:[%s661] sm:$0xff] %v1629
  %v1636 = vpack.c.bf16 %v1612, %v1612
  %s1637 = scalar_lea.vmem %s3, 16
  %1638 = vst [vmem:[%s1637] sm:$0xf] %v1636
  %v1639 = vpack.c.bf16 %v1631, %v1631
  %s1640 = scalar_lea.vmem %s55, 12
  %1641 = vst [vmem:[%s1640] sm:$0xf] %v1639
  %s1642 = scalar_lea.vmem %s0, 80
  %v1643 = vld [vmem:[%s1642] sm:$0xff]
  %v1644 = vld [vmem:[%s1642 + $0x8] sm:$0xff]
  %v1645 = vunpack.c.l.bf16 %v1643
  %v1646 = vunpack.c.h.bf16 %v1643
  %v1647 = vunpack.c.l.bf16 %v1644
  %v1648 = vunpack.c.h.bf16 %v1644
  %v1649 = vld [vmem:[#allocation2] sm:$0xff]
  %v1650 = vpack.c.bf16 %v1649, %v1649
  %1651 = vmatprep.subr.bf16.mxu0 %v237
  %1652 = vmatpush1.bf16.msra.mxu0 %v236
  %1653 = vmatprep.subr.bf16.mxu0 %v241
  %1654 = vmatpush1.bf16.msra.mxu0 %v240
  %1655 = vmatprep.subr.bf16.mxu0 %v245
  %1656 = vmatpush1.bf16.msra.mxu0 %v244
  %1657 = vmatprep.subr.bf16.mxu0 %v249
  %1658 = vmatpush1.bf16.msra.mxu0 %v248
  %1659 = vmatprep.subr.bf16.mxu0 %v253
  %1660 = vmatpush1.bf16.msra.mxu0 %v252
  %1661 = vmatprep.subr.bf16.mxu0 %v257
  %1662 = vmatpush1.bf16.msra.mxu0 %v256
  %1663 = vmatprep.subr.bf16.mxu0 %v261
  %1664 = vmatpush1.bf16.msra.mxu0 %v260
  %1665 = vmatprep.subr.bf16.mxu0 %v265
  %1666 = vmatpush1.bf16.msra.mxu0 %v264
  %1667 = vmatprep.subr.bf16.mxu0 0
  %1668 = vmatpush1.bf16.msra.mxu0 0
  %1669 = vmatprep.subr.bf16.mxu0 0
  %1670 = vmatpush1.bf16.msra.mxu0 0
  %1671 = vmatprep.subr.bf16.mxu0 0
  %1672 = vmatpush1.bf16.msra.mxu0 0
  %1673 = vmatprep.subr.bf16.mxu0 0
  %1674 = vmatpush1.bf16.msra.mxu0 0
  %1675 = vmatprep.subr.bf16.mxu0 0
  %1676 = vmatpush1.bf16.msra.mxu0 0
  %1677 = vmatprep.subr.bf16.mxu0 0
  %1678 = vmatpush1.bf16.msra.mxu0 0
  %1679 = vmatprep.subr.bf16.mxu0 0
  %1680 = vmatpush1.bf16.msra.mxu0 0
  %1681 = vmatprep.subr.bf16.mxu0 0
  %1682 = vmatpush1.bf16.msra.mxu0 0
  %1683 = vmatprep.mubr.bf16.mxu0 0
  %1684 = vmatmul.mubr.bf16.gmra.mrb[0].mxu0 %v1650
  %v1685 = vpop.f32.mrb[0].mxu0
  %v1686 = vadd.f32 0.0, %v1685
  %v1687 = vpop.f32.mrb[0].mxu0
  %v1688 = vadd.f32 0.0, %v1687
  %v1689 = vpop.f32.mrb[0].mxu0
  %v1690 = vpop.f32.mrb[0].mxu0
  %1691 = vdwg.mxu0
  %1692 = vmatprep.subr.bf16.mxu0 %v239
  %1693 = vmatpush1.bf16.msra.mxu0 %v238
  %1694 = vmatprep.subr.bf16.mxu0 %v243
  %1695 = vmatpush1.bf16.msra.mxu0 %v242
  %1696 = vmatprep.subr.bf16.mxu0 %v247
  %1697 = vmatpush1.bf16.msra.mxu0 %v246
  %1698 = vmatprep.subr.bf16.mxu0 %v251
  %1699 = vmatpush1.bf16.msra.mxu0 %v250
  %1700 = vmatprep.subr.bf16.mxu0 %v255
  %1701 = vmatpush1.bf16.msra.mxu0 %v254
  %1702 = vmatprep.subr.bf16.mxu0 %v259
  %1703 = vmatpush1.bf16.msra.mxu0 %v258
  %1704 = vmatprep.subr.bf16.mxu0 %v263
  %1705 = vmatpush1.bf16.msra.mxu0 %v262
  %1706 = vmatprep.subr.bf16.mxu0 %v267
  %1707 = vmatpush1.bf16.msra.mxu0 %v266
  %1708 = vmatprep.subr.bf16.mxu0 0
  %1709 = vmatpush1.bf16.msra.mxu0 0
  %1710 = vmatprep.subr.bf16.mxu0 0
  %1711 = vmatpush1.bf16.msra.mxu0 0
  %1712 = vmatprep.subr.bf16.mxu0 0
  %1713 = vmatpush1.bf16.msra.mxu0 0
  %1714 = vmatprep.subr.bf16.mxu0 0
  %1715 = vmatpush1.bf16.msra.mxu0 0
  %1716 = vmatprep.subr.bf16.mxu0 0
  %1717 = vmatpush1.bf16.msra.mxu0 0
  %1718 = vmatprep.subr.bf16.mxu0 0
  %1719 = vmatpush1.bf16.msra.mxu0 0
  %1720 = vmatprep.subr.bf16.mxu0 0
  %1721 = vmatpush1.bf16.msra.mxu0 0
  %1722 = vmatprep.subr.bf16.mxu0 0
  %1723 = vmatpush1.bf16.msra.mxu0 0
  %1724 = vmatprep.mubr.bf16.mxu0 0
  %1725 = vmatmul.mubr.bf16.gmra.mrb[0].mxu0 %v1650
  %v1726 = vpop.f32.mrb[0].mxu0
  %v1727 = vadd.f32 0.0, %v1726
  %v1728 = vpop.f32.mrb[0].mxu0
  %v1729 = vadd.f32 0.0, %v1728
  %v1730 = vpop.f32.mrb[0].mxu0
  %v1731 = vpop.f32.mrb[0].mxu0
  %1732 = vdwg.mxu0
  %v1733 = vadd.f32 %v1645, %v1686
  %v1734 = vadd.f32 %v1646, %v1688
  %v1735 = vadd.f32 %v1647, %v1727
  %v1736 = vadd.f32 %v1648, %v1729
  %s1737 = scalar_lea.vmem %s47, 32
  %v1738 = vld [vmem:[%s1737] sm:$0xff]
  %v1739 = vld [vmem:[%s1737 + $0x8] sm:$0xff]
  %v1740 = vunpack.c.l.bf16 %v1738
  %v1741 = vunpack.c.h.bf16 %v1738
  %v1742 = vunpack.c.l.bf16 %v1739
  %v1743 = vunpack.c.h.bf16 %v1739
  %v1744 = vld [vmem:[%s393] sm:$0xff]
  %v1745 = vpack.c.bf16 %v1744, %v1744
  %1746 = vmatprep.subr.bf16.mxu0 %v493
  %1747 = vmatpush1.bf16.msra.mxu0 %v492
  %1748 = vmatprep.subr.bf16.mxu0 %v497
  %1749 = vmatpush1.bf16.msra.mxu0 %v496
  %1750 = vmatprep.subr.bf16.mxu0 %v501
  %1751 = vmatpush1.bf16.msra.mxu0 %v500
  %1752 = vmatprep.subr.bf16.mxu0 %v505
  %1753 = vmatpush1.bf16.msra.mxu0 %v504
  %1754 = vmatprep.subr.bf16.mxu0 %v509
  %1755 = vmatpush1.bf16.msra.mxu0 %v508
  %1756 = vmatprep.subr.bf16.mxu0 %v513
  %1757 = vmatpush1.bf16.msra.mxu0 %v512
  %1758 = vmatprep.subr.bf16.mxu0 %v517
  %1759 = vmatpush1.bf16.msra.mxu0 %v516
  %1760 = vmatprep.subr.bf16.mxu0 %v521
  %1761 = vmatpush1.bf16.msra.mxu0 %v520
  %1762 = vmatprep.subr.bf16.mxu0 0
  %1763 = vmatpush1.bf16.msra.mxu0 0
  %1764 = vmatprep.subr.bf16.mxu0 0
  %1765 = vmatpush1.bf16.msra.mxu0 0
  %1766 = vmatprep.subr.bf16.mxu0 0
  %1767 = vmatpush1.bf16.msra.mxu0 0
  %1768 = vmatprep.subr.bf16.mxu0 0
  %1769 = vmatpush1.bf16.msra.mxu0 0
  %1770 = vmatprep.subr.bf16.mxu0 0
  %1771 = vmatpush1.bf16.msra.mxu0 0
  %1772 = vmatprep.subr.bf16.mxu0 0
  %1773 = vmatpush1.bf16.msra.mxu0 0
  %1774 = vmatprep.subr.bf16.mxu0 0
  %1775 = vmatpush1.bf16.msra.mxu0 0
  %1776 = vmatprep.subr.bf16.mxu0 0
  %1777 = vmatpush1.bf16.msra.mxu0 0
  %1778 = vmatprep.mubr.bf16.mxu0 0
  %1779 = vmatmul.mubr.bf16.gmra.mrb[0].mxu0 %v1745
  %v1780 = vpop.f32.mrb[0].mxu0
  %v1781 = vadd.f32 0.0, %v1780
  %v1782 = vpop.f32.mrb[0].mxu0
  %v1783 = vadd.f32 0.0, %v1782
  %v1784 = vpop.f32.mrb[0].mxu0
  %v1785 = vpop.f32.mrb[0].mxu0
  %1786 = vdwg.mxu0
  %1787 = vmatprep.subr.bf16.mxu0 %v495
  %1788 = vmatpush1.bf16.msra.mxu0 %v494
  %1789 = vmatprep.subr.bf16.mxu0 %v499
  %1790 = vmatpush1.bf16.msra.mxu0 %v498
  %1791 = vmatprep.subr.bf16.mxu0 %v503
  %1792 = vmatpush1.bf16.msra.mxu0 %v502
  %1793 = vmatprep.subr.bf16.mxu0 %v507
  %1794 = vmatpush1.bf16.msra.mxu0 %v506
  %1795 = vmatprep.subr.bf16.mxu0 %v511
  %1796 = vmatpush1.bf16.msra.mxu0 %v510
  %1797 = vmatprep.subr.bf16.mxu0 %v515
  %1798 = vmatpush1.bf16.msra.mxu0 %v514
  %1799 = vmatprep.subr.bf16.mxu0 %v519
  %1800 = vmatpush1.bf16.msra.mxu0 %v518
  %1801 = vmatprep.subr.bf16.mxu0 %v523
  %1802 = vmatpush1.bf16.msra.mxu0 %v522
  %1803 = vmatprep.subr.bf16.mxu0 0
  %1804 = vmatpush1.bf16.msra.mxu0 0
  %1805 = vmatprep.subr.bf16.mxu0 0
  %1806 = vmatpush1.bf16.msra.mxu0 0
  %1807 = vmatprep.subr.bf16.mxu0 0
  %1808 = vmatpush1.bf16.msra.mxu0 0
  %1809 = vmatprep.subr.bf16.mxu0 0
  %1810 = vmatpush1.bf16.msra.mxu0 0
  %1811 = vmatprep.subr.bf16.mxu0 0
  %1812 = vmatpush1.bf16.msra.mxu0 0
  %1813 = vmatprep.subr.bf16.mxu0 0
  %1814 = vmatpush1.bf16.msra.mxu0 0
  %1815 = vmatprep.subr.bf16.mxu0 0
  %1816 = vmatpush1.bf16.msra.mxu0 0
  %1817 = vmatprep.subr.bf16.mxu0 0
  %1818 = vmatpush1.bf16.msra.mxu0 0
  %1819 = vmatprep.mubr.bf16.mxu0 0
  %1820 = vmatmul.mubr.bf16.gmra.mrb[0].mxu0 %v1745
  %v1821 = vpop.f32.mrb[0].mxu0
  %v1822 = vadd.f32 0.0, %v1821
  %v1823 = vpop.f32.mrb[0].mxu0
  %v1824 = vadd.f32 0.0, %v1823
  %v1825 = vpop.f32.mrb[0].mxu0
  %v1826 = vpop.f32.mrb[0].mxu0
  %1827 = vdwg.mxu0
  %v1828 = vadd.f32 %v1740, %v1781
  %v1829 = vadd.f32 %v1741, %v1783
  %v1830 = vadd.f32 %v1742, %v1822
  %v1831 = vadd.f32 %v1743, %v1824
  %v1832 = vld [vmem:[#allocation3] sm:$0xff]
  %v1833 = vmul.f32 %v1733, 0.5
  %v1834 = vtanh.pop %v1833
  %v1835 = vmul.f32 %v1834, 0.5
  %v1836 = vadd.f32 %v1835, 0.5
  %v1837 = vmul.f32 %v1734, 0.5
  %v1838 = vtanh.pop %v1837
  %v1839 = vmul.f32 %v1838, 0.5
  %v1840 = vadd.f32 %v1839, 0.5
  %v1841 = vtanh.pop %v1735
  %v1842 = vmul.f32 %v1736, 0.5
  %v1843 = vtanh.pop %v1842
  %v1844 = vmul.f32 %v1843, 0.5
  %v1845 = vadd.f32 %v1844, 0.5
  %v1846 = vmul.f32 %v1840, %v1832
  %v1847 = vmul.f32 %v1836, %v1841
  %v1848 = vadd.f32 %v1846, %v1847
  %v1849 = vtanh.pop %v1848
  %v1850 = vmul.f32 %v1845, %v1849
  %v1851 = vld [vmem:[%s661] sm:$0xff]
  %v1852 = vmul.f32 %v1828, 0.5
  %v1853 = vtanh.pop %v1852
  %v1854 = vmul.f32 %v1853, 0.5
  %v1855 = vadd.f32 %v1854, 0.5
  %v1856 = vmul.f32 %v1829, 0.5
  %v1857 = vtanh.pop %v1856
  %v1858 = vmul.f32 %v1857, 0.5
  %v1859 = vadd.f32 %v1858, 0.5
  %v1860 = vtanh.pop %v1830
  %v1861 = vmul.f32 %v1831, 0.5
  %v1862 = vtanh.pop %v1861
  %v1863 = vmul.f32 %v1862, 0.5
  %v1864 = vadd.f32 %v1863, 0.5
  %v1865 = vmul.f32 %v1859, %v1851
  %v1866 = vmul.f32 %v1855, %v1860
  %v1867 = vadd.f32 %v1865, %v1866
  %v1868 = vtanh.pop %v1867
  %v1869 = vmul.f32 %v1864, %v1868
  %1870 = vst [vmem:[#allocation2] sm:$0xff] %v1850
  %1871 = vst [vmem:[#allocation3] sm:$0xff] %v1848
  %1872 = vst [vmem:[%s393] sm:$0xff] %v1869
  %1873 = vst [vmem:[%s661] sm:$0xff] %v1867
  %v1874 = vpack.c.bf16 %v1850, %v1850
  %s1875 = scalar_lea.vmem %s3, 20
  %1876 = vst [vmem:[%s1875] sm:$0xf] %v1874
  %v1877 = vpack.c.bf16 %v1869, %v1869
  %s1878 = scalar_lea.vmem %s55, 8
  %1879 = vst [vmem:[%s1878] sm:$0xf] %v1877
  %s1880 = scalar_lea.vmem %s0, 96
  %v1881 = vld [vmem:[%s1880] sm:$0xff]
  %v1882 = vld [vmem:[%s1880 + $0x8] sm:$0xff]
  %v1883 = vunpack.c.l.bf16 %v1881
  %v1884 = vunpack.c.h.bf16 %v1881
  %v1885 = vunpack.c.l.bf16 %v1882
  %v1886 = vunpack.c.h.bf16 %v1882
  %v1887 = vld [vmem:[#allocation2] sm:$0xff]
  %v1888 = vpack.c.bf16 %v1887, %v1887
  %1889 = vmatprep.subr.bf16.mxu0 %v237
  %1890 = vmatpush1.bf16.msra.mxu0 %v236
  %1891 = vmatprep.subr.bf16.mxu0 %v241
  %1892 = vmatpush1.bf16.msra.mxu0 %v240
  %1893 = vmatprep.subr.bf16.mxu0 %v245
  %1894 = vmatpush1.bf16.msra.mxu0 %v244
  %1895 = vmatprep.subr.bf16.mxu0 %v249
  %1896 = vmatpush1.bf16.msra.mxu0 %v248
  %1897 = vmatprep.subr.bf16.mxu0 %v253
  %1898 = vmatpush1.bf16.msra.mxu0 %v252
  %1899 = vmatprep.subr.bf16.mxu0 %v257
  %1900 = vmatpush1.bf16.msra.mxu0 %v256
  %1901 = vmatprep.subr.bf16.mxu0 %v261
  %1902 = vmatpush1.bf16.msra.mxu0 %v260
  %1903 = vmatprep.subr.bf16.mxu0 %v265
  %1904 = vmatpush1.bf16.msra.mxu0 %v264
  %1905 = vmatprep.subr.bf16.mxu0 0
  %1906 = vmatpush1.bf16.msra.mxu0 0
  %1907 = vmatprep.subr.bf16.mxu0 0
  %1908 = vmatpush1.bf16.msra.mxu0 0
  %1909 = vmatprep.subr.bf16.mxu0 0
  %1910 = vmatpush1.bf16.msra.mxu0 0
  %1911 = vmatprep.subr.bf16.mxu0 0
  %1912 = vmatpush1.bf16.msra.mxu0 0
  %1913 = vmatprep.subr.bf16.mxu0 0
  %1914 = vmatpush1.bf16.msra.mxu0 0
  %1915 = vmatprep.subr.bf16.mxu0 0
  %1916 = vmatpush1.bf16.msra.mxu0 0
  %1917 = vmatprep.subr.bf16.mxu0 0
  %1918 = vmatpush1.bf16.msra.mxu0 0
  %1919 = vmatprep.subr.bf16.mxu0 0
  %1920 = vmatpush1.bf16.msra.mxu0 0
  %1921 = vmatprep.mubr.bf16.mxu0 0
  %1922 = vmatmul.mubr.bf16.gmra.mrb[0].mxu0 %v1888
  %v1923 = vpop.f32.mrb[0].mxu0
  %v1924 = vadd.f32 0.0, %v1923
  %v1925 = vpop.f32.mrb[0].mxu0
  %v1926 = vadd.f32 0.0, %v1925
  %v1927 = vpop.f32.mrb[0].mxu0
  %v1928 = vpop.f32.mrb[0].mxu0
  %1929 = vdwg.mxu0
  %1930 = vmatprep.subr.bf16.mxu0 %v239
  %1931 = vmatpush1.bf16.msra.mxu0 %v238
  %1932 = vmatprep.subr.bf16.mxu0 %v243
  %1933 = vmatpush1.bf16.msra.mxu0 %v242
  %1934 = vmatprep.subr.bf16.mxu0 %v247
  %1935 = vmatpush1.bf16.msra.mxu0 %v246
  %1936 = vmatprep.subr.bf16.mxu0 %v251
  %1937 = vmatpush1.bf16.msra.mxu0 %v250
  %1938 = vmatprep.subr.bf16.mxu0 %v255
  %1939 = vmatpush1.bf16.msra.mxu0 %v254
  %1940 = vmatprep.subr.bf16.mxu0 %v259
  %1941 = vmatpush1.bf16.msra.mxu0 %v258
  %1942 = vmatprep.subr.bf16.mxu0 %v263
  %1943 = vmatpush1.bf16.msra.mxu0 %v262
  %1944 = vmatprep.subr.bf16.mxu0 %v267
  %1945 = vmatpush1.bf16.msra.mxu0 %v266
  %1946 = vmatprep.subr.bf16.mxu0 0
  %1947 = vmatpush1.bf16.msra.mxu0 0
  %1948 = vmatprep.subr.bf16.mxu0 0
  %1949 = vmatpush1.bf16.msra.mxu0 0
  %1950 = vmatprep.subr.bf16.mxu0 0
  %1951 = vmatpush1.bf16.msra.mxu0 0
  %1952 = vmatprep.subr.bf16.mxu0 0
  %1953 = vmatpush1.bf16.msra.mxu0 0
  %1954 = vmatprep.subr.bf16.mxu0 0
  %1955 = vmatpush1.bf16.msra.mxu0 0
  %1956 = vmatprep.subr.bf16.mxu0 0
  %1957 = vmatpush1.bf16.msra.mxu0 0
  %1958 = vmatprep.subr.bf16.mxu0 0
  %1959 = vmatpush1.bf16.msra.mxu0 0
  %1960 = vmatprep.subr.bf16.mxu0 0
  %1961 = vmatpush1.bf16.msra.mxu0 0
  %1962 = vmatprep.mubr.bf16.mxu0 0
  %1963 = vmatmul.mubr.bf16.gmra.mrb[0].mxu0 %v1888
  %v1964 = vpop.f32.mrb[0].mxu0
  %v1965 = vadd.f32 0.0, %v1964
  %v1966 = vpop.f32.mrb[0].mxu0
  %v1967 = vadd.f32 0.0, %v1966
  %v1968 = vpop.f32.mrb[0].mxu0
  %v1969 = vpop.f32.mrb[0].mxu0
  %1970 = vdwg.mxu0
  %v1971 = vadd.f32 %v1883, %v1924
  %v1972 = vadd.f32 %v1884, %v1926
  %v1973 = vadd.f32 %v1885, %v1965
  %v1974 = vadd.f32 %v1886, %v1967
  %s1975 = scalar_lea.vmem %s47, 16
  %v1976 = vld [vmem:[%s1975] sm:$0xff]
  %v1977 = vld [vmem:[%s1975 + $0x8] sm:$0xff]
  %v1978 = vunpack.c.l.bf16 %v1976
  %v1979 = vunpack.c.h.bf16 %v1976
  %v1980 = vunpack.c.l.bf16 %v1977
  %v1981 = vunpack.c.h.bf16 %v1977
  %v1982 = vld [vmem:[%s393] sm:$0xff]
  %v1983 = vpack.c.bf16 %v1982, %v1982
  %1984 = vmatprep.subr.bf16.mxu0 %v493
  %1985 = vmatpush1.bf16.msra.mxu0 %v492
  %1986 = vmatprep.subr.bf16.mxu0 %v497
  %1987 = vmatpush1.bf16.msra.mxu0 %v496
  %1988 = vmatprep.subr.bf16.mxu0 %v501
  %1989 = vmatpush1.bf16.msra.mxu0 %v500
  %1990 = vmatprep.subr.bf16.mxu0 %v505
  %1991 = vmatpush1.bf16.msra.mxu0 %v504
  %1992 = vmatprep.subr.bf16.mxu0 %v509
  %1993 = vmatpush1.bf16.msra.mxu0 %v508
  %1994 = vmatprep.subr.bf16.mxu0 %v513
  %1995 = vmatpush1.bf16.msra.mxu0 %v512
  %1996 = vmatprep.subr.bf16.mxu0 %v517
  %1997 = vmatpush1.bf16.msra.mxu0 %v516
  %1998 = vmatprep.subr.bf16.mxu0 %v521
  %1999 = vmatpush1.bf16.msra.mxu0 %v520
  %2000 = vmatprep.subr.bf16.mxu0 0
  %2001 = vmatpush1.bf16.msra.mxu0 0
  %2002 = vmatprep.subr.bf16.mxu0 0
  %2003 = vmatpush1.bf16.msra.mxu0 0
  %2004 = vmatprep.subr.bf16.mxu0 0
  %2005 = vmatpush1.bf16.msra.mxu0 0
  %2006 = vmatprep.subr.bf16.mxu0 0
  %2007 = vmatpush1.bf16.msra.mxu0 0
  %2008 = vmatprep.subr.bf16.mxu0 0
  %2009 = vmatpush1.bf16.msra.mxu0 0
  %2010 = vmatprep.subr.bf16.mxu0 0
  %2011 = vmatpush1.bf16.msra.mxu0 0
  %2012 = vmatprep.subr.bf16.mxu0 0
  %2013 = vmatpush1.bf16.msra.mxu0 0
  %2014 = vmatprep.subr.bf16.mxu0 0
  %2015 = vmatpush1.bf16.msra.mxu0 0
  %2016 = vmatprep.mubr.bf16.mxu0 0
  %2017 = vmatmul.mubr.bf16.gmra.mrb[0].mxu0 %v1983
  %v2018 = vpop.f32.mrb[0].mxu0
  %v2019 = vadd.f32 0.0, %v2018
  %v2020 = vpop.f32.mrb[0].mxu0
  %v2021 = vadd.f32 0.0, %v2020
  %v2022 = vpop.f32.mrb[0].mxu0
  %v2023 = vpop.f32.mrb[0].mxu0
  %2024 = vdwg.mxu0
  %2025 = vmatprep.subr.bf16.mxu0 %v495
  %2026 = vmatpush1.bf16.msra.mxu0 %v494
  %2027 = vmatprep.subr.bf16.mxu0 %v499
  %2028 = vmatpush1.bf16.msra.mxu0 %v498
  %2029 = vmatprep.subr.bf16.mxu0 %v503
  %2030 = vmatpush1.bf16.msra.mxu0 %v502
  %2031 = vmatprep.subr.bf16.mxu0 %v507
  %2032 = vmatpush1.bf16.msra.mxu0 %v506
  %2033 = vmatprep.subr.bf16.mxu0 %v511
  %2034 = vmatpush1.bf16.msra.mxu0 %v510
  %2035 = vmatprep.subr.bf16.mxu0 %v515
  %2036 = vmatpush1.bf16.msra.mxu0 %v514
  %2037 = vmatprep.subr.bf16.mxu0 %v519
  %2038 = vmatpush1.bf16.msra.mxu0 %v518
  %2039 = vmatprep.subr.bf16.mxu0 %v523
  %2040 = vmatpush1.bf16.msra.mxu0 %v522
  %2041 = vmatprep.subr.bf16.mxu0 0
  %2042 = vmatpush1.bf16.msra.mxu0 0
  %2043 = vmatprep.subr.bf16.mxu0 0
  %2044 = vmatpush1.bf16.msra.mxu0 0
  %2045 = vmatprep.subr.bf16.mxu0 0
  %2046 = vmatpush1.bf16.msra.mxu0 0
  %2047 = vmatprep.subr.bf16.mxu0 0
  %2048 = vmatpush1.bf16.msra.mxu0 0
  %2049 = vmatprep.subr.bf16.mxu0 0
  %2050 = vmatpush1.bf16.msra.mxu0 0
  %2051 = vmatprep.subr.bf16.mxu0 0
  %2052 = vmatpush1.bf16.msra.mxu0 0
  %2053 = vmatprep.subr.bf16.mxu0 0
  %2054 = vmatpush1.bf16.msra.mxu0 0
  %2055 = vmatprep.subr.bf16.mxu0 0
  %2056 = vmatpush1.bf16.msra.mxu0 0
  %2057 = vmatprep.mubr.bf16.mxu0 0
  %2058 = vmatmul.mubr.bf16.gmra.mrb[0].mxu0 %v1983
  %v2059 = vpop.f32.mrb[0].mxu0
  %v2060 = vadd.f32 0.0, %v2059
  %v2061 = vpop.f32.mrb[0].mxu0
  %v2062 = vadd.f32 0.0, %v2061
  %v2063 = vpop.f32.mrb[0].mxu0
  %v2064 = vpop.f32.mrb[0].mxu0
  %2065 = vdwg.mxu0
  %v2066 = vadd.f32 %v1978, %v2019
  %v2067 = vadd.f32 %v1979, %v2021
  %v2068 = vadd.f32 %v1980, %v2060
  %v2069 = vadd.f32 %v1981, %v2062
  %v2070 = vld [vmem:[#allocation3] sm:$0xff]
  %v2071 = vmul.f32 %v1971, 0.5
  %v2072 = vtanh.pop %v2071
  %v2073 = vmul.f32 %v2072, 0.5
  %v2074 = vadd.f32 %v2073, 0.5
  %v2075 = vmul.f32 %v1972, 0.5
  %v2076 = vtanh.pop %v2075
  %v2077 = vmul.f32 %v2076, 0.5
  %v2078 = vadd.f32 %v2077, 0.5
  %v2079 = vtanh.pop %v1973
  %v2080 = vmul.f32 %v1974, 0.5
  %v2081 = vtanh.pop %v2080
  %v2082 = vmul.f32 %v2081, 0.5
  %v2083 = vadd.f32 %v2082, 0.5
  %v2084 = vmul.f32 %v2078, %v2070
  %v2085 = vmul.f32 %v2074, %v2079
  %v2086 = vadd.f32 %v2084, %v2085
  %v2087 = vtanh.pop %v2086
  %v2088 = vmul.f32 %v2083, %v2087
  %v2089 = vld [vmem:[%s661] sm:$0xff]
  %v2090 = vmul.f32 %v2066, 0.5
  %v2091 = vtanh.pop %v2090
  %v2092 = vmul.f32 %v2091, 0.5
  %v2093 = vadd.f32 %v2092, 0.5
  %v2094 = vmul.f32 %v2067, 0.5
  %v2095 = vtanh.pop %v2094
  %v2096 = vmul.f32 %v2095, 0.5
  %v2097 = vadd.f32 %v2096, 0.5
  %v2098 = vtanh.pop %v2068
  %v2099 = vmul.f32 %v2069, 0.5
  %v2100 = vtanh.pop %v2099
  %v2101 = vmul.f32 %v2100, 0.5
  %v2102 = vadd.f32 %v2101, 0.5
  %v2103 = vmul.f32 %v2097, %v2089
  %v2104 = vmul.f32 %v2093, %v2098
  %v2105 = vadd.f32 %v2103, %v2104
  %v2106 = vtanh.pop %v2105
  %v2107 = vmul.f32 %v2102, %v2106
  %2108 = vst [vmem:[#allocation2] sm:$0xff] %v2088
  %2109 = vst [vmem:[#allocation3] sm:$0xff] %v2086
  %2110 = vst [vmem:[%s393] sm:$0xff] %v2107
  %2111 = vst [vmem:[%s661] sm:$0xff] %v2105
  %v2112 = vpack.c.bf16 %v2088, %v2088
  %s2113 = scalar_lea.vmem %s3, 24
  %2114 = vst [vmem:[%s2113] sm:$0xf] %v2112
  %v2115 = vpack.c.bf16 %v2107, %v2107
  %s2116 = scalar_lea.vmem %s55, 4
  %2117 = vst [vmem:[%s2116] sm:$0xf] %v2115
  %s2118 = scalar_lea.vmem %s0, 112
  %v2119 = vld [vmem:[%s2118] sm:$0xff]
  %v2120 = vld [vmem:[%s2118 + $0x8] sm:$0xff]
  %v2121 = vunpack.c.l.bf16 %v2119
  %v2122 = vunpack.c.h.bf16 %v2119
  %v2123 = vunpack.c.l.bf16 %v2120
  %v2124 = vunpack.c.h.bf16 %v2120
  %v2125 = vld [vmem:[#allocation2] sm:$0xff]
  %v2126 = vpack.c.bf16 %v2125, %v2125
  %2127 = vmatprep.subr.bf16.mxu0 %v237
  %2128 = vmatpush1.bf16.msra.mxu0 %v236
  %2129 = vmatprep.subr.bf16.mxu0 %v241
  %2130 = vmatpush1.bf16.msra.mxu0 %v240
  %2131 = vmatprep.subr.bf16.mxu0 %v245
  %2132 = vmatpush1.bf16.msra.mxu0 %v244
  %2133 = vmatprep.subr.bf16.mxu0 %v249
  %2134 = vmatpush1.bf16.msra.mxu0 %v248
  %2135 = vmatprep.subr.bf16.mxu0 %v253
  %2136 = vmatpush1.bf16.msra.mxu0 %v252
  %2137 = vmatprep.subr.bf16.mxu0 %v257
  %2138 = vmatpush1.bf16.msra.mxu0 %v256
  %2139 = vmatprep.subr.bf16.mxu0 %v261
  %2140 = vmatpush1.bf16.msra.mxu0 %v260
  %2141 = vmatprep.subr.bf16.mxu0 %v265
  %2142 = vmatpush1.bf16.msra.mxu0 %v264
  %2143 = vmatprep.subr.bf16.mxu0 0
  %2144 = vmatpush1.bf16.msra.mxu0 0
  %2145 = vmatprep.subr.bf16.mxu0 0
  %2146 = vmatpush1.bf16.msra.mxu0 0
  %2147 = vmatprep.subr.bf16.mxu0 0
  %2148 = vmatpush1.bf16.msra.mxu0 0
  %2149 = vmatprep.subr.bf16.mxu0 0
  %2150 = vmatpush1.bf16.msra.mxu0 0
  %2151 = vmatprep.subr.bf16.mxu0 0
  %2152 = vmatpush1.bf16.msra.mxu0 0
  %2153 = vmatprep.subr.bf16.mxu0 0
  %2154 = vmatpush1.bf16.msra.mxu0 0
  %2155 = vmatprep.subr.bf16.mxu0 0
  %2156 = vmatpush1.bf16.msra.mxu0 0
  %2157 = vmatprep.subr.bf16.mxu0 0
  %2158 = vmatpush1.bf16.msra.mxu0 0
  %2159 = vmatprep.mubr.bf16.mxu0 0
  %2160 = vmatmul.mubr.bf16.gmra.mrb[0].mxu0 %v2126
  %v2161 = vpop.f32.mrb[0].mxu0
  %v2162 = vadd.f32 0.0, %v2161
  %v2163 = vpop.f32.mrb[0].mxu0
  %v2164 = vadd.f32 0.0, %v2163
  %v2165 = vpop.f32.mrb[0].mxu0
  %v2166 = vpop.f32.mrb[0].mxu0
  %2167 = vdwg.mxu0
  %2168 = vmatprep.subr.bf16.mxu0 %v239
  %2169 = vmatpush1.bf16.msra.mxu0 %v238
  %2170 = vmatprep.subr.bf16.mxu0 %v243
  %2171 = vmatpush1.bf16.msra.mxu0 %v242
  %2172 = vmatprep.subr.bf16.mxu0 %v247
  %2173 = vmatpush1.bf16.msra.mxu0 %v246
  %2174 = vmatprep.subr.bf16.mxu0 %v251
  %2175 = vmatpush1.bf16.msra.mxu0 %v250
  %2176 = vmatprep.subr.bf16.mxu0 %v255
  %2177 = vmatpush1.bf16.msra.mxu0 %v254
  %2178 = vmatprep.subr.bf16.mxu0 %v259
  %2179 = vmatpush1.bf16.msra.mxu0 %v258
  %2180 = vmatprep.subr.bf16.mxu0 %v263
  %2181 = vmatpush1.bf16.msra.mxu0 %v262
  %2182 = vmatprep.subr.bf16.mxu0 %v267
  %2183 = vmatpush1.bf16.msra.mxu0 %v266
  %2184 = vmatprep.subr.bf16.mxu0 0
  %2185 = vmatpush1.bf16.msra.mxu0 0
  %2186 = vmatprep.subr.bf16.mxu0 0
  %2187 = vmatpush1.bf16.msra.mxu0 0
  %2188 = vmatprep.subr.bf16.mxu0 0
  %2189 = vmatpush1.bf16.msra.mxu0 0
  %2190 = vmatprep.subr.bf16.mxu0 0
  %2191 = vmatpush1.bf16.msra.mxu0 0
  %2192 = vmatprep.subr.bf16.mxu0 0
  %2193 = vmatpush1.bf16.msra.mxu0 0
  %2194 = vmatprep.subr.bf16.mxu0 0
  %2195 = vmatpush1.bf16.msra.mxu0 0
  %2196 = vmatprep.subr.bf16.mxu0 0
  %2197 = vmatpush1.bf16.msra.mxu0 0
  %2198 = vmatprep.subr.bf16.mxu0 0
  %2199 = vmatpush1.bf16.msra.mxu0 0
  %2200 = vmatprep.mubr.bf16.mxu0 0
  %2201 = vmatmul.mubr.bf16.gmra.mrb[0].mxu0 %v2126
  %v2202 = vpop.f32.mrb[0].mxu0
  %v2203 = vadd.f32 0.0, %v2202
  %v2204 = vpop.f32.mrb[0].mxu0
  %v2205 = vadd.f32 0.0, %v2204
  %v2206 = vpop.f32.mrb[0].mxu0
  %v2207 = vpop.f32.mrb[0].mxu0
  %2208 = vdwg.mxu0
  %v2209 = vadd.f32 %v2121, %v2162
  %v2210 = vadd.f32 %v2122, %v2164
  %v2211 = vadd.f32 %v2123, %v2203
  %v2212 = vadd.f32 %v2124, %v2205
  %v2213 = vld [vmem:[%s47] sm:$0xff]
  %v2214 = vld [vmem:[%s47 + $0x8] sm:$0xff]
  %v2215 = vunpack.c.l.bf16 %v2213
  %v2216 = vunpack.c.h.bf16 %v2213
  %v2217 = vunpack.c.l.bf16 %v2214
  %v2218 = vunpack.c.h.bf16 %v2214
  %v2219 = vld [vmem:[%s393] sm:$0xff]
  %v2220 = vpack.c.bf16 %v2219, %v2219
  %2221 = vmatprep.subr.bf16.mxu0 %v493
  %2222 = vmatpush1.bf16.msra.mxu0 %v492
  %2223 = vmatprep.subr.bf16.mxu0 %v497
  %2224 = vmatpush1.bf16.msra.mxu0 %v496
  %2225 = vmatprep.subr.bf16.mxu0 %v501
  %2226 = vmatpush1.bf16.msra.mxu0 %v500
  %2227 = vmatprep.subr.bf16.mxu0 %v505
  %2228 = vmatpush1.bf16.msra.mxu0 %v504
  %2229 = vmatprep.subr.bf16.mxu0 %v509
  %2230 = vmatpush1.bf16.msra.mxu0 %v508
  %2231 = vmatprep.subr.bf16.mxu0 %v513
  %2232 = vmatpush1.bf16.msra.mxu0 %v512
  %2233 = vmatprep.subr.bf16.mxu0 %v517
  %2234 = vmatpush1.bf16.msra.mxu0 %v516
  %2235 = vmatprep.subr.bf16.mxu0 %v521
  %2236 = vmatpush1.bf16.msra.mxu0 %v520
  %2237 = vmatprep.subr.bf16.mxu0 0
  %2238 = vmatpush1.bf16.msra.mxu0 0
  %2239 = vmatprep.subr.bf16.mxu0 0
  %2240 = vmatpush1.bf16.msra.mxu0 0
  %2241 = vmatprep.subr.bf16.mxu0 0
  %2242 = vmatpush1.bf16.msra.mxu0 0
  %2243 = vmatprep.subr.bf16.mxu0 0
  %2244 = vmatpush1.bf16.msra.mxu0 0
  %2245 = vmatprep.subr.bf16.mxu0 0
  %2246 = vmatpush1.bf16.msra.mxu0 0
  %2247 = vmatprep.subr.bf16.mxu0 0
  %2248 = vmatpush1.bf16.msra.mxu0 0
  %2249 = vmatprep.subr.bf16.mxu0 0
  %2250 = vmatpush1.bf16.msra.mxu0 0
  %2251 = vmatprep.subr.bf16.mxu0 0
  %2252 = vmatpush1.bf16.msra.mxu0 0
  %2253 = vmatprep.mubr.bf16.mxu0 0
  %2254 = vmatmul.mubr.bf16.gmra.mrb[0].mxu0 %v2220
  %v2255 = vpop.f32.mrb[0].mxu0
  %v2256 = vadd.f32 0.0, %v2255
  %v2257 = vpop.f32.mrb[0].mxu0
  %v2258 = vadd.f32 0.0, %v2257
  %v2259 = vpop.f32.mrb[0].mxu0
  %v2260 = vpop.f32.mrb[0].mxu0
  %2261 = vdwg.mxu0
  %2262 = vmatprep.subr.bf16.mxu0 %v495
  %2263 = vmatpush1.bf16.msra.mxu0 %v494
  %2264 = vmatprep.subr.bf16.mxu0 %v499
  %2265 = vmatpush1.bf16.msra.mxu0 %v498
  %2266 = vmatprep.subr.bf16.mxu0 %v503
  %2267 = vmatpush1.bf16.msra.mxu0 %v502
  %2268 = vmatprep.subr.bf16.mxu0 %v507
  %2269 = vmatpush1.bf16.msra.mxu0 %v506
  %2270 = vmatprep.subr.bf16.mxu0 %v511
  %2271 = vmatpush1.bf16.msra.mxu0 %v510
  %2272 = vmatprep.subr.bf16.mxu0 %v515
  %2273 = vmatpush1.bf16.msra.mxu0 %v514
  %2274 = vmatprep.subr.bf16.mxu0 %v519
  %2275 = vmatpush1.bf16.msra.mxu0 %v518
  %2276 = vmatprep.subr.bf16.mxu0 %v523
  %2277 = vmatpush1.bf16.msra.mxu0 %v522
  %2278 = vmatprep.subr.bf16.mxu0 0
  %2279 = vmatpush1.bf16.msra.mxu0 0
  %2280 = vmatprep.subr.bf16.mxu0 0
  %2281 = vmatpush1.bf16.msra.mxu0 0
  %2282 = vmatprep.subr.bf16.mxu0 0
  %2283 = vmatpush1.bf16.msra.mxu0 0
  %2284 = vmatprep.subr.bf16.mxu0 0
  %2285 = vmatpush1.bf16.msra.mxu0 0
  %2286 = vmatprep.subr.bf16.mxu0 0
  %2287 = vmatpush1.bf16.msra.mxu0 0
  %2288 = vmatprep.subr.bf16.mxu0 0
  %2289 = vmatpush1.bf16.msra.mxu0 0
  %2290 = vmatprep.subr.bf16.mxu0 0
  %2291 = vmatpush1.bf16.msra.mxu0 0
  %2292 = vmatprep.subr.bf16.mxu0 0
  %2293 = vmatpush1.bf16.msra.mxu0 0
  %2294 = vmatprep.mubr.bf16.mxu0 0
  %2295 = vmatmul.mubr.bf16.gmra.mrb[0].mxu0 %v2220
  %v2296 = vpop.f32.mrb[0].mxu0
  %v2297 = vadd.f32 0.0, %v2296
  %v2298 = vpop.f32.mrb[0].mxu0
  %v2299 = vadd.f32 0.0, %v2298
  %v2300 = vpop.f32.mrb[0].mxu0
  %v2301 = vpop.f32.mrb[0].mxu0
  %2302 = vdwg.mxu0
  %v2303 = vadd.f32 %v2215, %v2256
  %v2304 = vadd.f32 %v2216, %v2258
  %v2305 = vadd.f32 %v2217, %v2297
  %v2306 = vadd.f32 %v2218, %v2299
  %v2307 = vld [vmem:[#allocation3] sm:$0xff]
  %v2308 = vmul.f32 %v2209, 0.5
  %v2309 = vtanh.pop %v2308
  %v2310 = vmul.f32 %v2309, 0.5
  %v2311 = vadd.f32 %v2310, 0.5
  %v2312 = vmul.f32 %v2210, 0.5
  %v2313 = vtanh.pop %v2312
  %v2314 = vmul.f32 %v2313, 0.5
  %v2315 = vadd.f32 %v2314, 0.5
  %v2316 = vtanh.pop %v2211
  %v2317 = vmul.f32 %v2212, 0.5
  %v2318 = vtanh.pop %v2317
  %v2319 = vmul.f32 %v2318, 0.5
  %v2320 = vadd.f32 %v2319, 0.5
  %v2321 = vmul.f32 %v2315, %v2307
  %v2322 = vmul.f32 %v2311, %v2316
  %v2323 = vadd.f32 %v2321, %v2322
  %v2324 = vtanh.pop %v2323
  %v2325 = vmul.f32 %v2320, %v2324
  %v2326 = vld [vmem:[%s661] sm:$0xff]
  %v2327 = vmul.f32 %v2303, 0.5
  %v2328 = vtanh.pop %v2327
  %v2329 = vmul.f32 %v2328, 0.5
  %v2330 = vadd.f32 %v2329, 0.5
  %v2331 = vmul.f32 %v2304, 0.5
  %v2332 = vtanh.pop %v2331
  %v2333 = vmul.f32 %v2332, 0.5
  %v2334 = vadd.f32 %v2333, 0.5
  %v2335 = vtanh.pop %v2305
  %v2336 = vmul.f32 %v2306, 0.5
  %v2337 = vtanh.pop %v2336
  %v2338 = vmul.f32 %v2337, 0.5
  %v2339 = vadd.f32 %v2338, 0.5
  %v2340 = vmul.f32 %v2334, %v2326
  %v2341 = vmul.f32 %v2330, %v2335
  %v2342 = vadd.f32 %v2340, %v2341
  %v2343 = vtanh.pop %v2342
  %v2344 = vmul.f32 %v2339, %v2343
  %2345 = vst [vmem:[#allocation2] sm:$0xff] %v2325
  %2346 = vst [vmem:[#allocation3] sm:$0xff] %v2323
  %2347 = vst [vmem:[%s393] sm:$0xff] %v2344
  %2348 = vst [vmem:[%s661] sm:$0xff] %v2342
  %v2349 = vpack.c.bf16 %v2325, %v2325
  %s2350 = scalar_lea.vmem %s3, 28
  %2351 = vst [vmem:[%s2350] sm:$0xf] %v2349
  %v2352 = vpack.c.bf16 %v2344, %v2344
  %2353 = vst [vmem:[%s55] sm:$0xf] %v2352
  %s2354 = ssub.s32 0, 0
  %s2355 = smul.u32 8, %s2354
  %p2356 = scmp.lt.s32.totalorder %s2355, 7
  %s2357 = scalar_select %p2356, %s2355, 7
  %s2358 = smul.addr %s2357, 4
  %s2359 = scalar_lea.vmem %s4, %s2358
  // Predicated region
  $region18: #{_lambda_.5} parent=0 // pred_check
    _
  $region19: #{_lambda_.5} parent=0 // pred_check_branch
    %2361 = sbr.rel (0) target = $region21
  $region20: #{_lambda_.5} parent=0 // pred_region
    _
  $region21: #{_lambda_.5} parent=0 // pred_fallthru
    _
  // Predicated region
  $region22: #{_lambda_.5} parent=0 // pred_check
    _
  $region23: #{_lambda_.5} parent=0 // pred_check_branch
    %2363 = sbr.rel (0) target = $region25
  $region24: #{_lambda_.5} parent=0 // pred_region
    %s2364 = ssub.s32 0, 0
    %s2365 = smul.u32 8, %s2364
  $region25: #{_lambda_.5} parent=0 // pred_fallthru
    _
  // Predicated region
  $region26: #{_lambda_.5} parent=0 // pred_check
    _
  $region27: #{_lambda_.5} parent=0 // pred_check_branch
    %2367 = sbr.rel (0) target = $region29
  $region28: #{_lambda_.5} parent=0 // pred_region
    _
  $region29: #{_lambda_.5} parent=0 // pred_fallthru
    _
  // Predicated region
  $region30: #{_lambda_.5} parent=0 // pred_check
    _
  $region31: #{_lambda_.5} parent=0 // pred_check_branch
    %2369 = sbr.rel (0) target = $region33
  $region32: #{_lambda_.5} parent=0 // pred_region
    %s2370 = ssub.s32 0, 0
    %s2371 = smul.u32 8, %s2370
    %p2372 = scmp.lt.s32.totalorder %s2371, 7
    %s2373 = scalar_select %p2372, %s2371, 7
    %s2374 = smul.addr %s2373, 4
    %s2375 = scalar_lea.vmem %s4, %s2374
  $region33: #{_lambda_.5} parent=0 // pred_fallthru
    _

// kernel: _lambda_.7
$region0: #{_lambda_.7}
  #allocation0 [shape = 'u32[]', space=smem, size = 0x4, offset = 0x4, fixed_abs, tag = 'smem constant byte address 0x4 - core index']
  #allocation1 [shape = 'u32[144,128]{1,0:T(1,128)}', space=vmem, size = 0x12000, scoped, tag = 'internal scratch']
  #allocation2 [shape = 'f32[2,8,128]{2,1,0:T(8,128)}', space=vmem, size = 0x2000, scoped, tag = 'scratch operand']
  #allocation3 [shape = 'f32[2,8,128]{2,1,0:T(8,128)}', space=vmem, size = 0x2000, scoped, tag = 'scratch operand']
  %s0 = inlined_call_operand.vmem [shape: bf16[2,8,8,512], index: 0, kind: input, shape index: {}, may-alias: {0,1}]
  %s1 = inlined_call_operand.vmem [shape: bf16[2,8,8,512], index: 1, kind: input, shape index: {}, may-alias: {0,1}]
  %s2 = inlined_call_operand.vmem [shape: bf16[2,128,512], index: 2, kind: input, shape index: {}]
  %s3 = inlined_call_operand.vmem [shape: f32[8,8,128], index: 3, kind: output, shape index: {0}]
  %s4 = inlined_call_operand.vmem [shape: f32[8,8,128], index: 4, kind: output, shape index: {1}]
  %5 = xla_tuple %s3, %s4
  %s6 = sld [smem:[#allocation0]]
  $region34: #{_lambda_.7} parent=0
    _
  %s8 = ssub.s32 1, %s6
  %s9 = scalar_select 0, %s8, %s6
  // Predicated region
  $region2: #{_lambda_.7} parent=0 // pred_check
    _
  $region3: #{_lambda_.7} parent=0 // pred_check_branch
    %11 = sbr.rel (0) target = $region5
  $region4: #{_lambda_.7} parent=0 // pred_region
    _
  $region5: #{_lambda_.7} parent=0 // pred_fallthru
    _
  // Predicated region
  $region6: #{_lambda_.7} parent=0 // pred_check
    _
  $region7: #{_lambda_.7} parent=0 // pred_check_branch
    %13 = sbr.rel (0) target = $region9
  $region8: #{_lambda_.7} parent=0 // pred_region
    %s14 = ssub.s32 0, 0
    %s15 = smul.u32 8, %s14
    %p16 = scmp.lt.s32.totalorder %s15, 7
    %s17 = scalar_select %p16, %s15, 7
    %s18 = smul.addr %s17, 4
    %s19 = sadd.s32 %s18, 32
    %s20 = smul.addr %s19, 4
    %s21 = scalar_lea.vmem %s1, %s20
    %s22 = ssub.s32 0, 0
    %s23 = smul.u32 8, %s22
  $region9: #{_lambda_.7} parent=0 // pred_fallthru
    _
  // Predicated region
  $region10: #{_lambda_.7} parent=0 // pred_check
    _
  $region11: #{_lambda_.7} parent=0 // pred_check_branch
    %25 = sbr.rel (0) target = $region13
  $region12: #{_lambda_.7} parent=0 // pred_region
    _
  $region13: #{_lambda_.7} parent=0 // pred_fallthru
    _
  %s26 = ssub.s32 0, 0
  %s27 = smul.u32 8, %s26
  %p28 = scmp.lt.s32.totalorder %s27, 7
  %s29 = scalar_select %p28, %s27, 7
  %s30 = smul.addr %s29, 4
  %s31 = sadd.s32 %s30, 32
  %s32 = smul.addr %s31, 4
  %s33 = scalar_lea.vmem %s1, %s32
  %s34 = ssub.s32 0, 0
  %s35 = smul.u32 8, %s34
  %p36 = scmp.lt.s32.totalorder %s35, 7
  %s37 = scalar_select %p36, %s35, 7
  %s38 = smul.addr %s37, 8
  %s39 = scalar_lea.vmem %s4, %s38
  %s40 = ssub.s32 0, 0
  %s41 = smul.u32 8, %s40
  %p42 = scmp.lt.s32.totalorder %s41, 7
  %s43 = scalar_select %p42, %s41, 7
  %s44 = smul.addr %s43, 4
  %s45 = sadd.s32 %s44, 32
  %s46 = smul.addr %s45, 4
  %s47 = scalar_lea.vmem %s1, %s46
  %s48 = ssub.s32 0, 0
  %s49 = smul.u32 8, %s48
  %s50 = ssub.s32 0, 0
  %s51 = smul.u32 8, %s50
  %p52 = scmp.lt.s32.totalorder %s51, 7
  %s53 = scalar_select %p52, %s51, 7
  %s54 = smul.addr %s53, 8
  %s55 = scalar_lea.vmem %s4, %s54
  %s56 = ssub.s32 0, 0
  %s57 = smul.u32 8, %s56
  %p59 = scmp.eq.s32.totalorder 0, 0
  // Predicated region
  $region14: #{_lambda_.7} parent=0 // pred_check
    %p60 = pneg %p59
  $region15: #{_lambda_.7} parent=0 // pred_check_branch
    %62 = sbr.rel (%p60) target = $region17
  $region16: #{_lambda_.7} parent=0 // pred_region
    %63 = vst [vmem:[#allocation2] sm:$0xff] 0.0
    %64 = vst [vmem:[#allocation2 + $0x8] sm:$0xff] 0.0
    %65 = vst [vmem:[#allocation3] sm:$0xff] 0.0
    %66 = vst [vmem:[#allocation3 + $0x8] sm:$0xff] 0.0
  $region17: #{_lambda_.7} parent=0 // pred_fallthru
    _
  %v67 = vld [vmem:[%s2] sm:$0xff]
  %v68 = vld [vmem:[%s2 + $0x8] sm:$0xff]
  %v69 = vld [vmem:[%s2 + $0x10] sm:$0xff]
  %v70 = vld [vmem:[%s2 + $0x18] sm:$0xff]
  %v71 = vld [vmem:[%s2 + $0x20] sm:$0xff]
  %v72 = vld [vmem:[%s2 + $0x28] sm:$0xff]
  %v73 = vld [vmem:[%s2 + $0x30] sm:$0xff]
  %v74 = vld [vmem:[%s2 + $0x38] sm:$0xff]
  %v75 = vld [vmem:[%s2 + $0x40] sm:$0xff]
  %v76 = vld [vmem:[%s2 + $0x48] sm:$0xff]
  %v77 = vld [vmem:[%s2 + $0x50] sm:$0xff]
  %v78 = vld [vmem:[%s2 + $0x58] sm:$0xff]
  %v79 = vld [vmem:[%s2 + $0x60] sm:$0xff]
  %v80 = vld [vmem:[%s2 + $0x68] sm:$0xff]
  %v81 = vld [vmem:[%s2 + $0x70] sm:$0xff]
  %v82 = vld [vmem:[%s2 + $0x78] sm:$0xff]
  %v83 = vld [vmem:[%s2 + $0x80] sm:$0xff]
  %v84 = vld [vmem:[%s2 + $0x88] sm:$0xff]
  %v85 = vld [vmem:[%s2 + $0x90] sm:$0xff]
  %v86 = vld [vmem:[%s2 + $0x98] sm:$0xff]
  %v87 = vld [vmem:[%s2 + $0xa0] sm:$0xff]
  %v88 = vld [vmem:[%s2 + $0xa8] sm:$0xff]
  %v89 = vld [vmem:[%s2 + $0xb0] sm:$0xff]
  %v90 = vld [vmem:[%s2 + $0xb8] sm:$0xff]
  %v91 = vld [vmem:[%s2 + $0xc0] sm:$0xff]
  %v92 = vld [vmem:[%s2 + $0xc8] sm:$0xff]
  %v93 = vld [vmem:[%s2 + $0xd0] sm:$0xff]
  %v94 = vld [vmem:[%s2 + $0xd8] sm:$0xff]
  %v95 = vld [vmem:[%s2 + $0xe0] sm:$0xff]
  %v96 = vld [vmem:[%s2 + $0xe8] sm:$0xff]
  %v97 = vld [vmem:[%s2 + $0xf0] sm:$0xff]
  %v98 = vld [vmem:[%s2 + $0xf8] sm:$0xff]
  %s99 = scalar_lea.vmem %s2, 256
  %v100 = vld [vmem:[%s99] sm:$0xff]
  %v101 = vld [vmem:[%s99 + $0x8] sm:$0xff]
  %v102 = vld [vmem:[%s99 + $0x10] sm:$0xff]
  %v103 = vld [vmem:[%s99 + $0x18] sm:$0xff]
  %v104 = vld [vmem:[%s99 + $0x20] sm:$0xff]
  %v105 = vld [vmem:[%s99 + $0x28] sm:$0xff]
  %v106 = vld [vmem:[%s99 + $0x30] sm:$0xff]
  %v107 = vld [vmem:[%s99 + $0x38] sm:$0xff]
  %v108 = vld [vmem:[%s99 + $0x40] sm:$0xff]
  %v109 = vld [vmem:[%s99 + $0x48] sm:$0xff]
  %v110 = vld [vmem:[%s99 + $0x50] sm:$0xff]
  %v111 = vld [vmem:[%s99 + $0x58] sm:$0xff]
  %v112 = vld [vmem:[%s99 + $0x60] sm:$0xff]
  %v113 = vld [vmem:[%s99 + $0x68] sm:$0xff]
  %v114 = vld [vmem:[%s99 + $0x70] sm:$0xff]
  %v115 = vld [vmem:[%s99 + $0x78] sm:$0xff]
  %v116 = vld [vmem:[%s99 + $0x80] sm:$0xff]
  %v117 = vld [vmem:[%s99 + $0x88] sm:$0xff]
  %v118 = vld [vmem:[%s99 + $0x90] sm:$0xff]
  %v119 = vld [vmem:[%s99 + $0x98] sm:$0xff]
  %v120 = vld [vmem:[%s99 + $0xa0] sm:$0xff]
  %v121 = vld [vmem:[%s99 + $0xa8] sm:$0xff]
  %v122 = vld [vmem:[%s99 + $0xb0] sm:$0xff]
  %v123 = vld [vmem:[%s99 + $0xb8] sm:$0xff]
  %v124 = vld [vmem:[%s99 + $0xc0] sm:$0xff]
  %v125 = vld [vmem:[%s99 + $0xc8] sm:$0xff]
  %v126 = vld [vmem:[%s99 + $0xd0] sm:$0xff]
  %v127 = vld [vmem:[%s99 + $0xd8] sm:$0xff]
  %v128 = vld [vmem:[%s99 + $0xe0] sm:$0xff]
  %v129 = vld [vmem:[%s99 + $0xe8] sm:$0xff]
  %v130 = vld [vmem:[%s99 + $0xf0] sm:$0xff]
  %v131 = vld [vmem:[%s99 + $0xf8] sm:$0xff]
  %v132 = vld [vmem:[%s0] sm:$0xff]
  %v133 = vld [vmem:[%s0 + $0x8] sm:$0xff]
  %v134 = vunpack.c.l.bf16 %v132
  %v135 = vunpack.c.h.bf16 %v132
  %v136 = vunpack.c.l.bf16 %v133
  %v137 = vunpack.c.h.bf16 %v133
  %v138 = vld [vmem:[#allocation2] sm:$0xff]
  %v139 = vpack.c.bf16 %v138, %v138
  %v172 = vunpack.c.l.b16 %v67
  %v173 = vunpack.c.h.b16 %v67
  %v174 = vunpack.c.l.b16 %v68
  %v175 = vunpack.c.h.b16 %v68
  %v176 = vunpack.c.l.b16 %v69
  %v177 = vunpack.c.h.b16 %v69
  %v178 = vunpack.c.l.b16 %v70
  %v179 = vunpack.c.h.b16 %v70
  %v180 = vunpack.c.l.b16 %v71
  %v181 = vunpack.c.h.b16 %v71
  %v182 = vunpack.c.l.b16 %v72
  %v183 = vunpack.c.h.b16 %v72
  %v184 = vunpack.c.l.b16 %v73
  %v185 = vunpack.c.h.b16 %v73
  %v186 = vunpack.c.l.b16 %v74
  %v187 = vunpack.c.h.b16 %v74
  %v188 = vunpack.c.l.b16 %v75
  %v189 = vunpack.c.h.b16 %v75
  %v190 = vunpack.c.l.b16 %v76
  %v191 = vunpack.c.h.b16 %v76
  %v192 = vunpack.c.l.b16 %v77
  %v193 = vunpack.c.h.b16 %v77
  %v194 = vunpack.c.l.b16 %v78
  %v195 = vunpack.c.h.b16 %v78
  %v196 = vunpack.c.l.b16 %v79
  %v197 = vunpack.c.h.b16 %v79
  %v198 = vunpack.c.l.b16 %v80
  %v199 = vunpack.c.h.b16 %v80
  %v200 = vunpack.c.l.b16 %v81
  %v201 = vunpack.c.h.b16 %v81
  %v202 = vunpack.c.l.b16 %v82
  %v203 = vunpack.c.h.b16 %v82
  %v204 = vunpack.c.l.b16 %v83
  %v205 = vunpack.c.h.b16 %v83
  %v206 = vunpack.c.l.b16 %v84
  %v207 = vunpack.c.h.b16 %v84
  %v208 = vunpack.c.l.b16 %v85
  %v209 = vunpack.c.h.b16 %v85
  %v210 = vunpack.c.l.b16 %v86
  %v211 = vunpack.c.h.b16 %v86
  %v212 = vunpack.c.l.b16 %v87
  %v213 = vunpack.c.h.b16 %v87
  %v214 = vunpack.c.l.b16 %v88
  %v215 = vunpack.c.h.b16 %v88
  %v216 = vunpack.c.l.b16 %v89
  %v217 = vunpack.c.h.b16 %v89
  %v218 = vunpack.c.l.b16 %v90
  %v219 = vunpack.c.h.b16 %v90
  %v220 = vunpack.c.l.b16 %v91
  %v221 = vunpack.c.h.b16 %v91
  %v222 = vunpack.c.l.b16 %v92
  %v223 = vunpack.c.h.b16 %v92
  %v224 = vunpack.c.l.b16 %v93
  %v225 = vunpack.c.h.b16 %v93
  %v226 = vunpack.c.l.b16 %v94
  %v227 = vunpack.c.h.b16 %v94
  %v228 = vunpack.c.l.b16 %v95
  %v229 = vunpack.c.h.b16 %v95
  %v230 = vunpack.c.l.b16 %v96
  %v231 = vunpack.c.h.b16 %v96
  %v232 = vunpack.c.l.b16 %v97
  %v233 = vunpack.c.h.b16 %v97
  %v234 = vunpack.c.l.b16 %v98
  %v235 = vunpack.c.h.b16 %v98
  %v236 = vpack.c.b16 %v176, %v172
  %v237 = vpack.c.b16 %v177, %v173
  %v238 = vpack.c.b16 %v178, %v174
  %v239 = vpack.c.b16 %v179, %v175
  %v240 = vpack.c.b16 %v184, %v180
  %v241 = vpack.c.b16 %v185, %v181
  %v242 = vpack.c.b16 %v186, %v182
  %v243 = vpack.c.b16 %v187, %v183
  %v244 = vpack.c.b16 %v192, %v188
  %v245 = vpack.c.b16 %v193, %v189
  %v246 = vpack.c.b16 %v194, %v190
  %v247 = vpack.c.b16 %v195, %v191
  %v248 = vpack.c.b16 %v200, %v196
  %v249 = vpack.c.b16 %v201, %v197
  %v250 = vpack.c.b16 %v202, %v198
  %v251 = vpack.c.b16 %v203, %v199
  %v252 = vpack.c.b16 %v208, %v204
  %v253 = vpack.c.b16 %v209, %v205
  %v254 = vpack.c.b16 %v210, %v206
  %v255 = vpack.c.b16 %v211, %v207
  %v256 = vpack.c.b16 %v216, %v212
  %v257 = vpack.c.b16 %v217, %v213
  %v258 = vpack.c.b16 %v218, %v214
  %v259 = vpack.c.b16 %v219, %v215
  %v260 = vpack.c.b16 %v224, %v220
  %v261 = vpack.c.b16 %v225, %v221
  %v262 = vpack.c.b16 %v226, %v222
  %v263 = vpack.c.b16 %v227, %v223
  %v264 = vpack.c.b16 %v232, %v228
  %v265 = vpack.c.b16 %v233, %v229
  %v266 = vpack.c.b16 %v234, %v230
  %v267 = vpack.c.b16 %v235, %v231
  %300 = vmatprep.subr.bf16.mxu0 %v237
  %301 = vmatpush1.bf16.msra.mxu0 %v236
  %302 = vmatprep.subr.bf16.mxu0 %v241
  %303 = vmatpush1.bf16.msra.mxu0 %v240
  %304 = vmatprep.subr.bf16.mxu0 %v245
  %305 = vmatpush1.bf16.msra.mxu0 %v244
  %306 = vmatprep.subr.bf16.mxu0 %v249
  %307 = vmatpush1.bf16.msra.mxu0 %v248
  %308 = vmatprep.subr.bf16.mxu0 %v253
  %309 = vmatpush1.bf16.msra.mxu0 %v252
  %310 = vmatprep.subr.bf16.mxu0 %v257
  %311 = vmatpush1.bf16.msra.mxu0 %v256
  %312 = vmatprep.subr.bf16.mxu0 %v261
  %313 = vmatpush1.bf16.msra.mxu0 %v260
  %314 = vmatprep.subr.bf16.mxu0 %v265
  %315 = vmatpush1.bf16.msra.mxu0 %v264
  %316 = vmatprep.subr.bf16.mxu0 0
  %317 = vmatpush1.bf16.msra.mxu0 0
  %318 = vmatprep.subr.bf16.mxu0 0
  %319 = vmatpush1.bf16.msra.mxu0 0
  %320 = vmatprep.subr.bf16.mxu0 0
  %321 = vmatpush1.bf16.msra.mxu0 0
  %322 = vmatprep.subr.bf16.mxu0 0
  %323 = vmatpush1.bf16.msra.mxu0 0
  %324 = vmatprep.subr.bf16.mxu0 0
  %325 = vmatpush1.bf16.msra.mxu0 0
  %326 = vmatprep.subr.bf16.mxu0 0
  %327 = vmatpush1.bf16.msra.mxu0 0
  %328 = vmatprep.subr.bf16.mxu0 0
  %329 = vmatpush1.bf16.msra.mxu0 0
  %330 = vmatprep.subr.bf16.mxu0 0
  %331 = vmatpush1.bf16.msra.mxu0 0
  %332 = vmatprep.mubr.bf16.mxu0 0
  %333 = vmatmul.mubr.bf16.gmra.mrb[0].mxu0 %v139
  %v334 = vpop.f32.mrb[0].mxu0
  %v335 = vadd.f32 0.0, %v334
  %v336 = vpop.f32.mrb[0].mxu0
  %v337 = vadd.f32 0.0, %v336
  %v338 = vpop.f32.mrb[0].mxu0
  %v339 = vpop.f32.mrb[0].mxu0
  %340 = vdwg.mxu0
  %341 = vmatprep.subr.bf16.mxu0 %v239
  %342 = vmatpush1.bf16.msra.mxu0 %v238
  %343 = vmatprep.subr.bf16.mxu0 %v243
  %344 = vmatpush1.bf16.msra.mxu0 %v242
  %345 = vmatprep.subr.bf16.mxu0 %v247
  %346 = vmatpush1.bf16.msra.mxu0 %v246
  %347 = vmatprep.subr.bf16.mxu0 %v251
  %348 = vmatpush1.bf16.msra.mxu0 %v250
  %349 = vmatprep.subr.bf16.mxu0 %v255
  %350 = vmatpush1.bf16.msra.mxu0 %v254
  %351 = vmatprep.subr.bf16.mxu0 %v259
  %352 = vmatpush1.bf16.msra.mxu0 %v258
  %353 = vmatprep.subr.bf16.mxu0 %v263
  %354 = vmatpush1.bf16.msra.mxu0 %v262
  %355 = vmatprep.subr.bf16.mxu0 %v267
  %356 = vmatpush1.bf16.msra.mxu0 %v266
  %357 = vmatprep.subr.bf16.mxu0 0
  %358 = vmatpush1.bf16.msra.mxu0 0
  %359 = vmatprep.subr.bf16.mxu0 0
  %360 = vmatpush1.bf16.msra.mxu0 0
  %361 = vmatprep.subr.bf16.mxu0 0
  %362 = vmatpush1.bf16.msra.mxu0 0
  %363 = vmatprep.subr.bf16.mxu0 0
  %364 = vmatpush1.bf16.msra.mxu0 0
  %365 = vmatprep.subr.bf16.mxu0 0
  %366 = vmatpush1.bf16.msra.mxu0 0
  %367 = vmatprep.subr.bf16.mxu0 0
  %368 = vmatpush1.bf16.msra.mxu0 0
  %369 = vmatprep.subr.bf16.mxu0 0
  %370 = vmatpush1.bf16.msra.mxu0 0
  %371 = vmatprep.subr.bf16.mxu0 0
  %372 = vmatpush1.bf16.msra.mxu0 0
  %373 = vmatprep.mubr.bf16.mxu0 0
  %374 = vmatmul.mubr.bf16.gmra.mrb[0].mxu0 %v139
  %v375 = vpop.f32.mrb[0].mxu0
  %v376 = vadd.f32 0.0, %v375
  %v377 = vpop.f32.mrb[0].mxu0
  %v378 = vadd.f32 0.0, %v377
  %v379 = vpop.f32.mrb[0].mxu0
  %v380 = vpop.f32.mrb[0].mxu0
  %381 = vdwg.mxu0
  %v382 = vadd.f32 %v134, %v335
  %v383 = vadd.f32 %v135, %v337
  %v384 = vadd.f32 %v136, %v376
  %v385 = vadd.f32 %v137, %v378
  %s386 = scalar_lea.vmem %s47, 112
  %v387 = vld [vmem:[%s386] sm:$0xff]
  %v388 = vld [vmem:[%s386 + $0x8] sm:$0xff]
  %v389 = vunpack.c.l.bf16 %v387
  %v390 = vunpack.c.h.bf16 %v387
  %v391 = vunpack.c.l.bf16 %v388
  %v392 = vunpack.c.h.bf16 %v388
  %s393 = scalar_lea.vmem [#allocation2], 8
  %v394 = vld [vmem:[%s393] sm:$0xff]
  %v395 = vpack.c.bf16 %v394, %v394
  %v428 = vunpack.c.l.b16 %v100
  %v429 = vunpack.c.h.b16 %v100
  %v430 = vunpack.c.l.b16 %v101
  %v431 = vunpack.c.h.b16 %v101
  %v432 = vunpack.c.l.b16 %v102
  %v433 = vunpack.c.h.b16 %v102
  %v434 = vunpack.c.l.b16 %v103
  %v435 = vunpack.c.h.b16 %v103
  %v436 = vunpack.c.l.b16 %v104
  %v437 = vunpack.c.h.b16 %v104
  %v438 = vunpack.c.l.b16 %v105
  %v439 = vunpack.c.h.b16 %v105
  %v440 = vunpack.c.l.b16 %v106
  %v441 = vunpack.c.h.b16 %v106
  %v442 = vunpack.c.l.b16 %v107
  %v443 = vunpack.c.h.b16 %v107
  %v444 = vunpack.c.l.b16 %v108
  %v445 = vunpack.c.h.b16 %v108
  %v446 = vunpack.c.l.b16 %v109
  %v447 = vunpack.c.h.b16 %v109
  %v448 = vunpack.c.l.b16 %v110
  %v449 = vunpack.c.h.b16 %v110
  %v450 = vunpack.c.l.b16 %v111
  %v451 = vunpack.c.h.b16 %v111
  %v452 = vunpack.c.l.b16 %v112
  %v453 = vunpack.c.h.b16 %v112
  %v454 = vunpack.c.l.b16 %v113
  %v455 = vunpack.c.h.b16 %v113
  %v456 = vunpack.c.l.b16 %v114
  %v457 = vunpack.c.h.b16 %v114
  %v458 = vunpack.c.l.b16 %v115
  %v459 = vunpack.c.h.b16 %v115
  %v460 = vunpack.c.l.b16 %v116
  %v461 = vunpack.c.h.b16 %v116
  %v462 = vunpack.c.l.b16 %v117
  %v463 = vunpack.c.h.b16 %v117
  %v464 = vunpack.c.l.b16 %v118
  %v465 = vunpack.c.h.b16 %v118
  %v466 = vunpack.c.l.b16 %v119
  %v467 = vunpack.c.h.b16 %v119
  %v468 = vunpack.c.l.b16 %v120
  %v469 = vunpack.c.h.b16 %v120
  %v470 = vunpack.c.l.b16 %v121
  %v471 = vunpack.c.h.b16 %v121
  %v472 = vunpack.c.l.b16 %v122
  %v473 = vunpack.c.h.b16 %v122
  %v474 = vunpack.c.l.b16 %v123
  %v475 = vunpack.c.h.b16 %v123
  %v476 = vunpack.c.l.b16 %v124
  %v477 = vunpack.c.h.b16 %v124
  %v478 = vunpack.c.l.b16 %v125
  %v479 = vunpack.c.h.b16 %v125
  %v480 = vunpack.c.l.b16 %v126
  %v481 = vunpack.c.h.b16 %v126
  %v482 = vunpack.c.l.b16 %v127
  %v483 = vunpack.c.h.b16 %v127
  %v484 = vunpack.c.l.b16 %v128
  %v485 = vunpack.c.h.b16 %v128
  %v486 = vunpack.c.l.b16 %v129
  %v487 = vunpack.c.h.b16 %v129
  %v488 = vunpack.c.l.b16 %v130
  %v489 = vunpack.c.h.b16 %v130
  %v490 = vunpack.c.l.b16 %v131
  %v491 = vunpack.c.h.b16 %v131
  %v492 = vpack.c.b16 %v432, %v428
  %v493 = vpack.c.b16 %v433, %v429
  %v494 = vpack.c.b16 %v434, %v430
  %v495 = vpack.c.b16 %v435, %v431
  %v496 = vpack.c.b16 %v440, %v436
  %v497 = vpack.c.b16 %v441, %v437
  %v498 = vpack.c.b16 %v442, %v438
  %v499 = vpack.c.b16 %v443, %v439
  %v500 = vpack.c.b16 %v448, %v444
  %v501 = vpack.c.b16 %v449, %v445
  %v502 = vpack.c.b16 %v450, %v446
  %v503 = vpack.c.b16 %v451, %v447
  %v504 = vpack.c.b16 %v456, %v452
  %v505 = vpack.c.b16 %v457, %v453
  %v506 = vpack.c.b16 %v458, %v454
  %v507 = vpack.c.b16 %v459, %v455
  %v508 = vpack.c.b16 %v464, %v460
  %v509 = vpack.c.b16 %v465, %v461
  %v510 = vpack.c.b16 %v466, %v462
  %v511 = vpack.c.b16 %v467, %v463
  %v512 = vpack.c.b16 %v472, %v468
  %v513 = vpack.c.b16 %v473, %v469
  %v514 = vpack.c.b16 %v474, %v470
  %v515 = vpack.c.b16 %v475, %v471
  %v516 = vpack.c.b16 %v480, %v476
  %v517 = vpack.c.b16 %v481, %v477
  %v518 = vpack.c.b16 %v482, %v478
  %v519 = vpack.c.b16 %v483, %v479
  %v520 = vpack.c.b16 %v488, %v484
  %v521 = vpack.c.b16 %v489, %v485
  %v522 = vpack.c.b16 %v490, %v486
  %v523 = vpack.c.b16 %v491, %v487
  %556 = vmatprep.subr.bf16.mxu0 %v493
  %557 = vmatpush1.bf16.msra.mxu0 %v492
  %558 = vmatprep.subr.bf16.mxu0 %v497
  %559 = vmatpush1.bf16.msra.mxu0 %v496
  %560 = vmatprep.subr.bf16.mxu0 %v501
  %561 = vmatpush1.bf16.msra.mxu0 %v500
  %562 = vmatprep.subr.bf16.mxu0 %v505
  %563 = vmatpush1.bf16.msra.mxu0 %v504
  %564 = vmatprep.subr.bf16.mxu0 %v509
  %565 = vmatpush1.bf16.msra.mxu0 %v508
  %566 = vmatprep.subr.bf16.mxu0 %v513
  %567 = vmatpush1.bf16.msra.mxu0 %v512
  %568 = vmatprep.subr.bf16.mxu0 %v517
  %569 = vmatpush1.bf16.msra.mxu0 %v516
  %570 = vmatprep.subr.bf16.mxu0 %v521
  %571 = vmatpush1.bf16.msra.mxu0 %v520
  %572 = vmatprep.subr.bf16.mxu0 0
  %573 = vmatpush1.bf16.msra.mxu0 0
  %574 = vmatprep.subr.bf16.mxu0 0
  %575 = vmatpush1.bf16.msra.mxu0 0
  %576 = vmatprep.subr.bf16.mxu0 0
  %577 = vmatpush1.bf16.msra.mxu0 0
  %578 = vmatprep.subr.bf16.mxu0 0
  %579 = vmatpush1.bf16.msra.mxu0 0
  %580 = vmatprep.subr.bf16.mxu0 0
  %581 = vmatpush1.bf16.msra.mxu0 0
  %582 = vmatprep.subr.bf16.mxu0 0
  %583 = vmatpush1.bf16.msra.mxu0 0
  %584 = vmatprep.subr.bf16.mxu0 0
  %585 = vmatpush1.bf16.msra.mxu0 0
  %586 = vmatprep.subr.bf16.mxu0 0
  %587 = vmatpush1.bf16.msra.mxu0 0
  %588 = vmatprep.mubr.bf16.mxu0 0
  %589 = vmatmul.mubr.bf16.gmra.mrb[0].mxu0 %v395
  %v590 = vpop.f32.mrb[0].mxu0
  %v591 = vadd.f32 0.0, %v590
  %v592 = vpop.f32.mrb[0].mxu0
  %v593 = vadd.f32 0.0, %v592
  %v594 = vpop.f32.mrb[0].mxu0
  %v595 = vpop.f32.mrb[0].mxu0
  %596 = vdwg.mxu0
  %597 = vmatprep.subr.bf16.mxu0 %v495
  %598 = vmatpush1.bf16.msra.mxu0 %v494
  %599 = vmatprep.subr.bf16.mxu0 %v499
  %600 = vmatpush1.bf16.msra.mxu0 %v498
  %601 = vmatprep.subr.bf16.mxu0 %v503
  %602 = vmatpush1.bf16.msra.mxu0 %v502
  %603 = vmatprep.subr.bf16.mxu0 %v507
  %604 = vmatpush1.bf16.msra.mxu0 %v506
  %605 = vmatprep.subr.bf16.mxu0 %v511
  %606 = vmatpush1.bf16.msra.mxu0 %v510
  %607 = vmatprep.subr.bf16.mxu0 %v515
  %608 = vmatpush1.bf16.msra.mxu0 %v514
  %609 = vmatprep.subr.bf16.mxu0 %v519
  %610 = vmatpush1.bf16.msra.mxu0 %v518
  %611 = vmatprep.subr.bf16.mxu0 %v523
  %612 = vmatpush1.bf16.msra.mxu0 %v522
  %613 = vmatprep.subr.bf16.mxu0 0
  %614 = vmatpush1.bf16.msra.mxu0 0
  %615 = vmatprep.subr.bf16.mxu0 0
  %616 = vmatpush1.bf16.msra.mxu0 0
  %617 = vmatprep.subr.bf16.mxu0 0
  %618 = vmatpush1.bf16.msra.mxu0 0
  %619 = vmatprep.subr.bf16.mxu0 0
  %620 = vmatpush1.bf16.msra.mxu0 0
  %621 = vmatprep.subr.bf16.mxu0 0
  %622 = vmatpush1.bf16.msra.mxu0 0
  %623 = vmatprep.subr.bf16.mxu0 0
  %624 = vmatpush1.bf16.msra.mxu0 0
  %625 = vmatprep.subr.bf16.mxu0 0
  %626 = vmatpush1.bf16.msra.mxu0 0
  %627 = vmatprep.subr.bf16.mxu0 0
  %628 = vmatpush1.bf16.msra.mxu0 0
  %629 = vmatprep.mubr.bf16.mxu0 0
  %630 = vmatmul.mubr.bf16.gmra.mrb[0].mxu0 %v395
  %v631 = vpop.f32.mrb[0].mxu0
  %v632 = vadd.f32 0.0, %v631
  %v633 = vpop.f32.mrb[0].mxu0
  %v634 = vadd.f32 0.0, %v633
  %v635 = vpop.f32.mrb[0].mxu0
  %v636 = vpop.f32.mrb[0].mxu0
  %637 = vdwg.mxu0
  %v638 = vadd.f32 %v389, %v591
  %v639 = vadd.f32 %v390, %v593
  %v640 = vadd.f32 %v391, %v632
  %v641 = vadd.f32 %v392, %v634
  %v642 = vld [vmem:[#allocation3] sm:$0xff]
  %v643 = vmul.f32 %v382, 0.5
  %v644 = vtanh.pop %v643
  %v645 = vmul.f32 %v644, 0.5
  %v646 = vadd.f32 %v645, 0.5
  %v647 = vmul.f32 %v383, 0.5
  %v648 = vtanh.pop %v647
  %v649 = vmul.f32 %v648, 0.5
  %v650 = vadd.f32 %v649, 0.5
  %v651 = vtanh.pop %v384
  %v652 = vmul.f32 %v385, 0.5
  %v653 = vtanh.pop %v652
  %v654 = vmul.f32 %v653, 0.5
  %v655 = vadd.f32 %v654, 0.5
  %v656 = vmul.f32 %v650, %v642
  %v657 = vmul.f32 %v646, %v651
  %v658 = vadd.f32 %v656, %v657
  %v659 = vtanh.pop %v658
  %v660 = vmul.f32 %v655, %v659
  %s661 = scalar_lea.vmem [#allocation3], 8
  %v662 = vld [vmem:[%s661] sm:$0xff]
  %v663 = vmul.f32 %v638, 0.5
  %v664 = vtanh.pop %v663
  %v665 = vmul.f32 %v664, 0.5
  %v666 = vadd.f32 %v665, 0.5
  %v667 = vmul.f32 %v639, 0.5
  %v668 = vtanh.pop %v667
  %v669 = vmul.f32 %v668, 0.5
  %v670 = vadd.f32 %v669, 0.5
  %v671 = vtanh.pop %v640
  %v672 = vmul.f32 %v641, 0.5
  %v673 = vtanh.pop %v672
  %v674 = vmul.f32 %v673, 0.5
  %v675 = vadd.f32 %v674, 0.5
  %v676 = vmul.f32 %v670, %v662
  %v677 = vmul.f32 %v666, %v671
  %v678 = vadd.f32 %v676, %v677
  %v679 = vtanh.pop %v678
  %v680 = vmul.f32 %v675, %v679
  %681 = vst [vmem:[#allocation2] sm:$0xff] %v660
  %682 = vst [vmem:[#allocation3] sm:$0xff] %v658
  %683 = vst [vmem:[%s393] sm:$0xff] %v680
  %684 = vst [vmem:[%s661] sm:$0xff] %v678
  %685 = vst [vmem:[%s3] sm:$0xff] %v660
  %s686 = scalar_lea.vmem %s55, 56
  %687 = vst [vmem:[%s686] sm:$0xff] %v680
  %s688 = scalar_lea.vmem %s0, 16
  %v689 = vld [vmem:[%s688] sm:$0xff]
  %v690 = vld [vmem:[%s688 + $0x8] sm:$0xff]
  %v691 = vunpack.c.l.bf16 %v689
  %v692 = vunpack.c.h.bf16 %v689
  %v693 = vunpack.c.l.bf16 %v690
  %v694 = vunpack.c.h.bf16 %v690
  %v695 = vld [vmem:[#allocation2] sm:$0xff]
  %v696 = vpack.c.bf16 %v695, %v695
  %697 = vmatprep.subr.bf16.mxu0 %v237
  %698 = vmatpush1.bf16.msra.mxu0 %v236
  %699 = vmatprep.subr.bf16.mxu0 %v241
  %700 = vmatpush1.bf16.msra.mxu0 %v240
  %701 = vmatprep.subr.bf16.mxu0 %v245
  %702 = vmatpush1.bf16.msra.mxu0 %v244
  %703 = vmatprep.subr.bf16.mxu0 %v249
  %704 = vmatpush1.bf16.msra.mxu0 %v248
  %705 = vmatprep.subr.bf16.mxu0 %v253
  %706 = vmatpush1.bf16.msra.mxu0 %v252
  %707 = vmatprep.subr.bf16.mxu0 %v257
  %708 = vmatpush1.bf16.msra.mxu0 %v256
  %709 = vmatprep.subr.bf16.mxu0 %v261
  %710 = vmatpush1.bf16.msra.mxu0 %v260
  %711 = vmatprep.subr.bf16.mxu0 %v265
  %712 = vmatpush1.bf16.msra.mxu0 %v264
  %713 = vmatprep.subr.bf16.mxu0 0
  %714 = vmatpush1.bf16.msra.mxu0 0
  %715 = vmatprep.subr.bf16.mxu0 0
  %716 = vmatpush1.bf16.msra.mxu0 0
  %717 = vmatprep.subr.bf16.mxu0 0
  %718 = vmatpush1.bf16.msra.mxu0 0
  %719 = vmatprep.subr.bf16.mxu0 0
  %720 = vmatpush1.bf16.msra.mxu0 0
  %721 = vmatprep.subr.bf16.mxu0 0
  %722 = vmatpush1.bf16.msra.mxu0 0
  %723 = vmatprep.subr.bf16.mxu0 0
  %724 = vmatpush1.bf16.msra.mxu0 0
  %725 = vmatprep.subr.bf16.mxu0 0
  %726 = vmatpush1.bf16.msra.mxu0 0
  %727 = vmatprep.subr.bf16.mxu0 0
  %728 = vmatpush1.bf16.msra.mxu0 0
  %729 = vmatprep.mubr.bf16.mxu0 0
  %730 = vmatmul.mubr.bf16.gmra.mrb[0].mxu0 %v696
  %v731 = vpop.f32.mrb[0].mxu0
  %v732 = vadd.f32 0.0, %v731
  %v733 = vpop.f32.mrb[0].mxu0
  %v734 = vadd.f32 0.0, %v733
  %v735 = vpop.f32.mrb[0].mxu0
  %v736 = vpop.f32.mrb[0].mxu0
  %737 = vdwg.mxu0
  %738 = vmatprep.subr.bf16.mxu0 %v239
  %739 = vmatpush1.bf16.msra.mxu0 %v238
  %740 = vmatprep.subr.bf16.mxu0 %v243
  %741 = vmatpush1.bf16.msra.mxu0 %v242
  %742 = vmatprep.subr.bf16.mxu0 %v247
  %743 = vmatpush1.bf16.msra.mxu0 %v246
  %744 = vmatprep.subr.bf16.mxu0 %v251
  %745 = vmatpush1.bf16.msra.mxu0 %v250
  %746 = vmatprep.subr.bf16.mxu0 %v255
  %747 = vmatpush1.bf16.msra.mxu0 %v254
  %748 = vmatprep.subr.bf16.mxu0 %v259
  %749 = vmatpush1.bf16.msra.mxu0 %v258
  %750 = vmatprep.subr.bf16.mxu0 %v263
  %751 = vmatpush1.bf16.msra.mxu0 %v262
  %752 = vmatprep.subr.bf16.mxu0 %v267
  %753 = vmatpush1.bf16.msra.mxu0 %v266
  %754 = vmatprep.subr.bf16.mxu0 0
  %755 = vmatpush1.bf16.msra.mxu0 0
  %756 = vmatprep.subr.bf16.mxu0 0
  %757 = vmatpush1.bf16.msra.mxu0 0
  %758 = vmatprep.subr.bf16.mxu0 0
  %759 = vmatpush1.bf16.msra.mxu0 0
  %760 = vmatprep.subr.bf16.mxu0 0
  %761 = vmatpush1.bf16.msra.mxu0 0
  %762 = vmatprep.subr.bf16.mxu0 0
  %763 = vmatpush1.bf16.msra.mxu0 0
  %764 = vmatprep.subr.bf16.mxu0 0
  %765 = vmatpush1.bf16.msra.mxu0 0
  %766 = vmatprep.subr.bf16.mxu0 0
  %767 = vmatpush1.bf16.msra.mxu0 0
  %768 = vmatprep.subr.bf16.mxu0 0
  %769 = vmatpush1.bf16.msra.mxu0 0
  %770 = vmatprep.mubr.bf16.mxu0 0
  %771 = vmatmul.mubr.bf16.gmra.mrb[0].mxu0 %v696
  %v772 = vpop.f32.mrb[0].mxu0
  %v773 = vadd.f32 0.0, %v772
  %v774 = vpop.f32.mrb[0].mxu0
  %v775 = vadd.f32 0.0, %v774
  %v776 = vpop.f32.mrb[0].mxu0
  %v777 = vpop.f32.mrb[0].mxu0
  %778 = vdwg.mxu0
  %v779 = vadd.f32 %v691, %v732
  %v780 = vadd.f32 %v692, %v734
  %v781 = vadd.f32 %v693, %v773
  %v782 = vadd.f32 %v694, %v775
  %s783 = scalar_lea.vmem %s47, 96
  %v784 = vld [vmem:[%s783] sm:$0xff]
  %v785 = vld [vmem:[%s783 + $0x8] sm:$0xff]
  %v786 = vunpack.c.l.bf16 %v784
  %v787 = vunpack.c.h.bf16 %v784
  %v788 = vunpack.c.l.bf16 %v785
  %v789 = vunpack.c.h.bf16 %v785
  %v790 = vld [vmem:[%s393] sm:$0xff]
  %v791 = vpack.c.bf16 %v790, %v790
  %792 = vmatprep.subr.bf16.mxu0 %v493
  %793 = vmatpush1.bf16.msra.mxu0 %v492
  %794 = vmatprep.subr.bf16.mxu0 %v497
  %795 = vmatpush1.bf16.msra.mxu0 %v496
  %796 = vmatprep.subr.bf16.mxu0 %v501
  %797 = vmatpush1.bf16.msra.mxu0 %v500
  %798 = vmatprep.subr.bf16.mxu0 %v505
  %799 = vmatpush1.bf16.msra.mxu0 %v504
  %800 = vmatprep.subr.bf16.mxu0 %v509
  %801 = vmatpush1.bf16.msra.mxu0 %v508
  %802 = vmatprep.subr.bf16.mxu0 %v513
  %803 = vmatpush1.bf16.msra.mxu0 %v512
  %804 = vmatprep.subr.bf16.mxu0 %v517
  %805 = vmatpush1.bf16.msra.mxu0 %v516
  %806 = vmatprep.subr.bf16.mxu0 %v521
  %807 = vmatpush1.bf16.msra.mxu0 %v520
  %808 = vmatprep.subr.bf16.mxu0 0
  %809 = vmatpush1.bf16.msra.mxu0 0
  %810 = vmatprep.subr.bf16.mxu0 0
  %811 = vmatpush1.bf16.msra.mxu0 0
  %812 = vmatprep.subr.bf16.mxu0 0
  %813 = vmatpush1.bf16.msra.mxu0 0
  %814 = vmatprep.subr.bf16.mxu0 0
  %815 = vmatpush1.bf16.msra.mxu0 0
  %816 = vmatprep.subr.bf16.mxu0 0
  %817 = vmatpush1.bf16.msra.mxu0 0
  %818 = vmatprep.subr.bf16.mxu0 0
  %819 = vmatpush1.bf16.msra.mxu0 0
  %820 = vmatprep.subr.bf16.mxu0 0
  %821 = vmatpush1.bf16.msra.mxu0 0
  %822 = vmatprep.subr.bf16.mxu0 0
  %823 = vmatpush1.bf16.msra.mxu0 0
  %824 = vmatprep.mubr.bf16.mxu0 0
  %825 = vmatmul.mubr.bf16.gmra.mrb[0].mxu0 %v791
  %v826 = vpop.f32.mrb[0].mxu0
  %v827 = vadd.f32 0.0, %v826
  %v828 = vpop.f32.mrb[0].mxu0
  %v829 = vadd.f32 0.0, %v828
  %v830 = vpop.f32.mrb[0].mxu0
  %v831 = vpop.f32.mrb[0].mxu0
  %832 = vdwg.mxu0
  %833 = vmatprep.subr.bf16.mxu0 %v495
  %834 = vmatpush1.bf16.msra.mxu0 %v494
  %835 = vmatprep.subr.bf16.mxu0 %v499
  %836 = vmatpush1.bf16.msra.mxu0 %v498
  %837 = vmatprep.subr.bf16.mxu0 %v503
  %838 = vmatpush1.bf16.msra.mxu0 %v502
  %839 = vmatprep.subr.bf16.mxu0 %v507
  %840 = vmatpush1.bf16.msra.mxu0 %v506
  %841 = vmatprep.subr.bf16.mxu0 %v511
  %842 = vmatpush1.bf16.msra.mxu0 %v510
  %843 = vmatprep.subr.bf16.mxu0 %v515
  %844 = vmatpush1.bf16.msra.mxu0 %v514
  %845 = vmatprep.subr.bf16.mxu0 %v519
  %846 = vmatpush1.bf16.msra.mxu0 %v518
  %847 = vmatprep.subr.bf16.mxu0 %v523
  %848 = vmatpush1.bf16.msra.mxu0 %v522
  %849 = vmatprep.subr.bf16.mxu0 0
  %850 = vmatpush1.bf16.msra.mxu0 0
  %851 = vmatprep.subr.bf16.mxu0 0
  %852 = vmatpush1.bf16.msra.mxu0 0
  %853 = vmatprep.subr.bf16.mxu0 0
  %854 = vmatpush1.bf16.msra.mxu0 0
  %855 = vmatprep.subr.bf16.mxu0 0
  %856 = vmatpush1.bf16.msra.mxu0 0
  %857 = vmatprep.subr.bf16.mxu0 0
  %858 = vmatpush1.bf16.msra.mxu0 0
  %859 = vmatprep.subr.bf16.mxu0 0
  %860 = vmatpush1.bf16.msra.mxu0 0
  %861 = vmatprep.subr.bf16.mxu0 0
  %862 = vmatpush1.bf16.msra.mxu0 0
  %863 = vmatprep.subr.bf16.mxu0 0
  %864 = vmatpush1.bf16.msra.mxu0 0
  %865 = vmatprep.mubr.bf16.mxu0 0
  %866 = vmatmul.mubr.bf16.gmra.mrb[0].mxu0 %v791
  %v867 = vpop.f32.mrb[0].mxu0
  %v868 = vadd.f32 0.0, %v867
  %v869 = vpop.f32.mrb[0].mxu0
  %v870 = vadd.f32 0.0, %v869
  %v871 = vpop.f32.mrb[0].mxu0
  %v872 = vpop.f32.mrb[0].mxu0
  %873 = vdwg.mxu0
  %v874 = vadd.f32 %v786, %v827
  %v875 = vadd.f32 %v787, %v829
  %v876 = vadd.f32 %v788, %v868
  %v877 = vadd.f32 %v789, %v870
  %v878 = vld [vmem:[#allocation3] sm:$0xff]
  %v879 = vmul.f32 %v779, 0.5
  %v880 = vtanh.pop %v879
  %v881 = vmul.f32 %v880, 0.5
  %v882 = vadd.f32 %v881, 0.5
  %v883 = vmul.f32 %v780, 0.5
  %v884 = vtanh.pop %v883
  %v885 = vmul.f32 %v884, 0.5
  %v886 = vadd.f32 %v885, 0.5
  %v887 = vtanh.pop %v781
  %v888 = vmul.f32 %v782, 0.5
  %v889 = vtanh.pop %v888
  %v890 = vmul.f32 %v889, 0.5
  %v891 = vadd.f32 %v890, 0.5
  %v892 = vmul.f32 %v886, %v878
  %v893 = vmul.f32 %v882, %v887
  %v894 = vadd.f32 %v892, %v893
  %v895 = vtanh.pop %v894
  %v896 = vmul.f32 %v891, %v895
  %v897 = vld [vmem:[%s661] sm:$0xff]
  %v898 = vmul.f32 %v874, 0.5
  %v899 = vtanh.pop %v898
  %v900 = vmul.f32 %v899, 0.5
  %v901 = vadd.f32 %v900, 0.5
  %v902 = vmul.f32 %v875, 0.5
  %v903 = vtanh.pop %v902
  %v904 = vmul.f32 %v903, 0.5
  %v905 = vadd.f32 %v904, 0.5
  %v906 = vtanh.pop %v876
  %v907 = vmul.f32 %v877, 0.5
  %v908 = vtanh.pop %v907
  %v909 = vmul.f32 %v908, 0.5
  %v910 = vadd.f32 %v909, 0.5
  %v911 = vmul.f32 %v905, %v897
  %v912 = vmul.f32 %v901, %v906
  %v913 = vadd.f32 %v911, %v912
  %v914 = vtanh.pop %v913
  %v915 = vmul.f32 %v910, %v914
  %916 = vst [vmem:[#allocation2] sm:$0xff] %v896
  %917 = vst [vmem:[#allocation3] sm:$0xff] %v894
  %918 = vst [vmem:[%s393] sm:$0xff] %v915
  %919 = vst [vmem:[%s661] sm:$0xff] %v913
  %s920 = scalar_lea.vmem %s3, 8
  %921 = vst [vmem:[%s920] sm:$0xff] %v896
  %s922 = scalar_lea.vmem %s55, 48
  %923 = vst [vmem:[%s922] sm:$0xff] %v915
  %s924 = scalar_lea.vmem %s0, 32
  %v925 = vld [vmem:[%s924] sm:$0xff]
  %v926 = vld [vmem:[%s924 + $0x8] sm:$0xff]
  %v927 = vunpack.c.l.bf16 %v925
  %v928 = vunpack.c.h.bf16 %v925
  %v929 = vunpack.c.l.bf16 %v926
  %v930 = vunpack.c.h.bf16 %v926
  %v931 = vld [vmem:[#allocation2] sm:$0xff]
  %v932 = vpack.c.bf16 %v931, %v931
  %933 = vmatprep.subr.bf16.mxu0 %v237
  %934 = vmatpush1.bf16.msra.mxu0 %v236
  %935 = vmatprep.subr.bf16.mxu0 %v241
  %936 = vmatpush1.bf16.msra.mxu0 %v240
  %937 = vmatprep.subr.bf16.mxu0 %v245
  %938 = vmatpush1.bf16.msra.mxu0 %v244
  %939 = vmatprep.subr.bf16.mxu0 %v249
  %940 = vmatpush1.bf16.msra.mxu0 %v248
  %941 = vmatprep.subr.bf16.mxu0 %v253
  %942 = vmatpush1.bf16.msra.mxu0 %v252
  %943 = vmatprep.subr.bf16.mxu0 %v257
  %944 = vmatpush1.bf16.msra.mxu0 %v256
  %945 = vmatprep.subr.bf16.mxu0 %v261
  %946 = vmatpush1.bf16.msra.mxu0 %v260
  %947 = vmatprep.subr.bf16.mxu0 %v265
  %948 = vmatpush1.bf16.msra.mxu0 %v264
  %949 = vmatprep.subr.bf16.mxu0 0
  %950 = vmatpush1.bf16.msra.mxu0 0
  %951 = vmatprep.subr.bf16.mxu0 0
  %952 = vmatpush1.bf16.msra.mxu0 0
  %953 = vmatprep.subr.bf16.mxu0 0
  %954 = vmatpush1.bf16.msra.mxu0 0
  %955 = vmatprep.subr.bf16.mxu0 0
  %956 = vmatpush1.bf16.msra.mxu0 0
  %957 = vmatprep.subr.bf16.mxu0 0
  %958 = vmatpush1.bf16.msra.mxu0 0
  %959 = vmatprep.subr.bf16.mxu0 0
  %960 = vmatpush1.bf16.msra.mxu0 0
  %961 = vmatprep.subr.bf16.mxu0 0
  %962 = vmatpush1.bf16.msra.mxu0 0
  %963 = vmatprep.subr.bf16.mxu0 0
  %964 = vmatpush1.bf16.msra.mxu0 0
  %965 = vmatprep.mubr.bf16.mxu0 0
  %966 = vmatmul.mubr.bf16.gmra.mrb[0].mxu0 %v932
  %v967 = vpop.f32.mrb[0].mxu0
  %v968 = vadd.f32 0.0, %v967
  %v969 = vpop.f32.mrb[0].mxu0
  %v970 = vadd.f32 0.0, %v969
  %v971 = vpop.f32.mrb[0].mxu0
  %v972 = vpop.f32.mrb[0].mxu0
  %973 = vdwg.mxu0
  %974 = vmatprep.subr.bf16.mxu0 %v239
  %975 = vmatpush1.bf16.msra.mxu0 %v238
  %976 = vmatprep.subr.bf16.mxu0 %v243
  %977 = vmatpush1.bf16.msra.mxu0 %v242
  %978 = vmatprep.subr.bf16.mxu0 %v247
  %979 = vmatpush1.bf16.msra.mxu0 %v246
  %980 = vmatprep.subr.bf16.mxu0 %v251
  %981 = vmatpush1.bf16.msra.mxu0 %v250
  %982 = vmatprep.subr.bf16.mxu0 %v255
  %983 = vmatpush1.bf16.msra.mxu0 %v254
  %984 = vmatprep.subr.bf16.mxu0 %v259
  %985 = vmatpush1.bf16.msra.mxu0 %v258
  %986 = vmatprep.subr.bf16.mxu0 %v263
  %987 = vmatpush1.bf16.msra.mxu0 %v262
  %988 = vmatprep.subr.bf16.mxu0 %v267
  %989 = vmatpush1.bf16.msra.mxu0 %v266
  %990 = vmatprep.subr.bf16.mxu0 0
  %991 = vmatpush1.bf16.msra.mxu0 0
  %992 = vmatprep.subr.bf16.mxu0 0
  %993 = vmatpush1.bf16.msra.mxu0 0
  %994 = vmatprep.subr.bf16.mxu0 0
  %995 = vmatpush1.bf16.msra.mxu0 0
  %996 = vmatprep.subr.bf16.mxu0 0
  %997 = vmatpush1.bf16.msra.mxu0 0
  %998 = vmatprep.subr.bf16.mxu0 0
  %999 = vmatpush1.bf16.msra.mxu0 0
  %1000 = vmatprep.subr.bf16.mxu0 0
  %1001 = vmatpush1.bf16.msra.mxu0 0
  %1002 = vmatprep.subr.bf16.mxu0 0
  %1003 = vmatpush1.bf16.msra.mxu0 0
  %1004 = vmatprep.subr.bf16.mxu0 0
  %1005 = vmatpush1.bf16.msra.mxu0 0
  %1006 = vmatprep.mubr.bf16.mxu0 0
  %1007 = vmatmul.mubr.bf16.gmra.mrb[0].mxu0 %v932
  %v1008 = vpop.f32.mrb[0].mxu0
  %v1009 = vadd.f32 0.0, %v1008
  %v1010 = vpop.f32.mrb[0].mxu0
  %v1011 = vadd.f32 0.0, %v1010
  %v1012 = vpop.f32.mrb[0].mxu0
  %v1013 = vpop.f32.mrb[0].mxu0
  %1014 = vdwg.mxu0
  %v1015 = vadd.f32 %v927, %v968
  %v1016 = vadd.f32 %v928, %v970
  %v1017 = vadd.f32 %v929, %v1009
  %v1018 = vadd.f32 %v930, %v1011
  %s1019 = scalar_lea.vmem %s47, 80
  %v1020 = vld [vmem:[%s1019] sm:$0xff]
  %v1021 = vld [vmem:[%s1019 + $0x8] sm:$0xff]
  %v1022 = vunpack.c.l.bf16 %v1020
  %v1023 = vunpack.c.h.bf16 %v1020
  %v1024 = vunpack.c.l.bf16 %v1021
  %v1025 = vunpack.c.h.bf16 %v1021
  %v1026 = vld [vmem:[%s393] sm:$0xff]
  %v1027 = vpack.c.bf16 %v1026, %v1026
  %1028 = vmatprep.subr.bf16.mxu0 %v493
  %1029 = vmatpush1.bf16.msra.mxu0 %v492
  %1030 = vmatprep.subr.bf16.mxu0 %v497
  %1031 = vmatpush1.bf16.msra.mxu0 %v496
  %1032 = vmatprep.subr.bf16.mxu0 %v501
  %1033 = vmatpush1.bf16.msra.mxu0 %v500
  %1034 = vmatprep.subr.bf16.mxu0 %v505
  %1035 = vmatpush1.bf16.msra.mxu0 %v504
  %1036 = vmatprep.subr.bf16.mxu0 %v509
  %1037 = vmatpush1.bf16.msra.mxu0 %v508
  %1038 = vmatprep.subr.bf16.mxu0 %v513
  %1039 = vmatpush1.bf16.msra.mxu0 %v512
  %1040 = vmatprep.subr.bf16.mxu0 %v517
  %1041 = vmatpush1.bf16.msra.mxu0 %v516
  %1042 = vmatprep.subr.bf16.mxu0 %v521
  %1043 = vmatpush1.bf16.msra.mxu0 %v520
  %1044 = vmatprep.subr.bf16.mxu0 0
  %1045 = vmatpush1.bf16.msra.mxu0 0
  %1046 = vmatprep.subr.bf16.mxu0 0
  %1047 = vmatpush1.bf16.msra.mxu0 0
  %1048 = vmatprep.subr.bf16.mxu0 0
  %1049 = vmatpush1.bf16.msra.mxu0 0
  %1050 = vmatprep.subr.bf16.mxu0 0
  %1051 = vmatpush1.bf16.msra.mxu0 0
  %1052 = vmatprep.subr.bf16.mxu0 0
  %1053 = vmatpush1.bf16.msra.mxu0 0
  %1054 = vmatprep.subr.bf16.mxu0 0
  %1055 = vmatpush1.bf16.msra.mxu0 0
  %1056 = vmatprep.subr.bf16.mxu0 0
  %1057 = vmatpush1.bf16.msra.mxu0 0
  %1058 = vmatprep.subr.bf16.mxu0 0
  %1059 = vmatpush1.bf16.msra.mxu0 0
  %1060 = vmatprep.mubr.bf16.mxu0 0
  %1061 = vmatmul.mubr.bf16.gmra.mrb[0].mxu0 %v1027
  %v1062 = vpop.f32.mrb[0].mxu0
  %v1063 = vadd.f32 0.0, %v1062
  %v1064 = vpop.f32.mrb[0].mxu0
  %v1065 = vadd.f32 0.0, %v1064
  %v1066 = vpop.f32.mrb[0].mxu0
  %v1067 = vpop.f32.mrb[0].mxu0
  %1068 = vdwg.mxu0
  %1069 = vmatprep.subr.bf16.mxu0 %v495
  %1070 = vmatpush1.bf16.msra.mxu0 %v494
  %1071 = vmatprep.subr.bf16.mxu0 %v499
  %1072 = vmatpush1.bf16.msra.mxu0 %v498
  %1073 = vmatprep.subr.bf16.mxu0 %v503
  %1074 = vmatpush1.bf16.msra.mxu0 %v502
  %1075 = vmatprep.subr.bf16.mxu0 %v507
  %1076 = vmatpush1.bf16.msra.mxu0 %v506
  %1077 = vmatprep.subr.bf16.mxu0 %v511
  %1078 = vmatpush1.bf16.msra.mxu0 %v510
  %1079 = vmatprep.subr.bf16.mxu0 %v515
  %1080 = vmatpush1.bf16.msra.mxu0 %v514
  %1081 = vmatprep.subr.bf16.mxu0 %v519
  %1082 = vmatpush1.bf16.msra.mxu0 %v518
  %1083 = vmatprep.subr.bf16.mxu0 %v523
  %1084 = vmatpush1.bf16.msra.mxu0 %v522
  %1085 = vmatprep.subr.bf16.mxu0 0
  %1086 = vmatpush1.bf16.msra.mxu0 0
  %1087 = vmatprep.subr.bf16.mxu0 0
  %1088 = vmatpush1.bf16.msra.mxu0 0
  %1089 = vmatprep.subr.bf16.mxu0 0
  %1090 = vmatpush1.bf16.msra.mxu0 0
  %1091 = vmatprep.subr.bf16.mxu0 0
  %1092 = vmatpush1.bf16.msra.mxu0 0
  %1093 = vmatprep.subr.bf16.mxu0 0
  %1094 = vmatpush1.bf16.msra.mxu0 0
  %1095 = vmatprep.subr.bf16.mxu0 0
  %1096 = vmatpush1.bf16.msra.mxu0 0
  %1097 = vmatprep.subr.bf16.mxu0 0
  %1098 = vmatpush1.bf16.msra.mxu0 0
  %1099 = vmatprep.subr.bf16.mxu0 0
  %1100 = vmatpush1.bf16.msra.mxu0 0
  %1101 = vmatprep.mubr.bf16.mxu0 0
  %1102 = vmatmul.mubr.bf16.gmra.mrb[0].mxu0 %v1027
  %v1103 = vpop.f32.mrb[0].mxu0
  %v1104 = vadd.f32 0.0, %v1103
  %v1105 = vpop.f32.mrb[0].mxu0
  %v1106 = vadd.f32 0.0, %v1105
  %v1107 = vpop.f32.mrb[0].mxu0
  %v1108 = vpop.f32.mrb[0].mxu0
  %1109 = vdwg.mxu0
  %v1110 = vadd.f32 %v1022, %v1063
  %v1111 = vadd.f32 %v1023, %v1065
  %v1112 = vadd.f32 %v1024, %v1104
  %v1113 = vadd.f32 %v1025, %v1106
  %v1114 = vld [vmem:[#allocation3] sm:$0xff]
  %v1115 = vmul.f32 %v1015, 0.5
  %v1116 = vtanh.pop %v1115
  %v1117 = vmul.f32 %v1116, 0.5
  %v1118 = vadd.f32 %v1117, 0.5
  %v1119 = vmul.f32 %v1016, 0.5
  %v1120 = vtanh.pop %v1119
  %v1121 = vmul.f32 %v1120, 0.5
  %v1122 = vadd.f32 %v1121, 0.5
  %v1123 = vtanh.pop %v1017
  %v1124 = vmul.f32 %v1018, 0.5
  %v1125 = vtanh.pop %v1124
  %v1126 = vmul.f32 %v1125, 0.5
  %v1127 = vadd.f32 %v1126, 0.5
  %v1128 = vmul.f32 %v1122, %v1114
  %v1129 = vmul.f32 %v1118, %v1123
  %v1130 = vadd.f32 %v1128, %v1129
  %v1131 = vtanh.pop %v1130
  %v1132 = vmul.f32 %v1127, %v1131
  %v1133 = vld [vmem:[%s661] sm:$0xff]
  %v1134 = vmul.f32 %v1110, 0.5
  %v1135 = vtanh.pop %v1134
  %v1136 = vmul.f32 %v1135, 0.5
  %v1137 = vadd.f32 %v1136, 0.5
  %v1138 = vmul.f32 %v1111, 0.5
  %v1139 = vtanh.pop %v1138
  %v1140 = vmul.f32 %v1139, 0.5
  %v1141 = vadd.f32 %v1140, 0.5
  %v1142 = vtanh.pop %v1112
  %v1143 = vmul.f32 %v1113, 0.5
  %v1144 = vtanh.pop %v1143
  %v1145 = vmul.f32 %v1144, 0.5
  %v1146 = vadd.f32 %v1145, 0.5
  %v1147 = vmul.f32 %v1141, %v1133
  %v1148 = vmul.f32 %v1137, %v1142
  %v1149 = vadd.f32 %v1147, %v1148
  %v1150 = vtanh.pop %v1149
  %v1151 = vmul.f32 %v1146, %v1150
  %1152 = vst [vmem:[#allocation2] sm:$0xff] %v1132
  %1153 = vst [vmem:[#allocation3] sm:$0xff] %v1130
  %1154 = vst [vmem:[%s393] sm:$0xff] %v1151
  %1155 = vst [vmem:[%s661] sm:$0xff] %v1149
  %s1156 = scalar_lea.vmem %s3, 16
  %1157 = vst [vmem:[%s1156] sm:$0xff] %v1132
  %s1158 = scalar_lea.vmem %s55, 40
  %1159 = vst [vmem:[%s1158] sm:$0xff] %v1151
  %s1160 = scalar_lea.vmem %s0, 48
  %v1161 = vld [vmem:[%s1160] sm:$0xff]
  %v1162 = vld [vmem:[%s1160 + $0x8] sm:$0xff]
  %v1163 = vunpack.c.l.bf16 %v1161
  %v1164 = vunpack.c.h.bf16 %v1161
  %v1165 = vunpack.c.l.bf16 %v1162
  %v1166 = vunpack.c.h.bf16 %v1162
  %v1167 = vld [vmem:[#allocation2] sm:$0xff]
  %v1168 = vpack.c.bf16 %v1167, %v1167
  %1169 = vmatprep.subr.bf16.mxu0 %v237
  %1170 = vmatpush1.bf16.msra.mxu0 %v236
  %1171 = vmatprep.subr.bf16.mxu0 %v241
  %1172 = vmatpush1.bf16.msra.mxu0 %v240
  %1173 = vmatprep.subr.bf16.mxu0 %v245
  %1174 = vmatpush1.bf16.msra.mxu0 %v244
  %1175 = vmatprep.subr.bf16.mxu0 %v249
  %1176 = vmatpush1.bf16.msra.mxu0 %v248
  %1177 = vmatprep.subr.bf16.mxu0 %v253
  %1178 = vmatpush1.bf16.msra.mxu0 %v252
  %1179 = vmatprep.subr.bf16.mxu0 %v257
  %1180 = vmatpush1.bf16.msra.mxu0 %v256
  %1181 = vmatprep.subr.bf16.mxu0 %v261
  %1182 = vmatpush1.bf16.msra.mxu0 %v260
  %1183 = vmatprep.subr.bf16.mxu0 %v265
  %1184 = vmatpush1.bf16.msra.mxu0 %v264
  %1185 = vmatprep.subr.bf16.mxu0 0
  %1186 = vmatpush1.bf16.msra.mxu0 0
  %1187 = vmatprep.subr.bf16.mxu0 0
  %1188 = vmatpush1.bf16.msra.mxu0 0
  %1189 = vmatprep.subr.bf16.mxu0 0
  %1190 = vmatpush1.bf16.msra.mxu0 0
  %1191 = vmatprep.subr.bf16.mxu0 0
  %1192 = vmatpush1.bf16.msra.mxu0 0
  %1193 = vmatprep.subr.bf16.mxu0 0
  %1194 = vmatpush1.bf16.msra.mxu0 0
  %1195 = vmatprep.subr.bf16.mxu0 0
  %1196 = vmatpush1.bf16.msra.mxu0 0
  %1197 = vmatprep.subr.bf16.mxu0 0
  %1198 = vmatpush1.bf16.msra.mxu0 0
  %1199 = vmatprep.subr.bf16.mxu0 0
  %1200 = vmatpush1.bf16.msra.mxu0 0
  %1201 = vmatprep.mubr.bf16.mxu0 0
  %1202 = vmatmul.mubr.bf16.gmra.mrb[0].mxu0 %v1168
  %v1203 = vpop.f32.mrb[0].mxu0
  %v1204 = vadd.f32 0.0, %v1203
  %v1205 = vpop.f32.mrb[0].mxu0
  %v1206 = vadd.f32 0.0, %v1205
  %v1207 = vpop.f32.mrb[0].mxu0
  %v1208 = vpop.f32.mrb[0].mxu0
  %1209 = vdwg.mxu0
  %1210 = vmatprep.subr.bf16.mxu0 %v239
  %1211 = vmatpush1.bf16.msra.mxu0 %v238
  %1212 = vmatprep.subr.bf16.mxu0 %v243
  %1213 = vmatpush1.bf16.msra.mxu0 %v242
  %1214 = vmatprep.subr.bf16.mxu0 %v247
  %1215 = vmatpush1.bf16.msra.mxu0 %v246
  %1216 = vmatprep.subr.bf16.mxu0 %v251
  %1217 = vmatpush1.bf16.msra.mxu0 %v250
  %1218 = vmatprep.subr.bf16.mxu0 %v255
  %1219 = vmatpush1.bf16.msra.mxu0 %v254
  %1220 = vmatprep.subr.bf16.mxu0 %v259
  %1221 = vmatpush1.bf16.msra.mxu0 %v258
  %1222 = vmatprep.subr.bf16.mxu0 %v263
  %1223 = vmatpush1.bf16.msra.mxu0 %v262
  %1224 = vmatprep.subr.bf16.mxu0 %v267
  %1225 = vmatpush1.bf16.msra.mxu0 %v266
  %1226 = vmatprep.subr.bf16.mxu0 0
  %1227 = vmatpush1.bf16.msra.mxu0 0
  %1228 = vmatprep.subr.bf16.mxu0 0
  %1229 = vmatpush1.bf16.msra.mxu0 0
  %1230 = vmatprep.subr.bf16.mxu0 0
  %1231 = vmatpush1.bf16.msra.mxu0 0
  %1232 = vmatprep.subr.bf16.mxu0 0
  %1233 = vmatpush1.bf16.msra.mxu0 0
  %1234 = vmatprep.subr.bf16.mxu0 0
  %1235 = vmatpush1.bf16.msra.mxu0 0
  %1236 = vmatprep.subr.bf16.mxu0 0
  %1237 = vmatpush1.bf16.msra.mxu0 0
  %1238 = vmatprep.subr.bf16.mxu0 0
  %1239 = vmatpush1.bf16.msra.mxu0 0
  %1240 = vmatprep.subr.bf16.mxu0 0
  %1241 = vmatpush1.bf16.msra.mxu0 0
  %1242 = vmatprep.mubr.bf16.mxu0 0
  %1243 = vmatmul.mubr.bf16.gmra.mrb[0].mxu0 %v1168
  %v1244 = vpop.f32.mrb[0].mxu0
  %v1245 = vadd.f32 0.0, %v1244
  %v1246 = vpop.f32.mrb[0].mxu0
  %v1247 = vadd.f32 0.0, %v1246
  %v1248 = vpop.f32.mrb[0].mxu0
  %v1249 = vpop.f32.mrb[0].mxu0
  %1250 = vdwg.mxu0
  %v1251 = vadd.f32 %v1163, %v1204
  %v1252 = vadd.f32 %v1164, %v1206
  %v1253 = vadd.f32 %v1165, %v1245
  %v1254 = vadd.f32 %v1166, %v1247
  %s1255 = scalar_lea.vmem %s47, 64
  %v1256 = vld [vmem:[%s1255] sm:$0xff]
  %v1257 = vld [vmem:[%s1255 + $0x8] sm:$0xff]
  %v1258 = vunpack.c.l.bf16 %v1256
  %v1259 = vunpack.c.h.bf16 %v1256
  %v1260 = vunpack.c.l.bf16 %v1257
  %v1261 = vunpack.c.h.bf16 %v1257
  %v1262 = vld [vmem:[%s393] sm:$0xff]
  %v1263 = vpack.c.bf16 %v1262, %v1262
  %1264 = vmatprep.subr.bf16.mxu0 %v493
  %1265 = vmatpush1.bf16.msra.mxu0 %v492
  %1266 = vmatprep.subr.bf16.mxu0 %v497
  %1267 = vmatpush1.bf16.msra.mxu0 %v496
  %1268 = vmatprep.subr.bf16.mxu0 %v501
  %1269 = vmatpush1.bf16.msra.mxu0 %v500
  %1270 = vmatprep.subr.bf16.mxu0 %v505
  %1271 = vmatpush1.bf16.msra.mxu0 %v504
  %1272 = vmatprep.subr.bf16.mxu0 %v509
  %1273 = vmatpush1.bf16.msra.mxu0 %v508
  %1274 = vmatprep.subr.bf16.mxu0 %v513
  %1275 = vmatpush1.bf16.msra.mxu0 %v512
  %1276 = vmatprep.subr.bf16.mxu0 %v517
  %1277 = vmatpush1.bf16.msra.mxu0 %v516
  %1278 = vmatprep.subr.bf16.mxu0 %v521
  %1279 = vmatpush1.bf16.msra.mxu0 %v520
  %1280 = vmatprep.subr.bf16.mxu0 0
  %1281 = vmatpush1.bf16.msra.mxu0 0
  %1282 = vmatprep.subr.bf16.mxu0 0
  %1283 = vmatpush1.bf16.msra.mxu0 0
  %1284 = vmatprep.subr.bf16.mxu0 0
  %1285 = vmatpush1.bf16.msra.mxu0 0
  %1286 = vmatprep.subr.bf16.mxu0 0
  %1287 = vmatpush1.bf16.msra.mxu0 0
  %1288 = vmatprep.subr.bf16.mxu0 0
  %1289 = vmatpush1.bf16.msra.mxu0 0
  %1290 = vmatprep.subr.bf16.mxu0 0
  %1291 = vmatpush1.bf16.msra.mxu0 0
  %1292 = vmatprep.subr.bf16.mxu0 0
  %1293 = vmatpush1.bf16.msra.mxu0 0
  %1294 = vmatprep.subr.bf16.mxu0 0
  %1295 = vmatpush1.bf16.msra.mxu0 0
  %1296 = vmatprep.mubr.bf16.mxu0 0
  %1297 = vmatmul.mubr.bf16.gmra.mrb[0].mxu0 %v1263
  %v1298 = vpop.f32.mrb[0].mxu0
  %v1299 = vadd.f32 0.0, %v1298
  %v1300 = vpop.f32.mrb[0].mxu0
  %v1301 = vadd.f32 0.0, %v1300
  %v1302 = vpop.f32.mrb[0].mxu0
  %v1303 = vpop.f32.mrb[0].mxu0
  %1304 = vdwg.mxu0
  %1305 = vmatprep.subr.bf16.mxu0 %v495
  %1306 = vmatpush1.bf16.msra.mxu0 %v494
  %1307 = vmatprep.subr.bf16.mxu0 %v499
  %1308 = vmatpush1.bf16.msra.mxu0 %v498
  %1309 = vmatprep.subr.bf16.mxu0 %v503
  %1310 = vmatpush1.bf16.msra.mxu0 %v502
  %1311 = vmatprep.subr.bf16.mxu0 %v507
  %1312 = vmatpush1.bf16.msra.mxu0 %v506
  %1313 = vmatprep.subr.bf16.mxu0 %v511
  %1314 = vmatpush1.bf16.msra.mxu0 %v510
  %1315 = vmatprep.subr.bf16.mxu0 %v515
  %1316 = vmatpush1.bf16.msra.mxu0 %v514
  %1317 = vmatprep.subr.bf16.mxu0 %v519
  %1318 = vmatpush1.bf16.msra.mxu0 %v518
  %1319 = vmatprep.subr.bf16.mxu0 %v523
  %1320 = vmatpush1.bf16.msra.mxu0 %v522
  %1321 = vmatprep.subr.bf16.mxu0 0
  %1322 = vmatpush1.bf16.msra.mxu0 0
  %1323 = vmatprep.subr.bf16.mxu0 0
  %1324 = vmatpush1.bf16.msra.mxu0 0
  %1325 = vmatprep.subr.bf16.mxu0 0
  %1326 = vmatpush1.bf16.msra.mxu0 0
  %1327 = vmatprep.subr.bf16.mxu0 0
  %1328 = vmatpush1.bf16.msra.mxu0 0
  %1329 = vmatprep.subr.bf16.mxu0 0
  %1330 = vmatpush1.bf16.msra.mxu0 0
  %1331 = vmatprep.subr.bf16.mxu0 0
  %1332 = vmatpush1.bf16.msra.mxu0 0
  %1333 = vmatprep.subr.bf16.mxu0 0
  %1334 = vmatpush1.bf16.msra.mxu0 0
  %1335 = vmatprep.subr.bf16.mxu0 0
  %1336 = vmatpush1.bf16.msra.mxu0 0
  %1337 = vmatprep.mubr.bf16.mxu0 0
  %1338 = vmatmul.mubr.bf16.gmra.mrb[0].mxu0 %v1263
  %v1339 = vpop.f32.mrb[0].mxu0
  %v1340 = vadd.f32 0.0, %v1339
  %v1341 = vpop.f32.mrb[0].mxu0
  %v1342 = vadd.f32 0.0, %v1341
  %v1343 = vpop.f32.mrb[0].mxu0
  %v1344 = vpop.f32.mrb[0].mxu0
  %1345 = vdwg.mxu0
  %v1346 = vadd.f32 %v1258, %v1299
  %v1347 = vadd.f32 %v1259, %v1301
  %v1348 = vadd.f32 %v1260, %v1340
  %v1349 = vadd.f32 %v1261, %v1342
  %v1350 = vld [vmem:[#allocation3] sm:$0xff]
  %v1351 = vmul.f32 %v1251, 0.5
  %v1352 = vtanh.pop %v1351
  %v1353 = vmul.f32 %v1352, 0.5
  %v1354 = vadd.f32 %v1353, 0.5
  %v1355 = vmul.f32 %v1252, 0.5
  %v1356 = vtanh.pop %v1355
  %v1357 = vmul.f32 %v1356, 0.5
  %v1358 = vadd.f32 %v1357, 0.5
  %v1359 = vtanh.pop %v1253
  %v1360 = vmul.f32 %v1254, 0.5
  %v1361 = vtanh.pop %v1360
  %v1362 = vmul.f32 %v1361, 0.5
  %v1363 = vadd.f32 %v1362, 0.5
  %v1364 = vmul.f32 %v1358, %v1350
  %v1365 = vmul.f32 %v1354, %v1359
  %v1366 = vadd.f32 %v1364, %v1365
  %v1367 = vtanh.pop %v1366
  %v1368 = vmul.f32 %v1363, %v1367
  %v1369 = vld [vmem:[%s661] sm:$0xff]
  %v1370 = vmul.f32 %v1346, 0.5
  %v1371 = vtanh.pop %v1370
  %v1372 = vmul.f32 %v1371, 0.5
  %v1373 = vadd.f32 %v1372, 0.5
  %v1374 = vmul.f32 %v1347, 0.5
  %v1375 = vtanh.pop %v1374
  %v1376 = vmul.f32 %v1375, 0.5
  %v1377 = vadd.f32 %v1376, 0.5
  %v1378 = vtanh.pop %v1348
  %v1379 = vmul.f32 %v1349, 0.5
  %v1380 = vtanh.pop %v1379
  %v1381 = vmul.f32 %v1380, 0.5
  %v1382 = vadd.f32 %v1381, 0.5
  %v1383 = vmul.f32 %v1377, %v1369
  %v1384 = vmul.f32 %v1373, %v1378
  %v1385 = vadd.f32 %v1383, %v1384
  %v1386 = vtanh.pop %v1385
  %v1387 = vmul.f32 %v1382, %v1386
  %1388 = vst [vmem:[#allocation2] sm:$0xff] %v1368
  %1389 = vst [vmem:[#allocation3] sm:$0xff] %v1366
  %1390 = vst [vmem:[%s393] sm:$0xff] %v1387
  %1391 = vst [vmem:[%s661] sm:$0xff] %v1385
  %s1392 = scalar_lea.vmem %s3, 24
  %1393 = vst [vmem:[%s1392] sm:$0xff] %v1368
  %s1394 = scalar_lea.vmem %s55, 32
  %1395 = vst [vmem:[%s1394] sm:$0xff] %v1387
  %s1396 = scalar_lea.vmem %s0, 64
  %v1397 = vld [vmem:[%s1396] sm:$0xff]
  %v1398 = vld [vmem:[%s1396 + $0x8] sm:$0xff]
  %v1399 = vunpack.c.l.bf16 %v1397
  %v1400 = vunpack.c.h.bf16 %v1397
  %v1401 = vunpack.c.l.bf16 %v1398
  %v1402 = vunpack.c.h.bf16 %v1398
  %v1403 = vld [vmem:[#allocation2] sm:$0xff]
  %v1404 = vpack.c.bf16 %v1403, %v1403
  %1405 = vmatprep.subr.bf16.mxu0 %v237
  %1406 = vmatpush1.bf16.msra.mxu0 %v236
  %1407 = vmatprep.subr.bf16.mxu0 %v241
  %1408 = vmatpush1.bf16.msra.mxu0 %v240
  %1409 = vmatprep.subr.bf16.mxu0 %v245
  %1410 = vmatpush1.bf16.msra.mxu0 %v244
  %1411 = vmatprep.subr.bf16.mxu0 %v249
  %1412 = vmatpush1.bf16.msra.mxu0 %v248
  %1413 = vmatprep.subr.bf16.mxu0 %v253
  %1414 = vmatpush1.bf16.msra.mxu0 %v252
  %1415 = vmatprep.subr.bf16.mxu0 %v257
  %1416 = vmatpush1.bf16.msra.mxu0 %v256
  %1417 = vmatprep.subr.bf16.mxu0 %v261
  %1418 = vmatpush1.bf16.msra.mxu0 %v260
  %1419 = vmatprep.subr.bf16.mxu0 %v265
  %1420 = vmatpush1.bf16.msra.mxu0 %v264
  %1421 = vmatprep.subr.bf16.mxu0 0
  %1422 = vmatpush1.bf16.msra.mxu0 0
  %1423 = vmatprep.subr.bf16.mxu0 0
  %1424 = vmatpush1.bf16.msra.mxu0 0
  %1425 = vmatprep.subr.bf16.mxu0 0
  %1426 = vmatpush1.bf16.msra.mxu0 0
  %1427 = vmatprep.subr.bf16.mxu0 0
  %1428 = vmatpush1.bf16.msra.mxu0 0
  %1429 = vmatprep.subr.bf16.mxu0 0
  %1430 = vmatpush1.bf16.msra.mxu0 0
  %1431 = vmatprep.subr.bf16.mxu0 0
  %1432 = vmatpush1.bf16.msra.mxu0 0
  %1433 = vmatprep.subr.bf16.mxu0 0
  %1434 = vmatpush1.bf16.msra.mxu0 0
  %1435 = vmatprep.subr.bf16.mxu0 0
  %1436 = vmatpush1.bf16.msra.mxu0 0
  %1437 = vmatprep.mubr.bf16.mxu0 0
  %1438 = vmatmul.mubr.bf16.gmra.mrb[0].mxu0 %v1404
  %v1439 = vpop.f32.mrb[0].mxu0
  %v1440 = vadd.f32 0.0, %v1439
  %v1441 = vpop.f32.mrb[0].mxu0
  %v1442 = vadd.f32 0.0, %v1441
  %v1443 = vpop.f32.mrb[0].mxu0
  %v1444 = vpop.f32.mrb[0].mxu0
  %1445 = vdwg.mxu0
  %1446 = vmatprep.subr.bf16.mxu0 %v239
  %1447 = vmatpush1.bf16.msra.mxu0 %v238
  %1448 = vmatprep.subr.bf16.mxu0 %v243
  %1449 = vmatpush1.bf16.msra.mxu0 %v242
  %1450 = vmatprep.subr.bf16.mxu0 %v247
  %1451 = vmatpush1.bf16.msra.mxu0 %v246
  %1452 = vmatprep.subr.bf16.mxu0 %v251
  %1453 = vmatpush1.bf16.msra.mxu0 %v250
  %1454 = vmatprep.subr.bf16.mxu0 %v255
  %1455 = vmatpush1.bf16.msra.mxu0 %v254
  %1456 = vmatprep.subr.bf16.mxu0 %v259
  %1457 = vmatpush1.bf16.msra.mxu0 %v258
  %1458 = vmatprep.subr.bf16.mxu0 %v263
  %1459 = vmatpush1.bf16.msra.mxu0 %v262
  %1460 = vmatprep.subr.bf16.mxu0 %v267
  %1461 = vmatpush1.bf16.msra.mxu0 %v266
  %1462 = vmatprep.subr.bf16.mxu0 0
  %1463 = vmatpush1.bf16.msra.mxu0 0
  %1464 = vmatprep.subr.bf16.mxu0 0
  %1465 = vmatpush1.bf16.msra.mxu0 0
  %1466 = vmatprep.subr.bf16.mxu0 0
  %1467 = vmatpush1.bf16.msra.mxu0 0
  %1468 = vmatprep.subr.bf16.mxu0 0
  %1469 = vmatpush1.bf16.msra.mxu0 0
  %1470 = vmatprep.subr.bf16.mxu0 0
  %1471 = vmatpush1.bf16.msra.mxu0 0
  %1472 = vmatprep.subr.bf16.mxu0 0
  %1473 = vmatpush1.bf16.msra.mxu0 0
  %1474 = vmatprep.subr.bf16.mxu0 0
  %1475 = vmatpush1.bf16.msra.mxu0 0
  %1476 = vmatprep.subr.bf16.mxu0 0
  %1477 = vmatpush1.bf16.msra.mxu0 0
  %1478 = vmatprep.mubr.bf16.mxu0 0
  %1479 = vmatmul.mubr.bf16.gmra.mrb[0].mxu0 %v1404
  %v1480 = vpop.f32.mrb[0].mxu0
  %v1481 = vadd.f32 0.0, %v1480
  %v1482 = vpop.f32.mrb[0].mxu0
  %v1483 = vadd.f32 0.0, %v1482
  %v1484 = vpop.f32.mrb[0].mxu0
  %v1485 = vpop.f32.mrb[0].mxu0
  %1486 = vdwg.mxu0
  %v1487 = vadd.f32 %v1399, %v1440
  %v1488 = vadd.f32 %v1400, %v1442
  %v1489 = vadd.f32 %v1401, %v1481
  %v1490 = vadd.f32 %v1402, %v1483
  %s1491 = scalar_lea.vmem %s47, 48
  %v1492 = vld [vmem:[%s1491] sm:$0xff]
  %v1493 = vld [vmem:[%s1491 + $0x8] sm:$0xff]
  %v1494 = vunpack.c.l.bf16 %v1492
  %v1495 = vunpack.c.h.bf16 %v1492
  %v1496 = vunpack.c.l.bf16 %v1493
  %v1497 = vunpack.c.h.bf16 %v1493
  %v1498 = vld [vmem:[%s393] sm:$0xff]
  %v1499 = vpack.c.bf16 %v1498, %v1498
  %1500 = vmatprep.subr.bf16.mxu0 %v493
  %1501 = vmatpush1.bf16.msra.mxu0 %v492
  %1502 = vmatprep.subr.bf16.mxu0 %v497
  %1503 = vmatpush1.bf16.msra.mxu0 %v496
  %1504 = vmatprep.subr.bf16.mxu0 %v501
  %1505 = vmatpush1.bf16.msra.mxu0 %v500
  %1506 = vmatprep.subr.bf16.mxu0 %v505
  %1507 = vmatpush1.bf16.msra.mxu0 %v504
  %1508 = vmatprep.subr.bf16.mxu0 %v509
  %1509 = vmatpush1.bf16.msra.mxu0 %v508
  %1510 = vmatprep.subr.bf16.mxu0 %v513
  %1511 = vmatpush1.bf16.msra.mxu0 %v512
  %1512 = vmatprep.subr.bf16.mxu0 %v517
  %1513 = vmatpush1.bf16.msra.mxu0 %v516
  %1514 = vmatprep.subr.bf16.mxu0 %v521
  %1515 = vmatpush1.bf16.msra.mxu0 %v520
  %1516 = vmatprep.subr.bf16.mxu0 0
  %1517 = vmatpush1.bf16.msra.mxu0 0
  %1518 = vmatprep.subr.bf16.mxu0 0
  %1519 = vmatpush1.bf16.msra.mxu0 0
  %1520 = vmatprep.subr.bf16.mxu0 0
  %1521 = vmatpush1.bf16.msra.mxu0 0
  %1522 = vmatprep.subr.bf16.mxu0 0
  %1523 = vmatpush1.bf16.msra.mxu0 0
  %1524 = vmatprep.subr.bf16.mxu0 0
  %1525 = vmatpush1.bf16.msra.mxu0 0
  %1526 = vmatprep.subr.bf16.mxu0 0
  %1527 = vmatpush1.bf16.msra.mxu0 0
  %1528 = vmatprep.subr.bf16.mxu0 0
  %1529 = vmatpush1.bf16.msra.mxu0 0
  %1530 = vmatprep.subr.bf16.mxu0 0
  %1531 = vmatpush1.bf16.msra.mxu0 0
  %1532 = vmatprep.mubr.bf16.mxu0 0
  %1533 = vmatmul.mubr.bf16.gmra.mrb[0].mxu0 %v1499
  %v1534 = vpop.f32.mrb[0].mxu0
  %v1535 = vadd.f32 0.0, %v1534
  %v1536 = vpop.f32.mrb[0].mxu0
  %v1537 = vadd.f32 0.0, %v1536
  %v1538 = vpop.f32.mrb[0].mxu0
  %v1539 = vpop.f32.mrb[0].mxu0
  %1540 = vdwg.mxu0
  %1541 = vmatprep.subr.bf16.mxu0 %v495
  %1542 = vmatpush1.bf16.msra.mxu0 %v494
  %1543 = vmatprep.subr.bf16.mxu0 %v499
  %1544 = vmatpush1.bf16.msra.mxu0 %v498
  %1545 = vmatprep.subr.bf16.mxu0 %v503
  %1546 = vmatpush1.bf16.msra.mxu0 %v502
  %1547 = vmatprep.subr.bf16.mxu0 %v507
  %1548 = vmatpush1.bf16.msra.mxu0 %v506
  %1549 = vmatprep.subr.bf16.mxu0 %v511
  %1550 = vmatpush1.bf16.msra.mxu0 %v510
  %1551 = vmatprep.subr.bf16.mxu0 %v515
  %1552 = vmatpush1.bf16.msra.mxu0 %v514
  %1553 = vmatprep.subr.bf16.mxu0 %v519
  %1554 = vmatpush1.bf16.msra.mxu0 %v518
  %1555 = vmatprep.subr.bf16.mxu0 %v523
  %1556 = vmatpush1.bf16.msra.mxu0 %v522
  %1557 = vmatprep.subr.bf16.mxu0 0
  %1558 = vmatpush1.bf16.msra.mxu0 0
  %1559 = vmatprep.subr.bf16.mxu0 0
  %1560 = vmatpush1.bf16.msra.mxu0 0
  %1561 = vmatprep.subr.bf16.mxu0 0
  %1562 = vmatpush1.bf16.msra.mxu0 0
  %1563 = vmatprep.subr.bf16.mxu0 0
  %1564 = vmatpush1.bf16.msra.mxu0 0
  %1565 = vmatprep.subr.bf16.mxu0 0
  %1566 = vmatpush1.bf16.msra.mxu0 0
  %1567 = vmatprep.subr.bf16.mxu0 0
  %1568 = vmatpush1.bf16.msra.mxu0 0
  %1569 = vmatprep.subr.bf16.mxu0 0
  %1570 = vmatpush1.bf16.msra.mxu0 0
  %1571 = vmatprep.subr.bf16.mxu0 0
  %1572 = vmatpush1.bf16.msra.mxu0 0
  %1573 = vmatprep.mubr.bf16.mxu0 0
  %1574 = vmatmul.mubr.bf16.gmra.mrb[0].mxu0 %v1499
  %v1575 = vpop.f32.mrb[0].mxu0
  %v1576 = vadd.f32 0.0, %v1575
  %v1577 = vpop.f32.mrb[0].mxu0
  %v1578 = vadd.f32 0.0, %v1577
  %v1579 = vpop.f32.mrb[0].mxu0
  %v1580 = vpop.f32.mrb[0].mxu0
  %1581 = vdwg.mxu0
  %v1582 = vadd.f32 %v1494, %v1535
  %v1583 = vadd.f32 %v1495, %v1537
  %v1584 = vadd.f32 %v1496, %v1576
  %v1585 = vadd.f32 %v1497, %v1578
  %v1586 = vld [vmem:[#allocation3] sm:$0xff]
  %v1587 = vmul.f32 %v1487, 0.5
  %v1588 = vtanh.pop %v1587
  %v1589 = vmul.f32 %v1588, 0.5
  %v1590 = vadd.f32 %v1589, 0.5
  %v1591 = vmul.f32 %v1488, 0.5
  %v1592 = vtanh.pop %v1591
  %v1593 = vmul.f32 %v1592, 0.5
  %v1594 = vadd.f32 %v1593, 0.5
  %v1595 = vtanh.pop %v1489
  %v1596 = vmul.f32 %v1490, 0.5
  %v1597 = vtanh.pop %v1596
  %v1598 = vmul.f32 %v1597, 0.5
  %v1599 = vadd.f32 %v1598, 0.5
  %v1600 = vmul.f32 %v1594, %v1586
  %v1601 = vmul.f32 %v1590, %v1595
  %v1602 = vadd.f32 %v1600, %v1601
  %v1603 = vtanh.pop %v1602
  %v1604 = vmul.f32 %v1599, %v1603
  %v1605 = vld [vmem:[%s661] sm:$0xff]
  %v1606 = vmul.f32 %v1582, 0.5
  %v1607 = vtanh.pop %v1606
  %v1608 = vmul.f32 %v1607, 0.5
  %v1609 = vadd.f32 %v1608, 0.5
  %v1610 = vmul.f32 %v1583, 0.5
  %v1611 = vtanh.pop %v1610
  %v1612 = vmul.f32 %v1611, 0.5
  %v1613 = vadd.f32 %v1612, 0.5
  %v1614 = vtanh.pop %v1584
  %v1615 = vmul.f32 %v1585, 0.5
  %v1616 = vtanh.pop %v1615
  %v1617 = vmul.f32 %v1616, 0.5
  %v1618 = vadd.f32 %v1617, 0.5
  %v1619 = vmul.f32 %v1613, %v1605
  %v1620 = vmul.f32 %v1609, %v1614
  %v1621 = vadd.f32 %v1619, %v1620
  %v1622 = vtanh.pop %v1621
  %v1623 = vmul.f32 %v1618, %v1622
  %1624 = vst [vmem:[#allocation2] sm:$0xff] %v1604
  %1625 = vst [vmem:[#allocation3] sm:$0xff] %v1602
  %1626 = vst [vmem:[%s393] sm:$0xff] %v1623
  %1627 = vst [vmem:[%s661] sm:$0xff] %v1621
  %s1628 = scalar_lea.vmem %s3, 32
  %1629 = vst [vmem:[%s1628] sm:$0xff] %v1604
  %s1630 = scalar_lea.vmem %s55, 24
  %1631 = vst [vmem:[%s1630] sm:$0xff] %v1623
  %s1632 = scalar_lea.vmem %s0, 80
  %v1633 = vld [vmem:[%s1632] sm:$0xff]
  %v1634 = vld [vmem:[%s1632 + $0x8] sm:$0xff]
  %v1635 = vunpack.c.l.bf16 %v1633
  %v1636 = vunpack.c.h.bf16 %v1633
  %v1637 = vunpack.c.l.bf16 %v1634
  %v1638 = vunpack.c.h.bf16 %v1634
  %v1639 = vld [vmem:[#allocation2] sm:$0xff]
  %v1640 = vpack.c.bf16 %v1639, %v1639
  %1641 = vmatprep.subr.bf16.mxu0 %v237
  %1642 = vmatpush1.bf16.msra.mxu0 %v236
  %1643 = vmatprep.subr.bf16.mxu0 %v241
  %1644 = vmatpush1.bf16.msra.mxu0 %v240
  %1645 = vmatprep.subr.bf16.mxu0 %v245
  %1646 = vmatpush1.bf16.msra.mxu0 %v244
  %1647 = vmatprep.subr.bf16.mxu0 %v249
  %1648 = vmatpush1.bf16.msra.mxu0 %v248
  %1649 = vmatprep.subr.bf16.mxu0 %v253
  %1650 = vmatpush1.bf16.msra.mxu0 %v252
  %1651 = vmatprep.subr.bf16.mxu0 %v257
  %1652 = vmatpush1.bf16.msra.mxu0 %v256
  %1653 = vmatprep.subr.bf16.mxu0 %v261
  %1654 = vmatpush1.bf16.msra.mxu0 %v260
  %1655 = vmatprep.subr.bf16.mxu0 %v265
  %1656 = vmatpush1.bf16.msra.mxu0 %v264
  %1657 = vmatprep.subr.bf16.mxu0 0
  %1658 = vmatpush1.bf16.msra.mxu0 0
  %1659 = vmatprep.subr.bf16.mxu0 0
  %1660 = vmatpush1.bf16.msra.mxu0 0
  %1661 = vmatprep.subr.bf16.mxu0 0
  %1662 = vmatpush1.bf16.msra.mxu0 0
  %1663 = vmatprep.subr.bf16.mxu0 0
  %1664 = vmatpush1.bf16.msra.mxu0 0
  %1665 = vmatprep.subr.bf16.mxu0 0
  %1666 = vmatpush1.bf16.msra.mxu0 0
  %1667 = vmatprep.subr.bf16.mxu0 0
  %1668 = vmatpush1.bf16.msra.mxu0 0
  %1669 = vmatprep.subr.bf16.mxu0 0
  %1670 = vmatpush1.bf16.msra.mxu0 0
  %1671 = vmatprep.subr.bf16.mxu0 0
  %1672 = vmatpush1.bf16.msra.mxu0 0
  %1673 = vmatprep.mubr.bf16.mxu0 0
  %1674 = vmatmul.mubr.bf16.gmra.mrb[0].mxu0 %v1640
  %v1675 = vpop.f32.mrb[0].mxu0
  %v1676 = vadd.f32 0.0, %v1675
  %v1677 = vpop.f32.mrb[0].mxu0
  %v1678 = vadd.f32 0.0, %v1677
  %v1679 = vpop.f32.mrb[0].mxu0
  %v1680 = vpop.f32.mrb[0].mxu0
  %1681 = vdwg.mxu0
  %1682 = vmatprep.subr.bf16.mxu0 %v239
  %1683 = vmatpush1.bf16.msra.mxu0 %v238
  %1684 = vmatprep.subr.bf16.mxu0 %v243
  %1685 = vmatpush1.bf16.msra.mxu0 %v242
  %1686 = vmatprep.subr.bf16.mxu0 %v247
  %1687 = vmatpush1.bf16.msra.mxu0 %v246
  %1688 = vmatprep.subr.bf16.mxu0 %v251
  %1689 = vmatpush1.bf16.msra.mxu0 %v250
  %1690 = vmatprep.subr.bf16.mxu0 %v255
  %1691 = vmatpush1.bf16.msra.mxu0 %v254
  %1692 = vmatprep.subr.bf16.mxu0 %v259
  %1693 = vmatpush1.bf16.msra.mxu0 %v258
  %1694 = vmatprep.subr.bf16.mxu0 %v263
  %1695 = vmatpush1.bf16.msra.mxu0 %v262
  %1696 = vmatprep.subr.bf16.mxu0 %v267
  %1697 = vmatpush1.bf16.msra.mxu0 %v266
  %1698 = vmatprep.subr.bf16.mxu0 0
  %1699 = vmatpush1.bf16.msra.mxu0 0
  %1700 = vmatprep.subr.bf16.mxu0 0
  %1701 = vmatpush1.bf16.msra.mxu0 0
  %1702 = vmatprep.subr.bf16.mxu0 0
  %1703 = vmatpush1.bf16.msra.mxu0 0
  %1704 = vmatprep.subr.bf16.mxu0 0
  %1705 = vmatpush1.bf16.msra.mxu0 0
  %1706 = vmatprep.subr.bf16.mxu0 0
  %1707 = vmatpush1.bf16.msra.mxu0 0
  %1708 = vmatprep.subr.bf16.mxu0 0
  %1709 = vmatpush1.bf16.msra.mxu0 0
  %1710 = vmatprep.subr.bf16.mxu0 0
  %1711 = vmatpush1.bf16.msra.mxu0 0
  %1712 = vmatprep.subr.bf16.mxu0 0
  %1713 = vmatpush1.bf16.msra.mxu0 0
  %1714 = vmatprep.mubr.bf16.mxu0 0
  %1715 = vmatmul.mubr.bf16.gmra.mrb[0].mxu0 %v1640
  %v1716 = vpop.f32.mrb[0].mxu0
  %v1717 = vadd.f32 0.0, %v1716
  %v1718 = vpop.f32.mrb[0].mxu0
  %v1719 = vadd.f32 0.0, %v1718
  %v1720 = vpop.f32.mrb[0].mxu0
  %v1721 = vpop.f32.mrb[0].mxu0
  %1722 = vdwg.mxu0
  %v1723 = vadd.f32 %v1635, %v1676
  %v1724 = vadd.f32 %v1636, %v1678
  %v1725 = vadd.f32 %v1637, %v1717
  %v1726 = vadd.f32 %v1638, %v1719
  %s1727 = scalar_lea.vmem %s47, 32
  %v1728 = vld [vmem:[%s1727] sm:$0xff]
  %v1729 = vld [vmem:[%s1727 + $0x8] sm:$0xff]
  %v1730 = vunpack.c.l.bf16 %v1728
  %v1731 = vunpack.c.h.bf16 %v1728
  %v1732 = vunpack.c.l.bf16 %v1729
  %v1733 = vunpack.c.h.bf16 %v1729
  %v1734 = vld [vmem:[%s393] sm:$0xff]
  %v1735 = vpack.c.bf16 %v1734, %v1734
  %1736 = vmatprep.subr.bf16.mxu0 %v493
  %1737 = vmatpush1.bf16.msra.mxu0 %v492
  %1738 = vmatprep.subr.bf16.mxu0 %v497
  %1739 = vmatpush1.bf16.msra.mxu0 %v496
  %1740 = vmatprep.subr.bf16.mxu0 %v501
  %1741 = vmatpush1.bf16.msra.mxu0 %v500
  %1742 = vmatprep.subr.bf16.mxu0 %v505
  %1743 = vmatpush1.bf16.msra.mxu0 %v504
  %1744 = vmatprep.subr.bf16.mxu0 %v509
  %1745 = vmatpush1.bf16.msra.mxu0 %v508
  %1746 = vmatprep.subr.bf16.mxu0 %v513
  %1747 = vmatpush1.bf16.msra.mxu0 %v512
  %1748 = vmatprep.subr.bf16.mxu0 %v517
  %1749 = vmatpush1.bf16.msra.mxu0 %v516
  %1750 = vmatprep.subr.bf16.mxu0 %v521
  %1751 = vmatpush1.bf16.msra.mxu0 %v520
  %1752 = vmatprep.subr.bf16.mxu0 0
  %1753 = vmatpush1.bf16.msra.mxu0 0
  %1754 = vmatprep.subr.bf16.mxu0 0
  %1755 = vmatpush1.bf16.msra.mxu0 0
  %1756 = vmatprep.subr.bf16.mxu0 0
  %1757 = vmatpush1.bf16.msra.mxu0 0
  %1758 = vmatprep.subr.bf16.mxu0 0
  %1759 = vmatpush1.bf16.msra.mxu0 0
  %1760 = vmatprep.subr.bf16.mxu0 0
  %1761 = vmatpush1.bf16.msra.mxu0 0
  %1762 = vmatprep.subr.bf16.mxu0 0
  %1763 = vmatpush1.bf16.msra.mxu0 0
  %1764 = vmatprep.subr.bf16.mxu0 0
  %1765 = vmatpush1.bf16.msra.mxu0 0
  %1766 = vmatprep.subr.bf16.mxu0 0
  %1767 = vmatpush1.bf16.msra.mxu0 0
  %1768 = vmatprep.mubr.bf16.mxu0 0
  %1769 = vmatmul.mubr.bf16.gmra.mrb[0].mxu0 %v1735
  %v1770 = vpop.f32.mrb[0].mxu0
  %v1771 = vadd.f32 0.0, %v1770
  %v1772 = vpop.f32.mrb[0].mxu0
  %v1773 = vadd.f32 0.0, %v1772
  %v1774 = vpop.f32.mrb[0].mxu0
  %v1775 = vpop.f32.mrb[0].mxu0
  %1776 = vdwg.mxu0
  %1777 = vmatprep.subr.bf16.mxu0 %v495
  %1778 = vmatpush1.bf16.msra.mxu0 %v494
  %1779 = vmatprep.subr.bf16.mxu0 %v499
  %1780 = vmatpush1.bf16.msra.mxu0 %v498
  %1781 = vmatprep.subr.bf16.mxu0 %v503
  %1782 = vmatpush1.bf16.msra.mxu0 %v502
  %1783 = vmatprep.subr.bf16.mxu0 %v507
  %1784 = vmatpush1.bf16.msra.mxu0 %v506
  %1785 = vmatprep.subr.bf16.mxu0 %v511
  %1786 = vmatpush1.bf16.msra.mxu0 %v510
  %1787 = vmatprep.subr.bf16.mxu0 %v515
  %1788 = vmatpush1.bf16.msra.mxu0 %v514
  %1789 = vmatprep.subr.bf16.mxu0 %v519
  %1790 = vmatpush1.bf16.msra.mxu0 %v518
  %1791 = vmatprep.subr.bf16.mxu0 %v523
  %1792 = vmatpush1.bf16.msra.mxu0 %v522
  %1793 = vmatprep.subr.bf16.mxu0 0
  %1794 = vmatpush1.bf16.msra.mxu0 0
  %1795 = vmatprep.subr.bf16.mxu0 0
  %1796 = vmatpush1.bf16.msra.mxu0 0
  %1797 = vmatprep.subr.bf16.mxu0 0
  %1798 = vmatpush1.bf16.msra.mxu0 0
  %1799 = vmatprep.subr.bf16.mxu0 0
  %1800 = vmatpush1.bf16.msra.mxu0 0
  %1801 = vmatprep.subr.bf16.mxu0 0
  %1802 = vmatpush1.bf16.msra.mxu0 0
  %1803 = vmatprep.subr.bf16.mxu0 0
  %1804 = vmatpush1.bf16.msra.mxu0 0
  %1805 = vmatprep.subr.bf16.mxu0 0
  %1806 = vmatpush1.bf16.msra.mxu0 0
  %1807 = vmatprep.subr.bf16.mxu0 0
  %1808 = vmatpush1.bf16.msra.mxu0 0
  %1809 = vmatprep.mubr.bf16.mxu0 0
  %1810 = vmatmul.mubr.bf16.gmra.mrb[0].mxu0 %v1735
  %v1811 = vpop.f32.mrb[0].mxu0
  %v1812 = vadd.f32 0.0, %v1811
  %v1813 = vpop.f32.mrb[0].mxu0
  %v1814 = vadd.f32 0.0, %v1813
  %v1815 = vpop.f32.mrb[0].mxu0
  %v1816 = vpop.f32.mrb[0].mxu0
  %1817 = vdwg.mxu0
  %v1818 = vadd.f32 %v1730, %v1771
  %v1819 = vadd.f32 %v1731, %v1773
  %v1820 = vadd.f32 %v1732, %v1812
  %v1821 = vadd.f32 %v1733, %v1814
  %v1822 = vld [vmem:[#allocation3] sm:$0xff]
  %v1823 = vmul.f32 %v1723, 0.5
  %v1824 = vtanh.pop %v1823
  %v1825 = vmul.f32 %v1824, 0.5
  %v1826 = vadd.f32 %v1825, 0.5
  %v1827 = vmul.f32 %v1724, 0.5
  %v1828 = vtanh.pop %v1827
  %v1829 = vmul.f32 %v1828, 0.5
  %v1830 = vadd.f32 %v1829, 0.5
  %v1831 = vtanh.pop %v1725
  %v1832 = vmul.f32 %v1726, 0.5
  %v1833 = vtanh.pop %v1832
  %v1834 = vmul.f32 %v1833, 0.5
  %v1835 = vadd.f32 %v1834, 0.5
  %v1836 = vmul.f32 %v1830, %v1822
  %v1837 = vmul.f32 %v1826, %v1831
  %v1838 = vadd.f32 %v1836, %v1837
  %v1839 = vtanh.pop %v1838
  %v1840 = vmul.f32 %v1835, %v1839
  %v1841 = vld [vmem:[%s661] sm:$0xff]
  %v1842 = vmul.f32 %v1818, 0.5
  %v1843 = vtanh.pop %v1842
  %v1844 = vmul.f32 %v1843, 0.5
  %v1845 = vadd.f32 %v1844, 0.5
  %v1846 = vmul.f32 %v1819, 0.5
  %v1847 = vtanh.pop %v1846
  %v1848 = vmul.f32 %v1847, 0.5
  %v1849 = vadd.f32 %v1848, 0.5
  %v1850 = vtanh.pop %v1820
  %v1851 = vmul.f32 %v1821, 0.5
  %v1852 = vtanh.pop %v1851
  %v1853 = vmul.f32 %v1852, 0.5
  %v1854 = vadd.f32 %v1853, 0.5
  %v1855 = vmul.f32 %v1849, %v1841
  %v1856 = vmul.f32 %v1845, %v1850
  %v1857 = vadd.f32 %v1855, %v1856
  %v1858 = vtanh.pop %v1857
  %v1859 = vmul.f32 %v1854, %v1858
  %1860 = vst [vmem:[#allocation2] sm:$0xff] %v1840
  %1861 = vst [vmem:[#allocation3] sm:$0xff] %v1838
  %1862 = vst [vmem:[%s393] sm:$0xff] %v1859
  %1863 = vst [vmem:[%s661] sm:$0xff] %v1857
  %s1864 = scalar_lea.vmem %s3, 40
  %1865 = vst [vmem:[%s1864] sm:$0xff] %v1840
  %s1866 = scalar_lea.vmem %s55, 16
  %1867 = vst [vmem:[%s1866] sm:$0xff] %v1859
  %s1868 = scalar_lea.vmem %s0, 96
  %v1869 = vld [vmem:[%s1868] sm:$0xff]
  %v1870 = vld [vmem:[%s1868 + $0x8] sm:$0xff]
  %v1871 = vunpack.c.l.bf16 %v1869
  %v1872 = vunpack.c.h.bf16 %v1869
  %v1873 = vunpack.c.l.bf16 %v1870
  %v1874 = vunpack.c.h.bf16 %v1870
  %v1875 = vld [vmem:[#allocation2] sm:$0xff]
  %v1876 = vpack.c.bf16 %v1875, %v1875
  %1877 = vmatprep.subr.bf16.mxu0 %v237
  %1878 = vmatpush1.bf16.msra.mxu0 %v236
  %1879 = vmatprep.subr.bf16.mxu0 %v241
  %1880 = vmatpush1.bf16.msra.mxu0 %v240
  %1881 = vmatprep.subr.bf16.mxu0 %v245
  %1882 = vmatpush1.bf16.msra.mxu0 %v244
  %1883 = vmatprep.subr.bf16.mxu0 %v249
  %1884 = vmatpush1.bf16.msra.mxu0 %v248
  %1885 = vmatprep.subr.bf16.mxu0 %v253
  %1886 = vmatpush1.bf16.msra.mxu0 %v252
  %1887 = vmatprep.subr.bf16.mxu0 %v257
  %1888 = vmatpush1.bf16.msra.mxu0 %v256
  %1889 = vmatprep.subr.bf16.mxu0 %v261
  %1890 = vmatpush1.bf16.msra.mxu0 %v260
  %1891 = vmatprep.subr.bf16.mxu0 %v265
  %1892 = vmatpush1.bf16.msra.mxu0 %v264
  %1893 = vmatprep.subr.bf16.mxu0 0
  %1894 = vmatpush1.bf16.msra.mxu0 0
  %1895 = vmatprep.subr.bf16.mxu0 0
  %1896 = vmatpush1.bf16.msra.mxu0 0
  %1897 = vmatprep.subr.bf16.mxu0 0
  %1898 = vmatpush1.bf16.msra.mxu0 0
  %1899 = vmatprep.subr.bf16.mxu0 0
  %1900 = vmatpush1.bf16.msra.mxu0 0
  %1901 = vmatprep.subr.bf16.mxu0 0
  %1902 = vmatpush1.bf16.msra.mxu0 0
  %1903 = vmatprep.subr.bf16.mxu0 0
  %1904 = vmatpush1.bf16.msra.mxu0 0
  %1905 = vmatprep.subr.bf16.mxu0 0
  %1906 = vmatpush1.bf16.msra.mxu0 0
  %1907 = vmatprep.subr.bf16.mxu0 0
  %1908 = vmatpush1.bf16.msra.mxu0 0
  %1909 = vmatprep.mubr.bf16.mxu0 0
  %1910 = vmatmul.mubr.bf16.gmra.mrb[0].mxu0 %v1876
  %v1911 = vpop.f32.mrb[0].mxu0
  %v1912 = vadd.f32 0.0, %v1911
  %v1913 = vpop.f32.mrb[0].mxu0
  %v1914 = vadd.f32 0.0, %v1913
  %v1915 = vpop.f32.mrb[0].mxu0
  %v1916 = vpop.f32.mrb[0].mxu0
  %1917 = vdwg.mxu0
  %1918 = vmatprep.subr.bf16.mxu0 %v239
  %1919 = vmatpush1.bf16.msra.mxu0 %v238
  %1920 = vmatprep.subr.bf16.mxu0 %v243
  %1921 = vmatpush1.bf16.msra.mxu0 %v242
  %1922 = vmatprep.subr.bf16.mxu0 %v247
  %1923 = vmatpush1.bf16.msra.mxu0 %v246
  %1924 = vmatprep.subr.bf16.mxu0 %v251
  %1925 = vmatpush1.bf16.msra.mxu0 %v250
  %1926 = vmatprep.subr.bf16.mxu0 %v255
  %1927 = vmatpush1.bf16.msra.mxu0 %v254
  %1928 = vmatprep.subr.bf16.mxu0 %v259
  %1929 = vmatpush1.bf16.msra.mxu0 %v258
  %1930 = vmatprep.subr.bf16.mxu0 %v263
  %1931 = vmatpush1.bf16.msra.mxu0 %v262
  %1932 = vmatprep.subr.bf16.mxu0 %v267
  %1933 = vmatpush1.bf16.msra.mxu0 %v266
  %1934 = vmatprep.subr.bf16.mxu0 0
  %1935 = vmatpush1.bf16.msra.mxu0 0
  %1936 = vmatprep.subr.bf16.mxu0 0
  %1937 = vmatpush1.bf16.msra.mxu0 0
  %1938 = vmatprep.subr.bf16.mxu0 0
  %1939 = vmatpush1.bf16.msra.mxu0 0
  %1940 = vmatprep.subr.bf16.mxu0 0
  %1941 = vmatpush1.bf16.msra.mxu0 0
  %1942 = vmatprep.subr.bf16.mxu0 0
  %1943 = vmatpush1.bf16.msra.mxu0 0
  %1944 = vmatprep.subr.bf16.mxu0 0
  %1945 = vmatpush1.bf16.msra.mxu0 0
  %1946 = vmatprep.subr.bf16.mxu0 0
  %1947 = vmatpush1.bf16.msra.mxu0 0
  %1948 = vmatprep.subr.bf16.mxu0 0
  %1949 = vmatpush1.bf16.msra.mxu0 0
  %1950 = vmatprep.mubr.bf16.mxu0 0
  %1951 = vmatmul.mubr.bf16.gmra.mrb[0].mxu0 %v1876
  %v1952 = vpop.f32.mrb[0].mxu0
  %v1953 = vadd.f32 0.0, %v1952
  %v1954 = vpop.f32.mrb[0].mxu0
  %v1955 = vadd.f32 0.0, %v1954
  %v1956 = vpop.f32.mrb[0].mxu0
  %v1957 = vpop.f32.mrb[0].mxu0
  %1958 = vdwg.mxu0
  %v1959 = vadd.f32 %v1871, %v1912
  %v1960 = vadd.f32 %v1872, %v1914
  %v1961 = vadd.f32 %v1873, %v1953
  %v1962 = vadd.f32 %v1874, %v1955
  %s1963 = scalar_lea.vmem %s47, 16
  %v1964 = vld [vmem:[%s1963] sm:$0xff]
  %v1965 = vld [vmem:[%s1963 + $0x8] sm:$0xff]
  %v1966 = vunpack.c.l.bf16 %v1964
  %v1967 = vunpack.c.h.bf16 %v1964
  %v1968 = vunpack.c.l.bf16 %v1965
  %v1969 = vunpack.c.h.bf16 %v1965
  %v1970 = vld [vmem:[%s393] sm:$0xff]
  %v1971 = vpack.c.bf16 %v1970, %v1970
  %1972 = vmatprep.subr.bf16.mxu0 %v493
  %1973 = vmatpush1.bf16.msra.mxu0 %v492
  %1974 = vmatprep.subr.bf16.mxu0 %v497
  %1975 = vmatpush1.bf16.msra.mxu0 %v496
  %1976 = vmatprep.subr.bf16.mxu0 %v501
  %1977 = vmatpush1.bf16.msra.mxu0 %v500
  %1978 = vmatprep.subr.bf16.mxu0 %v505
  %1979 = vmatpush1.bf16.msra.mxu0 %v504
  %1980 = vmatprep.subr.bf16.mxu0 %v509
  %1981 = vmatpush1.bf16.msra.mxu0 %v508
  %1982 = vmatprep.subr.bf16.mxu0 %v513
  %1983 = vmatpush1.bf16.msra.mxu0 %v512
  %1984 = vmatprep.subr.bf16.mxu0 %v517
  %1985 = vmatpush1.bf16.msra.mxu0 %v516
  %1986 = vmatprep.subr.bf16.mxu0 %v521
  %1987 = vmatpush1.bf16.msra.mxu0 %v520
  %1988 = vmatprep.subr.bf16.mxu0 0
  %1989 = vmatpush1.bf16.msra.mxu0 0
  %1990 = vmatprep.subr.bf16.mxu0 0
  %1991 = vmatpush1.bf16.msra.mxu0 0
  %1992 = vmatprep.subr.bf16.mxu0 0
  %1993 = vmatpush1.bf16.msra.mxu0 0
  %1994 = vmatprep.subr.bf16.mxu0 0
  %1995 = vmatpush1.bf16.msra.mxu0 0
  %1996 = vmatprep.subr.bf16.mxu0 0
  %1997 = vmatpush1.bf16.msra.mxu0 0
  %1998 = vmatprep.subr.bf16.mxu0 0
  %1999 = vmatpush1.bf16.msra.mxu0 0
  %2000 = vmatprep.subr.bf16.mxu0 0
  %2001 = vmatpush1.bf16.msra.mxu0 0
  %2002 = vmatprep.subr.bf16.mxu0 0
  %2003 = vmatpush1.bf16.msra.mxu0 0
  %2004 = vmatprep.mubr.bf16.mxu0 0
  %2005 = vmatmul.mubr.bf16.gmra.mrb[0].mxu0 %v1971
  %v2006 = vpop.f32.mrb[0].mxu0
  %v2007 = vadd.f32 0.0, %v2006
  %v2008 = vpop.f32.mrb[0].mxu0
  %v2009 = vadd.f32 0.0, %v2008
  %v2010 = vpop.f32.mrb[0].mxu0
  %v2011 = vpop.f32.mrb[0].mxu0
  %2012 = vdwg.mxu0
  %2013 = vmatprep.subr.bf16.mxu0 %v495
  %2014 = vmatpush1.bf16.msra.mxu0 %v494
  %2015 = vmatprep.subr.bf16.mxu0 %v499
  %2016 = vmatpush1.bf16.msra.mxu0 %v498
  %2017 = vmatprep.subr.bf16.mxu0 %v503
  %2018 = vmatpush1.bf16.msra.mxu0 %v502
  %2019 = vmatprep.subr.bf16.mxu0 %v507
  %2020 = vmatpush1.bf16.msra.mxu0 %v506
  %2021 = vmatprep.subr.bf16.mxu0 %v511
  %2022 = vmatpush1.bf16.msra.mxu0 %v510
  %2023 = vmatprep.subr.bf16.mxu0 %v515
  %2024 = vmatpush1.bf16.msra.mxu0 %v514
  %2025 = vmatprep.subr.bf16.mxu0 %v519
  %2026 = vmatpush1.bf16.msra.mxu0 %v518
  %2027 = vmatprep.subr.bf16.mxu0 %v523
  %2028 = vmatpush1.bf16.msra.mxu0 %v522
  %2029 = vmatprep.subr.bf16.mxu0 0
  %2030 = vmatpush1.bf16.msra.mxu0 0
  %2031 = vmatprep.subr.bf16.mxu0 0
  %2032 = vmatpush1.bf16.msra.mxu0 0
  %2033 = vmatprep.subr.bf16.mxu0 0
  %2034 = vmatpush1.bf16.msra.mxu0 0
  %2035 = vmatprep.subr.bf16.mxu0 0
  %2036 = vmatpush1.bf16.msra.mxu0 0
  %2037 = vmatprep.subr.bf16.mxu0 0
  %2038 = vmatpush1.bf16.msra.mxu0 0
  %2039 = vmatprep.subr.bf16.mxu0 0
  %2040 = vmatpush1.bf16.msra.mxu0 0
  %2041 = vmatprep.subr.bf16.mxu0 0
  %2042 = vmatpush1.bf16.msra.mxu0 0
  %2043 = vmatprep.subr.bf16.mxu0 0
  %2044 = vmatpush1.bf16.msra.mxu0 0
  %2045 = vmatprep.mubr.bf16.mxu0 0
  %2046 = vmatmul.mubr.bf16.gmra.mrb[0].mxu0 %v1971
  %v2047 = vpop.f32.mrb[0].mxu0
  %v2048 = vadd.f32 0.0, %v2047
  %v2049 = vpop.f32.mrb[0].mxu0
  %v2050 = vadd.f32 0.0, %v2049
  %v2051 = vpop.f32.mrb[0].mxu0
  %v2052 = vpop.f32.mrb[0].mxu0
  %2053 = vdwg.mxu0
  %v2054 = vadd.f32 %v1966, %v2007
  %v2055 = vadd.f32 %v1967, %v2009
  %v2056 = vadd.f32 %v1968, %v2048
  %v2057 = vadd.f32 %v1969, %v2050
  %v2058 = vld [vmem:[#allocation3] sm:$0xff]
  %v2059 = vmul.f32 %v1959, 0.5
  %v2060 = vtanh.pop %v2059
  %v2061 = vmul.f32 %v2060, 0.5
  %v2062 = vadd.f32 %v2061, 0.5
  %v2063 = vmul.f32 %v1960, 0.5
  %v2064 = vtanh.pop %v2063
  %v2065 = vmul.f32 %v2064, 0.5
  %v2066 = vadd.f32 %v2065, 0.5
  %v2067 = vtanh.pop %v1961
  %v2068 = vmul.f32 %v1962, 0.5
  %v2069 = vtanh.pop %v2068
  %v2070 = vmul.f32 %v2069, 0.5
  %v2071 = vadd.f32 %v2070, 0.5
  %v2072 = vmul.f32 %v2066, %v2058
  %v2073 = vmul.f32 %v2062, %v2067
  %v2074 = vadd.f32 %v2072, %v2073
  %v2075 = vtanh.pop %v2074
  %v2076 = vmul.f32 %v2071, %v2075
  %v2077 = vld [vmem:[%s661] sm:$0xff]
  %v2078 = vmul.f32 %v2054, 0.5
  %v2079 = vtanh.pop %v2078
  %v2080 = vmul.f32 %v2079, 0.5
  %v2081 = vadd.f32 %v2080, 0.5
  %v2082 = vmul.f32 %v2055, 0.5
  %v2083 = vtanh.pop %v2082
  %v2084 = vmul.f32 %v2083, 0.5
  %v2085 = vadd.f32 %v2084, 0.5
  %v2086 = vtanh.pop %v2056
  %v2087 = vmul.f32 %v2057, 0.5
  %v2088 = vtanh.pop %v2087
  %v2089 = vmul.f32 %v2088, 0.5
  %v2090 = vadd.f32 %v2089, 0.5
  %v2091 = vmul.f32 %v2085, %v2077
  %v2092 = vmul.f32 %v2081, %v2086
  %v2093 = vadd.f32 %v2091, %v2092
  %v2094 = vtanh.pop %v2093
  %v2095 = vmul.f32 %v2090, %v2094
  %2096 = vst [vmem:[#allocation2] sm:$0xff] %v2076
  %2097 = vst [vmem:[#allocation3] sm:$0xff] %v2074
  %2098 = vst [vmem:[%s393] sm:$0xff] %v2095
  %2099 = vst [vmem:[%s661] sm:$0xff] %v2093
  %s2100 = scalar_lea.vmem %s3, 48
  %2101 = vst [vmem:[%s2100] sm:$0xff] %v2076
  %s2102 = scalar_lea.vmem %s55, 8
  %2103 = vst [vmem:[%s2102] sm:$0xff] %v2095
  %s2104 = scalar_lea.vmem %s0, 112
  %v2105 = vld [vmem:[%s2104] sm:$0xff]
  %v2106 = vld [vmem:[%s2104 + $0x8] sm:$0xff]
  %v2107 = vunpack.c.l.bf16 %v2105
  %v2108 = vunpack.c.h.bf16 %v2105
  %v2109 = vunpack.c.l.bf16 %v2106
  %v2110 = vunpack.c.h.bf16 %v2106
  %v2111 = vld [vmem:[#allocation2] sm:$0xff]
  %v2112 = vpack.c.bf16 %v2111, %v2111
  %2113 = vmatprep.subr.bf16.mxu0 %v237
  %2114 = vmatpush1.bf16.msra.mxu0 %v236
  %2115 = vmatprep.subr.bf16.mxu0 %v241
  %2116 = vmatpush1.bf16.msra.mxu0 %v240
  %2117 = vmatprep.subr.bf16.mxu0 %v245
  %2118 = vmatpush1.bf16.msra.mxu0 %v244
  %2119 = vmatprep.subr.bf16.mxu0 %v249
  %2120 = vmatpush1.bf16.msra.mxu0 %v248
  %2121 = vmatprep.subr.bf16.mxu0 %v253
  %2122 = vmatpush1.bf16.msra.mxu0 %v252
  %2123 = vmatprep.subr.bf16.mxu0 %v257
  %2124 = vmatpush1.bf16.msra.mxu0 %v256
  %2125 = vmatprep.subr.bf16.mxu0 %v261
  %2126 = vmatpush1.bf16.msra.mxu0 %v260
  %2127 = vmatprep.subr.bf16.mxu0 %v265
  %2128 = vmatpush1.bf16.msra.mxu0 %v264
  %2129 = vmatprep.subr.bf16.mxu0 0
  %2130 = vmatpush1.bf16.msra.mxu0 0
  %2131 = vmatprep.subr.bf16.mxu0 0
  %2132 = vmatpush1.bf16.msra.mxu0 0
  %2133 = vmatprep.subr.bf16.mxu0 0
  %2134 = vmatpush1.bf16.msra.mxu0 0
  %2135 = vmatprep.subr.bf16.mxu0 0
  %2136 = vmatpush1.bf16.msra.mxu0 0
  %2137 = vmatprep.subr.bf16.mxu0 0
  %2138 = vmatpush1.bf16.msra.mxu0 0
  %2139 = vmatprep.subr.bf16.mxu0 0
  %2140 = vmatpush1.bf16.msra.mxu0 0
  %2141 = vmatprep.subr.bf16.mxu0 0
  %2142 = vmatpush1.bf16.msra.mxu0 0
  %2143 = vmatprep.subr.bf16.mxu0 0
  %2144 = vmatpush1.bf16.msra.mxu0 0
  %2145 = vmatprep.mubr.bf16.mxu0 0
  %2146 = vmatmul.mubr.bf16.gmra.mrb[0].mxu0 %v2112
  %v2147 = vpop.f32.mrb[0].mxu0
  %v2148 = vadd.f32 0.0, %v2147
  %v2149 = vpop.f32.mrb[0].mxu0
  %v2150 = vadd.f32 0.0, %v2149
  %v2151 = vpop.f32.mrb[0].mxu0
  %v2152 = vpop.f32.mrb[0].mxu0
  %2153 = vdwg.mxu0
  %2154 = vmatprep.subr.bf16.mxu0 %v239
  %2155 = vmatpush1.bf16.msra.mxu0 %v238
  %2156 = vmatprep.subr.bf16.mxu0 %v243
  %2157 = vmatpush1.bf16.msra.mxu0 %v242
  %2158 = vmatprep.subr.bf16.mxu0 %v247
  %2159 = vmatpush1.bf16.msra.mxu0 %v246
  %2160 = vmatprep.subr.bf16.mxu0 %v251
  %2161 = vmatpush1.bf16.msra.mxu0 %v250
  %2162 = vmatprep.subr.bf16.mxu0 %v255
  %2163 = vmatpush1.bf16.msra.mxu0 %v254
  %2164 = vmatprep.subr.bf16.mxu0 %v259
  %2165 = vmatpush1.bf16.msra.mxu0 %v258
  %2166 = vmatprep.subr.bf16.mxu0 %v263
  %2167 = vmatpush1.bf16.msra.mxu0 %v262
  %2168 = vmatprep.subr.bf16.mxu0 %v267
  %2169 = vmatpush1.bf16.msra.mxu0 %v266
  %2170 = vmatprep.subr.bf16.mxu0 0
  %2171 = vmatpush1.bf16.msra.mxu0 0
  %2172 = vmatprep.subr.bf16.mxu0 0
  %2173 = vmatpush1.bf16.msra.mxu0 0
  %2174 = vmatprep.subr.bf16.mxu0 0
  %2175 = vmatpush1.bf16.msra.mxu0 0
  %2176 = vmatprep.subr.bf16.mxu0 0
  %2177 = vmatpush1.bf16.msra.mxu0 0
  %2178 = vmatprep.subr.bf16.mxu0 0
  %2179 = vmatpush1.bf16.msra.mxu0 0
  %2180 = vmatprep.subr.bf16.mxu0 0
  %2181 = vmatpush1.bf16.msra.mxu0 0
  %2182 = vmatprep.subr.bf16.mxu0 0
  %2183 = vmatpush1.bf16.msra.mxu0 0
  %2184 = vmatprep.subr.bf16.mxu0 0
  %2185 = vmatpush1.bf16.msra.mxu0 0
  %2186 = vmatprep.mubr.bf16.mxu0 0
  %2187 = vmatmul.mubr.bf16.gmra.mrb[0].mxu0 %v2112
  %v2188 = vpop.f32.mrb[0].mxu0
  %v2189 = vadd.f32 0.0, %v2188
  %v2190 = vpop.f32.mrb[0].mxu0
  %v2191 = vadd.f32 0.0, %v2190
  %v2192 = vpop.f32.mrb[0].mxu0
  %v2193 = vpop.f32.mrb[0].mxu0
  %2194 = vdwg.mxu0
  %v2195 = vadd.f32 %v2107, %v2148
  %v2196 = vadd.f32 %v2108, %v2150
  %v2197 = vadd.f32 %v2109, %v2189
  %v2198 = vadd.f32 %v2110, %v2191
  %v2199 = vld [vmem:[%s47] sm:$0xff]
  %v2200 = vld [vmem:[%s47 + $0x8] sm:$0xff]
  %v2201 = vunpack.c.l.bf16 %v2199
  %v2202 = vunpack.c.h.bf16 %v2199
  %v2203 = vunpack.c.l.bf16 %v2200
  %v2204 = vunpack.c.h.bf16 %v2200
  %v2205 = vld [vmem:[%s393] sm:$0xff]
  %v2206 = vpack.c.bf16 %v2205, %v2205
  %2207 = vmatprep.subr.bf16.mxu0 %v493
  %2208 = vmatpush1.bf16.msra.mxu0 %v492
  %2209 = vmatprep.subr.bf16.mxu0 %v497
  %2210 = vmatpush1.bf16.msra.mxu0 %v496
  %2211 = vmatprep.subr.bf16.mxu0 %v501
  %2212 = vmatpush1.bf16.msra.mxu0 %v500
  %2213 = vmatprep.subr.bf16.mxu0 %v505
  %2214 = vmatpush1.bf16.msra.mxu0 %v504
  %2215 = vmatprep.subr.bf16.mxu0 %v509
  %2216 = vmatpush1.bf16.msra.mxu0 %v508
  %2217 = vmatprep.subr.bf16.mxu0 %v513
  %2218 = vmatpush1.bf16.msra.mxu0 %v512
  %2219 = vmatprep.subr.bf16.mxu0 %v517
  %2220 = vmatpush1.bf16.msra.mxu0 %v516
  %2221 = vmatprep.subr.bf16.mxu0 %v521
  %2222 = vmatpush1.bf16.msra.mxu0 %v520
  %2223 = vmatprep.subr.bf16.mxu0 0
  %2224 = vmatpush1.bf16.msra.mxu0 0
  %2225 = vmatprep.subr.bf16.mxu0 0
  %2226 = vmatpush1.bf16.msra.mxu0 0
  %2227 = vmatprep.subr.bf16.mxu0 0
  %2228 = vmatpush1.bf16.msra.mxu0 0
  %2229 = vmatprep.subr.bf16.mxu0 0
  %2230 = vmatpush1.bf16.msra.mxu0 0
  %2231 = vmatprep.subr.bf16.mxu0 0
  %2232 = vmatpush1.bf16.msra.mxu0 0
  %2233 = vmatprep.subr.bf16.mxu0 0
  %2234 = vmatpush1.bf16.msra.mxu0 0
  %2235 = vmatprep.subr.bf16.mxu0 0
  %2236 = vmatpush1.bf16.msra.mxu0 0
  %2237 = vmatprep.subr.bf16.mxu0 0
  %2238 = vmatpush1.bf16.msra.mxu0 0
  %2239 = vmatprep.mubr.bf16.mxu0 0
  %2240 = vmatmul.mubr.bf16.gmra.mrb[0].mxu0 %v2206
  %v2241 = vpop.f32.mrb[0].mxu0
  %v2242 = vadd.f32 0.0, %v2241
  %v2243 = vpop.f32.mrb[0].mxu0
  %v2244 = vadd.f32 0.0, %v2243
  %v2245 = vpop.f32.mrb[0].mxu0
  %v2246 = vpop.f32.mrb[0].mxu0
  %2247 = vdwg.mxu0
  %2248 = vmatprep.subr.bf16.mxu0 %v495
  %2249 = vmatpush1.bf16.msra.mxu0 %v494
  %2250 = vmatprep.subr.bf16.mxu0 %v499
  %2251 = vmatpush1.bf16.msra.mxu0 %v498
  %2252 = vmatprep.subr.bf16.mxu0 %v503
  %2253 = vmatpush1.bf16.msra.mxu0 %v502
  %2254 = vmatprep.subr.bf16.mxu0 %v507
  %2255 = vmatpush1.bf16.msra.mxu0 %v506
  %2256 = vmatprep.subr.bf16.mxu0 %v511
  %2257 = vmatpush1.bf16.msra.mxu0 %v510
  %2258 = vmatprep.subr.bf16.mxu0 %v515
  %2259 = vmatpush1.bf16.msra.mxu0 %v514
  %2260 = vmatprep.subr.bf16.mxu0 %v519
  %2261 = vmatpush1.bf16.msra.mxu0 %v518
  %2262 = vmatprep.subr.bf16.mxu0 %v523
  %2263 = vmatpush1.bf16.msra.mxu0 %v522
  %2264 = vmatprep.subr.bf16.mxu0 0
  %2265 = vmatpush1.bf16.msra.mxu0 0
  %2266 = vmatprep.subr.bf16.mxu0 0
  %2267 = vmatpush1.bf16.msra.mxu0 0
  %2268 = vmatprep.subr.bf16.mxu0 0
  %2269 = vmatpush1.bf16.msra.mxu0 0
  %2270 = vmatprep.subr.bf16.mxu0 0
  %2271 = vmatpush1.bf16.msra.mxu0 0
  %2272 = vmatprep.subr.bf16.mxu0 0
  %2273 = vmatpush1.bf16.msra.mxu0 0
  %2274 = vmatprep.subr.bf16.mxu0 0
  %2275 = vmatpush1.bf16.msra.mxu0 0
  %2276 = vmatprep.subr.bf16.mxu0 0
  %2277 = vmatpush1.bf16.msra.mxu0 0
  %2278 = vmatprep.subr.bf16.mxu0 0
  %2279 = vmatpush1.bf16.msra.mxu0 0
  %2280 = vmatprep.mubr.bf16.mxu0 0
  %2281 = vmatmul.mubr.bf16.gmra.mrb[0].mxu0 %v2206
  %v2282 = vpop.f32.mrb[0].mxu0
  %v2283 = vadd.f32 0.0, %v2282
  %v2284 = vpop.f32.mrb[0].mxu0
  %v2285 = vadd.f32 0.0, %v2284
  %v2286 = vpop.f32.mrb[0].mxu0
  %v2287 = vpop.f32.mrb[0].mxu0
  %2288 = vdwg.mxu0
  %v2289 = vadd.f32 %v2201, %v2242
  %v2290 = vadd.f32 %v2202, %v2244
  %v2291 = vadd.f32 %v2203, %v2283
  %v2292 = vadd.f32 %v2204, %v2285
  %v2293 = vld [vmem:[#allocation3] sm:$0xff]
  %v2294 = vmul.f32 %v2195, 0.5
  %v2295 = vtanh.pop %v2294
  %v2296 = vmul.f32 %v2295, 0.5
  %v2297 = vadd.f32 %v2296, 0.5
  %v2298 = vmul.f32 %v2196, 0.5
  %v2299 = vtanh.pop %v2298
  %v2300 = vmul.f32 %v2299, 0.5
  %v2301 = vadd.f32 %v2300, 0.5
  %v2302 = vtanh.pop %v2197
  %v2303 = vmul.f32 %v2198, 0.5
  %v2304 = vtanh.pop %v2303
  %v2305 = vmul.f32 %v2304, 0.5
  %v2306 = vadd.f32 %v2305, 0.5
  %v2307 = vmul.f32 %v2301, %v2293
  %v2308 = vmul.f32 %v2297, %v2302
  %v2309 = vadd.f32 %v2307, %v2308
  %v2310 = vtanh.pop %v2309
  %v2311 = vmul.f32 %v2306, %v2310
  %v2312 = vld [vmem:[%s661] sm:$0xff]
  %v2313 = vmul.f32 %v2289, 0.5
  %v2314 = vtanh.pop %v2313
  %v2315 = vmul.f32 %v2314, 0.5
  %v2316 = vadd.f32 %v2315, 0.5
  %v2317 = vmul.f32 %v2290, 0.5
  %v2318 = vtanh.pop %v2317
  %v2319 = vmul.f32 %v2318, 0.5
  %v2320 = vadd.f32 %v2319, 0.5
  %v2321 = vtanh.pop %v2291
  %v2322 = vmul.f32 %v2292, 0.5
  %v2323 = vtanh.pop %v2322
  %v2324 = vmul.f32 %v2323, 0.5
  %v2325 = vadd.f32 %v2324, 0.5
  %v2326 = vmul.f32 %v2320, %v2312
  %v2327 = vmul.f32 %v2316, %v2321
  %v2328 = vadd.f32 %v2326, %v2327
  %v2329 = vtanh.pop %v2328
  %v2330 = vmul.f32 %v2325, %v2329
  %2331 = vst [vmem:[#allocation2] sm:$0xff] %v2311
  %2332 = vst [vmem:[#allocation3] sm:$0xff] %v2309
  %2333 = vst [vmem:[%s393] sm:$0xff] %v2330
  %2334 = vst [vmem:[%s661] sm:$0xff] %v2328
  %s2335 = scalar_lea.vmem %s3, 56
  %2336 = vst [vmem:[%s2335] sm:$0xff] %v2311
  %2337 = vst [vmem:[%s55] sm:$0xff] %v2330
  %s2338 = ssub.s32 0, 0
  %s2339 = smul.u32 8, %s2338
  %p2340 = scmp.lt.s32.totalorder %s2339, 7
  %s2341 = scalar_select %p2340, %s2339, 7
  %s2342 = smul.addr %s2341, 8
  %s2343 = scalar_lea.vmem %s4, %s2342
  // Predicated region
  $region18: #{_lambda_.7} parent=0 // pred_check
    _
  $region19: #{_lambda_.7} parent=0 // pred_check_branch
    %2345 = sbr.rel (0) target = $region21
  $region20: #{_lambda_.7} parent=0 // pred_region
    _
  $region21: #{_lambda_.7} parent=0 // pred_fallthru
    _
  // Predicated region
  $region22: #{_lambda_.7} parent=0 // pred_check
    _
  $region23: #{_lambda_.7} parent=0 // pred_check_branch
    %2347 = sbr.rel (0) target = $region25
  $region24: #{_lambda_.7} parent=0 // pred_region
    %s2348 = ssub.s32 0, 0
    %s2349 = smul.u32 8, %s2348
  $region25: #{_lambda_.7} parent=0 // pred_fallthru
    _
  // Predicated region
  $region26: #{_lambda_.7} parent=0 // pred_check
    _
  $region27: #{_lambda_.7} parent=0 // pred_check_branch
    %2351 = sbr.rel (0) target = $region29
  $region28: #{_lambda_.7} parent=0 // pred_region
    _
  $region29: #{_lambda_.7} parent=0 // pred_fallthru
    _
  // Predicated region
  $region30: #{_lambda_.7} parent=0 // pred_check
    _
  $region31: #{_lambda_.7} parent=0 // pred_check_branch
    %2353 = sbr.rel (0) target = $region33
  $region32: #{_lambda_.7} parent=0 // pred_region
    %s2354 = ssub.s32 0, 0
    %s2355 = smul.u32 8, %s2354
    %p2356 = scmp.lt.s32.totalorder %s2355, 7
    %s2357 = scalar_select %p2356, %s2355, 7
    %s2358 = smul.addr %s2357, 8
    %s2359 = scalar_lea.vmem %s4, %s2358
  $region33: #{_lambda_.7} parent=0 // pred_fallthru
    _

</llo_original>
